<compile_context>
chip_gen: v7x
topology: tpu7x:2x2x1
jax: 0.10.0
libtpu: 0.0.40
codegen_flags: <defaults>
</compile_context>

<pallas_src>
import jax
import jax.numpy as jnp
import numpy as np
from jax.experimental import pallas as pl
from jax.experimental.pallas import tpu as pltpu

_EPS = 1e-5  # nn.LayerNorm default


# ------------------------------ in-kernel helpers -------------------------------------

def _mm(a, b):
    # bf16 weights are upcast here; accumulation is f32 either way.
    if b.dtype != a.dtype:
        b = b.astype(a.dtype)
    return jnp.dot(a, b, preferred_element_type=jnp.float32)


def _mix_blockdiag(x, w_ref, bias_row):
    """x @ kron(I, Wg) + bias, where w_ref holds only the (g, g) factor.

    g is a multiple of 128 (lane-aligned), so the per-group slices / concat are cheap and the
    dense (HW*C)^2 matrix is never materialised.  Falls back to a plain matmul when the
    stored factor already spans all columns.
    """
    w = w_ref[...]
    g = w.shape[0]
    n = x.shape[-1] // g
    if n <= 1:
        return _mm(x, w) + bias_row
    parts = [_mm(x[:, i * g:(i + 1) * g], w) for i in range(n)]
    return jnp.concatenate(parts, axis=-1) + bias_row


def _erf(x):
    # Abramowitz & Stegun 7.1.26 rational approximation, |err| <= 1.5e-7.
    p = 0.3275911
    a1, a2, a3, a4, a5 = (0.254829592, -0.284496736, 1.421413741,
                          -1.453152027, 1.061405429)
    sgn = jnp.where(x >= 0.0, 1.0, -1.0)
    ax = x * sgn
    t = pl.reciprocal(1.0 + p * ax, approx=True)       # EUP slot, not VALU
    poly = ((((a5 * t + a4) * t + a3) * t + a2) * t + a1) * t
    return sgn * (1.0 - poly * jnp.exp(-ax * ax))


def _gelu(x):
    # exact (erf-form) GELU to match nn.GELU default
    return 0.5 * x * (1.0 + _erf(x * 0.7071067811865476))


def _ln_normalize(x, acol, aexp):
    """(x - mean) * rsqrt(var + eps), mean/var grouped per channel-block of the row.

    Single pass: mu and E[x^2] are independent matmul chains (var = E[x^2] - mu^2), so the
    serial MXU chain is 2 deep instead of 4.  gamma/beta are folded into the next matmul.
    """
    mu = _mm(_mm(x, acol), aexp)
    ex2 = _mm(_mm(x * x, acol), aexp)
    var = jnp.maximum(ex2 - mu * mu, 0.0)
    return (x - mu) * jax.lax.rsqrt(var + _EPS)


# ------------------------------------ kernels ------------------------------------------

def _spe_branch_kernel(x_ref, acol_ref, aexp_ref, m_ref, r_ref, o_ref):
    # rows=(b,h,w), cols=(t,c).  Whole Spe_FC branch (LN -> mlp_t -> proj) is linear after
    # the LN normalisation, so it collapses to ONE folded matmul + bias row + residual.
    x = x_ref[...]
    xhat = _ln_normalize(x, acol_ref[...], aexp_ref[...])
    o_ref[...] = x + _mm(xhat, m_ref[...]) + r_ref[...]


def _mlp_branch_kernel(x_ref, acol_ref, aexp_ref, m1_ref, r1_ref, m2_ref, r2_ref, o_ref):
    # rows=(b,t,h), cols=(w,c).  LN -> fc1 -> GELU -> fc2 -> residual, fully fused.
    x = x_ref[...]
    xhat = _ln_normalize(x, acol_ref[...], aexp_ref[...])
    h = _gelu(_mm(xhat, m1_ref[...]) + r1_ref[...])
    o_ref[...] = x + _mm(h, m2_ref[...]) + r2_ref[...]


def _spa_branch_kernel(xres_ref, xs_ref, acol_ref, aexp_ref,
                       mh_ref, mw_ref, mc_ref, rmix_ref,
                       rowavg_ref, csel_ref, w1_ref, b1_ref, w2_ref, b2_ref,
                       rowexp_ref, ctile_ref, mp_ref, o_ref):
    # One grid step == one batch: rows=(t), cols=(h,w,c).  LN + h/w/c mixing + reweight MLP
    # + softmax + weighted mix + proj + residual, all inside one kernel.  The residual base
    # is the ORIGINAL x (xres, read only at the end), while the LN input is xs (matches the
    # PyTorch forward exactly).
    xs = xs_ref[...]
    xhat = _ln_normalize(xs, acol_ref[...], aexp_ref[...])
    rmix = rmix_ref[...]                                           # rows: rh, rw, rc, bproj

    hv = _mm(xhat, mh_ref[...]) + rmix[0:1, :]
    wv = _mm(xhat, mw_ref[...]) + rmix[1:2, :]
    cv = _mix_blockdiag(xhat, mc_ref, rmix[2:3, :])                # kron(I, Wc) factor

    # reweighting: per-batch mean over (T,H,W) per channel -> small MLP -> softmax over the
    # 3 branches, computed and broadcast entirely in VMEM.
    s = hv + wv + cv
    a_in = _mm(_mm(rowavg_ref[...], s), csel_ref[...])             # (8, C), identical rows
    z = _gelu(_mm(a_in, w1_ref[...]) + b1_ref[...])                # (8, C//4)
    l = _mm(z, w2_ref[...]) + b2_ref[...]                          # (8, 3C) packed logits
    c = csel_ref.shape[1]
    l0, l1, l2 = l[:, 0:c], l[:, c:2 * c], l[:, 2 * c:3 * c]
    m = jnp.maximum(l0, jnp.maximum(l1, l2))
    e0 = jnp.exp(l0 - m)
    e1 = jnp.exp(l1 - m)
    e2 = jnp.exp(l2 - m)
    inv = pl.reciprocal(e0 + e1 + e2, approx=True)
    # three independent (depth-2) broadcast chains; the MXU pipeline overlaps them.
    a0 = _mm(_mm(rowexp_ref[...], e0 * inv), ctile_ref[...])       # (T, H*W*C)
    a1 = _mm(_mm(rowexp_ref[...], e1 * inv), ctile_ref[...])
    a2 = _mm(_mm(rowexp_ref[...], e2 * inv), ctile_ref[...])

    mix = hv * a0 + wv * a1 + cv * a2
    o_ref[...] = xres_ref[...] + _mix_blockdiag(mix, mp_ref, rmix[3:4, :])


# ------------------------------ hardware-aware knobs -------------------------------------

def _num_cores():
    """Best-effort TensorCores-per-device count (v7x megacore = 2); defaults to 1."""
    try:
        info = pltpu.get_tpu_info()
        for name in ("num_cores", "core_count", "num_tensorcores",
                     "cores_per_chip", "tensorcores_per_chip"):
            v = getattr(info, name, None)
            if isinstance(v, int) and 1 <= v <= 8:
                return v
    except Exception:
        pass
    try:
        v = getattr(jax.devices()[0], "num_cores", None)
        if isinstance(v, int) and 1 <= v <= 8:
            return v
    except Exception:
        pass
    return 1


def _vmem_limit():
    """Generation-aware VMEM cap (v5e/v6e: 128 MiB physical, v7x: 64 MiB)."""
    try:
        cap = int(getattr(pltpu.get_tpu_info(), "vmem_capacity_bytes", 0))
        if cap > 0:
            return max(16 * 1024 * 1024, min(cap // 2, 64 * 1024 * 1024))
    except Exception:
        pass
    return 32 * 1024 * 1024


def _pick_row_block(rows):
    """Row block for spe/mlp: split across TensorCores only when >1 present; cap block size."""
    rb = rows
    cores = _num_cores()
    if cores > 1 and rows % cores == 0 and (rows // cores) % 8 == 0:
        rb = rows // cores
    while rb > 512 and rb % 2 == 0:
        rb //= 2
    if rows % rb != 0:
        rb = rows
    return rb


# ------------------------------ pallas_call wrapper -------------------------------------

def _pallas_apply(kernel, slabs, weights, *, row_block=None):
    """Run `kernel` over equally shaped (rows, cols) activation slabs + constant weights.

    The first slab (the residual carrier) is aliased to the output.  Weight blocks are
    grid-invariant (same block index every step), so Pallas does not re-DMA them.
    """
    rows, cols = slabs[0].shape
    rb = row_block if row_block is not None else _pick_row_block(rows)
    if rows % rb != 0:
        rb = rows
    grid = (rows // rb,)
    slab_spec = pl.BlockSpec((rb, cols), lambda i: (i, 0))
    weight_specs = [pl.BlockSpec(w.shape, lambda i: (0, 0)) for w in weights]
    # TODO(synk): single-buffer the grid-invariant weight blocks (pipeline_mode=pl.Buffered(1))
    # once that knob is verified; VMEM is not tight at these sizes so it is left default.
    return pl.pallas_call(
        kernel,
        out_shape=jax.ShapeDtypeStruct((rows, cols), slabs[0].dtype),
        grid=grid,
        in_specs=[slab_spec] * len(slabs) + weight_specs,
        out_specs=slab_spec,
        input_output_aliases={0: 0},
        compiler_params=pltpu.CompilerParams(
            dimension_semantics=("parallel",),
            vmem_limit_bytes=_vmem_limit(),
        ),
    )(*slabs, *weights)


# ------------------------------ weight packing (one-time) -------------------------------

def pack_params(p, *, B, T, H, W, dim, segment_dim, tmp, skip_lam=1.0):
    """Fold LayerNorm affines, permutations, block-diagonal expansions and 1/skip_lam into
    small structured matrices consumed by the fused kernels.  Runs once, outside jit.
    Big folded matrices are stored bf16 (weight-DMA bound kernels); small/structured ones
    stay f32.  (B is accepted for interface stability; the spa reducers are per-batch now.)"""
    f32 = jnp.float32
    G = segment_dim
    S = dim // segment_dim
    C = dim
    HW = H * W
    eye = lambda n: jnp.eye(n, dtype=f32)
    ones = lambda *sh: jnp.ones(sh, f32)

    def tile_vec(v, n):
        return jnp.tile(jnp.asarray(v, f32), n)

    def kron_eye(w, n):
        return jnp.kron(eye(n), jnp.asarray(w, f32))

    def pad2d(a, rows, cols):
        a = jnp.asarray(a, f32)
        if a.shape == (rows, cols):
            return a
        return jnp.zeros((rows, cols), f32).at[: a.shape[0], : a.shape[1]].set(a)

    def row(v):
        return jnp.asarray(v, f32).reshape(1, -1)

    def big(a):
        a = jnp.asarray(a, f32)
        return a.astype(jnp.bfloat16) if a.size >= 32768 else a

    out = {}

    # ---------------- Spe_FC branch: rows=(b,h,w), cols=(t, c) ----------------
    Wt4 = jnp.asarray(p["spe_mlp_t_w"], f32).reshape(T, S, T, S)          # (t,s,t',s')
    M_spe = jnp.einsum("tsuv,gh->tgsuhv", Wt4, eye(G)).reshape(T * C, T * C)
    M_proj1 = kron_eye(p["spe_proj_w"], T)
    g1 = tile_vec(p["s_norm1_g"], T)
    b1 = tile_vec(p["s_norm1_b"], T)
    out["spe_M"] = big((g1[:, None] * M_spe) @ M_proj1)
    out["spe_r"] = row((b1 @ M_spe) @ M_proj1 + tile_vec(p["spe_proj_b"], T))
    out["spe_acol"] = pad2d(jnp.kron(eye(T), ones(C, 1) / C), T * C, max(T, 8))
    out["spe_aexp"] = pad2d(jnp.kron(eye(T), ones(1, C)), max(T, 8), T * C)

    # ---------------- Spa_FC branch: rows=(b,t), cols=(h, w, c) ----------------
    def spa_mix_matrix(wm, transpose_hw):
        # Matrix of the (tmp, S)-joint mixing on the (h,w,g,s) column space, built with the
        # exact chunk/pos index arithmetic of the PyTorch view/permute chain.
        hh, ww = np.meshgrid(np.arange(H), np.arange(W), indexing="ij")
        idx = (ww * H + hh) if transpose_hw else (hh * W + ww)
        idx = idx.reshape(HW)
        chunk, pos = idx // tmp, idx % tmp
        same = (chunk[:, None] == chunk[None, :]).astype(np.float32)      # (HW, HW)
        posoh = np.eye(tmp, dtype=np.float32)[pos]                        # (HW, tmp)
        w4 = jnp.asarray(wm, f32).reshape(tmp, S, tmp, S)
        k = jnp.einsum("pq,pu,qv,usvt->psqt", same, posoh, posoh, w4)     # (HW,S,HW,S)
        return jnp.einsum("psqt,gh->pgsqht", k, eye(G)).reshape(HW * C, HW * C)

    gamma1 = jnp.asarray(p["norm1_g"], f32)
    beta1 = jnp.asarray(p["norm1_b"], f32)
    g2 = jnp.tile(gamma1, HW)
    b2 = jnp.tile(beta1, HW)
    Mh_raw = spa_mix_matrix(p["spa_mlp_h_w"], True)    # h-branch starts with transpose(3,2)
    Mw_raw = spa_mix_matrix(p["spa_mlp_w_w"], False)
    out["spa_Mh"] = big(g2[:, None] * Mh_raw)
    out["spa_Mw"] = big(g2[:, None] * Mw_raw)
    rh = row(b2 @ Mh_raw)
    rw = row(b2 @ Mw_raw)
    rc = row(jnp.tile(beta1 @ jnp.asarray(p["spa_mlp_c_w"], f32), HW))
    bproj = row(tile_vec(p["spa_proj_b"], HW) / skip_lam)
    out["spa_rmix"] = jnp.concatenate([rh, rw, rc, bproj], axis=0)        # (4, HW*C)

    # c-mix / proj: keep only the kron factor spanning one 128-lane group when the channel
    # blocks tile 128 lanes exactly; otherwise fall back to the dense folded matrix.
    if C <= 128 and 128 % C == 0 and HW % (128 // C) == 0:
        cb = 128 // C
        out["spa_Mc"] = big(jnp.kron(eye(cb),
                                     gamma1[:, None] * jnp.asarray(p["spa_mlp_c_w"], f32)))
        out["spa_Mproj"] = big(jnp.kron(eye(cb), jnp.asarray(p["spa_proj_w"], f32)) / skip_lam)
    else:
        out["spa_Mc"] = big(g2[:, None] * kron_eye(p["spa_mlp_c_w"], HW))
        out["spa_Mproj"] = big(kron_eye(p["spa_proj_w"], HW) / skip_lam)
    # TODO(synk): Mh/Mw stay dense (their folded h/w permutation couples non-adjacent column
    # blocks); factor them too if HW*C grows, since their size is quadratic in HW*C.

    out["spa_acol"] = pad2d(jnp.kron(eye(HW), ones(C, 1) / C), HW * C, max(HW, 8))
    out["spa_aexp"] = pad2d(jnp.kron(eye(HW), ones(1, C)), max(HW, 8), HW * C)
    # per-batch-block reweighting reducers (grid is over batches; all 8 rows identical)
    out["spa_rowavg"] = ones(8, T) / T
    out["spa_rowexp"] = ones(T, 8) / 8.0
    out["spa_csel"] = jnp.kron(ones(HW, 1) / HW, eye(C))                  # (HW*C, C)
    out["spa_ctile"] = jnp.kron(ones(1, HW), eye(C))                      # (C, HW*C)
    out["spa_rw1_w"] = jnp.asarray(p["spa_rw_fc1_w"], f32)
    out["spa_rw1_b"] = row(p["spa_rw_fc1_b"])
    w2 = jnp.asarray(p["spa_rw_fc2_w"], f32).reshape(-1, C, 3)            # (hidden, C, 3)
    bb = jnp.asarray(p["spa_rw_fc2_b"], f32).reshape(C, 3)
    out["spa_rw2_w"] = jnp.concatenate([w2[:, :, k] for k in range(3)], axis=1)  # (C//4, 3C)
    out["spa_rw2_b"] = jnp.concatenate([bb[:, k] for k in range(3)], axis=0).reshape(1, -1)

    # ---------------- Mlp branch: rows=(b,t,h), cols=(w, c) ----------------
    g3 = tile_vec(p["norm2_g"], W)
    b3 = tile_vec(p["norm2_b"], W)
    BD1 = kron_eye(p["mlp_fc1_w"], W)                                     # (W*C, W*hidden)
    BD2 = kron_eye(p["mlp_fc2_w"], W)                                     # (W*hidden, W*C)
    out["mlp_M1"] = big(g3[:, None] * BD1)
    out["mlp_r1"] = row(b3 @ BD1 + tile_vec(p["mlp_fc1_b"], W))
    out["mlp_M2"] = big(BD2 / skip_lam)
    out["mlp_r2"] = row(tile_vec(p["mlp_fc2_b"], W) / skip_lam)
    out["mlp_acol"] = pad2d(jnp.kron(eye(W), ones(C, 1) / C), W * C, max(W, 8))
    out["mlp_aexp"] = pad2d(jnp.kron(eye(W), ones(1, C)), max(W, 8), W * C)

    return out


# ------------------------------------ forward -------------------------------------------

def permutator_block(x, q):
    """Fused Pallas forward of PermutatorBlock.  x: (B, T, H, W, C) float32."""
    B, T, H, W, C = x.shape

    # branch 1:  xs = x + Spe_FC(s_norm1(x))        layout (B*H*W, T*C)
    x_l1 = jnp.transpose(x, (0, 2, 3, 1, 4)).reshape(B * H * W, T * C)
    xs_l1 = _pallas_apply(
        _spe_branch_kernel, (x_l1,),
        (q["spe_acol"], q["spe_aexp"], q["spe_M"], q["spe_r"]))

    # branch 2:  x = x + Spa_FC(norm1(xs)) / skip_lam      layout (B*T, H*W*C)
    # grid over batches: the per-(batch,channel) reweighting mean stays inside one block and
    # both v7x TensorCores get work.
    xs_l2 = (xs_l1.reshape(B, H, W, T, C)
             .transpose(0, 3, 1, 2, 4)
             .reshape(B * T, H * W * C))
    x_l2 = x.reshape(B * T, H * W * C)
    assert T % 8 == 0 or B == 1, "spa batch-tiling needs T % 8 == 0"
    y_l2 = _pallas_apply(
        _spa_branch_kernel, (x_l2, xs_l2),
        (q["spa_acol"], q["spa_aexp"],
         q["spa_Mh"], q["spa_Mw"], q["spa_Mc"], q["spa_rmix"],
         q["spa_rowavg"], q["spa_csel"], q["spa_rw1_w"], q["spa_rw1_b"],
         q["spa_rw2_w"], q["spa_rw2_b"],
         q["spa_rowexp"], q["spa_ctile"], q["spa_Mproj"]),
        row_block=T)

    # branch 3:  x = x + Mlp(norm2(x)) / skip_lam          layout (B*T*H, W*C)
    y_l3 = y_l2.reshape(B * T * H, W * C)      # free bitcast from the spa layout
    out_l3 = _pallas_apply(
        _mlp_branch_kernel, (y_l3,),
        (q["mlp_acol"], q["mlp_aexp"], q["mlp_M1"], q["mlp_r1"], q["mlp_M2"], q["mlp_r2"]))
    # TODO(synk): fuse the spa+mlp branches into one call (the reshape between them is a
    # bitcast) to drop a launch at tiny shapes; kept separate so the mlp weights stay in
    # their small block-diagonal (W*C) layout.

    return out_l3.reshape(B, T, H, W, C)


# --------------------------- pure-JAX reference (for self-check) ------------------------

def _ref_ln(x, g, b):
    mu = jnp.mean(x, axis=-1, keepdims=True)
    xc = x - mu
    var = jnp.mean(xc * xc, axis=-1, keepdims=True)
    return xc * jax.lax.rsqrt(var + _EPS) * g + b


def _ref_linear(x, w, b=None):
    y = jnp.dot(x, w, precision=jax.lax.Precision.HIGHEST)
    return y if b is None else y + b


def _ref_mlp(x, p, prefix):
    y = _ref_linear(x, p[f"{prefix}_fc1_w"], p[f"{prefix}_fc1_b"])
    y = jax.nn.gelu(y, approximate=False)
    return _ref_linear(y, p[f"{prefix}_fc2_w"], p[f"{prefix}_fc2_b"])


def _ref_spe(x, p, segment_dim):
    B, T, H, W, C = x.shape
    S = C // segment_dim
    t = x.reshape(B, T, H, W, segment_dim, S)
    t = jnp.transpose(t, (0, 4, 2, 3, 1, 5)).reshape(B, segment_dim, H, W, T * S)
    t = _ref_linear(t, p["spe_mlp_t_w"])
    t = t.reshape(B, segment_dim, H, W, T, S)
    t = jnp.transpose(t, (0, 4, 2, 3, 1, 5)).reshape(B, T, H, W, C)
    return _ref_linear(t, p["spe_proj_w"], p["spe_proj_b"])


def _ref_spa(x, p, segment_dim, tmp):
    B, T, H, W, C = x.shape
    S = C // segment_dim
    HWt = H * W // tmp
    h = jnp.swapaxes(x, 3, 2)
    h = h.reshape(B, T, HWt, tmp, segment_dim, S)
    h = jnp.transpose(h, (0, 1, 2, 4, 3, 5)).reshape(B, T, HWt, segment_dim, tmp * S)
    h = _ref_linear(h, p["spa_mlp_h_w"])
    h = h.reshape(B, T, HWt, segment_dim, tmp, S)
    h = jnp.transpose(h, (0, 1, 2, 4, 3, 5)).reshape(B, T, W, H, C)
    h = jnp.swapaxes(h, 3, 2)
    w = x.reshape(B, T, HWt, tmp, segment_dim, S)
    w = jnp.transpose(w, (0, 1, 2, 4, 3, 5)).reshape(B, T, HWt, segment_dim, tmp * S)
    w = _ref_linear(w, p["spa_mlp_w_w"])
    w = w.reshape(B, T, HWt, segment_dim, tmp, S)
    w = jnp.transpose(w, (0, 1, 2, 4, 3, 5)).reshape(B, T, H, W, C)
    c = _ref_linear(x, p["spa_mlp_c_w"])
    a = jnp.transpose(h + w + c, (0, 4, 1, 2, 3)).reshape(B, C, -1).mean(axis=2)
    a = _ref_mlp(a, p, "spa_rw")
    a = jnp.transpose(a.reshape(B, C, 3), (2, 0, 1))
    a = jax.nn.softmax(a, axis=0)[:, :, None, None, None, :]
    xm = h * a[0] + w * a[1] + c * a[2]
    return _ref_linear(xm, p["spa_proj_w"], p["spa_proj_b"])


def reference_forward(x, p, *, segment_dim, tmp, skip_lam=1.0):
    xs = x + _ref_spe(_ref_ln(x, p["s_norm1_g"], p["s_norm1_b"]), p, segment_dim)
    x = x + _ref_spa(_ref_ln(xs, p["norm1_g"], p["norm1_b"]), p, segment_dim, tmp) / skip_lam
    x = x + _ref_mlp(_ref_ln(x, p["norm2_g"], p["norm2_b"]), p, "mlp") / skip_lam
    return x


# ------------------------------------ params --------------------------------------------

def init_params(key, dim, segment_dim, tmp, band, mlp_ratio=4.0):
    S = dim // segment_dim
    dim2_spa = S * tmp       # Spa_FC: C*tmp   (C arg == dim // segment_dim)
    dim2_spe = band * S      # Spe_FC: band*C  (== T*S)
    hidden = int(dim * mlp_ratio)
    ks = jax.random.split(key, 22)

    def w(k, shape, scale=0.1):
        return scale * jax.random.normal(k, shape, jnp.float32)

    return {
        # random LN affines so the gamma/beta folding is actually exercised
        "s_norm1_g": 1.0 + w(ks[0], (dim,), 0.2), "s_norm1_b": w(ks[1], (dim,), 0.2),
        "norm1_g": 1.0 + w(ks[2], (dim,), 0.2), "norm1_b": w(ks[3], (dim,), 0.2),
        "norm2_g": 1.0 + w(ks[4], (dim,), 0.2), "norm2_b": w(ks[5], (dim,), 0.2),
        # Spe_FC
        "spe_mlp_t_w": w(ks[6], (dim2_spe, dim2_spe)),
        "spe_proj_w": w(ks[7], (dim, dim)), "spe_proj_b": w(ks[8], (dim,)),
        # Spa_FC
        "spa_mlp_h_w": w(ks[9], (dim2_spa, dim2_spa)),
        "spa_mlp_w_w": w(ks[10], (dim2_spa, dim2_spa)),
        "spa_mlp_c_w": w(ks[11], (dim, dim)),
        "spa_rw_fc1_w": w(ks[12], (dim, dim // 4), 0.6), "spa_rw_fc1_b": w(ks[13], (dim // 4,), 0.6),
        "spa_rw_fc2_w": w(ks[14], (dim // 4, dim * 3), 0.6), "spa_rw_fc2_b": w(ks[15], (dim * 3,), 0.6),
        "spa_proj_w": w(ks[16], (dim, dim)), "spa_proj_b": w(ks[17], (dim,)),
        # Mlp
        "mlp_fc1_w": w(ks[18], (dim, hidden)), "mlp_fc1_b": w(ks[19], (hidden,)),
        "mlp_fc2_w": w(ks[20], (hidden, dim)), "mlp_fc2_b": w(ks[21], (dim,)),
    }


# -------------------------------------- main ---------------------------------------------

if __name__ == "__main__":
    B, T, H, W = 2, 8, 4, 4
    dim, segment_dim, tmp, band = 32, 8, 4, 8   # band == T, tmp divides H*W

    key = jax.random.PRNGKey(0)
    kx, kp = jax.random.split(key)
    x = jax.random.normal(kx, (B, T, H, W, dim), jnp.float32)
    params = init_params(kp, dim, segment_dim, tmp, band, mlp_ratio=4.0)
    packed = pack_params(params, B=B, T=T, H=H, W=W, dim=dim,
                         segment_dim=segment_dim, tmp=tmp, skip_lam=1.0)

    fwd = jax.jit(permutator_block)
    out = jax.block_until_ready(fwd(x, packed))
    assert out.shape == x.shape and out.dtype == jnp.float32

    ref = jax.block_until_ready(
        reference_forward(x, params, segment_dim=segment_dim, tmp=tmp, skip_lam=1.0))
    err = float(jnp.max(jnp.abs(out - ref)))
    # bf16 folded weights (f32 activations / f32 accumulation): quantisation error is ~1e-3
    # at these shapes; a structural bug would be O(0.3) or larger.
    assert err < 3e-2, f"kernel/reference mismatch: max abs err = {err}"

    print("KERNEL_OK")
</pallas_src>

<mosaic_0001>
module attributes {stable_mosaic.version = 11 : i64} {
  func.func @_spe_branch_kernel(%arg0: i32, %arg1: memref<32x256xf32, #tpu.memory_space<vmem>>, %arg2: memref<256x8xf32, #tpu.memory_space<vmem>>, %arg3: memref<8x256xf32, #tpu.memory_space<vmem>>, %arg4: memref<256x256xbf16, #tpu.memory_space<vmem>>, %arg5: memref<1x256xf32, #tpu.memory_space<vmem>>, %arg6: memref<32x256xf32, #tpu.memory_space<vmem>>) attributes {dimension_semantics = [#tpu.dimension_semantics<parallel>], iteration_bounds = array<i64: 1>, scalar_prefetch = 0 : i64, scratch_operands = 0 : i64, tpu.core_type = #tpu.core_type<tc>, window_params = [{transform_indices = @transform_0, window_bounds = array<i64: 32, 256>}, {pipeline_mode = #tpu.pipeline_mode<synchronous>, transform_indices = @transform_1, window_bounds = array<i64: 256, 8>}, {pipeline_mode = #tpu.pipeline_mode<synchronous>, transform_indices = @transform_2, window_bounds = array<i64: 8, 256>}, {pipeline_mode = #tpu.pipeline_mode<synchronous>, transform_indices = @transform_3, window_bounds = array<i64: 256, 256>}, {pipeline_mode = #tpu.pipeline_mode<synchronous>, transform_indices = @transform_4, window_bounds = array<i64: 1, 256>}, {transform_indices = @transform_5, window_bounds = array<i64: 32, 256>}]} {
    %c0 = arith.constant 0 : index
    %c0_0 = arith.constant 0 : index
    %0 = vector.load %arg1[%c0, %c0_0] : memref<32x256xf32, #tpu.memory_space<vmem>>, vector<32x256xf32>
    %c0_1 = arith.constant 0 : index
    %c0_2 = arith.constant 0 : index
    %1 = vector.load %arg2[%c0_1, %c0_2] : memref<256x8xf32, #tpu.memory_space<vmem>>, vector<256x8xf32>
    %c0_3 = arith.constant 0 : index
    %c0_4 = arith.constant 0 : index
    %2 = vector.load %arg3[%c0_3, %c0_4] : memref<8x256xf32, #tpu.memory_space<vmem>>, vector<8x256xf32>
    %cst = arith.constant dense<0.000000e+00> : vector<32x8xf32>
    %3 = tpu.matmul %0, %1, %cst {dimension_numbers = #tpu.dot_dimension_numbers<[1], [0], [0], [1], [0, 0, 1, 1], [], []>} : vector<32x256xf32>, vector<256x8xf32>, vector<32x8xf32> -> vector<32x8xf32>
    %cst_5 = arith.constant dense<0.000000e+00> : vector<32x256xf32>
    %4 = tpu.matmul %3, %2, %cst_5 {dimension_numbers = #tpu.dot_dimension_numbers<[1], [0], [0], [1], [0, 0, 1, 1], [], []>} : vector<32x8xf32>, vector<8x256xf32>, vector<32x256xf32> -> vector<32x256xf32>
    %5 = arith.mulf %0, %0 : vector<32x256xf32>
    %cst_6 = arith.constant dense<0.000000e+00> : vector<32x8xf32>
    %6 = tpu.matmul %5, %1, %cst_6 {dimension_numbers = #tpu.dot_dimension_numbers<[1], [0], [0], [1], [0, 0, 1, 1], [], []>} : vector<32x256xf32>, vector<256x8xf32>, vector<32x8xf32> -> vector<32x8xf32>
    %cst_7 = arith.constant dense<0.000000e+00> : vector<32x256xf32>
    %7 = tpu.matmul %6, %2, %cst_7 {dimension_numbers = #tpu.dot_dimension_numbers<[1], [0], [0], [1], [0, 0, 1, 1], [], []>} : vector<32x8xf32>, vector<8x256xf32>, vector<32x256xf32> -> vector<32x256xf32>
    %8 = arith.mulf %4, %4 : vector<32x256xf32>
    %9 = arith.subf %7, %8 : vector<32x256xf32>
    %cst_8 = arith.constant 0.000000e+00 : f32
    %10 = vector.broadcast %cst_8 : f32 to vector<32x256xf32>
    %11 = arith.maximumf %9, %10 : vector<32x256xf32>
    %12 = arith.subf %0, %4 : vector<32x256xf32>
    %cst_9 = arith.constant 9.99999974E-6 : f32
    %13 = vector.broadcast %cst_9 : f32 to vector<32x256xf32>
    %14 = arith.addf %11, %13 : vector<32x256xf32>
    %15 = math.rsqrt %14 : vector<32x256xf32>
    %16 = arith.mulf %12, %15 : vector<32x256xf32>
    %c0_10 = arith.constant 0 : index
    %c0_11 = arith.constant 0 : index
    %17 = vector.load %arg4[%c0_10, %c0_11] : memref<256x256xbf16, #tpu.memory_space<vmem>>, vector<256x256xbf16>
    %18 = arith.extf %17 : vector<256x256xbf16> to vector<256x256xf32>
    %cst_12 = arith.constant dense<0.000000e+00> : vector<32x256xf32>
    %19 = tpu.matmul %16, %18, %cst_12 {dimension_numbers = #tpu.dot_dimension_numbers<[1], [0], [0], [1], [0, 0, 1, 1], [], []>} : vector<32x256xf32>, vector<256x256xf32>, vector<32x256xf32> -> vector<32x256xf32>
    %20 = arith.addf %0, %19 : vector<32x256xf32>
    %c0_13 = arith.constant 0 : index
    %c0_14 = arith.constant 0 : index
    %21 = vector.load %arg5[%c0_13, %c0_14] : memref<1x256xf32, #tpu.memory_space<vmem>>, vector<1x256xf32>
    %22 = vector.broadcast %21 : vector<1x256xf32> to vector<32x256xf32>
    %23 = arith.addf %20, %22 : vector<32x256xf32>
    %c0_15 = arith.constant 0 : index
    %c0_16 = arith.constant 0 : index
    %24 = vector.load %arg6[%c0_15, %c0_16] : memref<32x256xf32, #tpu.memory_space<vmem>>, vector<32x256xf32>
    tpu.vector_store %arg6[%c0_15, %c0_16], %23 {strides = array<i32>} : memref<32x256xf32, #tpu.memory_space<vmem>>, vector<32x256xf32>,
    return
  }
  func.func @transform_0(%arg0: i32) -> (i32, i32) {
    %c0_i32 = arith.constant 0 : i32
    %c0_i32_0 = arith.constant 0 : i32
    return %arg0, %c0_i32 : i32, i32
  }
  func.func @transform_1(%arg0: i32) -> (i32, i32) {
    %c0_i32 = arith.constant 0 : i32
    %c0_i32_0 = arith.constant 0 : i32
    %c0_i32_1 = arith.constant 0 : i32
    return %c0_i32, %c0_i32_0 : i32, i32
  }
  func.func @transform_2(%arg0: i32) -> (i32, i32) {
    %c0_i32 = arith.constant 0 : i32
    %c0_i32_0 = arith.constant 0 : i32
    %c0_i32_1 = arith.constant 0 : i32
    return %c0_i32, %c0_i32_0 : i32, i32
  }
  func.func @transform_3(%arg0: i32) -> (i32, i32) {
    %c0_i32 = arith.constant 0 : i32
    %c0_i32_0 = arith.constant 0 : i32
    %c0_i32_1 = arith.constant 0 : i32
    return %c0_i32, %c0_i32_0 : i32, i32
  }
  func.func @transform_4(%arg0: i32) -> (i32, i32) {
    %c0_i32 = arith.constant 0 : i32
    %c0_i32_0 = arith.constant 0 : i32
    %c0_i32_1 = arith.constant 0 : i32
    return %c0_i32, %c0_i32_0 : i32, i32
  }
  func.func @transform_5(%arg0: i32) -> (i32, i32) {
    %c0_i32 = arith.constant 0 : i32
    %c0_i32_0 = arith.constant 0 : i32
    return %arg0, %c0_i32 : i32, i32
  }
}

module attributes {stable_mosaic.version = 11 : i64} {
  func.func @_spa_branch_kernel(%arg0: i32, %arg1: memref<8x512xf32, #tpu.memory_space<vmem>>, %arg2: memref<8x512xf32, #tpu.memory_space<vmem>>, %arg3: memref<512x16xf32, #tpu.memory_space<vmem>>, %arg4: memref<16x512xf32, #tpu.memory_space<vmem>>, %arg5: memref<512x512xbf16, #tpu.memory_space<vmem>>, %arg6: memref<512x512xbf16, #tpu.memory_space<vmem>>, %arg7: memref<128x128xf32, #tpu.memory_space<vmem>>, %arg8: memref<4x512xf32, #tpu.memory_space<vmem>>, %arg9: memref<8x8xf32, #tpu.memory_space<vmem>>, %arg10: memref<512x32xf32, #tpu.memory_space<vmem>>, %arg11: memref<32x8xf32, #tpu.memory_space<vmem>>, %arg12: memref<1x8xf32, #tpu.memory_space<vmem>>, %arg13: memref<8x96xf32, #tpu.memory_space<vmem>>, %arg14: memref<1x96xf32, #tpu.memory_space<vmem>>, %arg15: memref<8x8xf32, #tpu.memory_space<vmem>>, %arg16: memref<32x512xf32, #tpu.memory_space<vmem>>, %arg17: memref<128x128xf32, #tpu.memory_space<vmem>>, %arg18: memref<8x512xf32, #tpu.memory_space<vmem>>) attributes {dimension_semantics = [#tpu.dimension_semantics<parallel>], iteration_bounds = array<i64: 2>, scalar_prefetch = 0 : i64, scratch_operands = 0 : i64, tpu.core_type = #tpu.core_type<tc>, window_params = [{transform_indices = @transform_0, window_bounds = array<i64: 8, 512>}, {transform_indices = @transform_1, window_bounds = array<i64: 8, 512>}, {pipeline_mode = #tpu.pipeline_mode<synchronous>, transform_indices = @transform_2, window_bounds = array<i64: 512, 16>}, {pipeline_mode = #tpu.pipeline_mode<synchronous>, transform_indices = @transform_3, window_bounds = array<i64: 16, 512>}, {pipeline_mode = #tpu.pipeline_mode<synchronous>, transform_indices = @transform_4, window_bounds = array<i64: 512, 512>}, {pipeline_mode = #tpu.pipeline_mode<synchronous>, transform_indices = @transform_5, window_bounds = array<i64: 512, 512>}, {pipeline_mode = #tpu.pipeline_mode<synchronous>, transform_indices = @transform_6, window_bounds = array<i64: 128, 128>}, {pipeline_mode = #tpu.pipeline_mode<synchronous>, transform_indices = @transform_7, window_bounds = array<i64: 4, 512>}, {pipeline_mode = #tpu.pipeline_mode<synchronous>, transform_indices = @transform_8, window_bounds = array<i64: 8, 8>}, {pipeline_mode = #tpu.pipeline_mode<synchronous>, transform_indices = @transform_9, window_bounds = array<i64: 512, 32>}, {pipeline_mode = #tpu.pipeline_mode<synchronous>, transform_indices = @transform_10, window_bounds = array<i64: 32, 8>}, {pipeline_mode = #tpu.pipeline_mode<synchronous>, transform_indices = @transform_11, window_bounds = array<i64: 1, 8>}, {pipeline_mode = #tpu.pipeline_mode<synchronous>, transform_indices = @transform_12, window_bounds = array<i64: 8, 96>}, {pipeline_mode = #tpu.pipeline_mode<synchronous>, transform_indices = @transform_13, window_bounds = array<i64: 1, 96>}, {pipeline_mode = #tpu.pipeline_mode<synchronous>, transform_indices = @transform_14, window_bounds = array<i64: 8, 8>}, {pipeline_mode = #tpu.pipeline_mode<synchronous>, transform_indices = @transform_15, window_bounds = array<i64: 32, 512>}, {pipeline_mode = #tpu.pipeline_mode<synchronous>, transform_indices = @transform_16, window_bounds = array<i64: 128, 128>}, {transform_indices = @transform_17, window_bounds = array<i64: 8, 512>}]} {
    %c0 = arith.constant 0 : index
    %c0_0 = arith.constant 0 : index
    %0 = vector.load %arg2[%c0, %c0_0] : memref<8x512xf32, #tpu.memory_space<vmem>>, vector<8x512xf32>
    %c0_1 = arith.constant 0 : index
    %c0_2 = arith.constant 0 : index
    %1 = vector.load %arg3[%c0_1, %c0_2] : memref<512x16xf32, #tpu.memory_space<vmem>>, vector<512x16xf32>
    %c0_3 = arith.constant 0 : index
    %c0_4 = arith.constant 0 : index
    %2 = vector.load %arg4[%c0_3, %c0_4] : memref<16x512xf32, #tpu.memory_space<vmem>>, vector<16x512xf32>
    %cst = arith.constant dense<0.000000e+00> : vector<8x16xf32>
    %3 = tpu.matmul %0, %1, %cst {dimension_numbers = #tpu.dot_dimension_numbers<[1], [0], [0], [1], [0, 0, 1, 1], [], []>} : vector<8x512xf32>, vector<512x16xf32>, vector<8x16xf32> -> vector<8x16xf32>
    %cst_5 = arith.constant dense<0.000000e+00> : vector<8x512xf32>
    %4 = tpu.matmul %3, %2, %cst_5 {dimension_numbers = #tpu.dot_dimension_numbers<[1], [0], [0], [1], [0, 0, 1, 1], [], []>} : vector<8x16xf32>, vector<16x512xf32>, vector<8x512xf32> -> vector<8x512xf32>
    %5 = arith.mulf %0, %0 : vector<8x512xf32>
    %cst_6 = arith.constant dense<0.000000e+00> : vector<8x16xf32>
    %6 = tpu.matmul %5, %1, %cst_6 {dimension_numbers = #tpu.dot_dimension_numbers<[1], [0], [0], [1], [0, 0, 1, 1], [], []>} : vector<8x512xf32>, vector<512x16xf32>, vector<8x16xf32> -> vector<8x16xf32>
    %cst_7 = arith.constant dense<0.000000e+00> : vector<8x512xf32>
    %7 = tpu.matmul %6, %2, %cst_7 {dimension_numbers = #tpu.dot_dimension_numbers<[1], [0], [0], [1], [0, 0, 1, 1], [], []>} : vector<8x16xf32>, vector<16x512xf32>, vector<8x512xf32> -> vector<8x512xf32>
    %8 = arith.mulf %4, %4 : vector<8x512xf32>
    %9 = arith.subf %7, %8 : vector<8x512xf32>
    %cst_8 = arith.constant 0.000000e+00 : f32
    %10 = vector.broadcast %cst_8 : f32 to vector<8x512xf32>
    %11 = arith.maximumf %9, %10 : vector<8x512xf32>
    %12 = arith.subf %0, %4 : vector<8x512xf32>
    %cst_9 = arith.constant 9.99999974E-6 : f32
    %13 = vector.broadcast %cst_9 : f32 to vector<8x512xf32>
    %14 = arith.addf %11, %13 : vector<8x512xf32>
    %15 = math.rsqrt %14 : vector<8x512xf32>
    %16 = arith.mulf %12, %15 : vector<8x512xf32>
    %c0_10 = arith.constant 0 : index
    %c0_11 = arith.constant 0 : index
    %17 = vector.load %arg8[%c0_10, %c0_11] : memref<4x512xf32, #tpu.memory_space<vmem>>, vector<4x512xf32>
    %c0_12 = arith.constant 0 : index
    %c0_13 = arith.constant 0 : index
    %18 = vector.load %arg5[%c0_12, %c0_13] : memref<512x512xbf16, #tpu.memory_space<vmem>>, vector<512x512xbf16>
    %19 = arith.extf %18 : vector<512x512xbf16> to vector<512x512xf32>
    %cst_14 = arith.constant dense<0.000000e+00> : vector<8x512xf32>
    %20 = tpu.matmul %16, %19, %cst_14 {dimension_numbers = #tpu.dot_dimension_numbers<[1], [0], [0], [1], [0, 0, 1, 1], [], []>} : vector<8x512xf32>, vector<512x512xf32>, vector<8x512xf32> -> vector<8x512xf32>
    %21 = vector.extract_strided_slice %17 {offsets = [0, 0], sizes = [1, 512], strides = [1, 1]} : vector<4x512xf32> to vector<1x512xf32>
    %22 = vector.broadcast %21 : vector<1x512xf32> to vector<8x512xf32>
    %23 = arith.addf %20, %22 : vector<8x512xf32>
    %c0_15 = arith.constant 0 : index
    %c0_16 = arith.constant 0 : index
    %24 = vector.load %arg6[%c0_15, %c0_16] : memref<512x512xbf16, #tpu.memory_space<vmem>>, vector<512x512xbf16>
    %25 = arith.extf %24 : vector<512x512xbf16> to vector<512x512xf32>
    %cst_17 = arith.constant dense<0.000000e+00> : vector<8x512xf32>
    %26 = tpu.matmul %16, %25, %cst_17 {dimension_numbers = #tpu.dot_dimension_numbers<[1], [0], [0], [1], [0, 0, 1, 1], [], []>} : vector<8x512xf32>, vector<512x512xf32>, vector<8x512xf32> -> vector<8x512xf32>
    %27 = vector.extract_strided_slice %17 {offsets = [1, 0], sizes = [1, 512], strides = [1, 1]} : vector<4x512xf32> to vector<1x512xf32>
    %28 = vector.broadcast %27 : vector<1x512xf32> to vector<8x512xf32>
    %29 = arith.addf %26, %28 : vector<8x512xf32>
    %30 = vector.extract_strided_slice %17 {offsets = [2, 0], sizes = [1, 512], strides = [1, 1]} : vector<4x512xf32> to vector<1x512xf32>
    %c0_18 = arith.constant 0 : index
    %c0_19 = arith.constant 0 : index
    %31 = vector.load %arg7[%c0_18, %c0_19] : memref<128x128xf32, #tpu.memory_space<vmem>>, vector<128x128xf32>
    %32 = vector.extract_strided_slice %16 {offsets = [0, 0], sizes = [8, 128], strides = [1, 1]} : vector<8x512xf32> to vector<8x128xf32>
    %cst_20 = arith.constant dense<0.000000e+00> : vector<8x128xf32>
    %33 = tpu.matmul %32, %31, %cst_20 {dimension_numbers = #tpu.dot_dimension_numbers<[1], [0], [0], [1], [0, 0, 1, 1], [], []>} : vector<8x128xf32>, vector<128x128xf32>, vector<8x128xf32> -> vector<8x128xf32>
    %34 = vector.extract_strided_slice %16 {offsets = [0, 128], sizes = [8, 128], strides = [1, 1]} : vector<8x512xf32> to vector<8x128xf32>
    %cst_21 = arith.constant dense<0.000000e+00> : vector<8x128xf32>
    %35 = tpu.matmul %34, %31, %cst_21 {dimension_numbers = #tpu.dot_dimension_numbers<[1], [0], [0], [1], [0, 0, 1, 1], [], []>} : vector<8x128xf32>, vector<128x128xf32>, vector<8x128xf32> -> vector<8x128xf32>
    %36 = vector.extract_strided_slice %16 {offsets = [0, 256], sizes = [8, 128], strides = [1, 1]} : vector<8x512xf32> to vector<8x128xf32>
    %cst_22 = arith.constant dense<0.000000e+00> : vector<8x128xf32>
    %37 = tpu.matmul %36, %31, %cst_22 {dimension_numbers = #tpu.dot_dimension_numbers<[1], [0], [0], [1], [0, 0, 1, 1], [], []>} : vector<8x128xf32>, vector<128x128xf32>, vector<8x128xf32> -> vector<8x128xf32>
    %38 = vector.extract_strided_slice %16 {offsets = [0, 384], sizes = [8, 128], strides = [1, 1]} : vector<8x512xf32> to vector<8x128xf32>
    %cst_23 = arith.constant dense<0.000000e+00> : vector<8x128xf32>
    %39 = tpu.matmul %38, %31, %cst_23 {dimension_numbers = #tpu.dot_dimension_numbers<[1], [0], [0], [1], [0, 0, 1, 1], [], []>} : vector<8x128xf32>, vector<128x128xf32>, vector<8x128xf32> -> vector<8x128xf32>
    %40 = tpu.concatenate %33, %35, %37, %39 in 1 : vector<8x128xf32>, vector<8x128xf32>, vector<8x128xf32>, vector<8x128xf32> -> vector<8x512xf32>
    %41 = vector.broadcast %30 : vector<1x512xf32> to vector<8x512xf32>
    %42 = arith.addf %40, %41 : vector<8x512xf32>
    %43 = arith.addf %23, %29 : vector<8x512xf32>
    %44 = arith.addf %43, %42 : vector<8x512xf32>
    %c0_24 = arith.constant 0 : index
    %c0_25 = arith.constant 0 : index
    %45 = vector.load %arg9[%c0_24, %c0_25] : memref<8x8xf32, #tpu.memory_space<vmem>>, vector<8x8xf32>
    %cst_26 = arith.constant dense<0.000000e+00> : vector<8x512xf32>
    %46 = tpu.matmul %45, %44, %cst_26 {dimension_numbers = #tpu.dot_dimension_numbers<[1], [0], [0], [1], [0, 0, 1, 1], [], []>} : vector<8x8xf32>, vector<8x512xf32>, vector<8x512xf32> -> vector<8x512xf32>
    %c0_27 = arith.constant 0 : index
    %c0_28 = arith.constant 0 : index
    %47 = vector.load %arg10[%c0_27, %c0_28] : memref<512x32xf32, #tpu.memory_space<vmem>>, vector<512x32xf32>
    %cst_29 = arith.constant dense<0.000000e+00> : vector<8x32xf32>
    %48 = tpu.matmul %46, %47, %cst_29 {dimension_numbers = #tpu.dot_dimension_numbers<[1], [0], [0], [1], [0, 0, 1, 1], [], []>} : vector<8x512xf32>, vector<512x32xf32>, vector<8x32xf32> -> vector<8x32xf32>
    %c0_30 = arith.constant 0 : index
    %c0_31 = arith.constant 0 : index
    %49 = vector.load %arg11[%c0_30, %c0_31] : memref<32x8xf32, #tpu.memory_space<vmem>>, vector<32x8xf32>
    %cst_32 = arith.constant dense<0.000000e+00> : vector<8x8xf32>
    %50 = tpu.matmul %48, %49, %cst_32 {dimension_numbers = #tpu.dot_dimension_numbers<[1], [0], [0], [1], [0, 0, 1, 1], [], []>} : vector<8x32xf32>, vector<32x8xf32>, vector<8x8xf32> -> vector<8x8xf32>
    %c0_33 = arith.constant 0 : index
    %c0_34 = arith.constant 0 : index
    %51 = vector.load %arg12[%c0_33, %c0_34] : memref<1x8xf32, #tpu.memory_space<vmem>>, vector<1x8xf32>
    %52 = vector.broadcast %51 : vector<1x8xf32> to vector<8x8xf32>
    %53 = arith.addf %50, %52 : vector<8x8xf32>
    %cst_35 = arith.constant 5.000000e-01 : f32
    %54 = vector.broadcast %cst_35 : f32 to vector<8x8xf32>
    %55 = arith.mulf %54, %53 : vector<8x8xf32>
    %cst_36 = arith.constant 0.707106769 : f32
    %56 = vector.broadcast %cst_36 : f32 to vector<8x8xf32>
    %57 = arith.mulf %53, %56 : vector<8x8xf32>
    %cst_37 = arith.constant 0.000000e+00 : f32
    %58 = vector.broadcast %cst_37 : f32 to vector<8x8xf32>
    %59 = arith.cmpf oge, %57, %58 : vector<8x8xf32>
    %cst_38 = arith.constant 1.000000e+00 : f32
    %cst_39 = arith.constant -1.000000e+00 : f32
    %60 = vector.broadcast %cst_38 : f32 to vector<8x8xf32>
    %61 = vector.broadcast %cst_39 : f32 to vector<8x8xf32>
    %62 = arith.select %59, %60, %61 : vector<8x8xi1>, vector<8x8xf32>
    %63 = arith.mulf %57, %62 : vector<8x8xf32>
    %cst_40 = arith.constant 0.327591091 : f32
    %64 = vector.broadcast %cst_40 : f32 to vector<8x8xf32>
    %65 = arith.mulf %64, %63 : vector<8x8xf32>
    %cst_41 = arith.constant 1.000000e+00 : f32
    %66 = vector.broadcast %cst_41 : f32 to vector<8x8xf32>
    %67 = arith.addf %66, %65 : vector<8x8xf32>
    %68 = tpu.reciprocal %67 {approx = true} : vector<8x8xf32> -> vector<8x8xf32>
    %cst_42 = arith.constant 1.06140542 : f32
    %69 = vector.broadcast %cst_42 : f32 to vector<8x8xf32>
    %70 = arith.mulf %69, %68 : vector<8x8xf32>
    %cst_43 = arith.constant -1.45315206 : f32
    %71 = vector.broadcast %cst_43 : f32 to vector<8x8xf32>
    %72 = arith.addf %70, %71 : vector<8x8xf32>
    %73 = arith.mulf %72, %68 : vector<8x8xf32>
    %cst_44 = arith.constant 1.42141378 : f32
    %74 = vector.broadcast %cst_44 : f32 to vector<8x8xf32>
    %75 = arith.addf %73, %74 : vector<8x8xf32>
    %76 = arith.mulf %75, %68 : vector<8x8xf32>
    %cst_45 = arith.constant -0.284496725 : f32
    %77 = vector.broadcast %cst_45 : f32 to vector<8x8xf32>
    %78 = arith.addf %76, %77 : vector<8x8xf32>
    %79 = arith.mulf %78, %68 : vector<8x8xf32>
    %cst_46 = arith.constant 0.254829586 : f32
    %80 = vector.broadcast %cst_46 : f32 to vector<8x8xf32>
    %81 = arith.addf %79, %80 : vector<8x8xf32>
    %82 = arith.mulf %81, %68 : vector<8x8xf32>
    %cst_47 = arith.constant 0.000000e+00 : f32
    %83 = vector.broadcast %cst_47 : f32 to vector<8x8xf32>
    %84 = arith.subf %83, %63 : vector<8x8xf32>
    %85 = arith.mulf %84, %63 : vector<8x8xf32>
    %86 = math.exp %85 : vector<8x8xf32>
    %87 = arith.mulf %82, %86 : vector<8x8xf32>
    %cst_48 = arith.constant 1.000000e+00 : f32
    %88 = vector.broadcast %cst_48 : f32 to vector<8x8xf32>
    %89 = arith.subf %88, %87 : vector<8x8xf32>
    %90 = arith.mulf %62, %89 : vector<8x8xf32>
    %cst_49 = arith.constant 1.000000e+00 : f32
    %91 = vector.broadcast %cst_49 : f32 to vector<8x8xf32>
    %92 = arith.addf %91, %90 : vector<8x8xf32>
    %93 = arith.mulf %55, %92 : vector<8x8xf32>
    %c0_50 = arith.constant 0 : index
    %c0_51 = arith.constant 0 : index
    %94 = vector.load %arg13[%c0_50, %c0_51] : memref<8x96xf32, #tpu.memory_space<vmem>>, vector<8x96xf32>
    %cst_52 = arith.constant dense<0.000000e+00> : vector<8x96xf32>
    %95 = tpu.matmul %93, %94, %cst_52 {dimension_numbers = #tpu.dot_dimension_numbers<[1], [0], [0], [1], [0, 0, 1, 1], [], []>} : vector<8x8xf32>, vector<8x96xf32>, vector<8x96xf32> -> vector<8x96xf32>
    %c0_53 = arith.constant 0 : index
    %c0_54 = arith.constant 0 : index
    %96 = vector.load %arg14[%c0_53, %c0_54] : memref<1x96xf32, #tpu.memory_space<vmem>>, vector<1x96xf32>
    %97 = vector.broadcast %96 : vector<1x96xf32> to vector<8x96xf32>
    %98 = arith.addf %95, %97 : vector<8x96xf32>
    %99 = vector.extract_strided_slice %98 {offsets = [0, 0], sizes = [8, 32], strides = [1, 1]} : vector<8x96xf32> to vector<8x32xf32>
    %100 = vector.extract_strided_slice %98 {offsets = [0, 32], sizes = [8, 32], strides = [1, 1]} : vector<8x96xf32> to vector<8x32xf32>
    %101 = vector.extract_strided_slice %98 {offsets = [0, 64], sizes = [8, 32], strides = [1, 1]} : vector<8x96xf32> to vector<8x32xf32>
    %102 = arith.maximumf %100, %101 : vector<8x32xf32>
    %103 = arith.maximumf %99, %102 : vector<8x32xf32>
    %104 = arith.subf %99, %103 : vector<8x32xf32>
    %105 = math.exp %104 : vector<8x32xf32>
    %106 = arith.subf %100, %103 : vector<8x32xf32>
    %107 = math.exp %106 : vector<8x32xf32>
    %108 = arith.subf %101, %103 : vector<8x32xf32>
    %109 = math.exp %108 : vector<8x32xf32>
    %110 = arith.addf %105, %107 : vector<8x32xf32>
    %111 = arith.addf %110, %109 : vector<8x32xf32>
    %112 = tpu.reciprocal %111 {approx = true} : vector<8x32xf32> -> vector<8x32xf32>
    %c0_55 = arith.constant 0 : index
    %c0_56 = arith.constant 0 : index
    %113 = vector.load %arg15[%c0_55, %c0_56] : memref<8x8xf32, #tpu.memory_space<vmem>>, vector<8x8xf32>
    %114 = arith.mulf %105, %112 : vector<8x32xf32>
    %cst_57 = arith.constant dense<0.000000e+00> : vector<8x32xf32>
    %115 = tpu.matmul %113, %114, %cst_57 {dimension_numbers = #tpu.dot_dimension_numbers<[1], [0], [0], [1], [0, 0, 1, 1], [], []>} : vector<8x8xf32>, vector<8x32xf32>, vector<8x32xf32> -> vector<8x32xf32>
    %c0_58 = arith.constant 0 : index
    %c0_59 = arith.constant 0 : index
    %116 = vector.load %arg16[%c0_58, %c0_59] : memref<32x512xf32, #tpu.memory_space<vmem>>, vector<32x512xf32>
    %cst_60 = arith.constant dense<0.000000e+00> : vector<8x512xf32>
    %117 = tpu.matmul %115, %116, %cst_60 {dimension_numbers = #tpu.dot_dimension_numbers<[1], [0], [0], [1], [0, 0, 1, 1], [], []>} : vector<8x32xf32>, vector<32x512xf32>, vector<8x512xf32> -> vector<8x512xf32>
    %c0_61 = arith.constant 0 : index
    %c0_62 = arith.constant 0 : index
    %118 = vector.load %arg15[%c0_61, %c0_62] : memref<8x8xf32, #tpu.memory_space<vmem>>, vector<8x8xf32>
    %119 = arith.mulf %107, %112 : vector<8x32xf32>
    %cst_63 = arith.constant dense<0.000000e+00> : vector<8x32xf32>
    %120 = tpu.matmul %118, %119, %cst_63 {dimension_numbers = #tpu.dot_dimension_numbers<[1], [0], [0], [1], [0, 0, 1, 1], [], []>} : vector<8x8xf32>, vector<8x32xf32>, vector<8x32xf32> -> vector<8x32xf32>
    %c0_64 = arith.constant 0 : index
    %c0_65 = arith.constant 0 : index
    %121 = vector.load %arg16[%c0_64, %c0_65] : memref<32x512xf32, #tpu.memory_space<vmem>>, vector<32x512xf32>
    %cst_66 = arith.constant dense<0.000000e+00> : vector<8x512xf32>
    %122 = tpu.matmul %120, %121, %cst_66 {dimension_numbers = #tpu.dot_dimension_numbers<[1], [0], [0], [1], [0, 0, 1, 1], [], []>} : vector<8x32xf32>, vector<32x512xf32>, vector<8x512xf32> -> vector<8x512xf32>
    %c0_67 = arith.constant 0 : index
    %c0_68 = arith.constant 0 : index
    %123 = vector.load %arg15[%c0_67, %c0_68] : memref<8x8xf32, #tpu.memory_space<vmem>>, vector<8x8xf32>
    %124 = arith.mulf %109, %112 : vector<8x32xf32>
    %cst_69 = arith.constant dense<0.000000e+00> : vector<8x32xf32>
    %125 = tpu.matmul %123, %124, %cst_69 {dimension_numbers = #tpu.dot_dimension_numbers<[1], [0], [0], [1], [0, 0, 1, 1], [], []>} : vector<8x8xf32>, vector<8x32xf32>, vector<8x32xf32> -> vector<8x32xf32>
    %c0_70 = arith.constant 0 : index
    %c0_71 = arith.constant 0 : index
    %126 = vector.load %arg16[%c0_70, %c0_71] : memref<32x512xf32, #tpu.memory_space<vmem>>, vector<32x512xf32>
    %cst_72 = arith.constant dense<0.000000e+00> : vector<8x512xf32>
    %127 = tpu.matmul %125, %126, %cst_72 {dimension_numbers = #tpu.dot_dimension_numbers<[1], [0], [0], [1], [0, 0, 1, 1], [], []>} : vector<8x32xf32>, vector<32x512xf32>, vector<8x512xf32> -> vector<8x512xf32>
    %128 = arith.mulf %23, %117 : vector<8x512xf32>
    %129 = arith.mulf %29, %122 : vector<8x512xf32>
    %130 = arith.addf %128, %129 : vector<8x512xf32>
    %131 = arith.mulf %42, %127 : vector<8x512xf32>
    %132 = arith.addf %130, %131 : vector<8x512xf32>
    %c0_73 = arith.constant 0 : index
    %c0_74 = arith.constant 0 : index
    %133 = vector.load %arg1[%c0_73, %c0_74] : memref<8x512xf32, #tpu.memory_space<vmem>>, vector<8x512xf32>
    %134 = vector.extract_strided_slice %17 {offsets = [3, 0], sizes = [1, 512], strides = [1, 1]} : vector<4x512xf32> to vector<1x512xf32>
    %c0_75 = arith.constant 0 : index
    %c0_76 = arith.constant 0 : index
    %135 = vector.load %arg17[%c0_75, %c0_76] : memref<128x128xf32, #tpu.memory_space<vmem>>, vector<128x128xf32>
    %136 = vector.extract_strided_slice %132 {offsets = [0, 0], sizes = [8, 128], strides = [1, 1]} : vector<8x512xf32> to vector<8x128xf32>
    %cst_77 = arith.constant dense<0.000000e+00> : vector<8x128xf32>
    %137 = tpu.matmul %136, %135, %cst_77 {dimension_numbers = #tpu.dot_dimension_numbers<[1], [0], [0], [1], [0, 0, 1, 1], [], []>} : vector<8x128xf32>, vector<128x128xf32>, vector<8x128xf32> -> vector<8x128xf32>
    %138 = vector.extract_strided_slice %132 {offsets = [0, 128], sizes = [8, 128], strides = [1, 1]} : vector<8x512xf32> to vector<8x128xf32>
    %cst_78 = arith.constant dense<0.000000e+00> : vector<8x128xf32>
    %139 = tpu.matmul %138, %135, %cst_78 {dimension_numbers = #tpu.dot_dimension_numbers<[1], [0], [0], [1], [0, 0, 1, 1], [], []>} : vector<8x128xf32>, vector<128x128xf32>, vector<8x128xf32> -> vector<8x128xf32>
    %140 = vector.extract_strided_slice %132 {offsets = [0, 256], sizes = [8, 128], strides = [1, 1]} : vector<8x512xf32> to vector<8x128xf32>
    %cst_79 = arith.constant dense<0.000000e+00> : vector<8x128xf32>
    %141 = tpu.matmul %140, %135, %cst_79 {dimension_numbers = #tpu.dot_dimension_numbers<[1], [0], [0], [1], [0, 0, 1, 1], [], []>} : vector<8x128xf32>, vector<128x128xf32>, vector<8x128xf32> -> vector<8x128xf32>
    %142 = vector.extract_strided_slice %132 {offsets = [0, 384], sizes = [8, 128], strides = [1, 1]} : vector<8x512xf32> to vector<8x128xf32>
    %cst_80 = arith.constant dense<0.000000e+00> : vector<8x128xf32>
    %143 = tpu.matmul %142, %135, %cst_80 {dimension_numbers = #tpu.dot_dimension_numbers<[1], [0], [0], [1], [0, 0, 1, 1], [], []>} : vector<8x128xf32>, vector<128x128xf32>, vector<8x128xf32> -> vector<8x128xf32>
    %144 = tpu.concatenate %137, %139, %141, %143 in 1 : vector<8x128xf32>, vector<8x128xf32>, vector<8x128xf32>, vector<8x128xf32> -> vector<8x512xf32>
    %145 = vector.broadcast %134 : vector<1x512xf32> to vector<8x512xf32>
    %146 = arith.addf %144, %145 : vector<8x512xf32>
    %147 = arith.addf %133, %146 : vector<8x512xf32>
    %c0_81 = arith.constant 0 : index
    %c0_82 = arith.constant 0 : index
    %148 = vector.load %arg18[%c0_81, %c0_82] : memref<8x512xf32, #tpu.memory_space<vmem>>, vector<8x512xf32>
    tpu.vector_store %arg18[%c0_81, %c0_82], %147 {strides = array<i32>} : memref<8x512xf32, #tpu.memory_space<vmem>>, vector<8x512xf32>,
    return
  }
  func.func @transform_0(%arg0: i32) -> (i32, i32) {
    %c0_i32 = arith.constant 0 : i32
    %c0_i32_0 = arith.constant 0 : i32
    return %arg0, %c0_i32 : i32, i32
  }
  func.func @transform_1(%arg0: i32) -> (i32, i32) {
    %c0_i32 = arith.constant 0 : i32
    %c0_i32_0 = arith.constant 0 : i32
    return %arg0, %c0_i32 : i32, i32
  }
  func.func @transform_2(%arg0: i32) -> (i32, i32) {
    %c0_i32 = arith.constant 0 : i32
    %c0_i32_0 = arith.constant 0 : i32
    %c0_i32_1 = arith.constant 0 : i32
    return %c0_i32, %c0_i32_0 : i32, i32
  }
  func.func @transform_3(%arg0: i32) -> (i32, i32) {
    %c0_i32 = arith.constant 0 : i32
    %c0_i32_0 = arith.constant 0 : i32
    %c0_i32_1 = arith.constant 0 : i32
    return %c0_i32, %c0_i32_0 : i32, i32
  }
  func.func @transform_4(%arg0: i32) -> (i32, i32) {
    %c0_i32 = arith.constant 0 : i32
    %c0_i32_0 = arith.constant 0 : i32
    %c0_i32_1 = arith.constant 0 : i32
    return %c0_i32, %c0_i32_0 : i32, i32
  }
  func.func @transform_5(%arg0: i32) -> (i32, i32) {
    %c0_i32 = arith.constant 0 : i32
    %c0_i32_0 = arith.constant 0 : i32
    %c0_i32_1 = arith.constant 0 : i32
    return %c0_i32, %c0_i32_0 : i32, i32
  }
  func.func @transform_6(%arg0: i32) -> (i32, i32) {
    %c0_i32 = arith.constant 0 : i32
    %c0_i32_0 = arith.constant 0 : i32
    %c0_i32_1 = arith.constant 0 : i32
    return %c0_i32, %c0_i32_0 : i32, i32
  }
  func.func @transform_7(%arg0: i32) -> (i32, i32) {
    %c0_i32 = arith.constant 0 : i32
    %c0_i32_0 = arith.constant 0 : i32
    %c0_i32_1 = arith.constant 0 : i32
    return %c0_i32, %c0_i32_0 : i32, i32
  }
  func.func @transform_8(%arg0: i32) -> (i32, i32) {
    %c0_i32 = arith.constant 0 : i32
    %c0_i32_0 = arith.constant 0 : i32
    %c0_i32_1 = arith.constant 0 : i32
    return %c0_i32, %c0_i32_0 : i32, i32
  }
  func.func @transform_9(%arg0: i32) -> (i32, i32) {
    %c0_i32 = arith.constant 0 : i32
    %c0_i32_0 = arith.constant 0 : i32
    %c0_i32_1 = arith.constant 0 : i32
    return %c0_i32, %c0_i32_0 : i32, i32
  }
  func.func @transform_10(%arg0: i32) -> (i32, i32) {
    %c0_i32 = arith.constant 0 : i32
    %c0_i32_0 = arith.constant 0 : i32
    %c0_i32_1 = arith.constant 0 : i32
    return %c0_i32, %c0_i32_0 : i32, i32
  }
  func.func @transform_11(%arg0: i32) -> (i32, i32) {
    %c0_i32 = arith.constant 0 : i32
    %c0_i32_0 = arith.constant 0 : i32
    %c0_i32_1 = arith.constant 0 : i32
    return %c0_i32, %c0_i32_0 : i32, i32
  }
  func.func @transform_12(%arg0: i32) -> (i32, i32) {
    %c0_i32 = arith.constant 0 : i32
    %c0_i32_0 = arith.constant 0 : i32
    %c0_i32_1 = arith.constant 0 : i32
    return %c0_i32, %c0_i32_0 : i32, i32
  }
  func.func @transform_13(%arg0: i32) -> (i32, i32) {
    %c0_i32 = arith.constant 0 : i32
    %c0_i32_0 = arith.constant 0 : i32
    %c0_i32_1 = arith.constant 0 : i32
    return %c0_i32, %c0_i32_0 : i32, i32
  }
  func.func @transform_14(%arg0: i32) -> (i32, i32) {
    %c0_i32 = arith.constant 0 : i32
    %c0_i32_0 = arith.constant 0 : i32
    %c0_i32_1 = arith.constant 0 : i32
    return %c0_i32, %c0_i32_0 : i32, i32
  }
  func.func @transform_15(%arg0: i32) -> (i32, i32) {
    %c0_i32 = arith.constant 0 : i32
    %c0_i32_0 = arith.constant 0 : i32
    %c0_i32_1 = arith.constant 0 : i32
    return %c0_i32, %c0_i32_0 : i32, i32
  }
  func.func @transform_16(%arg0: i32) -> (i32, i32) {
    %c0_i32 = arith.constant 0 : i32
    %c0_i32_0 = arith.constant 0 : i32
    %c0_i32_1 = arith.constant 0 : i32
    return %c0_i32, %c0_i32_0 : i32, i32
  }
  func.func @transform_17(%arg0: i32) -> (i32, i32) {
    %c0_i32 = arith.constant 0 : i32
    %c0_i32_0 = arith.constant 0 : i32
    return %arg0, %c0_i32 : i32, i32
  }
}

module attributes {stable_mosaic.version = 11 : i64} {
  func.func @_mlp_branch_kernel(%arg0: i32, %arg1: memref<64x128xf32, #tpu.memory_space<vmem>>, %arg2: memref<128x8xf32, #tpu.memory_space<vmem>>, %arg3: memref<8x128xf32, #tpu.memory_space<vmem>>, %arg4: memref<128x512xbf16, #tpu.memory_space<vmem>>, %arg5: memref<1x512xf32, #tpu.memory_space<vmem>>, %arg6: memref<512x128xbf16, #tpu.memory_space<vmem>>, %arg7: memref<1x128xf32, #tpu.memory_space<vmem>>, %arg8: memref<64x128xf32, #tpu.memory_space<vmem>>) attributes {dimension_semantics = [#tpu.dimension_semantics<parallel>], iteration_bounds = array<i64: 1>, scalar_prefetch = 0 : i64, scratch_operands = 0 : i64, tpu.core_type = #tpu.core_type<tc>, window_params = [{transform_indices = @transform_0, window_bounds = array<i64: 64, 128>}, {pipeline_mode = #tpu.pipeline_mode<synchronous>, transform_indices = @transform_1, window_bounds = array<i64: 128, 8>}, {pipeline_mode = #tpu.pipeline_mode<synchronous>, transform_indices = @transform_2, window_bounds = array<i64: 8, 128>}, {pipeline_mode = #tpu.pipeline_mode<synchronous>, transform_indices = @transform_3, window_bounds = array<i64: 128, 512>}, {pipeline_mode = #tpu.pipeline_mode<synchronous>, transform_indices = @transform_4, window_bounds = array<i64: 1, 512>}, {pipeline_mode = #tpu.pipeline_mode<synchronous>, transform_indices = @transform_5, window_bounds = array<i64: 512, 128>}, {pipeline_mode = #tpu.pipeline_mode<synchronous>, transform_indices = @transform_6, window_bounds = array<i64: 1, 128>}, {transform_indices = @transform_7, window_bounds = array<i64: 64, 128>}]} {
    %c0 = arith.constant 0 : index
    %c0_0 = arith.constant 0 : index
    %0 = vector.load %arg1[%c0, %c0_0] : memref<64x128xf32, #tpu.memory_space<vmem>>, vector<64x128xf32>
    %c0_1 = arith.constant 0 : index
    %c0_2 = arith.constant 0 : index
    %1 = vector.load %arg2[%c0_1, %c0_2] : memref<128x8xf32, #tpu.memory_space<vmem>>, vector<128x8xf32>
    %c0_3 = arith.constant 0 : index
    %c0_4 = arith.constant 0 : index
    %2 = vector.load %arg3[%c0_3, %c0_4] : memref<8x128xf32, #tpu.memory_space<vmem>>, vector<8x128xf32>
    %cst = arith.constant dense<0.000000e+00> : vector<64x8xf32>
    %3 = tpu.matmul %0, %1, %cst {dimension_numbers = #tpu.dot_dimension_numbers<[1], [0], [0], [1], [0, 0, 1, 1], [], []>} : vector<64x128xf32>, vector<128x8xf32>, vector<64x8xf32> -> vector<64x8xf32>
    %cst_5 = arith.constant dense<0.000000e+00> : vector<64x128xf32>
    %4 = tpu.matmul %3, %2, %cst_5 {dimension_numbers = #tpu.dot_dimension_numbers<[1], [0], [0], [1], [0, 0, 1, 1], [], []>} : vector<64x8xf32>, vector<8x128xf32>, vector<64x128xf32> -> vector<64x128xf32>
    %5 = arith.mulf %0, %0 : vector<64x128xf32>
    %cst_6 = arith.constant dense<0.000000e+00> : vector<64x8xf32>
    %6 = tpu.matmul %5, %1, %cst_6 {dimension_numbers = #tpu.dot_dimension_numbers<[1], [0], [0], [1], [0, 0, 1, 1], [], []>} : vector<64x128xf32>, vector<128x8xf32>, vector<64x8xf32> -> vector<64x8xf32>
    %cst_7 = arith.constant dense<0.000000e+00> : vector<64x128xf32>
    %7 = tpu.matmul %6, %2, %cst_7 {dimension_numbers = #tpu.dot_dimension_numbers<[1], [0], [0], [1], [0, 0, 1, 1], [], []>} : vector<64x8xf32>, vector<8x128xf32>, vector<64x128xf32> -> vector<64x128xf32>
    %8 = arith.mulf %4, %4 : vector<64x128xf32>
    %9 = arith.subf %7, %8 : vector<64x128xf32>
    %cst_8 = arith.constant 0.000000e+00 : f32
    %10 = vector.broadcast %cst_8 : f32 to vector<64x128xf32>
    %11 = arith.maximumf %9, %10 : vector<64x128xf32>
    %12 = arith.subf %0, %4 : vector<64x128xf32>
    %cst_9 = arith.constant 9.99999974E-6 : f32
    %13 = vector.broadcast %cst_9 : f32 to vector<64x128xf32>
    %14 = arith.addf %11, %13 : vector<64x128xf32>
    %15 = math.rsqrt %14 : vector<64x128xf32>
    %16 = arith.mulf %12, %15 : vector<64x128xf32>
    %c0_10 = arith.constant 0 : index
    %c0_11 = arith.constant 0 : index
    %17 = vector.load %arg4[%c0_10, %c0_11] : memref<128x512xbf16, #tpu.memory_space<vmem>>, vector<128x512xbf16>
    %18 = arith.extf %17 : vector<128x512xbf16> to vector<128x512xf32>
    %cst_12 = arith.constant dense<0.000000e+00> : vector<64x512xf32>
    %19 = tpu.matmul %16, %18, %cst_12 {dimension_numbers = #tpu.dot_dimension_numbers<[1], [0], [0], [1], [0, 0, 1, 1], [], []>} : vector<64x128xf32>, vector<128x512xf32>, vector<64x512xf32> -> vector<64x512xf32>
    %c0_13 = arith.constant 0 : index
    %c0_14 = arith.constant 0 : index
    %20 = vector.load %arg5[%c0_13, %c0_14] : memref<1x512xf32, #tpu.memory_space<vmem>>, vector<1x512xf32>
    %21 = vector.broadcast %20 : vector<1x512xf32> to vector<64x512xf32>
    %22 = arith.addf %19, %21 : vector<64x512xf32>
    %cst_15 = arith.constant 5.000000e-01 : f32
    %23 = vector.broadcast %cst_15 : f32 to vector<64x512xf32>
    %24 = arith.mulf %23, %22 : vector<64x512xf32>
    %cst_16 = arith.constant 0.707106769 : f32
    %25 = vector.broadcast %cst_16 : f32 to vector<64x512xf32>
    %26 = arith.mulf %22, %25 : vector<64x512xf32>
    %cst_17 = arith.constant 0.000000e+00 : f32
    %27 = vector.broadcast %cst_17 : f32 to vector<64x512xf32>
    %28 = arith.cmpf oge, %26, %27 : vector<64x512xf32>
    %cst_18 = arith.constant 1.000000e+00 : f32
    %cst_19 = arith.constant -1.000000e+00 : f32
    %29 = vector.broadcast %cst_18 : f32 to vector<64x512xf32>
    %30 = vector.broadcast %cst_19 : f32 to vector<64x512xf32>
    %31 = arith.select %28, %29, %30 : vector<64x512xi1>, vector<64x512xf32>
    %32 = arith.mulf %26, %31 : vector<64x512xf32>
    %cst_20 = arith.constant 0.327591091 : f32
    %33 = vector.broadcast %cst_20 : f32 to vector<64x512xf32>
    %34 = arith.mulf %33, %32 : vector<64x512xf32>
    %cst_21 = arith.constant 1.000000e+00 : f32
    %35 = vector.broadcast %cst_21 : f32 to vector<64x512xf32>
    %36 = arith.addf %35, %34 : vector<64x512xf32>
    %37 = tpu.reciprocal %36 {approx = true} : vector<64x512xf32> -> vector<64x512xf32>
    %cst_22 = arith.constant 1.06140542 : f32
    %38 = vector.broadcast %cst_22 : f32 to vector<64x512xf32>
    %39 = arith.mulf %38, %37 : vector<64x512xf32>
    %cst_23 = arith.constant -1.45315206 : f32
    %40 = vector.broadcast %cst_23 : f32 to vector<64x512xf32>
    %41 = arith.addf %39, %40 : vector<64x512xf32>
    %42 = arith.mulf %41, %37 : vector<64x512xf32>
    %cst_24 = arith.constant 1.42141378 : f32
    %43 = vector.broadcast %cst_24 : f32 to vector<64x512xf32>
    %44 = arith.addf %42, %43 : vector<64x512xf32>
    %45 = arith.mulf %44, %37 : vector<64x512xf32>
    %cst_25 = arith.constant -0.284496725 : f32
    %46 = vector.broadcast %cst_25 : f32 to vector<64x512xf32>
    %47 = arith.addf %45, %46 : vector<64x512xf32>
    %48 = arith.mulf %47, %37 : vector<64x512xf32>
    %cst_26 = arith.constant 0.254829586 : f32
    %49 = vector.broadcast %cst_26 : f32 to vector<64x512xf32>
    %50 = arith.addf %48, %49 : vector<64x512xf32>
    %51 = arith.mulf %50, %37 : vector<64x512xf32>
    %cst_27 = arith.constant 0.000000e+00 : f32
    %52 = vector.broadcast %cst_27 : f32 to vector<64x512xf32>
    %53 = arith.subf %52, %32 : vector<64x512xf32>
    %54 = arith.mulf %53, %32 : vector<64x512xf32>
    %55 = math.exp %54 : vector<64x512xf32>
    %56 = arith.mulf %51, %55 : vector<64x512xf32>
    %cst_28 = arith.constant 1.000000e+00 : f32
    %57 = vector.broadcast %cst_28 : f32 to vector<64x512xf32>
    %58 = arith.subf %57, %56 : vector<64x512xf32>
    %59 = arith.mulf %31, %58 : vector<64x512xf32>
    %cst_29 = arith.constant 1.000000e+00 : f32
    %60 = vector.broadcast %cst_29 : f32 to vector<64x512xf32>
    %61 = arith.addf %60, %59 : vector<64x512xf32>
    %62 = arith.mulf %24, %61 : vector<64x512xf32>
    %c0_30 = arith.constant 0 : index
    %c0_31 = arith.constant 0 : index
    %63 = vector.load %arg6[%c0_30, %c0_31] : memref<512x128xbf16, #tpu.memory_space<vmem>>, vector<512x128xbf16>
    %64 = arith.extf %63 : vector<512x128xbf16> to vector<512x128xf32>
    %cst_32 = arith.constant dense<0.000000e+00> : vector<64x128xf32>
    %65 = tpu.matmul %62, %64, %cst_32 {dimension_numbers = #tpu.dot_dimension_numbers<[1], [0], [0], [1], [0, 0, 1, 1], [], []>} : vector<64x512xf32>, vector<512x128xf32>, vector<64x128xf32> -> vector<64x128xf32>
    %66 = arith.addf %0, %65 : vector<64x128xf32>
    %c0_33 = arith.constant 0 : index
    %c0_34 = arith.constant 0 : index
    %67 = vector.load %arg7[%c0_33, %c0_34] : memref<1x128xf32, #tpu.memory_space<vmem>>, vector<1x128xf32>
    %68 = vector.broadcast %67 : vector<1x128xf32> to vector<64x128xf32>
    %69 = arith.addf %66, %68 : vector<64x128xf32>
    %c0_35 = arith.constant 0 : index
    %c0_36 = arith.constant 0 : index
    %70 = vector.load %arg8[%c0_35, %c0_36] : memref<64x128xf32, #tpu.memory_space<vmem>>, vector<64x128xf32>
    tpu.vector_store %arg8[%c0_35, %c0_36], %69 {strides = array<i32>} : memref<64x128xf32, #tpu.memory_space<vmem>>, vector<64x128xf32>,
    return
  }
  func.func @transform_0(%arg0: i32) -> (i32, i32) {
    %c0_i32 = arith.constant 0 : i32
    %c0_i32_0 = arith.constant 0 : i32
    return %arg0, %c0_i32 : i32, i32
  }
  func.func @transform_1(%arg0: i32) -> (i32, i32) {
    %c0_i32 = arith.constant 0 : i32
    %c0_i32_0 = arith.constant 0 : i32
    %c0_i32_1 = arith.constant 0 : i32
    return %c0_i32, %c0_i32_0 : i32, i32
  }
  func.func @transform_2(%arg0: i32) -> (i32, i32) {
    %c0_i32 = arith.constant 0 : i32
    %c0_i32_0 = arith.constant 0 : i32
    %c0_i32_1 = arith.constant 0 : i32
    return %c0_i32, %c0_i32_0 : i32, i32
  }
  func.func @transform_3(%arg0: i32) -> (i32, i32) {
    %c0_i32 = arith.constant 0 : i32
    %c0_i32_0 = arith.constant 0 : i32
    %c0_i32_1 = arith.constant 0 : i32
    return %c0_i32, %c0_i32_0 : i32, i32
  }
  func.func @transform_4(%arg0: i32) -> (i32, i32) {
    %c0_i32 = arith.constant 0 : i32
    %c0_i32_0 = arith.constant 0 : i32
    %c0_i32_1 = arith.constant 0 : i32
    return %c0_i32, %c0_i32_0 : i32, i32
  }
  func.func @transform_5(%arg0: i32) -> (i32, i32) {
    %c0_i32 = arith.constant 0 : i32
    %c0_i32_0 = arith.constant 0 : i32
    %c0_i32_1 = arith.constant 0 : i32
    return %c0_i32, %c0_i32_0 : i32, i32
  }
  func.func @transform_6(%arg0: i32) -> (i32, i32) {
    %c0_i32 = arith.constant 0 : i32
    %c0_i32_0 = arith.constant 0 : i32
    %c0_i32_1 = arith.constant 0 : i32
    return %c0_i32, %c0_i32_0 : i32, i32
  }
  func.func @transform_7(%arg0: i32) -> (i32, i32) {
    %c0_i32 = arith.constant 0 : i32
    %c0_i32_0 = arith.constant 0 : i32
    return %arg0, %c0_i32 : i32, i32
  }
}

</mosaic_0001>

<llo_original>
// kernel: permutator_block.3
$region0: #{permutator_block.3}
  #allocation0 [shape = 'u32[]', space=smem, size = 0x4, offset = 0x4, fixed_abs, tag = 'smem constant byte address 0x4 - core index']
  #allocation1 [shape = 'u32[144,128]{1,0:T(1,128)}', space=vmem, size = 0x12000, scoped, tag = 'internal scratch']
  %s0 = inlined_call_operand.vmem [shape: f32[32,256], index: 0, kind: input, shape index: {}, may-alias: {0,5}]
  %s1 = inlined_call_operand.vmem [shape: f32[256,8], index: 1, kind: input, shape index: {}]
  %s2 = inlined_call_operand.vmem [shape: f32[8,256], index: 2, kind: input, shape index: {}]
  %s3 = inlined_call_operand.vmem [shape: bf16[256,256], index: 3, kind: input, shape index: {}]
  %s4 = inlined_call_operand.vmem [shape: f32[1,256], index: 4, kind: input, shape index: {}]
  %s5 = inlined_call_operand.vmem [shape: f32[32,256], index: 5, kind: output, shape index: {}, may-alias: {0,5}]
  %s6 = sld [smem:[#allocation0]]
  $region30: #{permutator_block.3} parent=0
    _
  %s8 = ssub.s32 1, %s6
  %s9 = scalar_select 0, %s8, %s6
  // Predicated region
  $region2: #{permutator_block.3} parent=0 // pred_check
    _
  $region3: #{permutator_block.3} parent=0 // pred_check_branch
    %11 = sbr.rel (0) target = $region5
  $region4: #{permutator_block.3} parent=0 // pred_region
    _
  $region5: #{permutator_block.3} parent=0 // pred_fallthru
    _
  // Predicated region
  $region6: #{permutator_block.3} parent=0 // pred_check
    _
  $region7: #{permutator_block.3} parent=0 // pred_check_branch
    %13 = sbr.rel (0) target = $region9
  $region8: #{permutator_block.3} parent=0 // pred_region
    _
  $region9: #{permutator_block.3} parent=0 // pred_fallthru
    _
  // Predicated region
  $region10: #{permutator_block.3} parent=0 // pred_check
    _
  $region11: #{permutator_block.3} parent=0 // pred_check_branch
    %15 = sbr.rel (0) target = $region13
  $region12: #{permutator_block.3} parent=0 // pred_region
    _
  $region13: #{permutator_block.3} parent=0 // pred_fallthru
    _
  // Predicated region
  $region14: #{permutator_block.3} parent=0 // pred_check
    _
  $region15: #{permutator_block.3} parent=0 // pred_check_branch
    %17 = sbr.rel (0) target = $region17
  $region16: #{permutator_block.3} parent=0 // pred_region
    _
  $region17: #{permutator_block.3} parent=0 // pred_fallthru
    _
  // Predicated region
  $region18: #{permutator_block.3} parent=0 // pred_check
    _
  $region19: #{permutator_block.3} parent=0 // pred_check_branch
    %19 = sbr.rel (0) target = $region21
  $region20: #{permutator_block.3} parent=0 // pred_region
    _
  $region21: #{permutator_block.3} parent=0 // pred_fallthru
    _
  %v20 = vld [vmem:[%s0] sm:$0xff]
  %v21 = vld [vmem:[%s0 + $0x8] sm:$0xff]
  %v22 = vld [vmem:[%s0 + $0x10] sm:$0xff]
  %v23 = vld [vmem:[%s0 + $0x18] sm:$0xff]
  %v24 = vld [vmem:[%s0 + $0x20] sm:$0xff]
  %v25 = vld [vmem:[%s0 + $0x28] sm:$0xff]
  %v26 = vld [vmem:[%s0 + $0x30] sm:$0xff]
  %v27 = vld [vmem:[%s0 + $0x38] sm:$0xff]
  %v28 = vld [vmem:[%s1] sm:$0xff]
  %v29 = vld [vmem:[%s1 + $0x8] sm:$0xff]
  %v30 = vld [vmem:[%s1 + $0x10] sm:$0xff]
  %v31 = vld [vmem:[%s1 + $0x18] sm:$0xff]
  %v32 = vld [vmem:[%s1 + $0x20] sm:$0xff]
  %v33 = vld [vmem:[%s1 + $0x28] sm:$0xff]
  %v34 = vld [vmem:[%s1 + $0x30] sm:$0xff]
  %v35 = vld [vmem:[%s1 + $0x38] sm:$0xff]
  %v36 = vld [vmem:[%s1 + $0x40] sm:$0xff]
  %v37 = vld [vmem:[%s1 + $0x48] sm:$0xff]
  %v38 = vld [vmem:[%s1 + $0x50] sm:$0xff]
  %v39 = vld [vmem:[%s1 + $0x58] sm:$0xff]
  %v40 = vld [vmem:[%s1 + $0x60] sm:$0xff]
  %v41 = vld [vmem:[%s1 + $0x68] sm:$0xff]
  %v42 = vld [vmem:[%s1 + $0x70] sm:$0xff]
  %v43 = vld [vmem:[%s1 + $0x78] sm:$0xff]
  %v44 = vld [vmem:[%s1 + $0x80] sm:$0xff]
  %v45 = vld [vmem:[%s1 + $0x88] sm:$0xff]
  %v46 = vld [vmem:[%s1 + $0x90] sm:$0xff]
  %v47 = vld [vmem:[%s1 + $0x98] sm:$0xff]
  %v48 = vld [vmem:[%s1 + $0xa0] sm:$0xff]
  %v49 = vld [vmem:[%s1 + $0xa8] sm:$0xff]
  %v50 = vld [vmem:[%s1 + $0xb0] sm:$0xff]
  %v51 = vld [vmem:[%s1 + $0xb8] sm:$0xff]
  %v52 = vld [vmem:[%s1 + $0xc0] sm:$0xff]
  %v53 = vld [vmem:[%s1 + $0xc8] sm:$0xff]
  %v54 = vld [vmem:[%s1 + $0xd0] sm:$0xff]
  %v55 = vld [vmem:[%s1 + $0xd8] sm:$0xff]
  %v56 = vld [vmem:[%s1 + $0xe0] sm:$0xff]
  %v57 = vld [vmem:[%s1 + $0xe8] sm:$0xff]
  %v58 = vld [vmem:[%s1 + $0xf0] sm:$0xff]
  %v59 = vld [vmem:[%s1 + $0xf8] sm:$0xff]
  %v60 = vld [vmem:[%s2] sm:$0xff]
  %v61 = vld [vmem:[%s2 + $0x8] sm:$0xff]
  %62 = vmatprep.subr.mxu0 0.0
  %63 = vmatpush1.msra.mxu0 %v28
  %64 = vmatprep.subr.mxu0 0.0
  %65 = vmatpush1.msra.mxu0 %v29
  %66 = vmatprep.subr.mxu0 0.0
  %67 = vmatpush1.msra.mxu0 %v30
  %68 = vmatprep.subr.mxu0 0.0
  %69 = vmatpush1.msra.mxu0 %v31
  %70 = vmatprep.subr.mxu0 0.0
  %71 = vmatpush1.msra.mxu0 %v32
  %72 = vmatprep.subr.mxu0 0.0
  %73 = vmatpush1.msra.mxu0 %v33
  %74 = vmatprep.subr.mxu0 0.0
  %75 = vmatpush1.msra.mxu0 %v34
  %76 = vmatprep.subr.mxu0 0.0
  %77 = vmatpush1.msra.mxu0 %v35
  %78 = vmatprep.subr.mxu0 0.0
  %79 = vmatpush1.msra.mxu0 %v36
  %80 = vmatprep.subr.mxu0 0.0
  %81 = vmatpush1.msra.mxu0 %v37
  %82 = vmatprep.subr.mxu0 0.0
  %83 = vmatpush1.msra.mxu0 %v38
  %84 = vmatprep.subr.mxu0 0.0
  %85 = vmatpush1.msra.mxu0 %v39
  %86 = vmatprep.subr.mxu0 0.0
  %87 = vmatpush1.msra.mxu0 %v40
  %88 = vmatprep.subr.mxu0 0.0
  %89 = vmatpush1.msra.mxu0 %v41
  %90 = vmatprep.subr.mxu0 0.0
  %91 = vmatpush1.msra.mxu0 %v42
  %92 = vmatprep.subr.mxu0 0.0
  %93 = vmatpush1.msra.mxu0 %v43
  %94 = vmatprep.subr.mxu0 0.0
  %95 = vmatpush1.msra.mxu0 %v44
  %96 = vmatprep.subr.mxu0 0.0
  %97 = vmatpush1.msra.mxu0 %v45
  %98 = vmatprep.subr.mxu0 0.0
  %99 = vmatpush1.msra.mxu0 %v46
  %100 = vmatprep.subr.mxu0 0.0
  %101 = vmatpush1.msra.mxu0 %v47
  %102 = vmatprep.subr.mxu0 0.0
  %103 = vmatpush1.msra.mxu0 %v48
  %104 = vmatprep.subr.mxu0 0.0
  %105 = vmatpush1.msra.mxu0 %v49
  %106 = vmatprep.subr.mxu0 0.0
  %107 = vmatpush1.msra.mxu0 %v50
  %108 = vmatprep.subr.mxu0 0.0
  %109 = vmatpush1.msra.mxu0 %v51
  %110 = vmatprep.subr.mxu0 0.0
  %111 = vmatpush1.msra.mxu0 %v52
  %112 = vmatprep.subr.mxu0 0.0
  %113 = vmatpush1.msra.mxu0 %v53
  %114 = vmatprep.subr.mxu0 0.0
  %115 = vmatpush1.msra.mxu0 %v54
  %116 = vmatprep.subr.mxu0 0.0
  %117 = vmatpush1.msra.mxu0 %v55
  %118 = vmatprep.subr.mxu0 0.0
  %119 = vmatpush1.msra.mxu0 %v56
  %120 = vmatprep.subr.mxu0 0.0
  %121 = vmatpush1.msra.mxu0 %v57
  %122 = vmatprep.subr.mxu0 0.0
  %123 = vmatpush1.msra.mxu0 %v58
  %124 = vmatprep.subr.mxu0 0.0
  %125 = vmatpush1.msra.mxu0 %v59
  %126 = vmatprep.mubr.f32.mxu0 %v21
  %127 = vmatmul.mubr.f32.gmra.mrb[0].mxu0 %v20
  %v128 = vpop.f32.mrb[0].mxu0
  %v129 = vadd.f32 0.0, %v128
  %v130 = vpop.f32.mrb[0].mxu0
  %131 = vmatprep.mubr.f32.mxu0 %v23
  %132 = vmatmul.mubr.f32.gmra.mrb[0].mxu0 %v22
  %v133 = vpop.f32.mrb[0].mxu0
  %v134 = vadd.f32 0.0, %v133
  %v135 = vpop.f32.mrb[0].mxu0
  %136 = vmatprep.mubr.f32.mxu0 %v25
  %137 = vmatmul.mubr.f32.gmra.mrb[0].mxu0 %v24
  %v138 = vpop.f32.mrb[0].mxu0
  %v139 = vadd.f32 0.0, %v138
  %v140 = vpop.f32.mrb[0].mxu0
  %141 = vmatprep.mubr.f32.mxu0 %v27
  %142 = vmatmul.mubr.f32.gmra.mrb[0].mxu0 %v26
  %v143 = vpop.f32.mrb[0].mxu0
  %v144 = vadd.f32 0.0, %v143
  %v145 = vpop.f32.mrb[0].mxu0
  %146 = vdwg.mxu0
  %vm147 = vcmask 64512
  %v149 = vsel %vm147, %v129, 0
  %v152 = vsel %vm147, %v134, 0
  %v155 = vsel %vm147, %v139, 0
  %v158 = vsel %vm147, %v144, 0
  %160 = vmatprep.subr.mxu0 %v61
  %161 = vmatpush1.msra.mxu0 %v60
  %162 = vmatprep.subr.mxu0 0.0
  %163 = vmatpush1.msra.mxu0 0.0
  %164 = vmatprep.subr.mxu0 0.0
  %165 = vmatpush1.msra.mxu0 0.0
  %166 = vmatprep.subr.mxu0 0.0
  %167 = vmatpush1.msra.mxu0 0.0
  %168 = vmatprep.subr.mxu0 0.0
  %169 = vmatpush1.msra.mxu0 0.0
  %170 = vmatprep.subr.mxu0 0.0
  %171 = vmatpush1.msra.mxu0 0.0
  %172 = vmatprep.subr.mxu0 0.0
  %173 = vmatpush1.msra.mxu0 0.0
  %174 = vmatprep.subr.mxu0 0.0
  %175 = vmatpush1.msra.mxu0 0.0
  %176 = vmatprep.subr.mxu0 0.0
  %177 = vmatpush1.msra.mxu0 0.0
  %178 = vmatprep.subr.mxu0 0.0
  %179 = vmatpush1.msra.mxu0 0.0
  %180 = vmatprep.subr.mxu0 0.0
  %181 = vmatpush1.msra.mxu0 0.0
  %182 = vmatprep.subr.mxu0 0.0
  %183 = vmatpush1.msra.mxu0 0.0
  %184 = vmatprep.subr.mxu0 0.0
  %185 = vmatpush1.msra.mxu0 0.0
  %186 = vmatprep.subr.mxu0 0.0
  %187 = vmatpush1.msra.mxu0 0.0
  %188 = vmatprep.subr.mxu0 0.0
  %189 = vmatpush1.msra.mxu0 0.0
  %190 = vmatprep.subr.mxu0 0.0
  %191 = vmatpush1.msra.mxu0 0.0
  %192 = vmatprep.subr.mxu0 0.0
  %193 = vmatpush1.msra.mxu0 0.0
  %194 = vmatprep.subr.mxu0 0.0
  %195 = vmatpush1.msra.mxu0 0.0
  %196 = vmatprep.subr.mxu0 0.0
  %197 = vmatpush1.msra.mxu0 0.0
  %198 = vmatprep.subr.mxu0 0.0
  %199 = vmatpush1.msra.mxu0 0.0
  %200 = vmatprep.subr.mxu0 0.0
  %201 = vmatpush1.msra.mxu0 0.0
  %202 = vmatprep.subr.mxu0 0.0
  %203 = vmatpush1.msra.mxu0 0.0
  %204 = vmatprep.subr.mxu0 0.0
  %205 = vmatpush1.msra.mxu0 0.0
  %206 = vmatprep.subr.mxu0 0.0
  %207 = vmatpush1.msra.mxu0 0.0
  %208 = vmatprep.subr.mxu0 0.0
  %209 = vmatpush1.msra.mxu0 0.0
  %210 = vmatprep.subr.mxu0 0.0
  %211 = vmatpush1.msra.mxu0 0.0
  %212 = vmatprep.subr.mxu0 0.0
  %213 = vmatpush1.msra.mxu0 0.0
  %214 = vmatprep.subr.mxu0 0.0
  %215 = vmatpush1.msra.mxu0 0.0
  %216 = vmatprep.subr.mxu0 0.0
  %217 = vmatpush1.msra.mxu0 0.0
  %218 = vmatprep.subr.mxu0 0.0
  %219 = vmatpush1.msra.mxu0 0.0
  %220 = vmatprep.subr.mxu0 0.0
  %221 = vmatpush1.msra.mxu0 0.0
  %222 = vmatprep.subr.mxu0 0.0
  %223 = vmatpush1.msra.mxu0 0.0
  %224 = vmatprep.mubr.f32.mxu0 0.0
  %225 = vmatmul.mubr.f32.gmra.mrb[0].mxu0 %v149
  %v226 = vpop.f32.mrb[0].mxu0
  %v227 = vadd.f32 0.0, %v226
  %v228 = vpop.f32.mrb[0].mxu0
  %v229 = vadd.f32 0.0, %v228
  %230 = vmatprep.mubr.f32.mxu0 0.0
  %231 = vmatmul.mubr.f32.gmra.mrb[0].mxu0 %v152
  %v232 = vpop.f32.mrb[0].mxu0
  %v233 = vadd.f32 0.0, %v232
  %v234 = vpop.f32.mrb[0].mxu0
  %v235 = vadd.f32 0.0, %v234
  %236 = vmatprep.mubr.f32.mxu0 0.0
  %237 = vmatmul.mubr.f32.gmra.mrb[0].mxu0 %v155
  %v238 = vpop.f32.mrb[0].mxu0
  %v239 = vadd.f32 0.0, %v238
  %v240 = vpop.f32.mrb[0].mxu0
  %v241 = vadd.f32 0.0, %v240
  %242 = vmatprep.mubr.f32.mxu0 0.0
  %243 = vmatmul.mubr.f32.gmra.mrb[0].mxu0 %v158
  %v244 = vpop.f32.mrb[0].mxu0
  %v245 = vadd.f32 0.0, %v244
  %v246 = vpop.f32.mrb[0].mxu0
  %v247 = vadd.f32 0.0, %v246
  %248 = vdwg.mxu0
  %v249 = vmul.f32 %v20, %v20
  %v250 = vmul.f32 %v21, %v21
  %v251 = vmul.f32 %v22, %v22
  %v252 = vmul.f32 %v23, %v23
  %v253 = vmul.f32 %v24, %v24
  %v254 = vmul.f32 %v25, %v25
  %v255 = vmul.f32 %v26, %v26
  %v256 = vmul.f32 %v27, %v27
  %257 = vmatprep.subr.mxu0 0.0
  %258 = vmatpush1.msra.mxu0 %v28
  %259 = vmatprep.subr.mxu0 0.0
  %260 = vmatpush1.msra.mxu0 %v29
  %261 = vmatprep.subr.mxu0 0.0
  %262 = vmatpush1.msra.mxu0 %v30
  %263 = vmatprep.subr.mxu0 0.0
  %264 = vmatpush1.msra.mxu0 %v31
  %265 = vmatprep.subr.mxu0 0.0
  %266 = vmatpush1.msra.mxu0 %v32
  %267 = vmatprep.subr.mxu0 0.0
  %268 = vmatpush1.msra.mxu0 %v33
  %269 = vmatprep.subr.mxu0 0.0
  %270 = vmatpush1.msra.mxu0 %v34
  %271 = vmatprep.subr.mxu0 0.0
  %272 = vmatpush1.msra.mxu0 %v35
  %273 = vmatprep.subr.mxu0 0.0
  %274 = vmatpush1.msra.mxu0 %v36
  %275 = vmatprep.subr.mxu0 0.0
  %276 = vmatpush1.msra.mxu0 %v37
  %277 = vmatprep.subr.mxu0 0.0
  %278 = vmatpush1.msra.mxu0 %v38
  %279 = vmatprep.subr.mxu0 0.0
  %280 = vmatpush1.msra.mxu0 %v39
  %281 = vmatprep.subr.mxu0 0.0
  %282 = vmatpush1.msra.mxu0 %v40
  %283 = vmatprep.subr.mxu0 0.0
  %284 = vmatpush1.msra.mxu0 %v41
  %285 = vmatprep.subr.mxu0 0.0
  %286 = vmatpush1.msra.mxu0 %v42
  %287 = vmatprep.subr.mxu0 0.0
  %288 = vmatpush1.msra.mxu0 %v43
  %289 = vmatprep.subr.mxu0 0.0
  %290 = vmatpush1.msra.mxu0 %v44
  %291 = vmatprep.subr.mxu0 0.0
  %292 = vmatpush1.msra.mxu0 %v45
  %293 = vmatprep.subr.mxu0 0.0
  %294 = vmatpush1.msra.mxu0 %v46
  %295 = vmatprep.subr.mxu0 0.0
  %296 = vmatpush1.msra.mxu0 %v47
  %297 = vmatprep.subr.mxu0 0.0
  %298 = vmatpush1.msra.mxu0 %v48
  %299 = vmatprep.subr.mxu0 0.0
  %300 = vmatpush1.msra.mxu0 %v49
  %301 = vmatprep.subr.mxu0 0.0
  %302 = vmatpush1.msra.mxu0 %v50
  %303 = vmatprep.subr.mxu0 0.0
  %304 = vmatpush1.msra.mxu0 %v51
  %305 = vmatprep.subr.mxu0 0.0
  %306 = vmatpush1.msra.mxu0 %v52
  %307 = vmatprep.subr.mxu0 0.0
  %308 = vmatpush1.msra.mxu0 %v53
  %309 = vmatprep.subr.mxu0 0.0
  %310 = vmatpush1.msra.mxu0 %v54
  %311 = vmatprep.subr.mxu0 0.0
  %312 = vmatpush1.msra.mxu0 %v55
  %313 = vmatprep.subr.mxu0 0.0
  %314 = vmatpush1.msra.mxu0 %v56
  %315 = vmatprep.subr.mxu0 0.0
  %316 = vmatpush1.msra.mxu0 %v57
  %317 = vmatprep.subr.mxu0 0.0
  %318 = vmatpush1.msra.mxu0 %v58
  %319 = vmatprep.subr.mxu0 0.0
  %320 = vmatpush1.msra.mxu0 %v59
  %321 = vmatprep.mubr.f32.mxu0 %v250
  %322 = vmatmul.mubr.f32.gmra.mrb[0].mxu0 %v249
  %v323 = vpop.f32.mrb[0].mxu0
  %v324 = vadd.f32 0.0, %v323
  %v325 = vpop.f32.mrb[0].mxu0
  %326 = vmatprep.mubr.f32.mxu0 %v252
  %327 = vmatmul.mubr.f32.gmra.mrb[0].mxu0 %v251
  %v328 = vpop.f32.mrb[0].mxu0
  %v329 = vadd.f32 0.0, %v328
  %v330 = vpop.f32.mrb[0].mxu0
  %331 = vmatprep.mubr.f32.mxu0 %v254
  %332 = vmatmul.mubr.f32.gmra.mrb[0].mxu0 %v253
  %v333 = vpop.f32.mrb[0].mxu0
  %v334 = vadd.f32 0.0, %v333
  %v335 = vpop.f32.mrb[0].mxu0
  %336 = vmatprep.mubr.f32.mxu0 %v256
  %337 = vmatmul.mubr.f32.gmra.mrb[0].mxu0 %v255
  %v338 = vpop.f32.mrb[0].mxu0
  %v339 = vadd.f32 0.0, %v338
  %v340 = vpop.f32.mrb[0].mxu0
  %341 = vdwg.mxu0
  %v343 = vsel %vm147, %v324, 0
  %v346 = vsel %vm147, %v329, 0
  %v349 = vsel %vm147, %v334, 0
  %v352 = vsel %vm147, %v339, 0
  %354 = vmatprep.subr.mxu0 %v61
  %355 = vmatpush1.msra.mxu0 %v60
  %356 = vmatprep.subr.mxu0 0.0
  %357 = vmatpush1.msra.mxu0 0.0
  %358 = vmatprep.subr.mxu0 0.0
  %359 = vmatpush1.msra.mxu0 0.0
  %360 = vmatprep.subr.mxu0 0.0
  %361 = vmatpush1.msra.mxu0 0.0
  %362 = vmatprep.subr.mxu0 0.0
  %363 = vmatpush1.msra.mxu0 0.0
  %364 = vmatprep.subr.mxu0 0.0
  %365 = vmatpush1.msra.mxu0 0.0
  %366 = vmatprep.subr.mxu0 0.0
  %367 = vmatpush1.msra.mxu0 0.0
  %368 = vmatprep.subr.mxu0 0.0
  %369 = vmatpush1.msra.mxu0 0.0
  %370 = vmatprep.subr.mxu0 0.0
  %371 = vmatpush1.msra.mxu0 0.0
  %372 = vmatprep.subr.mxu0 0.0
  %373 = vmatpush1.msra.mxu0 0.0
  %374 = vmatprep.subr.mxu0 0.0
  %375 = vmatpush1.msra.mxu0 0.0
  %376 = vmatprep.subr.mxu0 0.0
  %377 = vmatpush1.msra.mxu0 0.0
  %378 = vmatprep.subr.mxu0 0.0
  %379 = vmatpush1.msra.mxu0 0.0
  %380 = vmatprep.subr.mxu0 0.0
  %381 = vmatpush1.msra.mxu0 0.0
  %382 = vmatprep.subr.mxu0 0.0
  %383 = vmatpush1.msra.mxu0 0.0
  %384 = vmatprep.subr.mxu0 0.0
  %385 = vmatpush1.msra.mxu0 0.0
  %386 = vmatprep.subr.mxu0 0.0
  %387 = vmatpush1.msra.mxu0 0.0
  %388 = vmatprep.subr.mxu0 0.0
  %389 = vmatpush1.msra.mxu0 0.0
  %390 = vmatprep.subr.mxu0 0.0
  %391 = vmatpush1.msra.mxu0 0.0
  %392 = vmatprep.subr.mxu0 0.0
  %393 = vmatpush1.msra.mxu0 0.0
  %394 = vmatprep.subr.mxu0 0.0
  %395 = vmatpush1.msra.mxu0 0.0
  %396 = vmatprep.subr.mxu0 0.0
  %397 = vmatpush1.msra.mxu0 0.0
  %398 = vmatprep.subr.mxu0 0.0
  %399 = vmatpush1.msra.mxu0 0.0
  %400 = vmatprep.subr.mxu0 0.0
  %401 = vmatpush1.msra.mxu0 0.0
  %402 = vmatprep.subr.mxu0 0.0
  %403 = vmatpush1.msra.mxu0 0.0
  %404 = vmatprep.subr.mxu0 0.0
  %405 = vmatpush1.msra.mxu0 0.0
  %406 = vmatprep.subr.mxu0 0.0
  %407 = vmatpush1.msra.mxu0 0.0
  %408 = vmatprep.subr.mxu0 0.0
  %409 = vmatpush1.msra.mxu0 0.0
  %410 = vmatprep.subr.mxu0 0.0
  %411 = vmatpush1.msra.mxu0 0.0
  %412 = vmatprep.subr.mxu0 0.0
  %413 = vmatpush1.msra.mxu0 0.0
  %414 = vmatprep.subr.mxu0 0.0
  %415 = vmatpush1.msra.mxu0 0.0
  %416 = vmatprep.subr.mxu0 0.0
  %417 = vmatpush1.msra.mxu0 0.0
  %418 = vmatprep.mubr.f32.mxu0 0.0
  %419 = vmatmul.mubr.f32.gmra.mrb[0].mxu0 %v343
  %v420 = vpop.f32.mrb[0].mxu0
  %v421 = vadd.f32 0.0, %v420
  %v422 = vpop.f32.mrb[0].mxu0
  %v423 = vadd.f32 0.0, %v422
  %424 = vmatprep.mubr.f32.mxu0 0.0
  %425 = vmatmul.mubr.f32.gmra.mrb[0].mxu0 %v346
  %v426 = vpop.f32.mrb[0].mxu0
  %v427 = vadd.f32 0.0, %v426
  %v428 = vpop.f32.mrb[0].mxu0
  %v429 = vadd.f32 0.0, %v428
  %430 = vmatprep.mubr.f32.mxu0 0.0
  %431 = vmatmul.mubr.f32.gmra.mrb[0].mxu0 %v349
  %v432 = vpop.f32.mrb[0].mxu0
  %v433 = vadd.f32 0.0, %v432
  %v434 = vpop.f32.mrb[0].mxu0
  %v435 = vadd.f32 0.0, %v434
  %436 = vmatprep.mubr.f32.mxu0 0.0
  %437 = vmatmul.mubr.f32.gmra.mrb[0].mxu0 %v352
  %v438 = vpop.f32.mrb[0].mxu0
  %v439 = vadd.f32 0.0, %v438
  %v440 = vpop.f32.mrb[0].mxu0
  %v441 = vadd.f32 0.0, %v440
  %442 = vdwg.mxu0
  %v443 = vmul.f32 %v227, %v227
  %v444 = vmul.f32 %v229, %v229
  %v445 = vmul.f32 %v233, %v233
  %v446 = vmul.f32 %v235, %v235
  %v447 = vmul.f32 %v239, %v239
  %v448 = vmul.f32 %v241, %v241
  %v449 = vmul.f32 %v245, %v245
  %v450 = vmul.f32 %v247, %v247
  %v451 = vsub.f32 %v421, %v443
  %v452 = vsub.f32 %v423, %v444
  %v453 = vsub.f32 %v427, %v445
  %v454 = vsub.f32 %v429, %v446
  %v455 = vsub.f32 %v433, %v447
  %v456 = vsub.f32 %v435, %v448
  %v457 = vsub.f32 %v439, %v449
  %v458 = vsub.f32 %v441, %v450
  %v459 = vmax.f32 %v451, 0.0
  %v460 = vmax.f32 %v452, 0.0
  %v461 = vmax.f32 %v453, 0.0
  %v462 = vmax.f32 %v454, 0.0
  %v463 = vmax.f32 %v455, 0.0
  %v464 = vmax.f32 %v456, 0.0
  %v465 = vmax.f32 %v457, 0.0
  %v466 = vmax.f32 %v458, 0.0
  %v467 = vsub.f32 %v20, %v227
  %v468 = vsub.f32 %v21, %v229
  %v469 = vsub.f32 %v22, %v233
  %v470 = vsub.f32 %v23, %v235
  %v471 = vsub.f32 %v24, %v239
  %v472 = vsub.f32 %v25, %v241
  %v473 = vsub.f32 %v26, %v245
  %v474 = vsub.f32 %v27, %v247
  %v475 = vadd.f32 %v459, 1e-05
  %v476 = vadd.f32 %v460, 1e-05
  %v477 = vadd.f32 %v461, 1e-05
  %v478 = vadd.f32 %v462, 1e-05
  %v479 = vadd.f32 %v463, 1e-05
  %v480 = vadd.f32 %v464, 1e-05
  %v481 = vadd.f32 %v465, 1e-05
  %v482 = vadd.f32 %v466, 1e-05
  %v483 = vrsqrt.pop %v475
  %v484 = vrsqrt.pop %v476
  %v485 = vrsqrt.pop %v477
  %v486 = vrsqrt.pop %v478
  %v487 = vrsqrt.pop %v479
  %v488 = vrsqrt.pop %v480
  %v489 = vrsqrt.pop %v481
  %v490 = vrsqrt.pop %v482
  %v491 = vmul.f32 %v467, %v483
  %v492 = vmul.f32 %v468, %v484
  %v493 = vmul.f32 %v469, %v485
  %v494 = vmul.f32 %v470, %v486
  %v495 = vmul.f32 %v471, %v487
  %v496 = vmul.f32 %v472, %v488
  %v497 = vmul.f32 %v473, %v489
  %v498 = vmul.f32 %v474, %v490
  %v499 = vld [vmem:[%s3] sm:$0xff]
  %v500 = vld [vmem:[%s3 + $0x8] sm:$0xff]
  %v501 = vld [vmem:[%s3 + $0x10] sm:$0xff]
  %v502 = vld [vmem:[%s3 + $0x18] sm:$0xff]
  %v503 = vld [vmem:[%s3 + $0x20] sm:$0xff]
  %v504 = vld [vmem:[%s3 + $0x28] sm:$0xff]
  %v505 = vld [vmem:[%s3 + $0x30] sm:$0xff]
  %v506 = vld [vmem:[%s3 + $0x38] sm:$0xff]
  %v507 = vld [vmem:[%s3 + $0x40] sm:$0xff]
  %v508 = vld [vmem:[%s3 + $0x48] sm:$0xff]
  %v509 = vld [vmem:[%s3 + $0x50] sm:$0xff]
  %v510 = vld [vmem:[%s3 + $0x58] sm:$0xff]
  %v511 = vld [vmem:[%s3 + $0x60] sm:$0xff]
  %v512 = vld [vmem:[%s3 + $0x68] sm:$0xff]
  %v513 = vld [vmem:[%s3 + $0x70] sm:$0xff]
  %v514 = vld [vmem:[%s3 + $0x78] sm:$0xff]
  %v515 = vld [vmem:[%s3 + $0x80] sm:$0xff]
  %v516 = vld [vmem:[%s3 + $0x88] sm:$0xff]
  %v517 = vld [vmem:[%s3 + $0x90] sm:$0xff]
  %v518 = vld [vmem:[%s3 + $0x98] sm:$0xff]
  %v519 = vld [vmem:[%s3 + $0xa0] sm:$0xff]
  %v520 = vld [vmem:[%s3 + $0xa8] sm:$0xff]
  %v521 = vld [vmem:[%s3 + $0xb0] sm:$0xff]
  %v522 = vld [vmem:[%s3 + $0xb8] sm:$0xff]
  %v523 = vld [vmem:[%s3 + $0xc0] sm:$0xff]
  %v524 = vld [vmem:[%s3 + $0xc8] sm:$0xff]
  %v525 = vld [vmem:[%s3 + $0xd0] sm:$0xff]
  %v526 = vld [vmem:[%s3 + $0xd8] sm:$0xff]
  %v527 = vld [vmem:[%s3 + $0xe0] sm:$0xff]
  %v528 = vld [vmem:[%s3 + $0xe8] sm:$0xff]
  %v529 = vld [vmem:[%s3 + $0xf0] sm:$0xff]
  %v530 = vld [vmem:[%s3 + $0xf8] sm:$0xff]
  %v531 = vunpack.c.l.bf16 %v499
  %v532 = vunpack.c.h.bf16 %v499
  %v533 = vunpack.c.l.bf16 %v500
  %v534 = vunpack.c.h.bf16 %v500
  %v535 = vunpack.c.l.bf16 %v501
  %v536 = vunpack.c.h.bf16 %v501
  %v537 = vunpack.c.l.bf16 %v502
  %v538 = vunpack.c.h.bf16 %v502
  %v539 = vunpack.c.l.bf16 %v503
  %v540 = vunpack.c.h.bf16 %v503
  %v541 = vunpack.c.l.bf16 %v504
  %v542 = vunpack.c.h.bf16 %v504
  %v543 = vunpack.c.l.bf16 %v505
  %v544 = vunpack.c.h.bf16 %v505
  %v545 = vunpack.c.l.bf16 %v506
  %v546 = vunpack.c.h.bf16 %v506
  %v547 = vunpack.c.l.bf16 %v507
  %v548 = vunpack.c.h.bf16 %v507
  %v549 = vunpack.c.l.bf16 %v508
  %v550 = vunpack.c.h.bf16 %v508
  %v551 = vunpack.c.l.bf16 %v509
  %v552 = vunpack.c.h.bf16 %v509
  %v553 = vunpack.c.l.bf16 %v510
  %v554 = vunpack.c.h.bf16 %v510
  %v555 = vunpack.c.l.bf16 %v511
  %v556 = vunpack.c.h.bf16 %v511
  %v557 = vunpack.c.l.bf16 %v512
  %v558 = vunpack.c.h.bf16 %v512
  %v559 = vunpack.c.l.bf16 %v513
  %v560 = vunpack.c.h.bf16 %v513
  %v561 = vunpack.c.l.bf16 %v514
  %v562 = vunpack.c.h.bf16 %v514
  %v563 = vunpack.c.l.bf16 %v515
  %v564 = vunpack.c.h.bf16 %v515
  %v565 = vunpack.c.l.bf16 %v516
  %v566 = vunpack.c.h.bf16 %v516
  %v567 = vunpack.c.l.bf16 %v517
  %v568 = vunpack.c.h.bf16 %v517
  %v569 = vunpack.c.l.bf16 %v518
  %v570 = vunpack.c.h.bf16 %v518
  %v571 = vunpack.c.l.bf16 %v519
  %v572 = vunpack.c.h.bf16 %v519
  %v573 = vunpack.c.l.bf16 %v520
  %v574 = vunpack.c.h.bf16 %v520
  %v575 = vunpack.c.l.bf16 %v521
  %v576 = vunpack.c.h.bf16 %v521
  %v577 = vunpack.c.l.bf16 %v522
  %v578 = vunpack.c.h.bf16 %v522
  %v579 = vunpack.c.l.bf16 %v523
  %v580 = vunpack.c.h.bf16 %v523
  %v581 = vunpack.c.l.bf16 %v524
  %v582 = vunpack.c.h.bf16 %v524
  %v583 = vunpack.c.l.bf16 %v525
  %v584 = vunpack.c.h.bf16 %v525
  %v585 = vunpack.c.l.bf16 %v526
  %v586 = vunpack.c.h.bf16 %v526
  %v587 = vunpack.c.l.bf16 %v527
  %v588 = vunpack.c.h.bf16 %v527
  %v589 = vunpack.c.l.bf16 %v528
  %v590 = vunpack.c.h.bf16 %v528
  %v591 = vunpack.c.l.bf16 %v529
  %v592 = vunpack.c.h.bf16 %v529
  %v593 = vunpack.c.l.bf16 %v530
  %v594 = vunpack.c.h.bf16 %v530
  %595 = vmatprep.subr.mxu0 %v532
  %596 = vmatpush1.msra.mxu0 %v531
  %597 = vmatprep.subr.mxu0 %v534
  %598 = vmatpush1.msra.mxu0 %v533
  %599 = vmatprep.subr.mxu0 %v536
  %600 = vmatpush1.msra.mxu0 %v535
  %601 = vmatprep.subr.mxu0 %v538
  %602 = vmatpush1.msra.mxu0 %v537
  %603 = vmatprep.subr.mxu0 %v540
  %604 = vmatpush1.msra.mxu0 %v539
  %605 = vmatprep.subr.mxu0 %v542
  %606 = vmatpush1.msra.mxu0 %v541
  %607 = vmatprep.subr.mxu0 %v544
  %608 = vmatpush1.msra.mxu0 %v543
  %609 = vmatprep.subr.mxu0 %v546
  %610 = vmatpush1.msra.mxu0 %v545
  %611 = vmatprep.subr.mxu0 %v548
  %612 = vmatpush1.msra.mxu0 %v547
  %613 = vmatprep.subr.mxu0 %v550
  %614 = vmatpush1.msra.mxu0 %v549
  %615 = vmatprep.subr.mxu0 %v552
  %616 = vmatpush1.msra.mxu0 %v551
  %617 = vmatprep.subr.mxu0 %v554
  %618 = vmatpush1.msra.mxu0 %v553
  %619 = vmatprep.subr.mxu0 %v556
  %620 = vmatpush1.msra.mxu0 %v555
  %621 = vmatprep.subr.mxu0 %v558
  %622 = vmatpush1.msra.mxu0 %v557
  %623 = vmatprep.subr.mxu0 %v560
  %624 = vmatpush1.msra.mxu0 %v559
  %625 = vmatprep.subr.mxu0 %v562
  %626 = vmatpush1.msra.mxu0 %v561
  %627 = vmatprep.subr.mxu0 %v564
  %628 = vmatpush1.msra.mxu0 %v563
  %629 = vmatprep.subr.mxu0 %v566
  %630 = vmatpush1.msra.mxu0 %v565
  %631 = vmatprep.subr.mxu0 %v568
  %632 = vmatpush1.msra.mxu0 %v567
  %633 = vmatprep.subr.mxu0 %v570
  %634 = vmatpush1.msra.mxu0 %v569
  %635 = vmatprep.subr.mxu0 %v572
  %636 = vmatpush1.msra.mxu0 %v571
  %637 = vmatprep.subr.mxu0 %v574
  %638 = vmatpush1.msra.mxu0 %v573
  %639 = vmatprep.subr.mxu0 %v576
  %640 = vmatpush1.msra.mxu0 %v575
  %641 = vmatprep.subr.mxu0 %v578
  %642 = vmatpush1.msra.mxu0 %v577
  %643 = vmatprep.subr.mxu0 %v580
  %644 = vmatpush1.msra.mxu0 %v579
  %645 = vmatprep.subr.mxu0 %v582
  %646 = vmatpush1.msra.mxu0 %v581
  %647 = vmatprep.subr.mxu0 %v584
  %648 = vmatpush1.msra.mxu0 %v583
  %649 = vmatprep.subr.mxu0 %v586
  %650 = vmatpush1.msra.mxu0 %v585
  %651 = vmatprep.subr.mxu0 %v588
  %652 = vmatpush1.msra.mxu0 %v587
  %653 = vmatprep.subr.mxu0 %v590
  %654 = vmatpush1.msra.mxu0 %v589
  %655 = vmatprep.subr.mxu0 %v592
  %656 = vmatpush1.msra.mxu0 %v591
  %657 = vmatprep.subr.mxu0 %v594
  %658 = vmatpush1.msra.mxu0 %v593
  %659 = vmatprep.mubr.f32.mxu0 %v492
  %660 = vmatmul.mubr.f32.gmra.mrb[0].mxu0 %v491
  %v661 = vpop.f32.mrb[0].mxu0
  %v662 = vadd.f32 0.0, %v661
  %v663 = vpop.f32.mrb[0].mxu0
  %v664 = vadd.f32 0.0, %v663
  %665 = vmatprep.mubr.f32.mxu0 %v494
  %666 = vmatmul.mubr.f32.gmra.mrb[0].mxu0 %v493
  %v667 = vpop.f32.mrb[0].mxu0
  %v668 = vadd.f32 0.0, %v667
  %v669 = vpop.f32.mrb[0].mxu0
  %v670 = vadd.f32 0.0, %v669
  %671 = vmatprep.mubr.f32.mxu0 %v496
  %672 = vmatmul.mubr.f32.gmra.mrb[0].mxu0 %v495
  %v673 = vpop.f32.mrb[0].mxu0
  %v674 = vadd.f32 0.0, %v673
  %v675 = vpop.f32.mrb[0].mxu0
  %v676 = vadd.f32 0.0, %v675
  %677 = vmatprep.mubr.f32.mxu0 %v498
  %678 = vmatmul.mubr.f32.gmra.mrb[0].mxu0 %v497
  %v679 = vpop.f32.mrb[0].mxu0
  %v680 = vadd.f32 0.0, %v679
  %v681 = vpop.f32.mrb[0].mxu0
  %v682 = vadd.f32 0.0, %v681
  %683 = vdwg.mxu0
  %v684 = vadd.f32 %v20, %v662
  %v685 = vadd.f32 %v21, %v664
  %v686 = vadd.f32 %v22, %v668
  %v687 = vadd.f32 %v23, %v670
  %v688 = vadd.f32 %v24, %v674
  %v689 = vadd.f32 %v25, %v676
  %v690 = vadd.f32 %v26, %v680
  %v691 = vadd.f32 %v27, %v682
  %v692 = vld [vmem:[%s4] sm:$0x3]
  %v694 = vlaneseq
  %v695 = vshrl.u32 %v694, 7
  %v696 = vsub.s32 0, %v695
  %v697 = vrot.slane %v692, %v696
  %v698 = vlaneseq
  %v699 = vshrl.u32 %v698, 7
  %v700 = vsub.s32 1, %v699
  %v701 = vrot.slane %v692, %v700
  %v704 = vadd.f32 %v684, %v697
  %v705 = vadd.f32 %v685, %v701
  %v706 = vadd.f32 %v686, %v697
  %v707 = vadd.f32 %v687, %v701
  %v708 = vadd.f32 %v688, %v697
  %v709 = vadd.f32 %v689, %v701
  %v710 = vadd.f32 %v690, %v697
  %v711 = vadd.f32 %v691, %v701
  %712 = vst [vmem:[%s5] sm:$0xff] %v704
  %713 = vst [vmem:[%s5 + $0x8] sm:$0xff] %v705
  %714 = vst [vmem:[%s5 + $0x10] sm:$0xff] %v706
  %715 = vst [vmem:[%s5 + $0x18] sm:$0xff] %v707
  %716 = vst [vmem:[%s5 + $0x20] sm:$0xff] %v708
  %717 = vst [vmem:[%s5 + $0x28] sm:$0xff] %v709
  %718 = vst [vmem:[%s5 + $0x30] sm:$0xff] %v710
  %719 = vst [vmem:[%s5 + $0x38] sm:$0xff] %v711
  // Predicated region
  $region22: #{permutator_block.3} parent=0 // pred_check
    _
  $region23: #{permutator_block.3} parent=0 // pred_check_branch
    %721 = sbr.rel (0) target = $region25
  $region24: #{permutator_block.3} parent=0 // pred_region
    _
  $region25: #{permutator_block.3} parent=0 // pred_fallthru
    _
  // Predicated region
  $region26: #{permutator_block.3} parent=0 // pred_check
    _
  $region27: #{permutator_block.3} parent=0 // pred_check_branch
    %723 = sbr.rel (0) target = $region29
  $region28: #{permutator_block.3} parent=0 // pred_region
    _
  $region29: #{permutator_block.3} parent=0 // pred_fallthru
    _

// kernel: permutator_block.5
$region0: #{permutator_block.5}
  #allocation0 [shape = 'u32[]', space=smem, size = 0x4, offset = 0x4, fixed_abs, tag = 'smem constant byte address 0x4 - core index']
  #allocation1 [shape = 'u32[144,128]{1,0:T(1,128)}', space=vmem, size = 0x12000, scoped, tag = 'internal scratch']
  %s0 = inlined_call_operand.vmem [shape: f32[64,128], index: 0, kind: input, shape index: {}, may-alias: {0,7}]
  %s1 = inlined_call_operand.vmem [shape: f32[128,8], index: 1, kind: input, shape index: {}]
  %s2 = inlined_call_operand.vmem [shape: f32[8,128], index: 2, kind: input, shape index: {}]
  %s3 = inlined_call_operand.vmem [shape: bf16[128,512], index: 3, kind: input, shape index: {}]
  %s4 = inlined_call_operand.vmem [shape: f32[1,512], index: 4, kind: input, shape index: {}]
  %s5 = inlined_call_operand.vmem [shape: bf16[512,128], index: 5, kind: input, shape index: {}]
  %s6 = inlined_call_operand.vmem [shape: f32[1,128], index: 6, kind: input, shape index: {}]
  %s7 = inlined_call_operand.vmem [shape: f32[64,128], index: 7, kind: output, shape index: {}, may-alias: {0,7}]
  %s8 = sld [smem:[#allocation0]]
  $region38: #{permutator_block.5} parent=0
    _
  %s10 = ssub.s32 1, %s8
  %s11 = scalar_select 0, %s10, %s8
  // Predicated region
  $region2: #{permutator_block.5} parent=0 // pred_check
    _
  $region3: #{permutator_block.5} parent=0 // pred_check_branch
    %13 = sbr.rel (0) target = $region5
  $region4: #{permutator_block.5} parent=0 // pred_region
    _
  $region5: #{permutator_block.5} parent=0 // pred_fallthru
    _
  // Predicated region
  $region6: #{permutator_block.5} parent=0 // pred_check
    _
  $region7: #{permutator_block.5} parent=0 // pred_check_branch
    %15 = sbr.rel (0) target = $region9
  $region8: #{permutator_block.5} parent=0 // pred_region
    _
  $region9: #{permutator_block.5} parent=0 // pred_fallthru
    _
  // Predicated region
  $region10: #{permutator_block.5} parent=0 // pred_check
    _
  $region11: #{permutator_block.5} parent=0 // pred_check_branch
    %17 = sbr.rel (0) target = $region13
  $region12: #{permutator_block.5} parent=0 // pred_region
    _
  $region13: #{permutator_block.5} parent=0 // pred_fallthru
    _
  // Predicated region
  $region14: #{permutator_block.5} parent=0 // pred_check
    _
  $region15: #{permutator_block.5} parent=0 // pred_check_branch
    %19 = sbr.rel (0) target = $region17
  $region16: #{permutator_block.5} parent=0 // pred_region
    _
  $region17: #{permutator_block.5} parent=0 // pred_fallthru
    _
  // Predicated region
  $region18: #{permutator_block.5} parent=0 // pred_check
    _
  $region19: #{permutator_block.5} parent=0 // pred_check_branch
    %21 = sbr.rel (0) target = $region21
  $region20: #{permutator_block.5} parent=0 // pred_region
    _
  $region21: #{permutator_block.5} parent=0 // pred_fallthru
    _
  // Predicated region
  $region22: #{permutator_block.5} parent=0 // pred_check
    _
  $region23: #{permutator_block.5} parent=0 // pred_check_branch
    %23 = sbr.rel (0) target = $region25
  $region24: #{permutator_block.5} parent=0 // pred_region
    _
  $region25: #{permutator_block.5} parent=0 // pred_fallthru
    _
  // Predicated region
  $region26: #{permutator_block.5} parent=0 // pred_check
    _
  $region27: #{permutator_block.5} parent=0 // pred_check_branch
    %25 = sbr.rel (0) target = $region29
  $region28: #{permutator_block.5} parent=0 // pred_region
    _
  $region29: #{permutator_block.5} parent=0 // pred_fallthru
    _
  %v26 = vld [vmem:[%s0] sm:$0xff]
  %v27 = vld [vmem:[%s0 + $0x8] sm:$0xff]
  %v28 = vld [vmem:[%s0 + $0x10] sm:$0xff]
  %v29 = vld [vmem:[%s0 + $0x18] sm:$0xff]
  %v30 = vld [vmem:[%s0 + $0x20] sm:$0xff]
  %v31 = vld [vmem:[%s0 + $0x28] sm:$0xff]
  %v32 = vld [vmem:[%s0 + $0x30] sm:$0xff]
  %v33 = vld [vmem:[%s0 + $0x38] sm:$0xff]
  %v34 = vld [vmem:[%s1] sm:$0xff]
  %v35 = vld [vmem:[%s1 + $0x8] sm:$0xff]
  %v36 = vld [vmem:[%s1 + $0x10] sm:$0xff]
  %v37 = vld [vmem:[%s1 + $0x18] sm:$0xff]
  %v38 = vld [vmem:[%s1 + $0x20] sm:$0xff]
  %v39 = vld [vmem:[%s1 + $0x28] sm:$0xff]
  %v40 = vld [vmem:[%s1 + $0x30] sm:$0xff]
  %v41 = vld [vmem:[%s1 + $0x38] sm:$0xff]
  %v42 = vld [vmem:[%s1 + $0x40] sm:$0xff]
  %v43 = vld [vmem:[%s1 + $0x48] sm:$0xff]
  %v44 = vld [vmem:[%s1 + $0x50] sm:$0xff]
  %v45 = vld [vmem:[%s1 + $0x58] sm:$0xff]
  %v46 = vld [vmem:[%s1 + $0x60] sm:$0xff]
  %v47 = vld [vmem:[%s1 + $0x68] sm:$0xff]
  %v48 = vld [vmem:[%s1 + $0x70] sm:$0xff]
  %v49 = vld [vmem:[%s1 + $0x78] sm:$0xff]
  %v50 = vld [vmem:[%s2] sm:$0xff]
  %51 = vmatprep.subr.mxu0 0.0
  %52 = vmatpush1.msra.mxu0 %v34
  %53 = vmatprep.subr.mxu0 0.0
  %54 = vmatpush1.msra.mxu0 %v35
  %55 = vmatprep.subr.mxu0 0.0
  %56 = vmatpush1.msra.mxu0 %v36
  %57 = vmatprep.subr.mxu0 0.0
  %58 = vmatpush1.msra.mxu0 %v37
  %59 = vmatprep.subr.mxu0 0.0
  %60 = vmatpush1.msra.mxu0 %v38
  %61 = vmatprep.subr.mxu0 0.0
  %62 = vmatpush1.msra.mxu0 %v39
  %63 = vmatprep.subr.mxu0 0.0
  %64 = vmatpush1.msra.mxu0 %v40
  %65 = vmatprep.subr.mxu0 0.0
  %66 = vmatpush1.msra.mxu0 %v41
  %67 = vmatprep.subr.mxu0 0.0
  %68 = vmatpush1.msra.mxu0 %v42
  %69 = vmatprep.subr.mxu0 0.0
  %70 = vmatpush1.msra.mxu0 %v43
  %71 = vmatprep.subr.mxu0 0.0
  %72 = vmatpush1.msra.mxu0 %v44
  %73 = vmatprep.subr.mxu0 0.0
  %74 = vmatpush1.msra.mxu0 %v45
  %75 = vmatprep.subr.mxu0 0.0
  %76 = vmatpush1.msra.mxu0 %v46
  %77 = vmatprep.subr.mxu0 0.0
  %78 = vmatpush1.msra.mxu0 %v47
  %79 = vmatprep.subr.mxu0 0.0
  %80 = vmatpush1.msra.mxu0 %v48
  %81 = vmatprep.subr.mxu0 0.0
  %82 = vmatpush1.msra.mxu0 %v49
  %83 = vmatprep.subr.mxu0 0.0
  %84 = vmatpush1.msra.mxu0 0.0
  %85 = vmatprep.subr.mxu0 0.0
  %86 = vmatpush1.msra.mxu0 0.0
  %87 = vmatprep.subr.mxu0 0.0
  %88 = vmatpush1.msra.mxu0 0.0
  %89 = vmatprep.subr.mxu0 0.0
  %90 = vmatpush1.msra.mxu0 0.0
  %91 = vmatprep.subr.mxu0 0.0
  %92 = vmatpush1.msra.mxu0 0.0
  %93 = vmatprep.subr.mxu0 0.0
  %94 = vmatpush1.msra.mxu0 0.0
  %95 = vmatprep.subr.mxu0 0.0
  %96 = vmatpush1.msra.mxu0 0.0
  %97 = vmatprep.subr.mxu0 0.0
  %98 = vmatpush1.msra.mxu0 0.0
  %99 = vmatprep.subr.mxu0 0.0
  %100 = vmatpush1.msra.mxu0 0.0
  %101 = vmatprep.subr.mxu0 0.0
  %102 = vmatpush1.msra.mxu0 0.0
  %103 = vmatprep.subr.mxu0 0.0
  %104 = vmatpush1.msra.mxu0 0.0
  %105 = vmatprep.subr.mxu0 0.0
  %106 = vmatpush1.msra.mxu0 0.0
  %107 = vmatprep.subr.mxu0 0.0
  %108 = vmatpush1.msra.mxu0 0.0
  %109 = vmatprep.subr.mxu0 0.0
  %110 = vmatpush1.msra.mxu0 0.0
  %111 = vmatprep.subr.mxu0 0.0
  %112 = vmatpush1.msra.mxu0 0.0
  %113 = vmatprep.subr.mxu0 0.0
  %114 = vmatpush1.msra.mxu0 0.0
  %115 = vmatprep.mubr.f32.mxu0 0.0
  %116 = vmatmul.mubr.f32.gmra.mrb[0].mxu0 %v26
  %v117 = vpop.f32.mrb[0].mxu0
  %v118 = vadd.f32 0.0, %v117
  %v119 = vpop.f32.mrb[0].mxu0
  %120 = vmatprep.mubr.f32.mxu0 0.0
  %121 = vmatmul.mubr.f32.gmra.mrb[0].mxu0 %v27
  %v122 = vpop.f32.mrb[0].mxu0
  %v123 = vadd.f32 0.0, %v122
  %v124 = vpop.f32.mrb[0].mxu0
  %125 = vmatprep.mubr.f32.mxu0 0.0
  %126 = vmatmul.mubr.f32.gmra.mrb[0].mxu0 %v28
  %v127 = vpop.f32.mrb[0].mxu0
  %v128 = vadd.f32 0.0, %v127
  %v129 = vpop.f32.mrb[0].mxu0
  %130 = vmatprep.mubr.f32.mxu0 0.0
  %131 = vmatmul.mubr.f32.gmra.mrb[0].mxu0 %v29
  %v132 = vpop.f32.mrb[0].mxu0
  %v133 = vadd.f32 0.0, %v132
  %v134 = vpop.f32.mrb[0].mxu0
  %135 = vmatprep.mubr.f32.mxu0 0.0
  %136 = vmatmul.mubr.f32.gmra.mrb[0].mxu0 %v30
  %v137 = vpop.f32.mrb[0].mxu0
  %v138 = vadd.f32 0.0, %v137
  %v139 = vpop.f32.mrb[0].mxu0
  %140 = vmatprep.mubr.f32.mxu0 0.0
  %141 = vmatmul.mubr.f32.gmra.mrb[0].mxu0 %v31
  %v142 = vpop.f32.mrb[0].mxu0
  %v143 = vadd.f32 0.0, %v142
  %v144 = vpop.f32.mrb[0].mxu0
  %145 = vmatprep.mubr.f32.mxu0 0.0
  %146 = vmatmul.mubr.f32.gmra.mrb[0].mxu0 %v32
  %v147 = vpop.f32.mrb[0].mxu0
  %v148 = vadd.f32 0.0, %v147
  %v149 = vpop.f32.mrb[0].mxu0
  %150 = vmatprep.mubr.f32.mxu0 0.0
  %151 = vmatmul.mubr.f32.gmra.mrb[0].mxu0 %v33
  %v152 = vpop.f32.mrb[0].mxu0
  %v153 = vadd.f32 0.0, %v152
  %v154 = vpop.f32.mrb[0].mxu0
  %155 = vdwg.mxu0
  %vm156 = vcmask 64512
  %v158 = vsel %vm156, %v118, 0
  %v161 = vsel %vm156, %v123, 0
  %v164 = vsel %vm156, %v128, 0
  %v167 = vsel %vm156, %v133, 0
  %v170 = vsel %vm156, %v138, 0
  %v173 = vsel %vm156, %v143, 0
  %v176 = vsel %vm156, %v148, 0
  %v179 = vsel %vm156, %v153, 0
  %181 = vmatprep.subr.mxu0 0.0
  %182 = vmatpush1.msra.mxu0 %v50
  %183 = vmatprep.subr.mxu0 0.0
  %184 = vmatpush1.msra.mxu0 0.0
  %185 = vmatprep.subr.mxu0 0.0
  %186 = vmatpush1.msra.mxu0 0.0
  %187 = vmatprep.subr.mxu0 0.0
  %188 = vmatpush1.msra.mxu0 0.0
  %189 = vmatprep.subr.mxu0 0.0
  %190 = vmatpush1.msra.mxu0 0.0
  %191 = vmatprep.subr.mxu0 0.0
  %192 = vmatpush1.msra.mxu0 0.0
  %193 = vmatprep.subr.mxu0 0.0
  %194 = vmatpush1.msra.mxu0 0.0
  %195 = vmatprep.subr.mxu0 0.0
  %196 = vmatpush1.msra.mxu0 0.0
  %197 = vmatprep.subr.mxu0 0.0
  %198 = vmatpush1.msra.mxu0 0.0
  %199 = vmatprep.subr.mxu0 0.0
  %200 = vmatpush1.msra.mxu0 0.0
  %201 = vmatprep.subr.mxu0 0.0
  %202 = vmatpush1.msra.mxu0 0.0
  %203 = vmatprep.subr.mxu0 0.0
  %204 = vmatpush1.msra.mxu0 0.0
  %205 = vmatprep.subr.mxu0 0.0
  %206 = vmatpush1.msra.mxu0 0.0
  %207 = vmatprep.subr.mxu0 0.0
  %208 = vmatpush1.msra.mxu0 0.0
  %209 = vmatprep.subr.mxu0 0.0
  %210 = vmatpush1.msra.mxu0 0.0
  %211 = vmatprep.subr.mxu0 0.0
  %212 = vmatpush1.msra.mxu0 0.0
  %213 = vmatprep.subr.mxu0 0.0
  %214 = vmatpush1.msra.mxu0 0.0
  %215 = vmatprep.subr.mxu0 0.0
  %216 = vmatpush1.msra.mxu0 0.0
  %217 = vmatprep.subr.mxu0 0.0
  %218 = vmatpush1.msra.mxu0 0.0
  %219 = vmatprep.subr.mxu0 0.0
  %220 = vmatpush1.msra.mxu0 0.0
  %221 = vmatprep.subr.mxu0 0.0
  %222 = vmatpush1.msra.mxu0 0.0
  %223 = vmatprep.subr.mxu0 0.0
  %224 = vmatpush1.msra.mxu0 0.0
  %225 = vmatprep.subr.mxu0 0.0
  %226 = vmatpush1.msra.mxu0 0.0
  %227 = vmatprep.subr.mxu0 0.0
  %228 = vmatpush1.msra.mxu0 0.0
  %229 = vmatprep.subr.mxu0 0.0
  %230 = vmatpush1.msra.mxu0 0.0
  %231 = vmatprep.subr.mxu0 0.0
  %232 = vmatpush1.msra.mxu0 0.0
  %233 = vmatprep.subr.mxu0 0.0
  %234 = vmatpush1.msra.mxu0 0.0
  %235 = vmatprep.subr.mxu0 0.0
  %236 = vmatpush1.msra.mxu0 0.0
  %237 = vmatprep.subr.mxu0 0.0
  %238 = vmatpush1.msra.mxu0 0.0
  %239 = vmatprep.subr.mxu0 0.0
  %240 = vmatpush1.msra.mxu0 0.0
  %241 = vmatprep.subr.mxu0 0.0
  %242 = vmatpush1.msra.mxu0 0.0
  %243 = vmatprep.subr.mxu0 0.0
  %244 = vmatpush1.msra.mxu0 0.0
  %245 = vmatprep.mubr.f32.mxu0 0.0
  %246 = vmatmul.mubr.f32.gmra.mrb[0].mxu0 %v158
  %v247 = vpop.f32.mrb[0].mxu0
  %v248 = vadd.f32 0.0, %v247
  %v249 = vpop.f32.mrb[0].mxu0
  %250 = vmatprep.mubr.f32.mxu0 0.0
  %251 = vmatmul.mubr.f32.gmra.mrb[0].mxu0 %v161
  %v252 = vpop.f32.mrb[0].mxu0
  %v253 = vadd.f32 0.0, %v252
  %v254 = vpop.f32.mrb[0].mxu0
  %255 = vmatprep.mubr.f32.mxu0 0.0
  %256 = vmatmul.mubr.f32.gmra.mrb[0].mxu0 %v164
  %v257 = vpop.f32.mrb[0].mxu0
  %v258 = vadd.f32 0.0, %v257
  %v259 = vpop.f32.mrb[0].mxu0
  %260 = vmatprep.mubr.f32.mxu0 0.0
  %261 = vmatmul.mubr.f32.gmra.mrb[0].mxu0 %v167
  %v262 = vpop.f32.mrb[0].mxu0
  %v263 = vadd.f32 0.0, %v262
  %v264 = vpop.f32.mrb[0].mxu0
  %265 = vmatprep.mubr.f32.mxu0 0.0
  %266 = vmatmul.mubr.f32.gmra.mrb[0].mxu0 %v170
  %v267 = vpop.f32.mrb[0].mxu0
  %v268 = vadd.f32 0.0, %v267
  %v269 = vpop.f32.mrb[0].mxu0
  %270 = vmatprep.mubr.f32.mxu0 0.0
  %271 = vmatmul.mubr.f32.gmra.mrb[0].mxu0 %v173
  %v272 = vpop.f32.mrb[0].mxu0
  %v273 = vadd.f32 0.0, %v272
  %v274 = vpop.f32.mrb[0].mxu0
  %275 = vmatprep.mubr.f32.mxu0 0.0
  %276 = vmatmul.mubr.f32.gmra.mrb[0].mxu0 %v176
  %v277 = vpop.f32.mrb[0].mxu0
  %v278 = vadd.f32 0.0, %v277
  %v279 = vpop.f32.mrb[0].mxu0
  %280 = vmatprep.mubr.f32.mxu0 0.0
  %281 = vmatmul.mubr.f32.gmra.mrb[0].mxu0 %v179
  %v282 = vpop.f32.mrb[0].mxu0
  %v283 = vadd.f32 0.0, %v282
  %v284 = vpop.f32.mrb[0].mxu0
  %285 = vdwg.mxu0
  %v286 = vmul.f32 %v26, %v26
  %v287 = vmul.f32 %v27, %v27
  %v288 = vmul.f32 %v28, %v28
  %v289 = vmul.f32 %v29, %v29
  %v290 = vmul.f32 %v30, %v30
  %v291 = vmul.f32 %v31, %v31
  %v292 = vmul.f32 %v32, %v32
  %v293 = vmul.f32 %v33, %v33
  %294 = vmatprep.subr.mxu0 0.0
  %295 = vmatpush1.msra.mxu0 %v34
  %296 = vmatprep.subr.mxu0 0.0
  %297 = vmatpush1.msra.mxu0 %v35
  %298 = vmatprep.subr.mxu0 0.0
  %299 = vmatpush1.msra.mxu0 %v36
  %300 = vmatprep.subr.mxu0 0.0
  %301 = vmatpush1.msra.mxu0 %v37
  %302 = vmatprep.subr.mxu0 0.0
  %303 = vmatpush1.msra.mxu0 %v38
  %304 = vmatprep.subr.mxu0 0.0
  %305 = vmatpush1.msra.mxu0 %v39
  %306 = vmatprep.subr.mxu0 0.0
  %307 = vmatpush1.msra.mxu0 %v40
  %308 = vmatprep.subr.mxu0 0.0
  %309 = vmatpush1.msra.mxu0 %v41
  %310 = vmatprep.subr.mxu0 0.0
  %311 = vmatpush1.msra.mxu0 %v42
  %312 = vmatprep.subr.mxu0 0.0
  %313 = vmatpush1.msra.mxu0 %v43
  %314 = vmatprep.subr.mxu0 0.0
  %315 = vmatpush1.msra.mxu0 %v44
  %316 = vmatprep.subr.mxu0 0.0
  %317 = vmatpush1.msra.mxu0 %v45
  %318 = vmatprep.subr.mxu0 0.0
  %319 = vmatpush1.msra.mxu0 %v46
  %320 = vmatprep.subr.mxu0 0.0
  %321 = vmatpush1.msra.mxu0 %v47
  %322 = vmatprep.subr.mxu0 0.0
  %323 = vmatpush1.msra.mxu0 %v48
  %324 = vmatprep.subr.mxu0 0.0
  %325 = vmatpush1.msra.mxu0 %v49
  %326 = vmatprep.subr.mxu0 0.0
  %327 = vmatpush1.msra.mxu0 0.0
  %328 = vmatprep.subr.mxu0 0.0
  %329 = vmatpush1.msra.mxu0 0.0
  %330 = vmatprep.subr.mxu0 0.0
  %331 = vmatpush1.msra.mxu0 0.0
  %332 = vmatprep.subr.mxu0 0.0
  %333 = vmatpush1.msra.mxu0 0.0
  %334 = vmatprep.subr.mxu0 0.0
  %335 = vmatpush1.msra.mxu0 0.0
  %336 = vmatprep.subr.mxu0 0.0
  %337 = vmatpush1.msra.mxu0 0.0
  %338 = vmatprep.subr.mxu0 0.0
  %339 = vmatpush1.msra.mxu0 0.0
  %340 = vmatprep.subr.mxu0 0.0
  %341 = vmatpush1.msra.mxu0 0.0
  %342 = vmatprep.subr.mxu0 0.0
  %343 = vmatpush1.msra.mxu0 0.0
  %344 = vmatprep.subr.mxu0 0.0
  %345 = vmatpush1.msra.mxu0 0.0
  %346 = vmatprep.subr.mxu0 0.0
  %347 = vmatpush1.msra.mxu0 0.0
  %348 = vmatprep.subr.mxu0 0.0
  %349 = vmatpush1.msra.mxu0 0.0
  %350 = vmatprep.subr.mxu0 0.0
  %351 = vmatpush1.msra.mxu0 0.0
  %352 = vmatprep.subr.mxu0 0.0
  %353 = vmatpush1.msra.mxu0 0.0
  %354 = vmatprep.subr.mxu0 0.0
  %355 = vmatpush1.msra.mxu0 0.0
  %356 = vmatprep.subr.mxu0 0.0
  %357 = vmatpush1.msra.mxu0 0.0
  %358 = vmatprep.mubr.f32.mxu0 0.0
  %359 = vmatmul.mubr.f32.gmra.mrb[0].mxu0 %v286
  %v360 = vpop.f32.mrb[0].mxu0
  %v361 = vadd.f32 0.0, %v360
  %v362 = vpop.f32.mrb[0].mxu0
  %363 = vmatprep.mubr.f32.mxu0 0.0
  %364 = vmatmul.mubr.f32.gmra.mrb[0].mxu0 %v287
  %v365 = vpop.f32.mrb[0].mxu0
  %v366 = vadd.f32 0.0, %v365
  %v367 = vpop.f32.mrb[0].mxu0
  %368 = vmatprep.mubr.f32.mxu0 0.0
  %369 = vmatmul.mubr.f32.gmra.mrb[0].mxu0 %v288
  %v370 = vpop.f32.mrb[0].mxu0
  %v371 = vadd.f32 0.0, %v370
  %v372 = vpop.f32.mrb[0].mxu0
  %373 = vmatprep.mubr.f32.mxu0 0.0
  %374 = vmatmul.mubr.f32.gmra.mrb[0].mxu0 %v289
  %v375 = vpop.f32.mrb[0].mxu0
  %v376 = vadd.f32 0.0, %v375
  %v377 = vpop.f32.mrb[0].mxu0
  %378 = vmatprep.mubr.f32.mxu0 0.0
  %379 = vmatmul.mubr.f32.gmra.mrb[0].mxu0 %v290
  %v380 = vpop.f32.mrb[0].mxu0
  %v381 = vadd.f32 0.0, %v380
  %v382 = vpop.f32.mrb[0].mxu0
  %383 = vmatprep.mubr.f32.mxu0 0.0
  %384 = vmatmul.mubr.f32.gmra.mrb[0].mxu0 %v291
  %v385 = vpop.f32.mrb[0].mxu0
  %v386 = vadd.f32 0.0, %v385
  %v387 = vpop.f32.mrb[0].mxu0
  %388 = vmatprep.mubr.f32.mxu0 0.0
  %389 = vmatmul.mubr.f32.gmra.mrb[0].mxu0 %v292
  %v390 = vpop.f32.mrb[0].mxu0
  %v391 = vadd.f32 0.0, %v390
  %v392 = vpop.f32.mrb[0].mxu0
  %393 = vmatprep.mubr.f32.mxu0 0.0
  %394 = vmatmul.mubr.f32.gmra.mrb[0].mxu0 %v293
  %v395 = vpop.f32.mrb[0].mxu0
  %v396 = vadd.f32 0.0, %v395
  %v397 = vpop.f32.mrb[0].mxu0
  %398 = vdwg.mxu0
  %v400 = vsel %vm156, %v361, 0
  %v403 = vsel %vm156, %v366, 0
  %v406 = vsel %vm156, %v371, 0
  %v409 = vsel %vm156, %v376, 0
  %v412 = vsel %vm156, %v381, 0
  %v415 = vsel %vm156, %v386, 0
  %v418 = vsel %vm156, %v391, 0
  %v421 = vsel %vm156, %v396, 0
  %423 = vmatprep.subr.mxu0 0.0
  %424 = vmatpush1.msra.mxu0 %v50
  %425 = vmatprep.subr.mxu0 0.0
  %426 = vmatpush1.msra.mxu0 0.0
  %427 = vmatprep.subr.mxu0 0.0
  %428 = vmatpush1.msra.mxu0 0.0
  %429 = vmatprep.subr.mxu0 0.0
  %430 = vmatpush1.msra.mxu0 0.0
  %431 = vmatprep.subr.mxu0 0.0
  %432 = vmatpush1.msra.mxu0 0.0
  %433 = vmatprep.subr.mxu0 0.0
  %434 = vmatpush1.msra.mxu0 0.0
  %435 = vmatprep.subr.mxu0 0.0
  %436 = vmatpush1.msra.mxu0 0.0
  %437 = vmatprep.subr.mxu0 0.0
  %438 = vmatpush1.msra.mxu0 0.0
  %439 = vmatprep.subr.mxu0 0.0
  %440 = vmatpush1.msra.mxu0 0.0
  %441 = vmatprep.subr.mxu0 0.0
  %442 = vmatpush1.msra.mxu0 0.0
  %443 = vmatprep.subr.mxu0 0.0
  %444 = vmatpush1.msra.mxu0 0.0
  %445 = vmatprep.subr.mxu0 0.0
  %446 = vmatpush1.msra.mxu0 0.0
  %447 = vmatprep.subr.mxu0 0.0
  %448 = vmatpush1.msra.mxu0 0.0
  %449 = vmatprep.subr.mxu0 0.0
  %450 = vmatpush1.msra.mxu0 0.0
  %451 = vmatprep.subr.mxu0 0.0
  %452 = vmatpush1.msra.mxu0 0.0
  %453 = vmatprep.subr.mxu0 0.0
  %454 = vmatpush1.msra.mxu0 0.0
  %455 = vmatprep.subr.mxu0 0.0
  %456 = vmatpush1.msra.mxu0 0.0
  %457 = vmatprep.subr.mxu0 0.0
  %458 = vmatpush1.msra.mxu0 0.0
  %459 = vmatprep.subr.mxu0 0.0
  %460 = vmatpush1.msra.mxu0 0.0
  %461 = vmatprep.subr.mxu0 0.0
  %462 = vmatpush1.msra.mxu0 0.0
  %463 = vmatprep.subr.mxu0 0.0
  %464 = vmatpush1.msra.mxu0 0.0
  %465 = vmatprep.subr.mxu0 0.0
  %466 = vmatpush1.msra.mxu0 0.0
  %467 = vmatprep.subr.mxu0 0.0
  %468 = vmatpush1.msra.mxu0 0.0
  %469 = vmatprep.subr.mxu0 0.0
  %470 = vmatpush1.msra.mxu0 0.0
  %471 = vmatprep.subr.mxu0 0.0
  %472 = vmatpush1.msra.mxu0 0.0
  %473 = vmatprep.subr.mxu0 0.0
  %474 = vmatpush1.msra.mxu0 0.0
  %475 = vmatprep.subr.mxu0 0.0
  %476 = vmatpush1.msra.mxu0 0.0
  %477 = vmatprep.subr.mxu0 0.0
  %478 = vmatpush1.msra.mxu0 0.0
  %479 = vmatprep.subr.mxu0 0.0
  %480 = vmatpush1.msra.mxu0 0.0
  %481 = vmatprep.subr.mxu0 0.0
  %482 = vmatpush1.msra.mxu0 0.0
  %483 = vmatprep.subr.mxu0 0.0
  %484 = vmatpush1.msra.mxu0 0.0
  %485 = vmatprep.subr.mxu0 0.0
  %486 = vmatpush1.msra.mxu0 0.0
  %487 = vmatprep.mubr.f32.mxu0 0.0
  %488 = vmatmul.mubr.f32.gmra.mrb[0].mxu0 %v400
  %v489 = vpop.f32.mrb[0].mxu0
  %v490 = vadd.f32 0.0, %v489
  %v491 = vpop.f32.mrb[0].mxu0
  %492 = vmatprep.mubr.f32.mxu0 0.0
  %493 = vmatmul.mubr.f32.gmra.mrb[0].mxu0 %v403
  %v494 = vpop.f32.mrb[0].mxu0
  %v495 = vadd.f32 0.0, %v494
  %v496 = vpop.f32.mrb[0].mxu0
  %497 = vmatprep.mubr.f32.mxu0 0.0
  %498 = vmatmul.mubr.f32.gmra.mrb[0].mxu0 %v406
  %v499 = vpop.f32.mrb[0].mxu0
  %v500 = vadd.f32 0.0, %v499
  %v501 = vpop.f32.mrb[0].mxu0
  %502 = vmatprep.mubr.f32.mxu0 0.0
  %503 = vmatmul.mubr.f32.gmra.mrb[0].mxu0 %v409
  %v504 = vpop.f32.mrb[0].mxu0
  %v505 = vadd.f32 0.0, %v504
  %v506 = vpop.f32.mrb[0].mxu0
  %507 = vmatprep.mubr.f32.mxu0 0.0
  %508 = vmatmul.mubr.f32.gmra.mrb[0].mxu0 %v412
  %v509 = vpop.f32.mrb[0].mxu0
  %v510 = vadd.f32 0.0, %v509
  %v511 = vpop.f32.mrb[0].mxu0
  %512 = vmatprep.mubr.f32.mxu0 0.0
  %513 = vmatmul.mubr.f32.gmra.mrb[0].mxu0 %v415
  %v514 = vpop.f32.mrb[0].mxu0
  %v515 = vadd.f32 0.0, %v514
  %v516 = vpop.f32.mrb[0].mxu0
  %517 = vmatprep.mubr.f32.mxu0 0.0
  %518 = vmatmul.mubr.f32.gmra.mrb[0].mxu0 %v418
  %v519 = vpop.f32.mrb[0].mxu0
  %v520 = vadd.f32 0.0, %v519
  %v521 = vpop.f32.mrb[0].mxu0
  %522 = vmatprep.mubr.f32.mxu0 0.0
  %523 = vmatmul.mubr.f32.gmra.mrb[0].mxu0 %v421
  %v524 = vpop.f32.mrb[0].mxu0
  %v525 = vadd.f32 0.0, %v524
  %v526 = vpop.f32.mrb[0].mxu0
  %527 = vdwg.mxu0
  %v528 = vmul.f32 %v248, %v248
  %v529 = vmul.f32 %v253, %v253
  %v530 = vmul.f32 %v258, %v258
  %v531 = vmul.f32 %v263, %v263
  %v532 = vmul.f32 %v268, %v268
  %v533 = vmul.f32 %v273, %v273
  %v534 = vmul.f32 %v278, %v278
  %v535 = vmul.f32 %v283, %v283
  %v536 = vsub.f32 %v490, %v528
  %v537 = vsub.f32 %v495, %v529
  %v538 = vsub.f32 %v500, %v530
  %v539 = vsub.f32 %v505, %v531
  %v540 = vsub.f32 %v510, %v532
  %v541 = vsub.f32 %v515, %v533
  %v542 = vsub.f32 %v520, %v534
  %v543 = vsub.f32 %v525, %v535
  %v544 = vmax.f32 %v536, 0.0
  %v545 = vmax.f32 %v537, 0.0
  %v546 = vmax.f32 %v538, 0.0
  %v547 = vmax.f32 %v539, 0.0
  %v548 = vmax.f32 %v540, 0.0
  %v549 = vmax.f32 %v541, 0.0
  %v550 = vmax.f32 %v542, 0.0
  %v551 = vmax.f32 %v543, 0.0
  %v552 = vsub.f32 %v26, %v248
  %v553 = vsub.f32 %v27, %v253
  %v554 = vsub.f32 %v28, %v258
  %v555 = vsub.f32 %v29, %v263
  %v556 = vsub.f32 %v30, %v268
  %v557 = vsub.f32 %v31, %v273
  %v558 = vsub.f32 %v32, %v278
  %v559 = vsub.f32 %v33, %v283
  %v560 = vadd.f32 %v544, 1e-05
  %v561 = vadd.f32 %v545, 1e-05
  %v562 = vadd.f32 %v546, 1e-05
  %v563 = vadd.f32 %v547, 1e-05
  %v564 = vadd.f32 %v548, 1e-05
  %v565 = vadd.f32 %v549, 1e-05
  %v566 = vadd.f32 %v550, 1e-05
  %v567 = vadd.f32 %v551, 1e-05
  %v568 = vrsqrt.pop %v560
  %v569 = vrsqrt.pop %v561
  %v570 = vrsqrt.pop %v562
  %v571 = vrsqrt.pop %v563
  %v572 = vrsqrt.pop %v564
  %v573 = vrsqrt.pop %v565
  %v574 = vrsqrt.pop %v566
  %v575 = vrsqrt.pop %v567
  %v576 = vmul.f32 %v552, %v568
  %v577 = vmul.f32 %v553, %v569
  %v578 = vmul.f32 %v554, %v570
  %v579 = vmul.f32 %v555, %v571
  %v580 = vmul.f32 %v556, %v572
  %v581 = vmul.f32 %v557, %v573
  %v582 = vmul.f32 %v558, %v574
  %v583 = vmul.f32 %v559, %v575
  %v584 = vld [vmem:[%s3] sm:$0xff]
  %v585 = vld [vmem:[%s3 + $0x8] sm:$0xff]
  %v586 = vld [vmem:[%s3 + $0x10] sm:$0xff]
  %v587 = vld [vmem:[%s3 + $0x18] sm:$0xff]
  %v588 = vld [vmem:[%s3 + $0x20] sm:$0xff]
  %v589 = vld [vmem:[%s3 + $0x28] sm:$0xff]
  %v590 = vld [vmem:[%s3 + $0x30] sm:$0xff]
  %v591 = vld [vmem:[%s3 + $0x38] sm:$0xff]
  %v592 = vld [vmem:[%s3 + $0x40] sm:$0xff]
  %v593 = vld [vmem:[%s3 + $0x48] sm:$0xff]
  %v594 = vld [vmem:[%s3 + $0x50] sm:$0xff]
  %v595 = vld [vmem:[%s3 + $0x58] sm:$0xff]
  %v596 = vld [vmem:[%s3 + $0x60] sm:$0xff]
  %v597 = vld [vmem:[%s3 + $0x68] sm:$0xff]
  %v598 = vld [vmem:[%s3 + $0x70] sm:$0xff]
  %v599 = vld [vmem:[%s3 + $0x78] sm:$0xff]
  %v600 = vld [vmem:[%s3 + $0x80] sm:$0xff]
  %v601 = vld [vmem:[%s3 + $0x88] sm:$0xff]
  %v602 = vld [vmem:[%s3 + $0x90] sm:$0xff]
  %v603 = vld [vmem:[%s3 + $0x98] sm:$0xff]
  %v604 = vld [vmem:[%s3 + $0xa0] sm:$0xff]
  %v605 = vld [vmem:[%s3 + $0xa8] sm:$0xff]
  %v606 = vld [vmem:[%s3 + $0xb0] sm:$0xff]
  %v607 = vld [vmem:[%s3 + $0xb8] sm:$0xff]
  %v608 = vld [vmem:[%s3 + $0xc0] sm:$0xff]
  %v609 = vld [vmem:[%s3 + $0xc8] sm:$0xff]
  %v610 = vld [vmem:[%s3 + $0xd0] sm:$0xff]
  %v611 = vld [vmem:[%s3 + $0xd8] sm:$0xff]
  %v612 = vld [vmem:[%s3 + $0xe0] sm:$0xff]
  %v613 = vld [vmem:[%s3 + $0xe8] sm:$0xff]
  %v614 = vld [vmem:[%s3 + $0xf0] sm:$0xff]
  %v615 = vld [vmem:[%s3 + $0xf8] sm:$0xff]
  %v616 = vunpack.c.l.bf16 %v584
  %v617 = vunpack.c.h.bf16 %v584
  %v618 = vunpack.c.l.bf16 %v585
  %v619 = vunpack.c.h.bf16 %v585
  %v620 = vunpack.c.l.bf16 %v586
  %v621 = vunpack.c.h.bf16 %v586
  %v622 = vunpack.c.l.bf16 %v587
  %v623 = vunpack.c.h.bf16 %v587
  %v624 = vunpack.c.l.bf16 %v588
  %v625 = vunpack.c.h.bf16 %v588
  %v626 = vunpack.c.l.bf16 %v589
  %v627 = vunpack.c.h.bf16 %v589
  %v628 = vunpack.c.l.bf16 %v590
  %v629 = vunpack.c.h.bf16 %v590
  %v630 = vunpack.c.l.bf16 %v591
  %v631 = vunpack.c.h.bf16 %v591
  %v632 = vunpack.c.l.bf16 %v592
  %v633 = vunpack.c.h.bf16 %v592
  %v634 = vunpack.c.l.bf16 %v593
  %v635 = vunpack.c.h.bf16 %v593
  %v636 = vunpack.c.l.bf16 %v594
  %v637 = vunpack.c.h.bf16 %v594
  %v638 = vunpack.c.l.bf16 %v595
  %v639 = vunpack.c.h.bf16 %v595
  %v640 = vunpack.c.l.bf16 %v596
  %v641 = vunpack.c.h.bf16 %v596
  %v642 = vunpack.c.l.bf16 %v597
  %v643 = vunpack.c.h.bf16 %v597
  %v644 = vunpack.c.l.bf16 %v598
  %v645 = vunpack.c.h.bf16 %v598
  %v646 = vunpack.c.l.bf16 %v599
  %v647 = vunpack.c.h.bf16 %v599
  %v648 = vunpack.c.l.bf16 %v600
  %v649 = vunpack.c.h.bf16 %v600
  %v650 = vunpack.c.l.bf16 %v601
  %v651 = vunpack.c.h.bf16 %v601
  %v652 = vunpack.c.l.bf16 %v602
  %v653 = vunpack.c.h.bf16 %v602
  %v654 = vunpack.c.l.bf16 %v603
  %v655 = vunpack.c.h.bf16 %v603
  %v656 = vunpack.c.l.bf16 %v604
  %v657 = vunpack.c.h.bf16 %v604
  %v658 = vunpack.c.l.bf16 %v605
  %v659 = vunpack.c.h.bf16 %v605
  %v660 = vunpack.c.l.bf16 %v606
  %v661 = vunpack.c.h.bf16 %v606
  %v662 = vunpack.c.l.bf16 %v607
  %v663 = vunpack.c.h.bf16 %v607
  %v664 = vunpack.c.l.bf16 %v608
  %v665 = vunpack.c.h.bf16 %v608
  %v666 = vunpack.c.l.bf16 %v609
  %v667 = vunpack.c.h.bf16 %v609
  %v668 = vunpack.c.l.bf16 %v610
  %v669 = vunpack.c.h.bf16 %v610
  %v670 = vunpack.c.l.bf16 %v611
  %v671 = vunpack.c.h.bf16 %v611
  %v672 = vunpack.c.l.bf16 %v612
  %v673 = vunpack.c.h.bf16 %v612
  %v674 = vunpack.c.l.bf16 %v613
  %v675 = vunpack.c.h.bf16 %v613
  %v676 = vunpack.c.l.bf16 %v614
  %v677 = vunpack.c.h.bf16 %v614
  %v678 = vunpack.c.l.bf16 %v615
  %v679 = vunpack.c.h.bf16 %v615
  %v680 = vld [vmem:[%s4] sm:$0xf]
  %v682 = vlaneseq
  %v683 = vshrl.u32 %v682, 7
  %v684 = vsub.s32 0, %v683
  %v685 = vrot.slane %v680, %v684
  %v686 = vlaneseq
  %v687 = vshrl.u32 %v686, 7
  %v688 = vsub.s32 1, %v687
  %v689 = vrot.slane %v680, %v688
  %v690 = vlaneseq
  %v691 = vshrl.u32 %v690, 7
  %v692 = vsub.s32 2, %v691
  %v693 = vrot.slane %v680, %v692
  %v694 = vlaneseq
  %v695 = vshrl.u32 %v694, 7
  %v696 = vsub.s32 3, %v695
  %v697 = vrot.slane %v680, %v696
  %702 = vmatprep.subr.mxu0 %v617
  %703 = vmatpush1.msra.mxu0 %v616
  %704 = vmatprep.subr.mxu0 %v621
  %705 = vmatpush1.msra.mxu0 %v620
  %706 = vmatprep.subr.mxu0 %v625
  %707 = vmatpush1.msra.mxu0 %v624
  %708 = vmatprep.subr.mxu0 %v629
  %709 = vmatpush1.msra.mxu0 %v628
  %710 = vmatprep.subr.mxu0 %v633
  %711 = vmatpush1.msra.mxu0 %v632
  %712 = vmatprep.subr.mxu0 %v637
  %713 = vmatpush1.msra.mxu0 %v636
  %714 = vmatprep.subr.mxu0 %v641
  %715 = vmatpush1.msra.mxu0 %v640
  %716 = vmatprep.subr.mxu0 %v645
  %717 = vmatpush1.msra.mxu0 %v644
  %718 = vmatprep.subr.mxu0 %v649
  %719 = vmatpush1.msra.mxu0 %v648
  %720 = vmatprep.subr.mxu0 %v653
  %721 = vmatpush1.msra.mxu0 %v652
  %722 = vmatprep.subr.mxu0 %v657
  %723 = vmatpush1.msra.mxu0 %v656
  %724 = vmatprep.subr.mxu0 %v661
  %725 = vmatpush1.msra.mxu0 %v660
  %726 = vmatprep.subr.mxu0 %v665
  %727 = vmatpush1.msra.mxu0 %v664
  %728 = vmatprep.subr.mxu0 %v669
  %729 = vmatpush1.msra.mxu0 %v668
  %730 = vmatprep.subr.mxu0 %v673
  %731 = vmatpush1.msra.mxu0 %v672
  %732 = vmatprep.subr.mxu0 %v677
  %733 = vmatpush1.msra.mxu0 %v676
  %734 = vmatprep.subr.mxu0 0.0
  %735 = vmatpush1.msra.mxu0 0.0
  %736 = vmatprep.subr.mxu0 0.0
  %737 = vmatpush1.msra.mxu0 0.0
  %738 = vmatprep.subr.mxu0 0.0
  %739 = vmatpush1.msra.mxu0 0.0
  %740 = vmatprep.subr.mxu0 0.0
  %741 = vmatpush1.msra.mxu0 0.0
  %742 = vmatprep.subr.mxu0 0.0
  %743 = vmatpush1.msra.mxu0 0.0
  %744 = vmatprep.subr.mxu0 0.0
  %745 = vmatpush1.msra.mxu0 0.0
  %746 = vmatprep.subr.mxu0 0.0
  %747 = vmatpush1.msra.mxu0 0.0
  %748 = vmatprep.subr.mxu0 0.0
  %749 = vmatpush1.msra.mxu0 0.0
  %750 = vmatprep.subr.mxu0 0.0
  %751 = vmatpush1.msra.mxu0 0.0
  %752 = vmatprep.subr.mxu0 0.0
  %753 = vmatpush1.msra.mxu0 0.0
  %754 = vmatprep.subr.mxu0 0.0
  %755 = vmatpush1.msra.mxu0 0.0
  %756 = vmatprep.subr.mxu0 0.0
  %757 = vmatpush1.msra.mxu0 0.0
  %758 = vmatprep.subr.mxu0 0.0
  %759 = vmatpush1.msra.mxu0 0.0
  %760 = vmatprep.subr.mxu0 0.0
  %761 = vmatpush1.msra.mxu0 0.0
  %762 = vmatprep.subr.mxu0 0.0
  %763 = vmatpush1.msra.mxu0 0.0
  %764 = vmatprep.subr.mxu0 0.0
  %765 = vmatpush1.msra.mxu0 0.0
  %766 = vmatprep.mubr.f32.mxu0 0.0
  %767 = vmatmul.mubr.f32.gmra.mrb[0].mxu0 %v576
  %v768 = vpop.f32.mrb[0].mxu0
  %v769 = vadd.f32 %v685, %v768
  %v770 = vpop.f32.mrb[0].mxu0
  %v771 = vadd.f32 %v689, %v770
  %772 = vmatprep.mubr.f32.mxu0 0.0
  %773 = vmatmul.mubr.f32.gmra.mrb[0].mxu0 %v577
  %v774 = vpop.f32.mrb[0].mxu0
  %v775 = vadd.f32 %v685, %v774
  %v776 = vpop.f32.mrb[0].mxu0
  %v777 = vadd.f32 %v689, %v776
  %778 = vmatprep.mubr.f32.mxu0 0.0
  %779 = vmatmul.mubr.f32.gmra.mrb[0].mxu0 %v578
  %v780 = vpop.f32.mrb[0].mxu0
  %v781 = vadd.f32 %v685, %v780
  %v782 = vpop.f32.mrb[0].mxu0
  %v783 = vadd.f32 %v689, %v782
  %784 = vmatprep.mubr.f32.mxu0 0.0
  %785 = vmatmul.mubr.f32.gmra.mrb[0].mxu0 %v579
  %v786 = vpop.f32.mrb[0].mxu0
  %v787 = vadd.f32 %v685, %v786
  %v788 = vpop.f32.mrb[0].mxu0
  %v789 = vadd.f32 %v689, %v788
  %790 = vmatprep.mubr.f32.mxu0 0.0
  %791 = vmatmul.mubr.f32.gmra.mrb[0].mxu0 %v580
  %v792 = vpop.f32.mrb[0].mxu0
  %v793 = vadd.f32 %v685, %v792
  %v794 = vpop.f32.mrb[0].mxu0
  %v795 = vadd.f32 %v689, %v794
  %796 = vmatprep.mubr.f32.mxu0 0.0
  %797 = vmatmul.mubr.f32.gmra.mrb[0].mxu0 %v581
  %v798 = vpop.f32.mrb[0].mxu0
  %v799 = vadd.f32 %v685, %v798
  %v800 = vpop.f32.mrb[0].mxu0
  %v801 = vadd.f32 %v689, %v800
  %802 = vmatprep.mubr.f32.mxu0 0.0
  %803 = vmatmul.mubr.f32.gmra.mrb[0].mxu0 %v582
  %v804 = vpop.f32.mrb[0].mxu0
  %v805 = vadd.f32 %v685, %v804
  %v806 = vpop.f32.mrb[0].mxu0
  %v807 = vadd.f32 %v689, %v806
  %808 = vmatprep.mubr.f32.mxu0 0.0
  %809 = vmatmul.mubr.f32.gmra.mrb[0].mxu0 %v583
  %v810 = vpop.f32.mrb[0].mxu0
  %v811 = vadd.f32 %v685, %v810
  %v812 = vpop.f32.mrb[0].mxu0
  %v813 = vadd.f32 %v689, %v812
  %814 = vdwg.mxu0
  %815 = vmatprep.subr.mxu0 %v619
  %816 = vmatpush1.msra.mxu0 %v618
  %817 = vmatprep.subr.mxu0 %v623
  %818 = vmatpush1.msra.mxu0 %v622
  %819 = vmatprep.subr.mxu0 %v627
  %820 = vmatpush1.msra.mxu0 %v626
  %821 = vmatprep.subr.mxu0 %v631
  %822 = vmatpush1.msra.mxu0 %v630
  %823 = vmatprep.subr.mxu0 %v635
  %824 = vmatpush1.msra.mxu0 %v634
  %825 = vmatprep.subr.mxu0 %v639
  %826 = vmatpush1.msra.mxu0 %v638
  %827 = vmatprep.subr.mxu0 %v643
  %828 = vmatpush1.msra.mxu0 %v642
  %829 = vmatprep.subr.mxu0 %v647
  %830 = vmatpush1.msra.mxu0 %v646
  %831 = vmatprep.subr.mxu0 %v651
  %832 = vmatpush1.msra.mxu0 %v650
  %833 = vmatprep.subr.mxu0 %v655
  %834 = vmatpush1.msra.mxu0 %v654
  %835 = vmatprep.subr.mxu0 %v659
  %836 = vmatpush1.msra.mxu0 %v658
  %837 = vmatprep.subr.mxu0 %v663
  %838 = vmatpush1.msra.mxu0 %v662
  %839 = vmatprep.subr.mxu0 %v667
  %840 = vmatpush1.msra.mxu0 %v666
  %841 = vmatprep.subr.mxu0 %v671
  %842 = vmatpush1.msra.mxu0 %v670
  %843 = vmatprep.subr.mxu0 %v675
  %844 = vmatpush1.msra.mxu0 %v674
  %845 = vmatprep.subr.mxu0 %v679
  %846 = vmatpush1.msra.mxu0 %v678
  %847 = vmatprep.subr.mxu0 0.0
  %848 = vmatpush1.msra.mxu0 0.0
  %849 = vmatprep.subr.mxu0 0.0
  %850 = vmatpush1.msra.mxu0 0.0
  %851 = vmatprep.subr.mxu0 0.0
  %852 = vmatpush1.msra.mxu0 0.0
  %853 = vmatprep.subr.mxu0 0.0
  %854 = vmatpush1.msra.mxu0 0.0
  %855 = vmatprep.subr.mxu0 0.0
  %856 = vmatpush1.msra.mxu0 0.0
  %857 = vmatprep.subr.mxu0 0.0
  %858 = vmatpush1.msra.mxu0 0.0
  %859 = vmatprep.subr.mxu0 0.0
  %860 = vmatpush1.msra.mxu0 0.0
  %861 = vmatprep.subr.mxu0 0.0
  %862 = vmatpush1.msra.mxu0 0.0
  %863 = vmatprep.subr.mxu0 0.0
  %864 = vmatpush1.msra.mxu0 0.0
  %865 = vmatprep.subr.mxu0 0.0
  %866 = vmatpush1.msra.mxu0 0.0
  %867 = vmatprep.subr.mxu0 0.0
  %868 = vmatpush1.msra.mxu0 0.0
  %869 = vmatprep.subr.mxu0 0.0
  %870 = vmatpush1.msra.mxu0 0.0
  %871 = vmatprep.subr.mxu0 0.0
  %872 = vmatpush1.msra.mxu0 0.0
  %873 = vmatprep.subr.mxu0 0.0
  %874 = vmatpush1.msra.mxu0 0.0
  %875 = vmatprep.subr.mxu0 0.0
  %876 = vmatpush1.msra.mxu0 0.0
  %877 = vmatprep.subr.mxu0 0.0
  %878 = vmatpush1.msra.mxu0 0.0
  %879 = vmatprep.mubr.f32.mxu0 0.0
  %880 = vmatmul.mubr.f32.gmra.mrb[0].mxu0 %v576
  %v881 = vpop.f32.mrb[0].mxu0
  %v882 = vadd.f32 %v693, %v881
  %v883 = vpop.f32.mrb[0].mxu0
  %v884 = vadd.f32 %v697, %v883
  %885 = vmatprep.mubr.f32.mxu0 0.0
  %886 = vmatmul.mubr.f32.gmra.mrb[0].mxu0 %v577
  %v887 = vpop.f32.mrb[0].mxu0
  %v888 = vadd.f32 %v693, %v887
  %v889 = vpop.f32.mrb[0].mxu0
  %v890 = vadd.f32 %v697, %v889
  %891 = vmatprep.mubr.f32.mxu0 0.0
  %892 = vmatmul.mubr.f32.gmra.mrb[0].mxu0 %v578
  %v893 = vpop.f32.mrb[0].mxu0
  %v894 = vadd.f32 %v693, %v893
  %v895 = vpop.f32.mrb[0].mxu0
  %v896 = vadd.f32 %v697, %v895
  %897 = vmatprep.mubr.f32.mxu0 0.0
  %898 = vmatmul.mubr.f32.gmra.mrb[0].mxu0 %v579
  %v899 = vpop.f32.mrb[0].mxu0
  %v900 = vadd.f32 %v693, %v899
  %v901 = vpop.f32.mrb[0].mxu0
  %v902 = vadd.f32 %v697, %v901
  %903 = vmatprep.mubr.f32.mxu0 0.0
  %904 = vmatmul.mubr.f32.gmra.mrb[0].mxu0 %v580
  %v905 = vpop.f32.mrb[0].mxu0
  %v906 = vadd.f32 %v693, %v905
  %v907 = vpop.f32.mrb[0].mxu0
  %v908 = vadd.f32 %v697, %v907
  %909 = vmatprep.mubr.f32.mxu0 0.0
  %910 = vmatmul.mubr.f32.gmra.mrb[0].mxu0 %v581
  %v911 = vpop.f32.mrb[0].mxu0
  %v912 = vadd.f32 %v693, %v911
  %v913 = vpop.f32.mrb[0].mxu0
  %v914 = vadd.f32 %v697, %v913
  %915 = vmatprep.mubr.f32.mxu0 0.0
  %916 = vmatmul.mubr.f32.gmra.mrb[0].mxu0 %v582
  %v917 = vpop.f32.mrb[0].mxu0
  %v918 = vadd.f32 %v693, %v917
  %v919 = vpop.f32.mrb[0].mxu0
  %v920 = vadd.f32 %v697, %v919
  %921 = vmatprep.mubr.f32.mxu0 0.0
  %922 = vmatmul.mubr.f32.gmra.mrb[0].mxu0 %v583
  %v923 = vpop.f32.mrb[0].mxu0
  %v924 = vadd.f32 %v693, %v923
  %v925 = vpop.f32.mrb[0].mxu0
  %v926 = vadd.f32 %v697, %v925
  %927 = vdwg.mxu0
  %v928 = vmul.f32 %v769, 0.5
  %v929 = vmul.f32 %v771, 0.5
  %v930 = vmul.f32 %v882, 0.5
  %v931 = vmul.f32 %v884, 0.5
  %v932 = vmul.f32 %v775, 0.5
  %v933 = vmul.f32 %v777, 0.5
  %v934 = vmul.f32 %v888, 0.5
  %v935 = vmul.f32 %v890, 0.5
  %v936 = vmul.f32 %v781, 0.5
  %v937 = vmul.f32 %v783, 0.5
  %v938 = vmul.f32 %v894, 0.5
  %v939 = vmul.f32 %v896, 0.5
  %v940 = vmul.f32 %v787, 0.5
  %v941 = vmul.f32 %v789, 0.5
  %v942 = vmul.f32 %v900, 0.5
  %v943 = vmul.f32 %v902, 0.5
  %v944 = vmul.f32 %v793, 0.5
  %v945 = vmul.f32 %v795, 0.5
  %v946 = vmul.f32 %v906, 0.5
  %v947 = vmul.f32 %v908, 0.5
  %v948 = vmul.f32 %v799, 0.5
  %v949 = vmul.f32 %v801, 0.5
  %v950 = vmul.f32 %v912, 0.5
  %v951 = vmul.f32 %v914, 0.5
  %v952 = vmul.f32 %v805, 0.5
  %v953 = vmul.f32 %v807, 0.5
  %v954 = vmul.f32 %v918, 0.5
  %v955 = vmul.f32 %v920, 0.5
  %v956 = vmul.f32 %v811, 0.5
  %v957 = vmul.f32 %v813, 0.5
  %v958 = vmul.f32 %v924, 0.5
  %v959 = vmul.f32 %v926, 0.5
  %v960 = vmul.f32 %v769, 0.70710677
  %v961 = vmul.f32 %v771, 0.70710677
  %v962 = vmul.f32 %v882, 0.70710677
  %v963 = vmul.f32 %v884, 0.70710677
  %v964 = vmul.f32 %v775, 0.70710677
  %v965 = vmul.f32 %v777, 0.70710677
  %v966 = vmul.f32 %v888, 0.70710677
  %v967 = vmul.f32 %v890, 0.70710677
  %v968 = vmul.f32 %v781, 0.70710677
  %v969 = vmul.f32 %v783, 0.70710677
  %v970 = vmul.f32 %v894, 0.70710677
  %v971 = vmul.f32 %v896, 0.70710677
  %v972 = vmul.f32 %v787, 0.70710677
  %v973 = vmul.f32 %v789, 0.70710677
  %v974 = vmul.f32 %v900, 0.70710677
  %v975 = vmul.f32 %v902, 0.70710677
  %v976 = vmul.f32 %v793, 0.70710677
  %v977 = vmul.f32 %v795, 0.70710677
  %v978 = vmul.f32 %v906, 0.70710677
  %v979 = vmul.f32 %v908, 0.70710677
  %v980 = vmul.f32 %v799, 0.70710677
  %v981 = vmul.f32 %v801, 0.70710677
  %v982 = vmul.f32 %v912, 0.70710677
  %v983 = vmul.f32 %v914, 0.70710677
  %v984 = vmul.f32 %v805, 0.70710677
  %v985 = vmul.f32 %v807, 0.70710677
  %v986 = vmul.f32 %v918, 0.70710677
  %v987 = vmul.f32 %v920, 0.70710677
  %v988 = vmul.f32 %v811, 0.70710677
  %v989 = vmul.f32 %v813, 0.70710677
  %v990 = vmul.f32 %v924, 0.70710677
  %v991 = vmul.f32 %v926, 0.70710677
  %vm992 = vcmp.ge.f32.partialorder %v960, 0.0
  %vm993 = vcmp.ge.f32.partialorder %v961, 0.0
  %vm994 = vcmp.ge.f32.partialorder %v962, 0.0
  %vm995 = vcmp.ge.f32.partialorder %v963, 0.0
  %vm996 = vcmp.ge.f32.partialorder %v964, 0.0
  %vm997 = vcmp.ge.f32.partialorder %v965, 0.0
  %vm998 = vcmp.ge.f32.partialorder %v966, 0.0
  %vm999 = vcmp.ge.f32.partialorder %v967, 0.0
  %vm1000 = vcmp.ge.f32.partialorder %v968, 0.0
  %vm1001 = vcmp.ge.f32.partialorder %v969, 0.0
  %vm1002 = vcmp.ge.f32.partialorder %v970, 0.0
  %vm1003 = vcmp.ge.f32.partialorder %v971, 0.0
  %vm1004 = vcmp.ge.f32.partialorder %v972, 0.0
  %vm1005 = vcmp.ge.f32.partialorder %v973, 0.0
  %vm1006 = vcmp.ge.f32.partialorder %v974, 0.0
  %vm1007 = vcmp.ge.f32.partialorder %v975, 0.0
  %vm1008 = vcmp.ge.f32.partialorder %v976, 0.0
  %vm1009 = vcmp.ge.f32.partialorder %v977, 0.0
  %vm1010 = vcmp.ge.f32.partialorder %v978, 0.0
  %vm1011 = vcmp.ge.f32.partialorder %v979, 0.0
  %vm1012 = vcmp.ge.f32.partialorder %v980, 0.0
  %vm1013 = vcmp.ge.f32.partialorder %v981, 0.0
  %vm1014 = vcmp.ge.f32.partialorder %v982, 0.0
  %vm1015 = vcmp.ge.f32.partialorder %v983, 0.0
  %vm1016 = vcmp.ge.f32.partialorder %v984, 0.0
  %vm1017 = vcmp.ge.f32.partialorder %v985, 0.0
  %vm1018 = vcmp.ge.f32.partialorder %v986, 0.0
  %vm1019 = vcmp.ge.f32.partialorder %v987, 0.0
  %vm1020 = vcmp.ge.f32.partialorder %v988, 0.0
  %vm1021 = vcmp.ge.f32.partialorder %v989, 0.0
  %vm1022 = vcmp.ge.f32.partialorder %v990, 0.0
  %vm1023 = vcmp.ge.f32.partialorder %v991, 0.0
  %v1024 = vsel %vm992, 1.0, -1.0
  %v1025 = vsel %vm993, 1.0, -1.0
  %v1026 = vsel %vm994, 1.0, -1.0
  %v1027 = vsel %vm995, 1.0, -1.0
  %v1028 = vsel %vm996, 1.0, -1.0
  %v1029 = vsel %vm997, 1.0, -1.0
  %v1030 = vsel %vm998, 1.0, -1.0
  %v1031 = vsel %vm999, 1.0, -1.0
  %v1032 = vsel %vm1000, 1.0, -1.0
  %v1033 = vsel %vm1001, 1.0, -1.0
  %v1034 = vsel %vm1002, 1.0, -1.0
  %v1035 = vsel %vm1003, 1.0, -1.0
  %v1036 = vsel %vm1004, 1.0, -1.0
  %v1037 = vsel %vm1005, 1.0, -1.0
  %v1038 = vsel %vm1006, 1.0, -1.0
  %v1039 = vsel %vm1007, 1.0, -1.0
  %v1040 = vsel %vm1008, 1.0, -1.0
  %v1041 = vsel %vm1009, 1.0, -1.0
  %v1042 = vsel %vm1010, 1.0, -1.0
  %v1043 = vsel %vm1011, 1.0, -1.0
  %v1044 = vsel %vm1012, 1.0, -1.0
  %v1045 = vsel %vm1013, 1.0, -1.0
  %v1046 = vsel %vm1014, 1.0, -1.0
  %v1047 = vsel %vm1015, 1.0, -1.0
  %v1048 = vsel %vm1016, 1.0, -1.0
  %v1049 = vsel %vm1017, 1.0, -1.0
  %v1050 = vsel %vm1018, 1.0, -1.0
  %v1051 = vsel %vm1019, 1.0, -1.0
  %v1052 = vsel %vm1020, 1.0, -1.0
  %v1053 = vsel %vm1021, 1.0, -1.0
  %v1054 = vsel %vm1022, 1.0, -1.0
  %v1055 = vsel %vm1023, 1.0, -1.0
  %v1056 = vmul.f32 %v960, %v1024
  %v1057 = vmul.f32 %v961, %v1025
  %v1058 = vmul.f32 %v962, %v1026
  %v1059 = vmul.f32 %v963, %v1027
  %v1060 = vmul.f32 %v964, %v1028
  %v1061 = vmul.f32 %v965, %v1029
  %v1062 = vmul.f32 %v966, %v1030
  %v1063 = vmul.f32 %v967, %v1031
  %v1064 = vmul.f32 %v968, %v1032
  %v1065 = vmul.f32 %v969, %v1033
  %v1066 = vmul.f32 %v970, %v1034
  %v1067 = vmul.f32 %v971, %v1035
  %v1068 = vmul.f32 %v972, %v1036
  %v1069 = vmul.f32 %v973, %v1037
  %v1070 = vmul.f32 %v974, %v1038
  %v1071 = vmul.f32 %v975, %v1039
  %v1072 = vmul.f32 %v976, %v1040
  %v1073 = vmul.f32 %v977, %v1041
  %v1074 = vmul.f32 %v978, %v1042
  %v1075 = vmul.f32 %v979, %v1043
  %v1076 = vmul.f32 %v980, %v1044
  %v1077 = vmul.f32 %v981, %v1045
  %v1078 = vmul.f32 %v982, %v1046
  %v1079 = vmul.f32 %v983, %v1047
  %v1080 = vmul.f32 %v984, %v1048
  %v1081 = vmul.f32 %v985, %v1049
  %v1082 = vmul.f32 %v986, %v1050
  %v1083 = vmul.f32 %v987, %v1051
  %v1084 = vmul.f32 %v988, %v1052
  %v1085 = vmul.f32 %v989, %v1053
  %v1086 = vmul.f32 %v990, %v1054
  %v1087 = vmul.f32 %v991, %v1055
  %v1088 = vmul.f32 %v1056, 0.3275911
  %v1089 = vmul.f32 %v1057, 0.3275911
  %v1090 = vmul.f32 %v1058, 0.3275911
  %v1091 = vmul.f32 %v1059, 0.3275911
  %v1092 = vmul.f32 %v1060, 0.3275911
  %v1093 = vmul.f32 %v1061, 0.3275911
  %v1094 = vmul.f32 %v1062, 0.3275911
  %v1095 = vmul.f32 %v1063, 0.3275911
  %v1096 = vmul.f32 %v1064, 0.3275911
  %v1097 = vmul.f32 %v1065, 0.3275911
  %v1098 = vmul.f32 %v1066, 0.3275911
  %v1099 = vmul.f32 %v1067, 0.3275911
  %v1100 = vmul.f32 %v1068, 0.3275911
  %v1101 = vmul.f32 %v1069, 0.3275911
  %v1102 = vmul.f32 %v1070, 0.3275911
  %v1103 = vmul.f32 %v1071, 0.3275911
  %v1104 = vmul.f32 %v1072, 0.3275911
  %v1105 = vmul.f32 %v1073, 0.3275911
  %v1106 = vmul.f32 %v1074, 0.3275911
  %v1107 = vmul.f32 %v1075, 0.3275911
  %v1108 = vmul.f32 %v1076, 0.3275911
  %v1109 = vmul.f32 %v1077, 0.3275911
  %v1110 = vmul.f32 %v1078, 0.3275911
  %v1111 = vmul.f32 %v1079, 0.3275911
  %v1112 = vmul.f32 %v1080, 0.3275911
  %v1113 = vmul.f32 %v1081, 0.3275911
  %v1114 = vmul.f32 %v1082, 0.3275911
  %v1115 = vmul.f32 %v1083, 0.3275911
  %v1116 = vmul.f32 %v1084, 0.3275911
  %v1117 = vmul.f32 %v1085, 0.3275911
  %v1118 = vmul.f32 %v1086, 0.3275911
  %v1119 = vmul.f32 %v1087, 0.3275911
  %v1120 = vadd.f32 %v1088, 1.0
  %v1121 = vadd.f32 %v1089, 1.0
  %v1122 = vadd.f32 %v1090, 1.0
  %v1123 = vadd.f32 %v1091, 1.0
  %v1124 = vadd.f32 %v1092, 1.0
  %v1125 = vadd.f32 %v1093, 1.0
  %v1126 = vadd.f32 %v1094, 1.0
  %v1127 = vadd.f32 %v1095, 1.0
  %v1128 = vadd.f32 %v1096, 1.0
  %v1129 = vadd.f32 %v1097, 1.0
  %v1130 = vadd.f32 %v1098, 1.0
  %v1131 = vadd.f32 %v1099, 1.0
  %v1132 = vadd.f32 %v1100, 1.0
  %v1133 = vadd.f32 %v1101, 1.0
  %v1134 = vadd.f32 %v1102, 1.0
  %v1135 = vadd.f32 %v1103, 1.0
  %v1136 = vadd.f32 %v1104, 1.0
  %v1137 = vadd.f32 %v1105, 1.0
  %v1138 = vadd.f32 %v1106, 1.0
  %v1139 = vadd.f32 %v1107, 1.0
  %v1140 = vadd.f32 %v1108, 1.0
  %v1141 = vadd.f32 %v1109, 1.0
  %v1142 = vadd.f32 %v1110, 1.0
  %v1143 = vadd.f32 %v1111, 1.0
  %v1144 = vadd.f32 %v1112, 1.0
  %v1145 = vadd.f32 %v1113, 1.0
  %v1146 = vadd.f32 %v1114, 1.0
  %v1147 = vadd.f32 %v1115, 1.0
  %v1148 = vadd.f32 %v1116, 1.0
  %v1149 = vadd.f32 %v1117, 1.0
  %v1150 = vadd.f32 %v1118, 1.0
  %v1151 = vadd.f32 %v1119, 1.0
  %v1152 = vrcp.pop %v1120
  %v1153 = vrcp.pop %v1121
  %v1154 = vrcp.pop %v1122
  %v1155 = vrcp.pop %v1123
  %v1156 = vrcp.pop %v1124
  %v1157 = vrcp.pop %v1125
  %v1158 = vrcp.pop %v1126
  %v1159 = vrcp.pop %v1127
  %v1160 = vrcp.pop %v1128
  %v1161 = vrcp.pop %v1129
  %v1162 = vrcp.pop %v1130
  %v1163 = vrcp.pop %v1131
  %v1164 = vrcp.pop %v1132
  %v1165 = vrcp.pop %v1133
  %v1166 = vrcp.pop %v1134
  %v1167 = vrcp.pop %v1135
  %v1168 = vrcp.pop %v1136
  %v1169 = vrcp.pop %v1137
  %v1170 = vrcp.pop %v1138
  %v1171 = vrcp.pop %v1139
  %v1172 = vrcp.pop %v1140
  %v1173 = vrcp.pop %v1141
  %v1174 = vrcp.pop %v1142
  %v1175 = vrcp.pop %v1143
  %v1176 = vrcp.pop %v1144
  %v1177 = vrcp.pop %v1145
  %v1178 = vrcp.pop %v1146
  %v1179 = vrcp.pop %v1147
  %v1180 = vrcp.pop %v1148
  %v1181 = vrcp.pop %v1149
  %v1182 = vrcp.pop %v1150
  %v1183 = vrcp.pop %v1151
  %v1184 = vmul.f32 %v1152, 1.0614054
  %v1185 = vmul.f32 %v1153, 1.0614054
  %v1186 = vmul.f32 %v1154, 1.0614054
  %v1187 = vmul.f32 %v1155, 1.0614054
  %v1188 = vmul.f32 %v1156, 1.0614054
  %v1189 = vmul.f32 %v1157, 1.0614054
  %v1190 = vmul.f32 %v1158, 1.0614054
  %v1191 = vmul.f32 %v1159, 1.0614054
  %v1192 = vmul.f32 %v1160, 1.0614054
  %v1193 = vmul.f32 %v1161, 1.0614054
  %v1194 = vmul.f32 %v1162, 1.0614054
  %v1195 = vmul.f32 %v1163, 1.0614054
  %v1196 = vmul.f32 %v1164, 1.0614054
  %v1197 = vmul.f32 %v1165, 1.0614054
  %v1198 = vmul.f32 %v1166, 1.0614054
  %v1199 = vmul.f32 %v1167, 1.0614054
  %v1200 = vmul.f32 %v1168, 1.0614054
  %v1201 = vmul.f32 %v1169, 1.0614054
  %v1202 = vmul.f32 %v1170, 1.0614054
  %v1203 = vmul.f32 %v1171, 1.0614054
  %v1204 = vmul.f32 %v1172, 1.0614054
  %v1205 = vmul.f32 %v1173, 1.0614054
  %v1206 = vmul.f32 %v1174, 1.0614054
  %v1207 = vmul.f32 %v1175, 1.0614054
  %v1208 = vmul.f32 %v1176, 1.0614054
  %v1209 = vmul.f32 %v1177, 1.0614054
  %v1210 = vmul.f32 %v1178, 1.0614054
  %v1211 = vmul.f32 %v1179, 1.0614054
  %v1212 = vmul.f32 %v1180, 1.0614054
  %v1213 = vmul.f32 %v1181, 1.0614054
  %v1214 = vmul.f32 %v1182, 1.0614054
  %v1215 = vmul.f32 %v1183, 1.0614054
  %v1216 = vadd.f32 %v1184, -1.4531521
  %v1217 = vadd.f32 %v1185, -1.4531521
  %v1218 = vadd.f32 %v1186, -1.4531521
  %v1219 = vadd.f32 %v1187, -1.4531521
  %v1220 = vadd.f32 %v1188, -1.4531521
  %v1221 = vadd.f32 %v1189, -1.4531521
  %v1222 = vadd.f32 %v1190, -1.4531521
  %v1223 = vadd.f32 %v1191, -1.4531521
  %v1224 = vadd.f32 %v1192, -1.4531521
  %v1225 = vadd.f32 %v1193, -1.4531521
  %v1226 = vadd.f32 %v1194, -1.4531521
  %v1227 = vadd.f32 %v1195, -1.4531521
  %v1228 = vadd.f32 %v1196, -1.4531521
  %v1229 = vadd.f32 %v1197, -1.4531521
  %v1230 = vadd.f32 %v1198, -1.4531521
  %v1231 = vadd.f32 %v1199, -1.4531521
  %v1232 = vadd.f32 %v1200, -1.4531521
  %v1233 = vadd.f32 %v1201, -1.4531521
  %v1234 = vadd.f32 %v1202, -1.4531521
  %v1235 = vadd.f32 %v1203, -1.4531521
  %v1236 = vadd.f32 %v1204, -1.4531521
  %v1237 = vadd.f32 %v1205, -1.4531521
  %v1238 = vadd.f32 %v1206, -1.4531521
  %v1239 = vadd.f32 %v1207, -1.4531521
  %v1240 = vadd.f32 %v1208, -1.4531521
  %v1241 = vadd.f32 %v1209, -1.4531521
  %v1242 = vadd.f32 %v1210, -1.4531521
  %v1243 = vadd.f32 %v1211, -1.4531521
  %v1244 = vadd.f32 %v1212, -1.4531521
  %v1245 = vadd.f32 %v1213, -1.4531521
  %v1246 = vadd.f32 %v1214, -1.4531521
  %v1247 = vadd.f32 %v1215, -1.4531521
  %v1248 = vmul.f32 %v1216, %v1152
  %v1249 = vmul.f32 %v1217, %v1153
  %v1250 = vmul.f32 %v1218, %v1154
  %v1251 = vmul.f32 %v1219, %v1155
  %v1252 = vmul.f32 %v1220, %v1156
  %v1253 = vmul.f32 %v1221, %v1157
  %v1254 = vmul.f32 %v1222, %v1158
  %v1255 = vmul.f32 %v1223, %v1159
  %v1256 = vmul.f32 %v1224, %v1160
  %v1257 = vmul.f32 %v1225, %v1161
  %v1258 = vmul.f32 %v1226, %v1162
  %v1259 = vmul.f32 %v1227, %v1163
  %v1260 = vmul.f32 %v1228, %v1164
  %v1261 = vmul.f32 %v1229, %v1165
  %v1262 = vmul.f32 %v1230, %v1166
  %v1263 = vmul.f32 %v1231, %v1167
  %v1264 = vmul.f32 %v1232, %v1168
  %v1265 = vmul.f32 %v1233, %v1169
  %v1266 = vmul.f32 %v1234, %v1170
  %v1267 = vmul.f32 %v1235, %v1171
  %v1268 = vmul.f32 %v1236, %v1172
  %v1269 = vmul.f32 %v1237, %v1173
  %v1270 = vmul.f32 %v1238, %v1174
  %v1271 = vmul.f32 %v1239, %v1175
  %v1272 = vmul.f32 %v1240, %v1176
  %v1273 = vmul.f32 %v1241, %v1177
  %v1274 = vmul.f32 %v1242, %v1178
  %v1275 = vmul.f32 %v1243, %v1179
  %v1276 = vmul.f32 %v1244, %v1180
  %v1277 = vmul.f32 %v1245, %v1181
  %v1278 = vmul.f32 %v1246, %v1182
  %v1279 = vmul.f32 %v1247, %v1183
  %v1280 = vadd.f32 %v1248, 1.4214138
  %v1281 = vadd.f32 %v1249, 1.4214138
  %v1282 = vadd.f32 %v1250, 1.4214138
  %v1283 = vadd.f32 %v1251, 1.4214138
  %v1284 = vadd.f32 %v1252, 1.4214138
  %v1285 = vadd.f32 %v1253, 1.4214138
  %v1286 = vadd.f32 %v1254, 1.4214138
  %v1287 = vadd.f32 %v1255, 1.4214138
  %v1288 = vadd.f32 %v1256, 1.4214138
  %v1289 = vadd.f32 %v1257, 1.4214138
  %v1290 = vadd.f32 %v1258, 1.4214138
  %v1291 = vadd.f32 %v1259, 1.4214138
  %v1292 = vadd.f32 %v1260, 1.4214138
  %v1293 = vadd.f32 %v1261, 1.4214138
  %v1294 = vadd.f32 %v1262, 1.4214138
  %v1295 = vadd.f32 %v1263, 1.4214138
  %v1296 = vadd.f32 %v1264, 1.4214138
  %v1297 = vadd.f32 %v1265, 1.4214138
  %v1298 = vadd.f32 %v1266, 1.4214138
  %v1299 = vadd.f32 %v1267, 1.4214138
  %v1300 = vadd.f32 %v1268, 1.4214138
  %v1301 = vadd.f32 %v1269, 1.4214138
  %v1302 = vadd.f32 %v1270, 1.4214138
  %v1303 = vadd.f32 %v1271, 1.4214138
  %v1304 = vadd.f32 %v1272, 1.4214138
  %v1305 = vadd.f32 %v1273, 1.4214138
  %v1306 = vadd.f32 %v1274, 1.4214138
  %v1307 = vadd.f32 %v1275, 1.4214138
  %v1308 = vadd.f32 %v1276, 1.4214138
  %v1309 = vadd.f32 %v1277, 1.4214138
  %v1310 = vadd.f32 %v1278, 1.4214138
  %v1311 = vadd.f32 %v1279, 1.4214138
  %v1312 = vmul.f32 %v1280, %v1152
  %v1313 = vmul.f32 %v1281, %v1153
  %v1314 = vmul.f32 %v1282, %v1154
  %v1315 = vmul.f32 %v1283, %v1155
  %v1316 = vmul.f32 %v1284, %v1156
  %v1317 = vmul.f32 %v1285, %v1157
  %v1318 = vmul.f32 %v1286, %v1158
  %v1319 = vmul.f32 %v1287, %v1159
  %v1320 = vmul.f32 %v1288, %v1160
  %v1321 = vmul.f32 %v1289, %v1161
  %v1322 = vmul.f32 %v1290, %v1162
  %v1323 = vmul.f32 %v1291, %v1163
  %v1324 = vmul.f32 %v1292, %v1164
  %v1325 = vmul.f32 %v1293, %v1165
  %v1326 = vmul.f32 %v1294, %v1166
  %v1327 = vmul.f32 %v1295, %v1167
  %v1328 = vmul.f32 %v1296, %v1168
  %v1329 = vmul.f32 %v1297, %v1169
  %v1330 = vmul.f32 %v1298, %v1170
  %v1331 = vmul.f32 %v1299, %v1171
  %v1332 = vmul.f32 %v1300, %v1172
  %v1333 = vmul.f32 %v1301, %v1173
  %v1334 = vmul.f32 %v1302, %v1174
  %v1335 = vmul.f32 %v1303, %v1175
  %v1336 = vmul.f32 %v1304, %v1176
  %v1337 = vmul.f32 %v1305, %v1177
  %v1338 = vmul.f32 %v1306, %v1178
  %v1339 = vmul.f32 %v1307, %v1179
  %v1340 = vmul.f32 %v1308, %v1180
  %v1341 = vmul.f32 %v1309, %v1181
  %v1342 = vmul.f32 %v1310, %v1182
  %v1343 = vmul.f32 %v1311, %v1183
  %v1344 = vadd.f32 %v1312, -0.28449672
  %v1345 = vadd.f32 %v1313, -0.28449672
  %v1346 = vadd.f32 %v1314, -0.28449672
  %v1347 = vadd.f32 %v1315, -0.28449672
  %v1348 = vadd.f32 %v1316, -0.28449672
  %v1349 = vadd.f32 %v1317, -0.28449672
  %v1350 = vadd.f32 %v1318, -0.28449672
  %v1351 = vadd.f32 %v1319, -0.28449672
  %v1352 = vadd.f32 %v1320, -0.28449672
  %v1353 = vadd.f32 %v1321, -0.28449672
  %v1354 = vadd.f32 %v1322, -0.28449672
  %v1355 = vadd.f32 %v1323, -0.28449672
  %v1356 = vadd.f32 %v1324, -0.28449672
  %v1357 = vadd.f32 %v1325, -0.28449672
  %v1358 = vadd.f32 %v1326, -0.28449672
  %v1359 = vadd.f32 %v1327, -0.28449672
  %v1360 = vadd.f32 %v1328, -0.28449672
  %v1361 = vadd.f32 %v1329, -0.28449672
  %v1362 = vadd.f32 %v1330, -0.28449672
  %v1363 = vadd.f32 %v1331, -0.28449672
  %v1364 = vadd.f32 %v1332, -0.28449672
  %v1365 = vadd.f32 %v1333, -0.28449672
  %v1366 = vadd.f32 %v1334, -0.28449672
  %v1367 = vadd.f32 %v1335, -0.28449672
  %v1368 = vadd.f32 %v1336, -0.28449672
  %v1369 = vadd.f32 %v1337, -0.28449672
  %v1370 = vadd.f32 %v1338, -0.28449672
  %v1371 = vadd.f32 %v1339, -0.28449672
  %v1372 = vadd.f32 %v1340, -0.28449672
  %v1373 = vadd.f32 %v1341, -0.28449672
  %v1374 = vadd.f32 %v1342, -0.28449672
  %v1375 = vadd.f32 %v1343, -0.28449672
  %v1376 = vmul.f32 %v1344, %v1152
  %v1377 = vmul.f32 %v1345, %v1153
  %v1378 = vmul.f32 %v1346, %v1154
  %v1379 = vmul.f32 %v1347, %v1155
  %v1380 = vmul.f32 %v1348, %v1156
  %v1381 = vmul.f32 %v1349, %v1157
  %v1382 = vmul.f32 %v1350, %v1158
  %v1383 = vmul.f32 %v1351, %v1159
  %v1384 = vmul.f32 %v1352, %v1160
  %v1385 = vmul.f32 %v1353, %v1161
  %v1386 = vmul.f32 %v1354, %v1162
  %v1387 = vmul.f32 %v1355, %v1163
  %v1388 = vmul.f32 %v1356, %v1164
  %v1389 = vmul.f32 %v1357, %v1165
  %v1390 = vmul.f32 %v1358, %v1166
  %v1391 = vmul.f32 %v1359, %v1167
  %v1392 = vmul.f32 %v1360, %v1168
  %v1393 = vmul.f32 %v1361, %v1169
  %v1394 = vmul.f32 %v1362, %v1170
  %v1395 = vmul.f32 %v1363, %v1171
  %v1396 = vmul.f32 %v1364, %v1172
  %v1397 = vmul.f32 %v1365, %v1173
  %v1398 = vmul.f32 %v1366, %v1174
  %v1399 = vmul.f32 %v1367, %v1175
  %v1400 = vmul.f32 %v1368, %v1176
  %v1401 = vmul.f32 %v1369, %v1177
  %v1402 = vmul.f32 %v1370, %v1178
  %v1403 = vmul.f32 %v1371, %v1179
  %v1404 = vmul.f32 %v1372, %v1180
  %v1405 = vmul.f32 %v1373, %v1181
  %v1406 = vmul.f32 %v1374, %v1182
  %v1407 = vmul.f32 %v1375, %v1183
  %v1408 = vadd.f32 %v1376, 0.2548296
  %v1409 = vadd.f32 %v1377, 0.2548296
  %v1410 = vadd.f32 %v1378, 0.2548296
  %v1411 = vadd.f32 %v1379, 0.2548296
  %v1412 = vadd.f32 %v1380, 0.2548296
  %v1413 = vadd.f32 %v1381, 0.2548296
  %v1414 = vadd.f32 %v1382, 0.2548296
  %v1415 = vadd.f32 %v1383, 0.2548296
  %v1416 = vadd.f32 %v1384, 0.2548296
  %v1417 = vadd.f32 %v1385, 0.2548296
  %v1418 = vadd.f32 %v1386, 0.2548296
  %v1419 = vadd.f32 %v1387, 0.2548296
  %v1420 = vadd.f32 %v1388, 0.2548296
  %v1421 = vadd.f32 %v1389, 0.2548296
  %v1422 = vadd.f32 %v1390, 0.2548296
  %v1423 = vadd.f32 %v1391, 0.2548296
  %v1424 = vadd.f32 %v1392, 0.2548296
  %v1425 = vadd.f32 %v1393, 0.2548296
  %v1426 = vadd.f32 %v1394, 0.2548296
  %v1427 = vadd.f32 %v1395, 0.2548296
  %v1428 = vadd.f32 %v1396, 0.2548296
  %v1429 = vadd.f32 %v1397, 0.2548296
  %v1430 = vadd.f32 %v1398, 0.2548296
  %v1431 = vadd.f32 %v1399, 0.2548296
  %v1432 = vadd.f32 %v1400, 0.2548296
  %v1433 = vadd.f32 %v1401, 0.2548296
  %v1434 = vadd.f32 %v1402, 0.2548296
  %v1435 = vadd.f32 %v1403, 0.2548296
  %v1436 = vadd.f32 %v1404, 0.2548296
  %v1437 = vadd.f32 %v1405, 0.2548296
  %v1438 = vadd.f32 %v1406, 0.2548296
  %v1439 = vadd.f32 %v1407, 0.2548296
  %v1440 = vmul.f32 %v1408, %v1152
  %v1441 = vmul.f32 %v1409, %v1153
  %v1442 = vmul.f32 %v1410, %v1154
  %v1443 = vmul.f32 %v1411, %v1155
  %v1444 = vmul.f32 %v1412, %v1156
  %v1445 = vmul.f32 %v1413, %v1157
  %v1446 = vmul.f32 %v1414, %v1158
  %v1447 = vmul.f32 %v1415, %v1159
  %v1448 = vmul.f32 %v1416, %v1160
  %v1449 = vmul.f32 %v1417, %v1161
  %v1450 = vmul.f32 %v1418, %v1162
  %v1451 = vmul.f32 %v1419, %v1163
  %v1452 = vmul.f32 %v1420, %v1164
  %v1453 = vmul.f32 %v1421, %v1165
  %v1454 = vmul.f32 %v1422, %v1166
  %v1455 = vmul.f32 %v1423, %v1167
  %v1456 = vmul.f32 %v1424, %v1168
  %v1457 = vmul.f32 %v1425, %v1169
  %v1458 = vmul.f32 %v1426, %v1170
  %v1459 = vmul.f32 %v1427, %v1171
  %v1460 = vmul.f32 %v1428, %v1172
  %v1461 = vmul.f32 %v1429, %v1173
  %v1462 = vmul.f32 %v1430, %v1174
  %v1463 = vmul.f32 %v1431, %v1175
  %v1464 = vmul.f32 %v1432, %v1176
  %v1465 = vmul.f32 %v1433, %v1177
  %v1466 = vmul.f32 %v1434, %v1178
  %v1467 = vmul.f32 %v1435, %v1179
  %v1468 = vmul.f32 %v1436, %v1180
  %v1469 = vmul.f32 %v1437, %v1181
  %v1470 = vmul.f32 %v1438, %v1182
  %v1471 = vmul.f32 %v1439, %v1183
  %v1472 = vsub.f32 0.0, %v1056
  %v1473 = vsub.f32 0.0, %v1057
  %v1474 = vsub.f32 0.0, %v1058
  %v1475 = vsub.f32 0.0, %v1059
  %v1476 = vsub.f32 0.0, %v1060
  %v1477 = vsub.f32 0.0, %v1061
  %v1478 = vsub.f32 0.0, %v1062
  %v1479 = vsub.f32 0.0, %v1063
  %v1480 = vsub.f32 0.0, %v1064
  %v1481 = vsub.f32 0.0, %v1065
  %v1482 = vsub.f32 0.0, %v1066
  %v1483 = vsub.f32 0.0, %v1067
  %v1484 = vsub.f32 0.0, %v1068
  %v1485 = vsub.f32 0.0, %v1069
  %v1486 = vsub.f32 0.0, %v1070
  %v1487 = vsub.f32 0.0, %v1071
  %v1488 = vsub.f32 0.0, %v1072
  %v1489 = vsub.f32 0.0, %v1073
  %v1490 = vsub.f32 0.0, %v1074
  %v1491 = vsub.f32 0.0, %v1075
  %v1492 = vsub.f32 0.0, %v1076
  %v1493 = vsub.f32 0.0, %v1077
  %v1494 = vsub.f32 0.0, %v1078
  %v1495 = vsub.f32 0.0, %v1079
  %v1496 = vsub.f32 0.0, %v1080
  %v1497 = vsub.f32 0.0, %v1081
  %v1498 = vsub.f32 0.0, %v1082
  %v1499 = vsub.f32 0.0, %v1083
  %v1500 = vsub.f32 0.0, %v1084
  %v1501 = vsub.f32 0.0, %v1085
  %v1502 = vsub.f32 0.0, %v1086
  %v1503 = vsub.f32 0.0, %v1087
  %v1504 = vmul.f32 %v1472, %v1056
  %v1505 = vmul.f32 %v1473, %v1057
  %v1506 = vmul.f32 %v1474, %v1058
  %v1507 = vmul.f32 %v1475, %v1059
  %v1508 = vmul.f32 %v1476, %v1060
  %v1509 = vmul.f32 %v1477, %v1061
  %v1510 = vmul.f32 %v1478, %v1062
  %v1511 = vmul.f32 %v1479, %v1063
  %v1512 = vmul.f32 %v1480, %v1064
  %v1513 = vmul.f32 %v1481, %v1065
  %v1514 = vmul.f32 %v1482, %v1066
  %v1515 = vmul.f32 %v1483, %v1067
  %v1516 = vmul.f32 %v1484, %v1068
  %v1517 = vmul.f32 %v1485, %v1069
  %v1518 = vmul.f32 %v1486, %v1070
  %v1519 = vmul.f32 %v1487, %v1071
  %v1520 = vmul.f32 %v1488, %v1072
  %v1521 = vmul.f32 %v1489, %v1073
  %v1522 = vmul.f32 %v1490, %v1074
  %v1523 = vmul.f32 %v1491, %v1075
  %v1524 = vmul.f32 %v1492, %v1076
  %v1525 = vmul.f32 %v1493, %v1077
  %v1526 = vmul.f32 %v1494, %v1078
  %v1527 = vmul.f32 %v1495, %v1079
  %v1528 = vmul.f32 %v1496, %v1080
  %v1529 = vmul.f32 %v1497, %v1081
  %v1530 = vmul.f32 %v1498, %v1082
  %v1531 = vmul.f32 %v1499, %v1083
  %v1532 = vmul.f32 %v1500, %v1084
  %v1533 = vmul.f32 %v1501, %v1085
  %v1534 = vmul.f32 %v1502, %v1086
  %v1535 = vmul.f32 %v1503, %v1087
  %v1536 = vmul.f32 %v1504, 1.442695
  %v1537 = vpow.pop %v1536
  %v1538 = vmul.f32 %v1505, 1.442695
  %v1539 = vpow.pop %v1538
  %v1540 = vmul.f32 %v1506, 1.442695
  %v1541 = vpow.pop %v1540
  %v1542 = vmul.f32 %v1507, 1.442695
  %v1543 = vpow.pop %v1542
  %v1544 = vmul.f32 %v1508, 1.442695
  %v1545 = vpow.pop %v1544
  %v1546 = vmul.f32 %v1509, 1.442695
  %v1547 = vpow.pop %v1546
  %v1548 = vmul.f32 %v1510, 1.442695
  %v1549 = vpow.pop %v1548
  %v1550 = vmul.f32 %v1511, 1.442695
  %v1551 = vpow.pop %v1550
  %v1552 = vmul.f32 %v1512, 1.442695
  %v1553 = vpow.pop %v1552
  %v1554 = vmul.f32 %v1513, 1.442695
  %v1555 = vpow.pop %v1554
  %v1556 = vmul.f32 %v1514, 1.442695
  %v1557 = vpow.pop %v1556
  %v1558 = vmul.f32 %v1515, 1.442695
  %v1559 = vpow.pop %v1558
  %v1560 = vmul.f32 %v1516, 1.442695
  %v1561 = vpow.pop %v1560
  %v1562 = vmul.f32 %v1517, 1.442695
  %v1563 = vpow.pop %v1562
  %v1564 = vmul.f32 %v1518, 1.442695
  %v1565 = vpow.pop %v1564
  %v1566 = vmul.f32 %v1519, 1.442695
  %v1567 = vpow.pop %v1566
  %v1568 = vmul.f32 %v1520, 1.442695
  %v1569 = vpow.pop %v1568
  %v1570 = vmul.f32 %v1521, 1.442695
  %v1571 = vpow.pop %v1570
  %v1572 = vmul.f32 %v1522, 1.442695
  %v1573 = vpow.pop %v1572
  %v1574 = vmul.f32 %v1523, 1.442695
  %v1575 = vpow.pop %v1574
  %v1576 = vmul.f32 %v1524, 1.442695
  %v1577 = vpow.pop %v1576
  %v1578 = vmul.f32 %v1525, 1.442695
  %v1579 = vpow.pop %v1578
  %v1580 = vmul.f32 %v1526, 1.442695
  %v1581 = vpow.pop %v1580
  %v1582 = vmul.f32 %v1527, 1.442695
  %v1583 = vpow.pop %v1582
  %v1584 = vmul.f32 %v1528, 1.442695
  %v1585 = vpow.pop %v1584
  %v1586 = vmul.f32 %v1529, 1.442695
  %v1587 = vpow.pop %v1586
  %v1588 = vmul.f32 %v1530, 1.442695
  %v1589 = vpow.pop %v1588
  %v1590 = vmul.f32 %v1531, 1.442695
  %v1591 = vpow.pop %v1590
  %v1592 = vmul.f32 %v1532, 1.442695
  %v1593 = vpow.pop %v1592
  %v1594 = vmul.f32 %v1533, 1.442695
  %v1595 = vpow.pop %v1594
  %v1596 = vmul.f32 %v1534, 1.442695
  %v1597 = vpow.pop %v1596
  %v1598 = vmul.f32 %v1535, 1.442695
  %v1599 = vpow.pop %v1598
  %v1600 = vmul.f32 %v1440, %v1537
  %v1601 = vmul.f32 %v1441, %v1539
  %v1602 = vmul.f32 %v1442, %v1541
  %v1603 = vmul.f32 %v1443, %v1543
  %v1604 = vmul.f32 %v1444, %v1545
  %v1605 = vmul.f32 %v1445, %v1547
  %v1606 = vmul.f32 %v1446, %v1549
  %v1607 = vmul.f32 %v1447, %v1551
  %v1608 = vmul.f32 %v1448, %v1553
  %v1609 = vmul.f32 %v1449, %v1555
  %v1610 = vmul.f32 %v1450, %v1557
  %v1611 = vmul.f32 %v1451, %v1559
  %v1612 = vmul.f32 %v1452, %v1561
  %v1613 = vmul.f32 %v1453, %v1563
  %v1614 = vmul.f32 %v1454, %v1565
  %v1615 = vmul.f32 %v1455, %v1567
  %v1616 = vmul.f32 %v1456, %v1569
  %v1617 = vmul.f32 %v1457, %v1571
  %v1618 = vmul.f32 %v1458, %v1573
  %v1619 = vmul.f32 %v1459, %v1575
  %v1620 = vmul.f32 %v1460, %v1577
  %v1621 = vmul.f32 %v1461, %v1579
  %v1622 = vmul.f32 %v1462, %v1581
  %v1623 = vmul.f32 %v1463, %v1583
  %v1624 = vmul.f32 %v1464, %v1585
  %v1625 = vmul.f32 %v1465, %v1587
  %v1626 = vmul.f32 %v1466, %v1589
  %v1627 = vmul.f32 %v1467, %v1591
  %v1628 = vmul.f32 %v1468, %v1593
  %v1629 = vmul.f32 %v1469, %v1595
  %v1630 = vmul.f32 %v1470, %v1597
  %v1631 = vmul.f32 %v1471, %v1599
  %v1632 = vsub.f32 1.0, %v1600
  %v1633 = vsub.f32 1.0, %v1601
  %v1634 = vsub.f32 1.0, %v1602
  %v1635 = vsub.f32 1.0, %v1603
  %v1636 = vsub.f32 1.0, %v1604
  %v1637 = vsub.f32 1.0, %v1605
  %v1638 = vsub.f32 1.0, %v1606
  %v1639 = vsub.f32 1.0, %v1607
  %v1640 = vsub.f32 1.0, %v1608
  %v1641 = vsub.f32 1.0, %v1609
  %v1642 = vsub.f32 1.0, %v1610
  %v1643 = vsub.f32 1.0, %v1611
  %v1644 = vsub.f32 1.0, %v1612
  %v1645 = vsub.f32 1.0, %v1613
  %v1646 = vsub.f32 1.0, %v1614
  %v1647 = vsub.f32 1.0, %v1615
  %v1648 = vsub.f32 1.0, %v1616
  %v1649 = vsub.f32 1.0, %v1617
  %v1650 = vsub.f32 1.0, %v1618
  %v1651 = vsub.f32 1.0, %v1619
  %v1652 = vsub.f32 1.0, %v1620
  %v1653 = vsub.f32 1.0, %v1621
  %v1654 = vsub.f32 1.0, %v1622
  %v1655 = vsub.f32 1.0, %v1623
  %v1656 = vsub.f32 1.0, %v1624
  %v1657 = vsub.f32 1.0, %v1625
  %v1658 = vsub.f32 1.0, %v1626
  %v1659 = vsub.f32 1.0, %v1627
  %v1660 = vsub.f32 1.0, %v1628
  %v1661 = vsub.f32 1.0, %v1629
  %v1662 = vsub.f32 1.0, %v1630
  %v1663 = vsub.f32 1.0, %v1631
  %v1664 = vmul.f32 %v1024, %v1632
  %v1665 = vmul.f32 %v1025, %v1633
  %v1666 = vmul.f32 %v1026, %v1634
  %v1667 = vmul.f32 %v1027, %v1635
  %v1668 = vmul.f32 %v1028, %v1636
  %v1669 = vmul.f32 %v1029, %v1637
  %v1670 = vmul.f32 %v1030, %v1638
  %v1671 = vmul.f32 %v1031, %v1639
  %v1672 = vmul.f32 %v1032, %v1640
  %v1673 = vmul.f32 %v1033, %v1641
  %v1674 = vmul.f32 %v1034, %v1642
  %v1675 = vmul.f32 %v1035, %v1643
  %v1676 = vmul.f32 %v1036, %v1644
  %v1677 = vmul.f32 %v1037, %v1645
  %v1678 = vmul.f32 %v1038, %v1646
  %v1679 = vmul.f32 %v1039, %v1647
  %v1680 = vmul.f32 %v1040, %v1648
  %v1681 = vmul.f32 %v1041, %v1649
  %v1682 = vmul.f32 %v1042, %v1650
  %v1683 = vmul.f32 %v1043, %v1651
  %v1684 = vmul.f32 %v1044, %v1652
  %v1685 = vmul.f32 %v1045, %v1653
  %v1686 = vmul.f32 %v1046, %v1654
  %v1687 = vmul.f32 %v1047, %v1655
  %v1688 = vmul.f32 %v1048, %v1656
  %v1689 = vmul.f32 %v1049, %v1657
  %v1690 = vmul.f32 %v1050, %v1658
  %v1691 = vmul.f32 %v1051, %v1659
  %v1692 = vmul.f32 %v1052, %v1660
  %v1693 = vmul.f32 %v1053, %v1661
  %v1694 = vmul.f32 %v1054, %v1662
  %v1695 = vmul.f32 %v1055, %v1663
  %v1696 = vadd.f32 %v1664, 1.0
  %v1697 = vadd.f32 %v1665, 1.0
  %v1698 = vadd.f32 %v1666, 1.0
  %v1699 = vadd.f32 %v1667, 1.0
  %v1700 = vadd.f32 %v1668, 1.0
  %v1701 = vadd.f32 %v1669, 1.0
  %v1702 = vadd.f32 %v1670, 1.0
  %v1703 = vadd.f32 %v1671, 1.0
  %v1704 = vadd.f32 %v1672, 1.0
  %v1705 = vadd.f32 %v1673, 1.0
  %v1706 = vadd.f32 %v1674, 1.0
  %v1707 = vadd.f32 %v1675, 1.0
  %v1708 = vadd.f32 %v1676, 1.0
  %v1709 = vadd.f32 %v1677, 1.0
  %v1710 = vadd.f32 %v1678, 1.0
  %v1711 = vadd.f32 %v1679, 1.0
  %v1712 = vadd.f32 %v1680, 1.0
  %v1713 = vadd.f32 %v1681, 1.0
  %v1714 = vadd.f32 %v1682, 1.0
  %v1715 = vadd.f32 %v1683, 1.0
  %v1716 = vadd.f32 %v1684, 1.0
  %v1717 = vadd.f32 %v1685, 1.0
  %v1718 = vadd.f32 %v1686, 1.0
  %v1719 = vadd.f32 %v1687, 1.0
  %v1720 = vadd.f32 %v1688, 1.0
  %v1721 = vadd.f32 %v1689, 1.0
  %v1722 = vadd.f32 %v1690, 1.0
  %v1723 = vadd.f32 %v1691, 1.0
  %v1724 = vadd.f32 %v1692, 1.0
  %v1725 = vadd.f32 %v1693, 1.0
  %v1726 = vadd.f32 %v1694, 1.0
  %v1727 = vadd.f32 %v1695, 1.0
  %v1728 = vmul.f32 %v928, %v1696
  %v1729 = vmul.f32 %v929, %v1697
  %v1730 = vmul.f32 %v930, %v1698
  %v1731 = vmul.f32 %v931, %v1699
  %v1732 = vmul.f32 %v932, %v1700
  %v1733 = vmul.f32 %v933, %v1701
  %v1734 = vmul.f32 %v934, %v1702
  %v1735 = vmul.f32 %v935, %v1703
  %v1736 = vmul.f32 %v936, %v1704
  %v1737 = vmul.f32 %v937, %v1705
  %v1738 = vmul.f32 %v938, %v1706
  %v1739 = vmul.f32 %v939, %v1707
  %v1740 = vmul.f32 %v940, %v1708
  %v1741 = vmul.f32 %v941, %v1709
  %v1742 = vmul.f32 %v942, %v1710
  %v1743 = vmul.f32 %v943, %v1711
  %v1744 = vmul.f32 %v944, %v1712
  %v1745 = vmul.f32 %v945, %v1713
  %v1746 = vmul.f32 %v946, %v1714
  %v1747 = vmul.f32 %v947, %v1715
  %v1748 = vmul.f32 %v948, %v1716
  %v1749 = vmul.f32 %v949, %v1717
  %v1750 = vmul.f32 %v950, %v1718
  %v1751 = vmul.f32 %v951, %v1719
  %v1752 = vmul.f32 %v952, %v1720
  %v1753 = vmul.f32 %v953, %v1721
  %v1754 = vmul.f32 %v954, %v1722
  %v1755 = vmul.f32 %v955, %v1723
  %v1756 = vmul.f32 %v956, %v1724
  %v1757 = vmul.f32 %v957, %v1725
  %v1758 = vmul.f32 %v958, %v1726
  %v1759 = vmul.f32 %v959, %v1727
  %v1760 = vld [vmem:[%s5] sm:$0xf]
  %v1761 = vld [vmem:[%s5 + $0x4] sm:$0xf]
  %v1762 = vld [vmem:[%s5 + $0x8] sm:$0xf]
  %v1763 = vld [vmem:[%s5 + $0xc] sm:$0xf]
  %v1764 = vld [vmem:[%s5 + $0x10] sm:$0xf]
  %v1765 = vld [vmem:[%s5 + $0x14] sm:$0xf]
  %v1766 = vld [vmem:[%s5 + $0x18] sm:$0xf]
  %v1767 = vld [vmem:[%s5 + $0x1c] sm:$0xf]
  %v1768 = vld [vmem:[%s5 + $0x20] sm:$0xf]
  %v1769 = vld [vmem:[%s5 + $0x24] sm:$0xf]
  %v1770 = vld [vmem:[%s5 + $0x28] sm:$0xf]
  %v1771 = vld [vmem:[%s5 + $0x2c] sm:$0xf]
  %v1772 = vld [vmem:[%s5 + $0x30] sm:$0xf]
  %v1773 = vld [vmem:[%s5 + $0x34] sm:$0xf]
  %v1774 = vld [vmem:[%s5 + $0x38] sm:$0xf]
  %v1775 = vld [vmem:[%s5 + $0x3c] sm:$0xf]
  %v1776 = vld [vmem:[%s5 + $0x40] sm:$0xf]
  %v1777 = vld [vmem:[%s5 + $0x44] sm:$0xf]
  %v1778 = vld [vmem:[%s5 + $0x48] sm:$0xf]
  %v1779 = vld [vmem:[%s5 + $0x4c] sm:$0xf]
  %v1780 = vld [vmem:[%s5 + $0x50] sm:$0xf]
  %v1781 = vld [vmem:[%s5 + $0x54] sm:$0xf]
  %v1782 = vld [vmem:[%s5 + $0x58] sm:$0xf]
  %v1783 = vld [vmem:[%s5 + $0x5c] sm:$0xf]
  %v1784 = vld [vmem:[%s5 + $0x60] sm:$0xf]
  %v1785 = vld [vmem:[%s5 + $0x64] sm:$0xf]
  %v1786 = vld [vmem:[%s5 + $0x68] sm:$0xf]
  %v1787 = vld [vmem:[%s5 + $0x6c] sm:$0xf]
  %v1788 = vld [vmem:[%s5 + $0x70] sm:$0xf]
  %v1789 = vld [vmem:[%s5 + $0x74] sm:$0xf]
  %v1790 = vld [vmem:[%s5 + $0x78] sm:$0xf]
  %v1791 = vld [vmem:[%s5 + $0x7c] sm:$0xf]
  %v1792 = vld [vmem:[%s5 + $0x80] sm:$0xf]
  %v1793 = vld [vmem:[%s5 + $0x84] sm:$0xf]
  %v1794 = vld [vmem:[%s5 + $0x88] sm:$0xf]
  %v1795 = vld [vmem:[%s5 + $0x8c] sm:$0xf]
  %v1796 = vld [vmem:[%s5 + $0x90] sm:$0xf]
  %v1797 = vld [vmem:[%s5 + $0x94] sm:$0xf]
  %v1798 = vld [vmem:[%s5 + $0x98] sm:$0xf]
  %v1799 = vld [vmem:[%s5 + $0x9c] sm:$0xf]
  %v1800 = vld [vmem:[%s5 + $0xa0] sm:$0xf]
  %v1801 = vld [vmem:[%s5 + $0xa4] sm:$0xf]
  %v1802 = vld [vmem:[%s5 + $0xa8] sm:$0xf]
  %v1803 = vld [vmem:[%s5 + $0xac] sm:$0xf]
  %v1804 = vld [vmem:[%s5 + $0xb0] sm:$0xf]
  %v1805 = vld [vmem:[%s5 + $0xb4] sm:$0xf]
  %v1806 = vld [vmem:[%s5 + $0xb8] sm:$0xf]
  %v1807 = vld [vmem:[%s5 + $0xbc] sm:$0xf]
  %v1808 = vld [vmem:[%s5 + $0xc0] sm:$0xf]
  %v1809 = vld [vmem:[%s5 + $0xc4] sm:$0xf]
  %v1810 = vld [vmem:[%s5 + $0xc8] sm:$0xf]
  %v1811 = vld [vmem:[%s5 + $0xcc] sm:$0xf]
  %v1812 = vld [vmem:[%s5 + $0xd0] sm:$0xf]
  %v1813 = vld [vmem:[%s5 + $0xd4] sm:$0xf]
  %v1814 = vld [vmem:[%s5 + $0xd8] sm:$0xf]
  %v1815 = vld [vmem:[%s5 + $0xdc] sm:$0xf]
  %v1816 = vld [vmem:[%s5 + $0xe0] sm:$0xf]
  %v1817 = vld [vmem:[%s5 + $0xe4] sm:$0xf]
  %v1818 = vld [vmem:[%s5 + $0xe8] sm:$0xf]
  %v1819 = vld [vmem:[%s5 + $0xec] sm:$0xf]
  %v1820 = vld [vmem:[%s5 + $0xf0] sm:$0xf]
  %v1821 = vld [vmem:[%s5 + $0xf4] sm:$0xf]
  %v1822 = vld [vmem:[%s5 + $0xf8] sm:$0xf]
  %v1823 = vld [vmem:[%s5 + $0xfc] sm:$0xf]
  %v1824 = vunpack.c.l.bf16 %v1760
  %v1825 = vunpack.c.l.bf16 %v1761
  %v1826 = vunpack.c.l.bf16 %v1762
  %v1827 = vunpack.c.l.bf16 %v1763
  %v1828 = vunpack.c.l.bf16 %v1764
  %v1829 = vunpack.c.l.bf16 %v1765
  %v1830 = vunpack.c.l.bf16 %v1766
  %v1831 = vunpack.c.l.bf16 %v1767
  %v1832 = vunpack.c.l.bf16 %v1768
  %v1833 = vunpack.c.l.bf16 %v1769
  %v1834 = vunpack.c.l.bf16 %v1770
  %v1835 = vunpack.c.l.bf16 %v1771
  %v1836 = vunpack.c.l.bf16 %v1772
  %v1837 = vunpack.c.l.bf16 %v1773
  %v1838 = vunpack.c.l.bf16 %v1774
  %v1839 = vunpack.c.l.bf16 %v1775
  %v1840 = vunpack.c.l.bf16 %v1776
  %v1841 = vunpack.c.l.bf16 %v1777
  %v1842 = vunpack.c.l.bf16 %v1778
  %v1843 = vunpack.c.l.bf16 %v1779
  %v1844 = vunpack.c.l.bf16 %v1780
  %v1845 = vunpack.c.l.bf16 %v1781
  %v1846 = vunpack.c.l.bf16 %v1782
  %v1847 = vunpack.c.l.bf16 %v1783
  %v1848 = vunpack.c.l.bf16 %v1784
  %v1849 = vunpack.c.l.bf16 %v1785
  %v1850 = vunpack.c.l.bf16 %v1786
  %v1851 = vunpack.c.l.bf16 %v1787
  %v1852 = vunpack.c.l.bf16 %v1788
  %v1853 = vunpack.c.l.bf16 %v1789
  %v1854 = vunpack.c.l.bf16 %v1790
  %v1855 = vunpack.c.l.bf16 %v1791
  %v1856 = vunpack.c.l.bf16 %v1792
  %v1857 = vunpack.c.l.bf16 %v1793
  %v1858 = vunpack.c.l.bf16 %v1794
  %v1859 = vunpack.c.l.bf16 %v1795
  %v1860 = vunpack.c.l.bf16 %v1796
  %v1861 = vunpack.c.l.bf16 %v1797
  %v1862 = vunpack.c.l.bf16 %v1798
  %v1863 = vunpack.c.l.bf16 %v1799
  %v1864 = vunpack.c.l.bf16 %v1800
  %v1865 = vunpack.c.l.bf16 %v1801
  %v1866 = vunpack.c.l.bf16 %v1802
  %v1867 = vunpack.c.l.bf16 %v1803
  %v1868 = vunpack.c.l.bf16 %v1804
  %v1869 = vunpack.c.l.bf16 %v1805
  %v1870 = vunpack.c.l.bf16 %v1806
  %v1871 = vunpack.c.l.bf16 %v1807
  %v1872 = vunpack.c.l.bf16 %v1808
  %v1873 = vunpack.c.l.bf16 %v1809
  %v1874 = vunpack.c.l.bf16 %v1810
  %v1875 = vunpack.c.l.bf16 %v1811
  %v1876 = vunpack.c.l.bf16 %v1812
  %v1877 = vunpack.c.l.bf16 %v1813
  %v1878 = vunpack.c.l.bf16 %v1814
  %v1879 = vunpack.c.l.bf16 %v1815
  %v1880 = vunpack.c.l.bf16 %v1816
  %v1881 = vunpack.c.l.bf16 %v1817
  %v1882 = vunpack.c.l.bf16 %v1818
  %v1883 = vunpack.c.l.bf16 %v1819
  %v1884 = vunpack.c.l.bf16 %v1820
  %v1885 = vunpack.c.l.bf16 %v1821
  %v1886 = vunpack.c.l.bf16 %v1822
  %v1887 = vunpack.c.l.bf16 %v1823
  %1888 = vmatprep.subr.mxu0 0.0
  %1889 = vmatpush1.msra.mxu0 %v1824
  %1890 = vmatprep.subr.mxu0 0.0
  %1891 = vmatpush1.msra.mxu0 %v1825
  %1892 = vmatprep.subr.mxu0 0.0
  %1893 = vmatpush1.msra.mxu0 %v1826
  %1894 = vmatprep.subr.mxu0 0.0
  %1895 = vmatpush1.msra.mxu0 %v1827
  %1896 = vmatprep.subr.mxu0 0.0
  %1897 = vmatpush1.msra.mxu0 %v1828
  %1898 = vmatprep.subr.mxu0 0.0
  %1899 = vmatpush1.msra.mxu0 %v1829
  %1900 = vmatprep.subr.mxu0 0.0
  %1901 = vmatpush1.msra.mxu0 %v1830
  %1902 = vmatprep.subr.mxu0 0.0
  %1903 = vmatpush1.msra.mxu0 %v1831
  %1904 = vmatprep.subr.mxu0 0.0
  %1905 = vmatpush1.msra.mxu0 %v1832
  %1906 = vmatprep.subr.mxu0 0.0
  %1907 = vmatpush1.msra.mxu0 %v1833
  %1908 = vmatprep.subr.mxu0 0.0
  %1909 = vmatpush1.msra.mxu0 %v1834
  %1910 = vmatprep.subr.mxu0 0.0
  %1911 = vmatpush1.msra.mxu0 %v1835
  %1912 = vmatprep.subr.mxu0 0.0
  %1913 = vmatpush1.msra.mxu0 %v1836
  %1914 = vmatprep.subr.mxu0 0.0
  %1915 = vmatpush1.msra.mxu0 %v1837
  %1916 = vmatprep.subr.mxu0 0.0
  %1917 = vmatpush1.msra.mxu0 %v1838
  %1918 = vmatprep.subr.mxu0 0.0
  %1919 = vmatpush1.msra.mxu0 %v1839
  %1920 = vmatprep.subr.mxu0 0.0
  %1921 = vmatpush1.msra.mxu0 %v1840
  %1922 = vmatprep.subr.mxu0 0.0
  %1923 = vmatpush1.msra.mxu0 %v1841
  %1924 = vmatprep.subr.mxu0 0.0
  %1925 = vmatpush1.msra.mxu0 %v1842
  %1926 = vmatprep.subr.mxu0 0.0
  %1927 = vmatpush1.msra.mxu0 %v1843
  %1928 = vmatprep.subr.mxu0 0.0
  %1929 = vmatpush1.msra.mxu0 %v1844
  %1930 = vmatprep.subr.mxu0 0.0
  %1931 = vmatpush1.msra.mxu0 %v1845
  %1932 = vmatprep.subr.mxu0 0.0
  %1933 = vmatpush1.msra.mxu0 %v1846
  %1934 = vmatprep.subr.mxu0 0.0
  %1935 = vmatpush1.msra.mxu0 %v1847
  %1936 = vmatprep.subr.mxu0 0.0
  %1937 = vmatpush1.msra.mxu0 %v1848
  %1938 = vmatprep.subr.mxu0 0.0
  %1939 = vmatpush1.msra.mxu0 %v1849
  %1940 = vmatprep.subr.mxu0 0.0
  %1941 = vmatpush1.msra.mxu0 %v1850
  %1942 = vmatprep.subr.mxu0 0.0
  %1943 = vmatpush1.msra.mxu0 %v1851
  %1944 = vmatprep.subr.mxu0 0.0
  %1945 = vmatpush1.msra.mxu0 %v1852
  %1946 = vmatprep.subr.mxu0 0.0
  %1947 = vmatpush1.msra.mxu0 %v1853
  %1948 = vmatprep.subr.mxu0 0.0
  %1949 = vmatpush1.msra.mxu0 %v1854
  %1950 = vmatprep.subr.mxu0 0.0
  %1951 = vmatpush1.msra.mxu0 %v1855
  %1952 = vmatprep.mubr.f32.mxu0 %v1729
  %1953 = vmatmul.mubr.f32.gmra.mrb[0].mxu0 %v1728
  %v1954 = vpop.f32.mrb[0].mxu0
  %v1955 = vadd.f32 0.0, %v1954
  %v1956 = vpop.f32.mrb[0].mxu0
  %1957 = vmatprep.mubr.f32.mxu0 %v1733
  %1958 = vmatmul.mubr.f32.gmra.mrb[0].mxu0 %v1732
  %v1959 = vpop.f32.mrb[0].mxu0
  %v1960 = vadd.f32 0.0, %v1959
  %v1961 = vpop.f32.mrb[0].mxu0
  %1962 = vmatprep.mubr.f32.mxu0 %v1737
  %1963 = vmatmul.mubr.f32.gmra.mrb[0].mxu0 %v1736
  %v1964 = vpop.f32.mrb[0].mxu0
  %v1965 = vadd.f32 0.0, %v1964
  %v1966 = vpop.f32.mrb[0].mxu0
  %1967 = vmatprep.mubr.f32.mxu0 %v1741
  %1968 = vmatmul.mubr.f32.gmra.mrb[0].mxu0 %v1740
  %v1969 = vpop.f32.mrb[0].mxu0
  %v1970 = vadd.f32 0.0, %v1969
  %v1971 = vpop.f32.mrb[0].mxu0
  %1972 = vmatprep.mubr.f32.mxu0 %v1745
  %1973 = vmatmul.mubr.f32.gmra.mrb[0].mxu0 %v1744
  %v1974 = vpop.f32.mrb[0].mxu0
  %v1975 = vadd.f32 0.0, %v1974
  %v1976 = vpop.f32.mrb[0].mxu0
  %1977 = vmatprep.mubr.f32.mxu0 %v1749
  %1978 = vmatmul.mubr.f32.gmra.mrb[0].mxu0 %v1748
  %v1979 = vpop.f32.mrb[0].mxu0
  %v1980 = vadd.f32 0.0, %v1979
  %v1981 = vpop.f32.mrb[0].mxu0
  %1982 = vmatprep.mubr.f32.mxu0 %v1753
  %1983 = vmatmul.mubr.f32.gmra.mrb[0].mxu0 %v1752
  %v1984 = vpop.f32.mrb[0].mxu0
  %v1985 = vadd.f32 0.0, %v1984
  %v1986 = vpop.f32.mrb[0].mxu0
  %1987 = vmatprep.mubr.f32.mxu0 %v1757
  %1988 = vmatmul.mubr.f32.gmra.mrb[0].mxu0 %v1756
  %v1989 = vpop.f32.mrb[0].mxu0
  %v1990 = vadd.f32 0.0, %v1989
  %v1991 = vpop.f32.mrb[0].mxu0
  %1992 = vdwg.mxu0
  %1993 = vmatprep.subr.mxu0 0.0
  %1994 = vmatpush1.msra.mxu0 %v1856
  %1995 = vmatprep.subr.mxu0 0.0
  %1996 = vmatpush1.msra.mxu0 %v1857
  %1997 = vmatprep.subr.mxu0 0.0
  %1998 = vmatpush1.msra.mxu0 %v1858
  %1999 = vmatprep.subr.mxu0 0.0
  %2000 = vmatpush1.msra.mxu0 %v1859
  %2001 = vmatprep.subr.mxu0 0.0
  %2002 = vmatpush1.msra.mxu0 %v1860
  %2003 = vmatprep.subr.mxu0 0.0
  %2004 = vmatpush1.msra.mxu0 %v1861
  %2005 = vmatprep.subr.mxu0 0.0
  %2006 = vmatpush1.msra.mxu0 %v1862
  %2007 = vmatprep.subr.mxu0 0.0
  %2008 = vmatpush1.msra.mxu0 %v1863
  %2009 = vmatprep.subr.mxu0 0.0
  %2010 = vmatpush1.msra.mxu0 %v1864
  %2011 = vmatprep.subr.mxu0 0.0
  %2012 = vmatpush1.msra.mxu0 %v1865
  %2013 = vmatprep.subr.mxu0 0.0
  %2014 = vmatpush1.msra.mxu0 %v1866
  %2015 = vmatprep.subr.mxu0 0.0
  %2016 = vmatpush1.msra.mxu0 %v1867
  %2017 = vmatprep.subr.mxu0 0.0
  %2018 = vmatpush1.msra.mxu0 %v1868
  %2019 = vmatprep.subr.mxu0 0.0
  %2020 = vmatpush1.msra.mxu0 %v1869
  %2021 = vmatprep.subr.mxu0 0.0
  %2022 = vmatpush1.msra.mxu0 %v1870
  %2023 = vmatprep.subr.mxu0 0.0
  %2024 = vmatpush1.msra.mxu0 %v1871
  %2025 = vmatprep.subr.mxu0 0.0
  %2026 = vmatpush1.msra.mxu0 %v1872
  %2027 = vmatprep.subr.mxu0 0.0
  %2028 = vmatpush1.msra.mxu0 %v1873
  %2029 = vmatprep.subr.mxu0 0.0
  %2030 = vmatpush1.msra.mxu0 %v1874
  %2031 = vmatprep.subr.mxu0 0.0
  %2032 = vmatpush1.msra.mxu0 %v1875
  %2033 = vmatprep.subr.mxu0 0.0
  %2034 = vmatpush1.msra.mxu0 %v1876
  %2035 = vmatprep.subr.mxu0 0.0
  %2036 = vmatpush1.msra.mxu0 %v1877
  %2037 = vmatprep.subr.mxu0 0.0
  %2038 = vmatpush1.msra.mxu0 %v1878
  %2039 = vmatprep.subr.mxu0 0.0
  %2040 = vmatpush1.msra.mxu0 %v1879
  %2041 = vmatprep.subr.mxu0 0.0
  %2042 = vmatpush1.msra.mxu0 %v1880
  %2043 = vmatprep.subr.mxu0 0.0
  %2044 = vmatpush1.msra.mxu0 %v1881
  %2045 = vmatprep.subr.mxu0 0.0
  %2046 = vmatpush1.msra.mxu0 %v1882
  %2047 = vmatprep.subr.mxu0 0.0
  %2048 = vmatpush1.msra.mxu0 %v1883
  %2049 = vmatprep.subr.mxu0 0.0
  %2050 = vmatpush1.msra.mxu0 %v1884
  %2051 = vmatprep.subr.mxu0 0.0
  %2052 = vmatpush1.msra.mxu0 %v1885
  %2053 = vmatprep.subr.mxu0 0.0
  %2054 = vmatpush1.msra.mxu0 %v1886
  %2055 = vmatprep.subr.mxu0 0.0
  %2056 = vmatpush1.msra.mxu0 %v1887
  %2057 = vmatprep.mubr.f32.mxu0 %v1731
  %2058 = vmatmul.mubr.f32.gmra.mrb[0].mxu0 %v1730
  %v2059 = vpop.f32.mrb[0].mxu0
  %v2060 = vadd.f32 %v1955, %v2059
  %v2061 = vpop.f32.mrb[0].mxu0
  %2062 = vmatprep.mubr.f32.mxu0 %v1735
  %2063 = vmatmul.mubr.f32.gmra.mrb[0].mxu0 %v1734
  %v2064 = vpop.f32.mrb[0].mxu0
  %v2065 = vadd.f32 %v1960, %v2064
  %v2066 = vpop.f32.mrb[0].mxu0
  %2067 = vmatprep.mubr.f32.mxu0 %v1739
  %2068 = vmatmul.mubr.f32.gmra.mrb[0].mxu0 %v1738
  %v2069 = vpop.f32.mrb[0].mxu0
  %v2070 = vadd.f32 %v1965, %v2069
  %v2071 = vpop.f32.mrb[0].mxu0
  %2072 = vmatprep.mubr.f32.mxu0 %v1743
  %2073 = vmatmul.mubr.f32.gmra.mrb[0].mxu0 %v1742
  %v2074 = vpop.f32.mrb[0].mxu0
  %v2075 = vadd.f32 %v1970, %v2074
  %v2076 = vpop.f32.mrb[0].mxu0
  %2077 = vmatprep.mubr.f32.mxu0 %v1747
  %2078 = vmatmul.mubr.f32.gmra.mrb[0].mxu0 %v1746
  %v2079 = vpop.f32.mrb[0].mxu0
  %v2080 = vadd.f32 %v1975, %v2079
  %v2081 = vpop.f32.mrb[0].mxu0
  %2082 = vmatprep.mubr.f32.mxu0 %v1751
  %2083 = vmatmul.mubr.f32.gmra.mrb[0].mxu0 %v1750
  %v2084 = vpop.f32.mrb[0].mxu0
  %v2085 = vadd.f32 %v1980, %v2084
  %v2086 = vpop.f32.mrb[0].mxu0
  %2087 = vmatprep.mubr.f32.mxu0 %v1755
  %2088 = vmatmul.mubr.f32.gmra.mrb[0].mxu0 %v1754
  %v2089 = vpop.f32.mrb[0].mxu0
  %v2090 = vadd.f32 %v1985, %v2089
  %v2091 = vpop.f32.mrb[0].mxu0
  %2092 = vmatprep.mubr.f32.mxu0 %v1759
  %2093 = vmatmul.mubr.f32.gmra.mrb[0].mxu0 %v1758
  %v2094 = vpop.f32.mrb[0].mxu0
  %v2095 = vadd.f32 %v1990, %v2094
  %v2096 = vpop.f32.mrb[0].mxu0
  %2097 = vdwg.mxu0
  %v2098 = vadd.f32 %v26, %v2060
  %v2099 = vadd.f32 %v27, %v2065
  %v2100 = vadd.f32 %v28, %v2070
  %v2101 = vadd.f32 %v29, %v2075
  %v2102 = vadd.f32 %v30, %v2080
  %v2103 = vadd.f32 %v31, %v2085
  %v2104 = vadd.f32 %v32, %v2090
  %v2105 = vadd.f32 %v33, %v2095
  %v2106 = vld [vmem:[%s6] sm:$0x1]
  %v2108 = vlaneseq
  %v2109 = vshrl.u32 %v2108, 7
  %v2110 = vsub.s32 0, %v2109
  %v2111 = vrot.slane %v2106, %v2110
  %v2113 = vadd.f32 %v2098, %v2111
  %v2114 = vadd.f32 %v2099, %v2111
  %v2115 = vadd.f32 %v2100, %v2111
  %v2116 = vadd.f32 %v2101, %v2111
  %v2117 = vadd.f32 %v2102, %v2111
  %v2118 = vadd.f32 %v2103, %v2111
  %v2119 = vadd.f32 %v2104, %v2111
  %v2120 = vadd.f32 %v2105, %v2111
  %2121 = vst [vmem:[%s7] sm:$0xff] %v2113
  %2122 = vst [vmem:[%s7 + $0x8] sm:$0xff] %v2114
  %2123 = vst [vmem:[%s7 + $0x10] sm:$0xff] %v2115
  %2124 = vst [vmem:[%s7 + $0x18] sm:$0xff] %v2116
  %2125 = vst [vmem:[%s7 + $0x20] sm:$0xff] %v2117
  %2126 = vst [vmem:[%s7 + $0x28] sm:$0xff] %v2118
  %2127 = vst [vmem:[%s7 + $0x30] sm:$0xff] %v2119
  %2128 = vst [vmem:[%s7 + $0x38] sm:$0xff] %v2120
  // Predicated region
  $region30: #{permutator_block.5} parent=0 // pred_check
    _
  $region31: #{permutator_block.5} parent=0 // pred_check_branch
    %2130 = sbr.rel (0) target = $region33
  $region32: #{permutator_block.5} parent=0 // pred_region
    _
  $region33: #{permutator_block.5} parent=0 // pred_fallthru
    _
  // Predicated region
  $region34: #{permutator_block.5} parent=0 // pred_check
    _
  $region35: #{permutator_block.5} parent=0 // pred_check_branch
    %2132 = sbr.rel (0) target = $region37
  $region36: #{permutator_block.5} parent=0 // pred_region
    _
  $region37: #{permutator_block.5} parent=0 // pred_fallthru
    _

// kernel: permutator_block.4
$region0: #{permutator_block.4}
  #allocation0 [shape = 'u32[]', space=smem, size = 0x4, offset = 0x4, fixed_abs, tag = 'smem constant byte address 0x4 - core index']
  #allocation1 [shape = 'u32[144,128]{1,0:T(1,128)}', space=vmem, size = 0x12000, scoped, tag = 'internal scratch']
  %s0 = inlined_call_operand.vmem [shape: f32[16,512], index: 0, kind: input, shape index: {}, may-alias: {0,17}]
  %s1 = inlined_call_operand.vmem [shape: f32[16,512], index: 1, kind: input, shape index: {}]
  %s2 = inlined_call_operand.vmem [shape: f32[512,16], index: 2, kind: input, shape index: {}]
  %s3 = inlined_call_operand.vmem [shape: f32[16,512], index: 3, kind: input, shape index: {}]
  %s4 = inlined_call_operand.vmem [shape: bf16[512,512], index: 4, kind: input, shape index: {}]
  %s5 = inlined_call_operand.vmem [shape: bf16[512,512], index: 5, kind: input, shape index: {}]
  %s6 = inlined_call_operand.vmem [shape: f32[128,128], index: 6, kind: input, shape index: {}]
  %s7 = inlined_call_operand.vmem [shape: f32[4,512], index: 7, kind: input, shape index: {}]
  %s8 = inlined_call_operand.vmem [shape: f32[8,8], index: 8, kind: input, shape index: {}]
  %s9 = inlined_call_operand.vmem [shape: f32[512,32], index: 9, kind: input, shape index: {}]
  %s10 = inlined_call_operand.vmem [shape: f32[32,8], index: 10, kind: input, shape index: {}]
  %s11 = inlined_call_operand.vmem [shape: f32[1,8], index: 11, kind: input, shape index: {}]
  %s12 = inlined_call_operand.vmem [shape: f32[8,96], index: 12, kind: input, shape index: {}]
  %s13 = inlined_call_operand.vmem [shape: f32[1,96], index: 13, kind: input, shape index: {}]
  %s14 = inlined_call_operand.vmem [shape: f32[8,8], index: 14, kind: input, shape index: {}]
  %s15 = inlined_call_operand.vmem [shape: f32[32,512], index: 15, kind: input, shape index: {}]
  %s16 = inlined_call_operand.vmem [shape: f32[128,128], index: 16, kind: input, shape index: {}]
  %s17 = inlined_call_operand.vmem [shape: f32[16,512], index: 17, kind: output, shape index: {}, may-alias: {0,17}]
  %s18 = sld [smem:[#allocation0]]
  $region101: #{permutator_block.4} parent=0
    _
  %s20 = ssub.s32 1, %s18
  %s21 = scalar_select 0, %s20, %s18
  loop: start=0, step=1, limit=4
  $region2: #{permutator_block.4} parent=0 // loop_pre_header
    _
  $region3: #{permutator_block.4} parent=0 // loop_header
    %s23 = sphi 0, %s27
    %p24 = scmp.ge.s32.totalorder %s23, 4
    %s33 = sphi 0, %s35
    %s36 = sphi 0, %s33
    %s37 = sphi 0, %s36
    %s53 = sphi 0, %s37
    %s59 = sphi 0, %s61
    %s62 = sphi 0, %s59
    %s63 = sphi 0, %s62
    %s79 = sphi 0, %s63
    %s83 = sphi 0, %s83
    %s85 = sphi 0, %s83
    %s86 = sphi 0, %s85
    %s100 = sphi 0, %s86
    %s104 = sphi 0, %s104
    %s106 = sphi 0, %s104
    %s107 = sphi 0, %s106
    %s121 = sphi 0, %s107
    %s125 = sphi 0, %s125
    %s127 = sphi 0, %s125
    %s128 = sphi 0, %s127
    %s142 = sphi 0, %s128
    %s146 = sphi 0, %s146
    %s148 = sphi 0, %s146
    %s149 = sphi 0, %s148
    %s163 = sphi 0, %s149
    %s167 = sphi 0, %s167
    %s169 = sphi 0, %s167
    %s170 = sphi 0, %s169
    %s184 = sphi 0, %s170
    %s188 = sphi 0, %s188
    %s190 = sphi 0, %s188
    %s191 = sphi 0, %s190
    %s205 = sphi 0, %s191
    %s209 = sphi 0, %s209
    %s211 = sphi 0, %s209
    %s212 = sphi 0, %s211
    %s226 = sphi 0, %s212
    %s230 = sphi 0, %s230
    %s232 = sphi 0, %s230
    %s233 = sphi 0, %s232
    %s247 = sphi 0, %s233
    %s251 = sphi 0, %s251
    %s253 = sphi 0, %s251
    %s254 = sphi 0, %s253
    %s268 = sphi 0, %s254
    %s272 = sphi 0, %s272
    %s274 = sphi 0, %s272
    %s275 = sphi 0, %s274
    %s289 = sphi 0, %s275
    %s293 = sphi 0, %s293
    %s295 = sphi 0, %s293
    %s296 = sphi 0, %s295
    %s310 = sphi 0, %s296
    %s314 = sphi 0, %s314
    %s316 = sphi 0, %s314
    %s317 = sphi 0, %s316
    %s331 = sphi 0, %s317
    %s335 = sphi 0, %s335
    %s337 = sphi 0, %s335
    %s338 = sphi 0, %s337
    %s352 = sphi 0, %s338
    %s356 = sphi 0, %s356
    %s358 = sphi 0, %s356
    %s359 = sphi 0, %s358
    %s373 = sphi 0, %s359
    %s377 = sphi 0, %s377
    %s379 = sphi 0, %s377
    %s380 = sphi 0, %s379
    %s394 = sphi 0, %s380
    %s400 = sphi 0, %s402
    %s403 = sphi 0, %s400
    %s404 = sphi 0, %s403
    %s420 = sphi 0, %s404
  $region4: #{permutator_block.4} parent=0 // loop_header_branch
    %26 = sbr.rel (%p24) target = $region8
  $region5: #{permutator_block.4} parent=0 // loop_body
    %s28 = ssub.s32 %s23, 1
    %s29 = ssub.s32 %s23, 2
    %s30 = sadd.s32 %s23, 1
    %s31 = ssub.s32 %s23, %s30
    %p32 = scmp.eq.s32.totalorder %s31, 0
    %s34 = sadd.s32 %s33, 1
    %s35 = scalar_select %p32, %s33, %s34
    %p38 = pneg %p32
    %p39 = scmp.eq.s32.totalorder %s23, 1
    %p40 = por %p38, %p39
    %p41 = scmp.ne.s32.totalorder %s33, %s36
    %p42 = scmp.eq.s32.totalorder %s23, 0
    %p43 = por %p41, %p42
    %p44 = scmp.ne.s32.totalorder %s33, %s36
    %p45 = scmp.eq.s32.totalorder %s28, 1
    %p46 = por %p44, %p45
    %p47 = scmp.ne.s32.totalorder %s36, %s37
    %p48 = scmp.eq.s32.totalorder %s28, 0
    %p49 = por %p47, %p48
    %p50 = scmp.ne.s32.totalorder %s36, %s37
    %p51 = scmp.eq.s32.totalorder %s29, 1
    %p52 = por %p50, %p51
    %p54 = scmp.ne.s32.totalorder %s37, %s53
    %p55 = scmp.eq.s32.totalorder %s29, 0
    %p56 = por %p54, %p55
    %s57 = ssub.s32 %s23, %s30
    %p58 = scmp.eq.s32.totalorder %s57, 0
    %s60 = sadd.s32 %s59, 1
    %s61 = scalar_select %p58, %s59, %s60
    %p64 = pneg %p58
    %p65 = scmp.eq.s32.totalorder %s23, 1
    %p66 = por %p64, %p65
    %p67 = scmp.ne.s32.totalorder %s59, %s62
    %p68 = scmp.eq.s32.totalorder %s23, 0
    %p69 = por %p67, %p68
    %p70 = scmp.ne.s32.totalorder %s59, %s62
    %p71 = scmp.eq.s32.totalorder %s28, 1
    %p72 = por %p70, %p71
    %p73 = scmp.ne.s32.totalorder %s62, %s63
    %p74 = scmp.eq.s32.totalorder %s28, 0
    %p75 = por %p73, %p74
    %p76 = scmp.ne.s32.totalorder %s62, %s63
    %p77 = scmp.eq.s32.totalorder %s29, 1
    %p78 = por %p76, %p77
    %p80 = scmp.ne.s32.totalorder %s63, %s79
    %p81 = scmp.eq.s32.totalorder %s29, 0
    %p82 = por %p80, %p81
    %s84 = sadd.s32 %s83, 1
    %p87 = scmp.eq.s32.totalorder %s23, 1
    %p88 = scmp.ne.s32.totalorder %s83, %s85
    %p89 = scmp.eq.s32.totalorder %s23, 0
    %p90 = por %p88, %p89
    %p91 = scmp.ne.s32.totalorder %s83, %s85
    %p92 = scmp.eq.s32.totalorder %s28, 1
    %p93 = por %p91, %p92
    %p94 = scmp.ne.s32.totalorder %s85, %s86
    %p95 = scmp.eq.s32.totalorder %s28, 0
    %p96 = por %p94, %p95
    %p97 = scmp.ne.s32.totalorder %s85, %s86
    %p98 = scmp.eq.s32.totalorder %s29, 1
    %p99 = por %p97, %p98
    %p101 = scmp.ne.s32.totalorder %s86, %s100
    %p102 = scmp.eq.s32.totalorder %s29, 0
    %p103 = por %p101, %p102
    %s105 = sadd.s32 %s104, 1
    %p108 = scmp.eq.s32.totalorder %s23, 1
    %p109 = scmp.ne.s32.totalorder %s104, %s106
    %p110 = scmp.eq.s32.totalorder %s23, 0
    %p111 = por %p109, %p110
    %p112 = scmp.ne.s32.totalorder %s104, %s106
    %p113 = scmp.eq.s32.totalorder %s28, 1
    %p114 = por %p112, %p113
    %p115 = scmp.ne.s32.totalorder %s106, %s107
    %p116 = scmp.eq.s32.totalorder %s28, 0
    %p117 = por %p115, %p116
    %p118 = scmp.ne.s32.totalorder %s106, %s107
    %p119 = scmp.eq.s32.totalorder %s29, 1
    %p120 = por %p118, %p119
    %p122 = scmp.ne.s32.totalorder %s107, %s121
    %p123 = scmp.eq.s32.totalorder %s29, 0
    %p124 = por %p122, %p123
    %s126 = sadd.s32 %s125, 1
    %p129 = scmp.eq.s32.totalorder %s23, 1
    %p130 = scmp.ne.s32.totalorder %s125, %s127
    %p131 = scmp.eq.s32.totalorder %s23, 0
    %p132 = por %p130, %p131
    %p133 = scmp.ne.s32.totalorder %s125, %s127
    %p134 = scmp.eq.s32.totalorder %s28, 1
    %p135 = por %p133, %p134
    %p136 = scmp.ne.s32.totalorder %s127, %s128
    %p137 = scmp.eq.s32.totalorder %s28, 0
    %p138 = por %p136, %p137
    %p139 = scmp.ne.s32.totalorder %s127, %s128
    %p140 = scmp.eq.s32.totalorder %s29, 1
    %p141 = por %p139, %p140
    %p143 = scmp.ne.s32.totalorder %s128, %s142
    %p144 = scmp.eq.s32.totalorder %s29, 0
    %p145 = por %p143, %p144
    %s147 = sadd.s32 %s146, 1
    %p150 = scmp.eq.s32.totalorder %s23, 1
    %p151 = scmp.ne.s32.totalorder %s146, %s148
    %p152 = scmp.eq.s32.totalorder %s23, 0
    %p153 = por %p151, %p152
    %p154 = scmp.ne.s32.totalorder %s146, %s148
    %p155 = scmp.eq.s32.totalorder %s28, 1
    %p156 = por %p154, %p155
    %p157 = scmp.ne.s32.totalorder %s148, %s149
    %p158 = scmp.eq.s32.totalorder %s28, 0
    %p159 = por %p157, %p158
    %p160 = scmp.ne.s32.totalorder %s148, %s149
    %p161 = scmp.eq.s32.totalorder %s29, 1
    %p162 = por %p160, %p161
    %p164 = scmp.ne.s32.totalorder %s149, %s163
    %p165 = scmp.eq.s32.totalorder %s29, 0
    %p166 = por %p164, %p165
    %s168 = sadd.s32 %s167, 1
    %p171 = scmp.eq.s32.totalorder %s23, 1
    %p172 = scmp.ne.s32.totalorder %s167, %s169
    %p173 = scmp.eq.s32.totalorder %s23, 0
    %p174 = por %p172, %p173
    %p175 = scmp.ne.s32.totalorder %s167, %s169
    %p176 = scmp.eq.s32.totalorder %s28, 1
    %p177 = por %p175, %p176
    %p178 = scmp.ne.s32.totalorder %s169, %s170
    %p179 = scmp.eq.s32.totalorder %s28, 0
    %p180 = por %p178, %p179
    %p181 = scmp.ne.s32.totalorder %s169, %s170
    %p182 = scmp.eq.s32.totalorder %s29, 1
    %p183 = por %p181, %p182
    %p185 = scmp.ne.s32.totalorder %s170, %s184
    %p186 = scmp.eq.s32.totalorder %s29, 0
    %p187 = por %p185, %p186
    %s189 = sadd.s32 %s188, 1
    %p192 = scmp.eq.s32.totalorder %s23, 1
    %p193 = scmp.ne.s32.totalorder %s188, %s190
    %p194 = scmp.eq.s32.totalorder %s23, 0
    %p195 = por %p193, %p194
    %p196 = scmp.ne.s32.totalorder %s188, %s190
    %p197 = scmp.eq.s32.totalorder %s28, 1
    %p198 = por %p196, %p197
    %p199 = scmp.ne.s32.totalorder %s190, %s191
    %p200 = scmp.eq.s32.totalorder %s28, 0
    %p201 = por %p199, %p200
    %p202 = scmp.ne.s32.totalorder %s190, %s191
    %p203 = scmp.eq.s32.totalorder %s29, 1
    %p204 = por %p202, %p203
    %p206 = scmp.ne.s32.totalorder %s191, %s205
    %p207 = scmp.eq.s32.totalorder %s29, 0
    %p208 = por %p206, %p207
    %s210 = sadd.s32 %s209, 1
    %p213 = scmp.eq.s32.totalorder %s23, 1
    %p214 = scmp.ne.s32.totalorder %s209, %s211
    %p215 = scmp.eq.s32.totalorder %s23, 0
    %p216 = por %p214, %p215
    %p217 = scmp.ne.s32.totalorder %s209, %s211
    %p218 = scmp.eq.s32.totalorder %s28, 1
    %p219 = por %p217, %p218
    %p220 = scmp.ne.s32.totalorder %s211, %s212
    %p221 = scmp.eq.s32.totalorder %s28, 0
    %p222 = por %p220, %p221
    %p223 = scmp.ne.s32.totalorder %s211, %s212
    %p224 = scmp.eq.s32.totalorder %s29, 1
    %p225 = por %p223, %p224
    %p227 = scmp.ne.s32.totalorder %s212, %s226
    %p228 = scmp.eq.s32.totalorder %s29, 0
    %p229 = por %p227, %p228
    %s231 = sadd.s32 %s230, 1
    %p234 = scmp.eq.s32.totalorder %s23, 1
    %p235 = scmp.ne.s32.totalorder %s230, %s232
    %p236 = scmp.eq.s32.totalorder %s23, 0
    %p237 = por %p235, %p236
    %p238 = scmp.ne.s32.totalorder %s230, %s232
    %p239 = scmp.eq.s32.totalorder %s28, 1
    %p240 = por %p238, %p239
    %p241 = scmp.ne.s32.totalorder %s232, %s233
    %p242 = scmp.eq.s32.totalorder %s28, 0
    %p243 = por %p241, %p242
    %p244 = scmp.ne.s32.totalorder %s232, %s233
    %p245 = scmp.eq.s32.totalorder %s29, 1
    %p246 = por %p244, %p245
    %p248 = scmp.ne.s32.totalorder %s233, %s247
    %p249 = scmp.eq.s32.totalorder %s29, 0
    %p250 = por %p248, %p249
    %s252 = sadd.s32 %s251, 1
    %p255 = scmp.eq.s32.totalorder %s23, 1
    %p256 = scmp.ne.s32.totalorder %s251, %s253
    %p257 = scmp.eq.s32.totalorder %s23, 0
    %p258 = por %p256, %p257
    %p259 = scmp.ne.s32.totalorder %s251, %s253
    %p260 = scmp.eq.s32.totalorder %s28, 1
    %p261 = por %p259, %p260
    %p262 = scmp.ne.s32.totalorder %s253, %s254
    %p263 = scmp.eq.s32.totalorder %s28, 0
    %p264 = por %p262, %p263
    %p265 = scmp.ne.s32.totalorder %s253, %s254
    %p266 = scmp.eq.s32.totalorder %s29, 1
    %p267 = por %p265, %p266
    %p269 = scmp.ne.s32.totalorder %s254, %s268
    %p270 = scmp.eq.s32.totalorder %s29, 0
    %p271 = por %p269, %p270
    %s273 = sadd.s32 %s272, 1
    %p276 = scmp.eq.s32.totalorder %s23, 1
    %p277 = scmp.ne.s32.totalorder %s272, %s274
    %p278 = scmp.eq.s32.totalorder %s23, 0
    %p279 = por %p277, %p278
    %p280 = scmp.ne.s32.totalorder %s272, %s274
    %p281 = scmp.eq.s32.totalorder %s28, 1
    %p282 = por %p280, %p281
    %p283 = scmp.ne.s32.totalorder %s274, %s275
    %p284 = scmp.eq.s32.totalorder %s28, 0
    %p285 = por %p283, %p284
    %p286 = scmp.ne.s32.totalorder %s274, %s275
    %p287 = scmp.eq.s32.totalorder %s29, 1
    %p288 = por %p286, %p287
    %p290 = scmp.ne.s32.totalorder %s275, %s289
    %p291 = scmp.eq.s32.totalorder %s29, 0
    %p292 = por %p290, %p291
    %s294 = sadd.s32 %s293, 1
    %p297 = scmp.eq.s32.totalorder %s23, 1
    %p298 = scmp.ne.s32.totalorder %s293, %s295
    %p299 = scmp.eq.s32.totalorder %s23, 0
    %p300 = por %p298, %p299
    %p301 = scmp.ne.s32.totalorder %s293, %s295
    %p302 = scmp.eq.s32.totalorder %s28, 1
    %p303 = por %p301, %p302
    %p304 = scmp.ne.s32.totalorder %s295, %s296
    %p305 = scmp.eq.s32.totalorder %s28, 0
    %p306 = por %p304, %p305
    %p307 = scmp.ne.s32.totalorder %s295, %s296
    %p308 = scmp.eq.s32.totalorder %s29, 1
    %p309 = por %p307, %p308
    %p311 = scmp.ne.s32.totalorder %s296, %s310
    %p312 = scmp.eq.s32.totalorder %s29, 0
    %p313 = por %p311, %p312
    %s315 = sadd.s32 %s314, 1
    %p318 = scmp.eq.s32.totalorder %s23, 1
    %p319 = scmp.ne.s32.totalorder %s314, %s316
    %p320 = scmp.eq.s32.totalorder %s23, 0
    %p321 = por %p319, %p320
    %p322 = scmp.ne.s32.totalorder %s314, %s316
    %p323 = scmp.eq.s32.totalorder %s28, 1
    %p324 = por %p322, %p323
    %p325 = scmp.ne.s32.totalorder %s316, %s317
    %p326 = scmp.eq.s32.totalorder %s28, 0
    %p327 = por %p325, %p326
    %p328 = scmp.ne.s32.totalorder %s316, %s317
    %p329 = scmp.eq.s32.totalorder %s29, 1
    %p330 = por %p328, %p329
    %p332 = scmp.ne.s32.totalorder %s317, %s331
    %p333 = scmp.eq.s32.totalorder %s29, 0
    %p334 = por %p332, %p333
    %s336 = sadd.s32 %s335, 1
    %p339 = scmp.eq.s32.totalorder %s23, 1
    %p340 = scmp.ne.s32.totalorder %s335, %s337
    %p341 = scmp.eq.s32.totalorder %s23, 0
    %p342 = por %p340, %p341
    %p343 = scmp.ne.s32.totalorder %s335, %s337
    %p344 = scmp.eq.s32.totalorder %s28, 1
    %p345 = por %p343, %p344
    %p346 = scmp.ne.s32.totalorder %s337, %s338
    %p347 = scmp.eq.s32.totalorder %s28, 0
    %p348 = por %p346, %p347
    %p349 = scmp.ne.s32.totalorder %s337, %s338
    %p350 = scmp.eq.s32.totalorder %s29, 1
    %p351 = por %p349, %p350
    %p353 = scmp.ne.s32.totalorder %s338, %s352
    %p354 = scmp.eq.s32.totalorder %s29, 0
    %p355 = por %p353, %p354
    %s357 = sadd.s32 %s356, 1
    %p360 = scmp.eq.s32.totalorder %s23, 1
    %p361 = scmp.ne.s32.totalorder %s356, %s358
    %p362 = scmp.eq.s32.totalorder %s23, 0
    %p363 = por %p361, %p362
    %p364 = scmp.ne.s32.totalorder %s356, %s358
    %p365 = scmp.eq.s32.totalorder %s28, 1
    %p366 = por %p364, %p365
    %p367 = scmp.ne.s32.totalorder %s358, %s359
    %p368 = scmp.eq.s32.totalorder %s28, 0
    %p369 = por %p367, %p368
    %p370 = scmp.ne.s32.totalorder %s358, %s359
    %p371 = scmp.eq.s32.totalorder %s29, 1
    %p372 = por %p370, %p371
    %p374 = scmp.ne.s32.totalorder %s359, %s373
    %p375 = scmp.eq.s32.totalorder %s29, 0
    %p376 = por %p374, %p375
    %s378 = sadd.s32 %s377, 1
    %p381 = scmp.eq.s32.totalorder %s23, 1
    %p382 = scmp.ne.s32.totalorder %s377, %s379
    %p383 = scmp.eq.s32.totalorder %s23, 0
    %p384 = por %p382, %p383
    %p385 = scmp.ne.s32.totalorder %s377, %s379
    %p386 = scmp.eq.s32.totalorder %s28, 1
    %p387 = por %p385, %p386
    %p388 = scmp.ne.s32.totalorder %s379, %s380
    %p389 = scmp.eq.s32.totalorder %s28, 0
    %p390 = por %p388, %p389
    %p391 = scmp.ne.s32.totalorder %s379, %s380
    %p392 = scmp.eq.s32.totalorder %s29, 1
    %p393 = por %p391, %p392
    %p395 = scmp.ne.s32.totalorder %s380, %s394
    %p396 = scmp.eq.s32.totalorder %s29, 0
    %p397 = por %p395, %p396
    %s398 = ssub.s32 %s23, %s30
    %p399 = scmp.eq.s32.totalorder %s398, 0
    %s401 = sadd.s32 %s400, 1
    %s402 = scalar_select %p399, %s400, %s401
    %p405 = pneg %p399
    %p406 = scmp.eq.s32.totalorder %s23, 1
    %p407 = por %p405, %p406
    %p408 = scmp.ne.s32.totalorder %s400, %s403
    %p409 = scmp.eq.s32.totalorder %s23, 0
    %p410 = por %p408, %p409
    %p411 = scmp.ne.s32.totalorder %s400, %s403
    %p412 = scmp.eq.s32.totalorder %s28, 1
    %p413 = por %p411, %p412
    %p414 = scmp.ne.s32.totalorder %s403, %s404
    %p415 = scmp.eq.s32.totalorder %s28, 0
    %p416 = por %p414, %p415
    %p417 = scmp.ne.s32.totalorder %s403, %s404
    %p418 = scmp.eq.s32.totalorder %s29, 1
    %p419 = por %p417, %p418
    %p421 = scmp.ne.s32.totalorder %s404, %s420
    %p422 = scmp.eq.s32.totalorder %s29, 0
    %p423 = por %p421, %p422
    %p424 = scmp.le.s32.totalorder 1, %s23
    %p425 = scmp.lt.s32.totalorder %s23, 3
    %p426 = pnand %p424, %p425
    %p427 = pneg %p426
    // Predicated region
    $region9: #{permutator_block.4} parent=5 // pred_check
      _
    $region10: #{permutator_block.4} parent=5 // pred_check_branch
      %429 = sbr.rel (%p426) target = $region12
    $region11: #{permutator_block.4} parent=5 // pred_region
      %s430 = ssub.s32 %s23, 1
      // Predicated region
      $region13: #{permutator_block.4} parent=11 // pred_check
        %p431 = pneg %p96
      $region14: #{permutator_block.4} parent=11 // pred_check_branch
        %433 = sbr.rel (%p431) target = $region16
      $region15: #{permutator_block.4} parent=11 // pred_region
        _
      $region16: #{permutator_block.4} parent=11 // pred_fallthru
        _
      // Predicated region
      $region17: #{permutator_block.4} parent=11 // pred_check
        %p434 = pneg %p117
      $region18: #{permutator_block.4} parent=11 // pred_check_branch
        %436 = sbr.rel (%p434) target = $region20
      $region19: #{permutator_block.4} parent=11 // pred_region
        _
      $region20: #{permutator_block.4} parent=11 // pred_fallthru
        _
      // Predicated region
      $region21: #{permutator_block.4} parent=11 // pred_check
        %p437 = pneg %p138
      $region22: #{permutator_block.4} parent=11 // pred_check_branch
        %439 = sbr.rel (%p437) target = $region24
      $region23: #{permutator_block.4} parent=11 // pred_region
        _
      $region24: #{permutator_block.4} parent=11 // pred_fallthru
        _
      // Predicated region
      $region25: #{permutator_block.4} parent=11 // pred_check
        %p440 = pneg %p159
      $region26: #{permutator_block.4} parent=11 // pred_check_branch
        %442 = sbr.rel (%p440) target = $region28
      $region27: #{permutator_block.4} parent=11 // pred_region
        _
      $region28: #{permutator_block.4} parent=11 // pred_fallthru
        _
      // Predicated region
      $region29: #{permutator_block.4} parent=11 // pred_check
        %p443 = pneg %p180
      $region30: #{permutator_block.4} parent=11 // pred_check_branch
        %445 = sbr.rel (%p443) target = $region32
      $region31: #{permutator_block.4} parent=11 // pred_region
        _
      $region32: #{permutator_block.4} parent=11 // pred_fallthru
        _
      // Predicated region
      $region33: #{permutator_block.4} parent=11 // pred_check
        %p446 = pneg %p201
      $region34: #{permutator_block.4} parent=11 // pred_check_branch
        %448 = sbr.rel (%p446) target = $region36
      $region35: #{permutator_block.4} parent=11 // pred_region
        _
      $region36: #{permutator_block.4} parent=11 // pred_fallthru
        _
      // Predicated region
      $region37: #{permutator_block.4} parent=11 // pred_check
        %p449 = pneg %p222
      $region38: #{permutator_block.4} parent=11 // pred_check_branch
        %451 = sbr.rel (%p449) target = $region40
      $region39: #{permutator_block.4} parent=11 // pred_region
        _
      $region40: #{permutator_block.4} parent=11 // pred_fallthru
        _
      // Predicated region
      $region41: #{permutator_block.4} parent=11 // pred_check
        %p452 = pneg %p243
      $region42: #{permutator_block.4} parent=11 // pred_check_branch
        %454 = sbr.rel (%p452) target = $region44
      $region43: #{permutator_block.4} parent=11 // pred_region
        _
      $region44: #{permutator_block.4} parent=11 // pred_fallthru
        _
      // Predicated region
      $region45: #{permutator_block.4} parent=11 // pred_check
        %p455 = pneg %p264
      $region46: #{permutator_block.4} parent=11 // pred_check_branch
        %457 = sbr.rel (%p455) target = $region48
      $region47: #{permutator_block.4} parent=11 // pred_region
        _
      $region48: #{permutator_block.4} parent=11 // pred_fallthru
        _
      // Predicated region
      $region49: #{permutator_block.4} parent=11 // pred_check
        %p458 = pneg %p285
      $region50: #{permutator_block.4} parent=11 // pred_check_branch
        %460 = sbr.rel (%p458) target = $region52
      $region51: #{permutator_block.4} parent=11 // pred_region
        _
      $region52: #{permutator_block.4} parent=11 // pred_fallthru
        _
      // Predicated region
      $region53: #{permutator_block.4} parent=11 // pred_check
        %p461 = pneg %p306
      $region54: #{permutator_block.4} parent=11 // pred_check_branch
        %463 = sbr.rel (%p461) target = $region56
      $region55: #{permutator_block.4} parent=11 // pred_region
        _
      $region56: #{permutator_block.4} parent=11 // pred_fallthru
        _
      // Predicated region
      $region57: #{permutator_block.4} parent=11 // pred_check
        %p464 = pneg %p327
      $region58: #{permutator_block.4} parent=11 // pred_check_branch
        %466 = sbr.rel (%p464) target = $region60
      $region59: #{permutator_block.4} parent=11 // pred_region
        _
      $region60: #{permutator_block.4} parent=11 // pred_fallthru
        _
      // Predicated region
      $region61: #{permutator_block.4} parent=11 // pred_check
        %p467 = pneg %p348
      $region62: #{permutator_block.4} parent=11 // pred_check_branch
        %469 = sbr.rel (%p467) target = $region64
      $region63: #{permutator_block.4} parent=11 // pred_region
        _
      $region64: #{permutator_block.4} parent=11 // pred_fallthru
        _
      // Predicated region
      $region65: #{permutator_block.4} parent=11 // pred_check
        %p470 = pneg %p369
      $region66: #{permutator_block.4} parent=11 // pred_check_branch
        %472 = sbr.rel (%p470) target = $region68
      $region67: #{permutator_block.4} parent=11 // pred_region
        _
      $region68: #{permutator_block.4} parent=11 // pred_fallthru
        _
      // Predicated region
      $region69: #{permutator_block.4} parent=11 // pred_check
        %p473 = pneg %p390
      $region70: #{permutator_block.4} parent=11 // pred_check_branch
        %475 = sbr.rel (%p473) target = $region72
      $region71: #{permutator_block.4} parent=11 // pred_region
        _
      $region72: #{permutator_block.4} parent=11 // pred_fallthru
        _
    $region12: #{permutator_block.4} parent=5 // pred_fallthru
      _
    %p476 = scmp.lt.s32.totalorder %s23, 2
    // Predicated region
    $region73: #{permutator_block.4} parent=5 // pred_check
      %p477 = pneg %p476
    $region74: #{permutator_block.4} parent=5 // pred_check_branch
      %479 = sbr.rel (%p477) target = $region76
    $region75: #{permutator_block.4} parent=5 // pred_region
      // Predicated region
      $region77: #{permutator_block.4} parent=75 // pred_check
        %p480 = pneg %p43
      $region78: #{permutator_block.4} parent=75 // pred_check_branch
        %482 = sbr.rel (%p480) target = $region80
      $region79: #{permutator_block.4} parent=75 // pred_region
        %p483 = scmp.lt.s32.totalorder %s23, 1
        %s484 = scalar_select %p483, %s23, 1
        %s485 = smul.addr %s484, 4
        %s486 = smul.addr %s485, 8
        %s487 = scalar_lea.vmem %s0, %s486
      $region80: #{permutator_block.4} parent=75 // pred_fallthru
        _
      // Predicated region
      $region81: #{permutator_block.4} parent=75 // pred_check
        %p488 = pneg %p69
      $region82: #{permutator_block.4} parent=75 // pred_check_branch
        %490 = sbr.rel (%p488) target = $region84
      $region83: #{permutator_block.4} parent=75 // pred_region
        %p491 = scmp.lt.s32.totalorder %s23, 1
        %s492 = scalar_select %p491, %s23, 1
        %s493 = smul.addr %s492, 4
        %s494 = smul.addr %s493, 8
        %s495 = scalar_lea.vmem %s1, %s494
      $region84: #{permutator_block.4} parent=75 // pred_fallthru
        _
    $region76: #{permutator_block.4} parent=5 // pred_fallthru
      _
    %p496 = scmp.le.s32.totalorder 1, %s23
    %p497 = scmp.lt.s32.totalorder %s23, 3
    %p498 = pnand %p496, %p497
    %p499 = pneg %p498
    // Predicated region
    $region85: #{permutator_block.4} parent=5 // pred_check
      _
    $region86: #{permutator_block.4} parent=5 // pred_check_branch
      %501 = sbr.rel (%p498) target = $region88
    $region87: #{permutator_block.4} parent=5 // pred_region
      %s502 = ssub.s32 %s23, 1
      %p503 = scmp.lt.s32.totalorder %s28, 1
      %s504 = scalar_select %p503, %s28, 1
      %s505 = smul.addr %s504, 4
      %s506 = smul.addr %s505, 8
      %s507 = scalar_lea.vmem %s0, %s506
      %p508 = pneg %p49
      %p509 = pneg %p46
      %p510 = scmp.lt.s32.totalorder %s28, 1
      %s511 = scalar_select %p510, %s28, 1
      %s512 = smul.addr %s511, 4
      %s513 = smul.addr %s512, 8
      %s514 = scalar_lea.vmem %s1, %s513
      %p515 = pneg %p75
      %p516 = pneg %p72
      %p517 = pneg %p96
      %p518 = pneg %p93
      %p519 = pneg %p117
      %p520 = pneg %p114
      %p521 = pneg %p138
      %p522 = pneg %p135
      %p523 = pneg %p159
      %p524 = pneg %p156
      %p525 = pneg %p180
      %p526 = pneg %p177
      %p527 = pneg %p201
      %p528 = pneg %p198
      %p529 = pneg %p222
      %p530 = pneg %p219
      %p531 = pneg %p243
      %p532 = pneg %p240
      %p533 = pneg %p264
      %p534 = pneg %p261
      %p535 = pneg %p285
      %p536 = pneg %p282
      %p537 = pneg %p306
      %p538 = pneg %p303
      %p539 = pneg %p327
      %p540 = pneg %p324
      %p541 = pneg %p348
      %p542 = pneg %p345
      %p543 = pneg %p369
      %p544 = pneg %p366
      %p545 = pneg %p390
      %p546 = pneg %p387
      %p547 = pneg %p416
      %p548 = pneg %p413
      %p549 = scmp.lt.s32.totalorder %s28, 1
      %s550 = scalar_select %p549, %s28, 1
      %s551 = smul.addr %s550, 4
      %s552 = smul.addr %s551, 8
      %s553 = scalar_lea.vmem %s17, %s552
      %p554 = scmp.lt.s32.totalorder %s28, 1
      %s555 = scalar_select %p554, %s28, 1
      %s556 = smul.addr %s555, 4
      %s557 = smul.addr %s556, 8
      %s558 = scalar_lea.vmem %s0, %s557
      %p559 = scmp.lt.s32.totalorder %s28, 1
      %s560 = scalar_select %p559, %s28, 1
      %s561 = smul.addr %s560, 4
      %s562 = smul.addr %s561, 8
      %s563 = scalar_lea.vmem %s1, %s562
      %p564 = scmp.lt.s32.totalorder %s28, 1
      %s565 = scalar_select %p564, %s28, 1
      %s566 = smul.addr %s565, 4
      %s567 = smul.addr %s566, 8
      %s568 = scalar_lea.vmem %s17, %s567
      %v569 = vld [vmem:[%s563] sm:$0xff]
      %v570 = vld [vmem:[%s563 + $0x8] sm:$0xff]
      %v571 = vld [vmem:[%s563 + $0x10] sm:$0xff]
      %v572 = vld [vmem:[%s563 + $0x18] sm:$0xff]
      %v573 = vld [vmem:[%s2] sm:$0xff]
      %v574 = vld [vmem:[%s2 + $0x8] sm:$0xff]
      %v575 = vld [vmem:[%s2 + $0x10] sm:$0xff]
      %v576 = vld [vmem:[%s2 + $0x18] sm:$0xff]
      %v577 = vld [vmem:[%s2 + $0x20] sm:$0xff]
      %v578 = vld [vmem:[%s2 + $0x28] sm:$0xff]
      %v579 = vld [vmem:[%s2 + $0x30] sm:$0xff]
      %v580 = vld [vmem:[%s2 + $0x38] sm:$0xff]
      %v581 = vld [vmem:[%s2 + $0x40] sm:$0xff]
      %v582 = vld [vmem:[%s2 + $0x48] sm:$0xff]
      %v583 = vld [vmem:[%s2 + $0x50] sm:$0xff]
      %v584 = vld [vmem:[%s2 + $0x58] sm:$0xff]
      %v585 = vld [vmem:[%s2 + $0x60] sm:$0xff]
      %v586 = vld [vmem:[%s2 + $0x68] sm:$0xff]
      %v587 = vld [vmem:[%s2 + $0x70] sm:$0xff]
      %v588 = vld [vmem:[%s2 + $0x78] sm:$0xff]
      %v589 = vld [vmem:[%s2 + $0x80] sm:$0xff]
      %v590 = vld [vmem:[%s2 + $0x88] sm:$0xff]
      %v591 = vld [vmem:[%s2 + $0x90] sm:$0xff]
      %v592 = vld [vmem:[%s2 + $0x98] sm:$0xff]
      %v593 = vld [vmem:[%s2 + $0xa0] sm:$0xff]
      %v594 = vld [vmem:[%s2 + $0xa8] sm:$0xff]
      %v595 = vld [vmem:[%s2 + $0xb0] sm:$0xff]
      %v596 = vld [vmem:[%s2 + $0xb8] sm:$0xff]
      %v597 = vld [vmem:[%s2 + $0xc0] sm:$0xff]
      %v598 = vld [vmem:[%s2 + $0xc8] sm:$0xff]
      %v599 = vld [vmem:[%s2 + $0xd0] sm:$0xff]
      %v600 = vld [vmem:[%s2 + $0xd8] sm:$0xff]
      %v601 = vld [vmem:[%s2 + $0xe0] sm:$0xff]
      %v602 = vld [vmem:[%s2 + $0xe8] sm:$0xff]
      %v603 = vld [vmem:[%s2 + $0xf0] sm:$0xff]
      %v604 = vld [vmem:[%s2 + $0xf8] sm:$0xff]
      %v605 = vld [vmem:[%s2 + $0x100] sm:$0xff]
      %v606 = vld [vmem:[%s2 + $0x108] sm:$0xff]
      %v607 = vld [vmem:[%s2 + $0x110] sm:$0xff]
      %v608 = vld [vmem:[%s2 + $0x118] sm:$0xff]
      %v609 = vld [vmem:[%s2 + $0x120] sm:$0xff]
      %v610 = vld [vmem:[%s2 + $0x128] sm:$0xff]
      %v611 = vld [vmem:[%s2 + $0x130] sm:$0xff]
      %v612 = vld [vmem:[%s2 + $0x138] sm:$0xff]
      %v613 = vld [vmem:[%s2 + $0x140] sm:$0xff]
      %v614 = vld [vmem:[%s2 + $0x148] sm:$0xff]
      %v615 = vld [vmem:[%s2 + $0x150] sm:$0xff]
      %v616 = vld [vmem:[%s2 + $0x158] sm:$0xff]
      %v617 = vld [vmem:[%s2 + $0x160] sm:$0xff]
      %v618 = vld [vmem:[%s2 + $0x168] sm:$0xff]
      %v619 = vld [vmem:[%s2 + $0x170] sm:$0xff]
      %v620 = vld [vmem:[%s2 + $0x178] sm:$0xff]
      %v621 = vld [vmem:[%s2 + $0x180] sm:$0xff]
      %v622 = vld [vmem:[%s2 + $0x188] sm:$0xff]
      %v623 = vld [vmem:[%s2 + $0x190] sm:$0xff]
      %v624 = vld [vmem:[%s2 + $0x198] sm:$0xff]
      %v625 = vld [vmem:[%s2 + $0x1a0] sm:$0xff]
      %v626 = vld [vmem:[%s2 + $0x1a8] sm:$0xff]
      %v627 = vld [vmem:[%s2 + $0x1b0] sm:$0xff]
      %v628 = vld [vmem:[%s2 + $0x1b8] sm:$0xff]
      %v629 = vld [vmem:[%s2 + $0x1c0] sm:$0xff]
      %v630 = vld [vmem:[%s2 + $0x1c8] sm:$0xff]
      %v631 = vld [vmem:[%s2 + $0x1d0] sm:$0xff]
      %v632 = vld [vmem:[%s2 + $0x1d8] sm:$0xff]
      %v633 = vld [vmem:[%s2 + $0x1e0] sm:$0xff]
      %v634 = vld [vmem:[%s2 + $0x1e8] sm:$0xff]
      %v635 = vld [vmem:[%s2 + $0x1f0] sm:$0xff]
      %v636 = vld [vmem:[%s2 + $0x1f8] sm:$0xff]
      %v637 = vld [vmem:[%s3] sm:$0xff]
      %v638 = vld [vmem:[%s3 + $0x8] sm:$0xff]
      %v639 = vld [vmem:[%s3 + $0x10] sm:$0xff]
      %v640 = vld [vmem:[%s3 + $0x18] sm:$0xff]
      %v641 = vld [vmem:[%s3 + $0x20] sm:$0xff]
      %v642 = vld [vmem:[%s3 + $0x28] sm:$0xff]
      %v643 = vld [vmem:[%s3 + $0x30] sm:$0xff]
      %v644 = vld [vmem:[%s3 + $0x38] sm:$0xff]
      %645 = vmatprep.subr.mxu0 0.0
      %646 = vmatpush1.msra.mxu0 %v573
      %647 = vmatprep.subr.mxu0 0.0
      %648 = vmatpush1.msra.mxu0 %v574
      %649 = vmatprep.subr.mxu0 0.0
      %650 = vmatpush1.msra.mxu0 %v575
      %651 = vmatprep.subr.mxu0 0.0
      %652 = vmatpush1.msra.mxu0 %v576
      %653 = vmatprep.subr.mxu0 0.0
      %654 = vmatpush1.msra.mxu0 %v577
      %655 = vmatprep.subr.mxu0 0.0
      %656 = vmatpush1.msra.mxu0 %v578
      %657 = vmatprep.subr.mxu0 0.0
      %658 = vmatpush1.msra.mxu0 %v579
      %659 = vmatprep.subr.mxu0 0.0
      %660 = vmatpush1.msra.mxu0 %v580
      %661 = vmatprep.subr.mxu0 0.0
      %662 = vmatpush1.msra.mxu0 %v581
      %663 = vmatprep.subr.mxu0 0.0
      %664 = vmatpush1.msra.mxu0 %v582
      %665 = vmatprep.subr.mxu0 0.0
      %666 = vmatpush1.msra.mxu0 %v583
      %667 = vmatprep.subr.mxu0 0.0
      %668 = vmatpush1.msra.mxu0 %v584
      %669 = vmatprep.subr.mxu0 0.0
      %670 = vmatpush1.msra.mxu0 %v585
      %671 = vmatprep.subr.mxu0 0.0
      %672 = vmatpush1.msra.mxu0 %v586
      %673 = vmatprep.subr.mxu0 0.0
      %674 = vmatpush1.msra.mxu0 %v587
      %675 = vmatprep.subr.mxu0 0.0
      %676 = vmatpush1.msra.mxu0 %v588
      %677 = vmatprep.subr.mxu0 0.0
      %678 = vmatpush1.msra.mxu0 %v589
      %679 = vmatprep.subr.mxu0 0.0
      %680 = vmatpush1.msra.mxu0 %v590
      %681 = vmatprep.subr.mxu0 0.0
      %682 = vmatpush1.msra.mxu0 %v591
      %683 = vmatprep.subr.mxu0 0.0
      %684 = vmatpush1.msra.mxu0 %v592
      %685 = vmatprep.subr.mxu0 0.0
      %686 = vmatpush1.msra.mxu0 %v593
      %687 = vmatprep.subr.mxu0 0.0
      %688 = vmatpush1.msra.mxu0 %v594
      %689 = vmatprep.subr.mxu0 0.0
      %690 = vmatpush1.msra.mxu0 %v595
      %691 = vmatprep.subr.mxu0 0.0
      %692 = vmatpush1.msra.mxu0 %v596
      %693 = vmatprep.subr.mxu0 0.0
      %694 = vmatpush1.msra.mxu0 %v597
      %695 = vmatprep.subr.mxu0 0.0
      %696 = vmatpush1.msra.mxu0 %v598
      %697 = vmatprep.subr.mxu0 0.0
      %698 = vmatpush1.msra.mxu0 %v599
      %699 = vmatprep.subr.mxu0 0.0
      %700 = vmatpush1.msra.mxu0 %v600
      %701 = vmatprep.subr.mxu0 0.0
      %702 = vmatpush1.msra.mxu0 %v601
      %703 = vmatprep.subr.mxu0 0.0
      %704 = vmatpush1.msra.mxu0 %v602
      %705 = vmatprep.subr.mxu0 0.0
      %706 = vmatpush1.msra.mxu0 %v603
      %707 = vmatprep.subr.mxu0 0.0
      %708 = vmatpush1.msra.mxu0 %v604
      %709 = vmatprep.mubr.f32.mxu0 %v570
      %710 = vmatmul.mubr.f32.gmra.mrb[0].mxu0 %v569
      %v711 = vpop.f32.mrb[0].mxu0
      %v712 = vadd.f32 0.0, %v711
      %v713 = vpop.f32.mrb[0].mxu0
      %714 = vdwg.mxu0
      %715 = vmatprep.subr.mxu0 0.0
      %716 = vmatpush1.msra.mxu0 %v605
      %717 = vmatprep.subr.mxu0 0.0
      %718 = vmatpush1.msra.mxu0 %v606
      %719 = vmatprep.subr.mxu0 0.0
      %720 = vmatpush1.msra.mxu0 %v607
      %721 = vmatprep.subr.mxu0 0.0
      %722 = vmatpush1.msra.mxu0 %v608
      %723 = vmatprep.subr.mxu0 0.0
      %724 = vmatpush1.msra.mxu0 %v609
      %725 = vmatprep.subr.mxu0 0.0
      %726 = vmatpush1.msra.mxu0 %v610
      %727 = vmatprep.subr.mxu0 0.0
      %728 = vmatpush1.msra.mxu0 %v611
      %729 = vmatprep.subr.mxu0 0.0
      %730 = vmatpush1.msra.mxu0 %v612
      %731 = vmatprep.subr.mxu0 0.0
      %732 = vmatpush1.msra.mxu0 %v613
      %733 = vmatprep.subr.mxu0 0.0
      %734 = vmatpush1.msra.mxu0 %v614
      %735 = vmatprep.subr.mxu0 0.0
      %736 = vmatpush1.msra.mxu0 %v615
      %737 = vmatprep.subr.mxu0 0.0
      %738 = vmatpush1.msra.mxu0 %v616
      %739 = vmatprep.subr.mxu0 0.0
      %740 = vmatpush1.msra.mxu0 %v617
      %741 = vmatprep.subr.mxu0 0.0
      %742 = vmatpush1.msra.mxu0 %v618
      %743 = vmatprep.subr.mxu0 0.0
      %744 = vmatpush1.msra.mxu0 %v619
      %745 = vmatprep.subr.mxu0 0.0
      %746 = vmatpush1.msra.mxu0 %v620
      %747 = vmatprep.subr.mxu0 0.0
      %748 = vmatpush1.msra.mxu0 %v621
      %749 = vmatprep.subr.mxu0 0.0
      %750 = vmatpush1.msra.mxu0 %v622
      %751 = vmatprep.subr.mxu0 0.0
      %752 = vmatpush1.msra.mxu0 %v623
      %753 = vmatprep.subr.mxu0 0.0
      %754 = vmatpush1.msra.mxu0 %v624
      %755 = vmatprep.subr.mxu0 0.0
      %756 = vmatpush1.msra.mxu0 %v625
      %757 = vmatprep.subr.mxu0 0.0
      %758 = vmatpush1.msra.mxu0 %v626
      %759 = vmatprep.subr.mxu0 0.0
      %760 = vmatpush1.msra.mxu0 %v627
      %761 = vmatprep.subr.mxu0 0.0
      %762 = vmatpush1.msra.mxu0 %v628
      %763 = vmatprep.subr.mxu0 0.0
      %764 = vmatpush1.msra.mxu0 %v629
      %765 = vmatprep.subr.mxu0 0.0
      %766 = vmatpush1.msra.mxu0 %v630
      %767 = vmatprep.subr.mxu0 0.0
      %768 = vmatpush1.msra.mxu0 %v631
      %769 = vmatprep.subr.mxu0 0.0
      %770 = vmatpush1.msra.mxu0 %v632
      %771 = vmatprep.subr.mxu0 0.0
      %772 = vmatpush1.msra.mxu0 %v633
      %773 = vmatprep.subr.mxu0 0.0
      %774 = vmatpush1.msra.mxu0 %v634
      %775 = vmatprep.subr.mxu0 0.0
      %776 = vmatpush1.msra.mxu0 %v635
      %777 = vmatprep.subr.mxu0 0.0
      %778 = vmatpush1.msra.mxu0 %v636
      %779 = vmatprep.mubr.f32.mxu0 %v572
      %780 = vmatmul.mubr.f32.gmra.mrb[0].mxu0 %v571
      %v781 = vpop.f32.mrb[0].mxu0
      %v782 = vadd.f32 %v712, %v781
      %v783 = vpop.f32.mrb[0].mxu0
      %784 = vdwg.mxu0
      %vm785 = vcmask 130048
      %v787 = vsel %vm785, %v782, 0
      %789 = vmatprep.subr.mxu0 %v638
      %790 = vmatpush1.msra.mxu0 %v637
      %791 = vmatprep.subr.mxu0 %v642
      %792 = vmatpush1.msra.mxu0 %v641
      %793 = vmatprep.subr.mxu0 0.0
      %794 = vmatpush1.msra.mxu0 0.0
      %795 = vmatprep.subr.mxu0 0.0
      %796 = vmatpush1.msra.mxu0 0.0
      %797 = vmatprep.subr.mxu0 0.0
      %798 = vmatpush1.msra.mxu0 0.0
      %799 = vmatprep.subr.mxu0 0.0
      %800 = vmatpush1.msra.mxu0 0.0
      %801 = vmatprep.subr.mxu0 0.0
      %802 = vmatpush1.msra.mxu0 0.0
      %803 = vmatprep.subr.mxu0 0.0
      %804 = vmatpush1.msra.mxu0 0.0
      %805 = vmatprep.subr.mxu0 0.0
      %806 = vmatpush1.msra.mxu0 0.0
      %807 = vmatprep.subr.mxu0 0.0
      %808 = vmatpush1.msra.mxu0 0.0
      %809 = vmatprep.subr.mxu0 0.0
      %810 = vmatpush1.msra.mxu0 0.0
      %811 = vmatprep.subr.mxu0 0.0
      %812 = vmatpush1.msra.mxu0 0.0
      %813 = vmatprep.subr.mxu0 0.0
      %814 = vmatpush1.msra.mxu0 0.0
      %815 = vmatprep.subr.mxu0 0.0
      %816 = vmatpush1.msra.mxu0 0.0
      %817 = vmatprep.subr.mxu0 0.0
      %818 = vmatpush1.msra.mxu0 0.0
      %819 = vmatprep.subr.mxu0 0.0
      %820 = vmatpush1.msra.mxu0 0.0
      %821 = vmatprep.subr.mxu0 0.0
      %822 = vmatpush1.msra.mxu0 0.0
      %823 = vmatprep.subr.mxu0 0.0
      %824 = vmatpush1.msra.mxu0 0.0
      %825 = vmatprep.subr.mxu0 0.0
      %826 = vmatpush1.msra.mxu0 0.0
      %827 = vmatprep.subr.mxu0 0.0
      %828 = vmatpush1.msra.mxu0 0.0
      %829 = vmatprep.subr.mxu0 0.0
      %830 = vmatpush1.msra.mxu0 0.0
      %831 = vmatprep.subr.mxu0 0.0
      %832 = vmatpush1.msra.mxu0 0.0
      %833 = vmatprep.subr.mxu0 0.0
      %834 = vmatpush1.msra.mxu0 0.0
      %835 = vmatprep.subr.mxu0 0.0
      %836 = vmatpush1.msra.mxu0 0.0
      %837 = vmatprep.subr.mxu0 0.0
      %838 = vmatpush1.msra.mxu0 0.0
      %839 = vmatprep.subr.mxu0 0.0
      %840 = vmatpush1.msra.mxu0 0.0
      %841 = vmatprep.subr.mxu0 0.0
      %842 = vmatpush1.msra.mxu0 0.0
      %843 = vmatprep.subr.mxu0 0.0
      %844 = vmatpush1.msra.mxu0 0.0
      %845 = vmatprep.subr.mxu0 0.0
      %846 = vmatpush1.msra.mxu0 0.0
      %847 = vmatprep.subr.mxu0 0.0
      %848 = vmatpush1.msra.mxu0 0.0
      %849 = vmatprep.subr.mxu0 0.0
      %850 = vmatpush1.msra.mxu0 0.0
      %851 = vmatprep.subr.mxu0 0.0
      %852 = vmatpush1.msra.mxu0 0.0
      %853 = vmatprep.mubr.f32.mxu0 0.0
      %854 = vmatmul.mubr.f32.gmra.mrb[0].mxu0 %v787
      %v855 = vpop.f32.mrb[0].mxu0
      %v856 = vadd.f32 0.0, %v855
      %v857 = vpop.f32.mrb[0].mxu0
      %v858 = vadd.f32 0.0, %v857
      %859 = vdwg.mxu0
      %860 = vmatprep.subr.mxu0 %v640
      %861 = vmatpush1.msra.mxu0 %v639
      %862 = vmatprep.subr.mxu0 %v644
      %863 = vmatpush1.msra.mxu0 %v643
      %864 = vmatprep.subr.mxu0 0.0
      %865 = vmatpush1.msra.mxu0 0.0
      %866 = vmatprep.subr.mxu0 0.0
      %867 = vmatpush1.msra.mxu0 0.0
      %868 = vmatprep.subr.mxu0 0.0
      %869 = vmatpush1.msra.mxu0 0.0
      %870 = vmatprep.subr.mxu0 0.0
      %871 = vmatpush1.msra.mxu0 0.0
      %872 = vmatprep.subr.mxu0 0.0
      %873 = vmatpush1.msra.mxu0 0.0
      %874 = vmatprep.subr.mxu0 0.0
      %875 = vmatpush1.msra.mxu0 0.0
      %876 = vmatprep.subr.mxu0 0.0
      %877 = vmatpush1.msra.mxu0 0.0
      %878 = vmatprep.subr.mxu0 0.0
      %879 = vmatpush1.msra.mxu0 0.0
      %880 = vmatprep.subr.mxu0 0.0
      %881 = vmatpush1.msra.mxu0 0.0
      %882 = vmatprep.subr.mxu0 0.0
      %883 = vmatpush1.msra.mxu0 0.0
      %884 = vmatprep.subr.mxu0 0.0
      %885 = vmatpush1.msra.mxu0 0.0
      %886 = vmatprep.subr.mxu0 0.0
      %887 = vmatpush1.msra.mxu0 0.0
      %888 = vmatprep.subr.mxu0 0.0
      %889 = vmatpush1.msra.mxu0 0.0
      %890 = vmatprep.subr.mxu0 0.0
      %891 = vmatpush1.msra.mxu0 0.0
      %892 = vmatprep.subr.mxu0 0.0
      %893 = vmatpush1.msra.mxu0 0.0
      %894 = vmatprep.subr.mxu0 0.0
      %895 = vmatpush1.msra.mxu0 0.0
      %896 = vmatprep.subr.mxu0 0.0
      %897 = vmatpush1.msra.mxu0 0.0
      %898 = vmatprep.subr.mxu0 0.0
      %899 = vmatpush1.msra.mxu0 0.0
      %900 = vmatprep.subr.mxu0 0.0
      %901 = vmatpush1.msra.mxu0 0.0
      %902 = vmatprep.subr.mxu0 0.0
      %903 = vmatpush1.msra.mxu0 0.0
      %904 = vmatprep.subr.mxu0 0.0
      %905 = vmatpush1.msra.mxu0 0.0
      %906 = vmatprep.subr.mxu0 0.0
      %907 = vmatpush1.msra.mxu0 0.0
      %908 = vmatprep.subr.mxu0 0.0
      %909 = vmatpush1.msra.mxu0 0.0
      %910 = vmatprep.subr.mxu0 0.0
      %911 = vmatpush1.msra.mxu0 0.0
      %912 = vmatprep.subr.mxu0 0.0
      %913 = vmatpush1.msra.mxu0 0.0
      %914 = vmatprep.subr.mxu0 0.0
      %915 = vmatpush1.msra.mxu0 0.0
      %916 = vmatprep.subr.mxu0 0.0
      %917 = vmatpush1.msra.mxu0 0.0
      %918 = vmatprep.subr.mxu0 0.0
      %919 = vmatpush1.msra.mxu0 0.0
      %920 = vmatprep.subr.mxu0 0.0
      %921 = vmatpush1.msra.mxu0 0.0
      %922 = vmatprep.subr.mxu0 0.0
      %923 = vmatpush1.msra.mxu0 0.0
      %924 = vmatprep.mubr.f32.mxu0 0.0
      %925 = vmatmul.mubr.f32.gmra.mrb[0].mxu0 %v787
      %v926 = vpop.f32.mrb[0].mxu0
      %v927 = vadd.f32 0.0, %v926
      %v928 = vpop.f32.mrb[0].mxu0
      %v929 = vadd.f32 0.0, %v928
      %930 = vdwg.mxu0
      %v931 = vmul.f32 %v569, %v569
      %v932 = vmul.f32 %v570, %v570
      %v933 = vmul.f32 %v571, %v571
      %v934 = vmul.f32 %v572, %v572
      %935 = vmatprep.subr.mxu0 0.0
      %936 = vmatpush1.msra.mxu0 %v573
      %937 = vmatprep.subr.mxu0 0.0
      %938 = vmatpush1.msra.mxu0 %v574
      %939 = vmatprep.subr.mxu0 0.0
      %940 = vmatpush1.msra.mxu0 %v575
      %941 = vmatprep.subr.mxu0 0.0
      %942 = vmatpush1.msra.mxu0 %v576
      %943 = vmatprep.subr.mxu0 0.0
      %944 = vmatpush1.msra.mxu0 %v577
      %945 = vmatprep.subr.mxu0 0.0
      %946 = vmatpush1.msra.mxu0 %v578
      %947 = vmatprep.subr.mxu0 0.0
      %948 = vmatpush1.msra.mxu0 %v579
      %949 = vmatprep.subr.mxu0 0.0
      %950 = vmatpush1.msra.mxu0 %v580
      %951 = vmatprep.subr.mxu0 0.0
      %952 = vmatpush1.msra.mxu0 %v581
      %953 = vmatprep.subr.mxu0 0.0
      %954 = vmatpush1.msra.mxu0 %v582
      %955 = vmatprep.subr.mxu0 0.0
      %956 = vmatpush1.msra.mxu0 %v583
      %957 = vmatprep.subr.mxu0 0.0
      %958 = vmatpush1.msra.mxu0 %v584
      %959 = vmatprep.subr.mxu0 0.0
      %960 = vmatpush1.msra.mxu0 %v585
      %961 = vmatprep.subr.mxu0 0.0
      %962 = vmatpush1.msra.mxu0 %v586
      %963 = vmatprep.subr.mxu0 0.0
      %964 = vmatpush1.msra.mxu0 %v587
      %965 = vmatprep.subr.mxu0 0.0
      %966 = vmatpush1.msra.mxu0 %v588
      %967 = vmatprep.subr.mxu0 0.0
      %968 = vmatpush1.msra.mxu0 %v589
      %969 = vmatprep.subr.mxu0 0.0
      %970 = vmatpush1.msra.mxu0 %v590
      %971 = vmatprep.subr.mxu0 0.0
      %972 = vmatpush1.msra.mxu0 %v591
      %973 = vmatprep.subr.mxu0 0.0
      %974 = vmatpush1.msra.mxu0 %v592
      %975 = vmatprep.subr.mxu0 0.0
      %976 = vmatpush1.msra.mxu0 %v593
      %977 = vmatprep.subr.mxu0 0.0
      %978 = vmatpush1.msra.mxu0 %v594
      %979 = vmatprep.subr.mxu0 0.0
      %980 = vmatpush1.msra.mxu0 %v595
      %981 = vmatprep.subr.mxu0 0.0
      %982 = vmatpush1.msra.mxu0 %v596
      %983 = vmatprep.subr.mxu0 0.0
      %984 = vmatpush1.msra.mxu0 %v597
      %985 = vmatprep.subr.mxu0 0.0
      %986 = vmatpush1.msra.mxu0 %v598
      %987 = vmatprep.subr.mxu0 0.0
      %988 = vmatpush1.msra.mxu0 %v599
      %989 = vmatprep.subr.mxu0 0.0
      %990 = vmatpush1.msra.mxu0 %v600
      %991 = vmatprep.subr.mxu0 0.0
      %992 = vmatpush1.msra.mxu0 %v601
      %993 = vmatprep.subr.mxu0 0.0
      %994 = vmatpush1.msra.mxu0 %v602
      %995 = vmatprep.subr.mxu0 0.0
      %996 = vmatpush1.msra.mxu0 %v603
      %997 = vmatprep.subr.mxu0 0.0
      %998 = vmatpush1.msra.mxu0 %v604
      %999 = vmatprep.mubr.f32.mxu0 %v932
      %1000 = vmatmul.mubr.f32.gmra.mrb[0].mxu0 %v931
      %v1001 = vpop.f32.mrb[0].mxu0
      %v1002 = vadd.f32 0.0, %v1001
      %v1003 = vpop.f32.mrb[0].mxu0
      %1004 = vdwg.mxu0
      %1005 = vmatprep.subr.mxu0 0.0
      %1006 = vmatpush1.msra.mxu0 %v605
      %1007 = vmatprep.subr.mxu0 0.0
      %1008 = vmatpush1.msra.mxu0 %v606
      %1009 = vmatprep.subr.mxu0 0.0
      %1010 = vmatpush1.msra.mxu0 %v607
      %1011 = vmatprep.subr.mxu0 0.0
      %1012 = vmatpush1.msra.mxu0 %v608
      %1013 = vmatprep.subr.mxu0 0.0
      %1014 = vmatpush1.msra.mxu0 %v609
      %1015 = vmatprep.subr.mxu0 0.0
      %1016 = vmatpush1.msra.mxu0 %v610
      %1017 = vmatprep.subr.mxu0 0.0
      %1018 = vmatpush1.msra.mxu0 %v611
      %1019 = vmatprep.subr.mxu0 0.0
      %1020 = vmatpush1.msra.mxu0 %v612
      %1021 = vmatprep.subr.mxu0 0.0
      %1022 = vmatpush1.msra.mxu0 %v613
      %1023 = vmatprep.subr.mxu0 0.0
      %1024 = vmatpush1.msra.mxu0 %v614
      %1025 = vmatprep.subr.mxu0 0.0
      %1026 = vmatpush1.msra.mxu0 %v615
      %1027 = vmatprep.subr.mxu0 0.0
      %1028 = vmatpush1.msra.mxu0 %v616
      %1029 = vmatprep.subr.mxu0 0.0
      %1030 = vmatpush1.msra.mxu0 %v617
      %1031 = vmatprep.subr.mxu0 0.0
      %1032 = vmatpush1.msra.mxu0 %v618
      %1033 = vmatprep.subr.mxu0 0.0
      %1034 = vmatpush1.msra.mxu0 %v619
      %1035 = vmatprep.subr.mxu0 0.0
      %1036 = vmatpush1.msra.mxu0 %v620
      %1037 = vmatprep.subr.mxu0 0.0
      %1038 = vmatpush1.msra.mxu0 %v621
      %1039 = vmatprep.subr.mxu0 0.0
      %1040 = vmatpush1.msra.mxu0 %v622
      %1041 = vmatprep.subr.mxu0 0.0
      %1042 = vmatpush1.msra.mxu0 %v623
      %1043 = vmatprep.subr.mxu0 0.0
      %1044 = vmatpush1.msra.mxu0 %v624
      %1045 = vmatprep.subr.mxu0 0.0
      %1046 = vmatpush1.msra.mxu0 %v625
      %1047 = vmatprep.subr.mxu0 0.0
      %1048 = vmatpush1.msra.mxu0 %v626
      %1049 = vmatprep.subr.mxu0 0.0
      %1050 = vmatpush1.msra.mxu0 %v627
      %1051 = vmatprep.subr.mxu0 0.0
      %1052 = vmatpush1.msra.mxu0 %v628
      %1053 = vmatprep.subr.mxu0 0.0
      %1054 = vmatpush1.msra.mxu0 %v629
      %1055 = vmatprep.subr.mxu0 0.0
      %1056 = vmatpush1.msra.mxu0 %v630
      %1057 = vmatprep.subr.mxu0 0.0
      %1058 = vmatpush1.msra.mxu0 %v631
      %1059 = vmatprep.subr.mxu0 0.0
      %1060 = vmatpush1.msra.mxu0 %v632
      %1061 = vmatprep.subr.mxu0 0.0
      %1062 = vmatpush1.msra.mxu0 %v633
      %1063 = vmatprep.subr.mxu0 0.0
      %1064 = vmatpush1.msra.mxu0 %v634
      %1065 = vmatprep.subr.mxu0 0.0
      %1066 = vmatpush1.msra.mxu0 %v635
      %1067 = vmatprep.subr.mxu0 0.0
      %1068 = vmatpush1.msra.mxu0 %v636
      %1069 = vmatprep.mubr.f32.mxu0 %v934
      %1070 = vmatmul.mubr.f32.gmra.mrb[0].mxu0 %v933
      %v1071 = vpop.f32.mrb[0].mxu0
      %v1072 = vadd.f32 %v1002, %v1071
      %v1073 = vpop.f32.mrb[0].mxu0
      %1074 = vdwg.mxu0
      %v1076 = vsel %vm785, %v1072, 0
      %1078 = vmatprep.subr.mxu0 %v638
      %1079 = vmatpush1.msra.mxu0 %v637
      %1080 = vmatprep.subr.mxu0 %v642
      %1081 = vmatpush1.msra.mxu0 %v641
      %1082 = vmatprep.subr.mxu0 0.0
      %1083 = vmatpush1.msra.mxu0 0.0
      %1084 = vmatprep.subr.mxu0 0.0
      %1085 = vmatpush1.msra.mxu0 0.0
      %1086 = vmatprep.subr.mxu0 0.0
      %1087 = vmatpush1.msra.mxu0 0.0
      %1088 = vmatprep.subr.mxu0 0.0
      %1089 = vmatpush1.msra.mxu0 0.0
      %1090 = vmatprep.subr.mxu0 0.0
      %1091 = vmatpush1.msra.mxu0 0.0
      %1092 = vmatprep.subr.mxu0 0.0
      %1093 = vmatpush1.msra.mxu0 0.0
      %1094 = vmatprep.subr.mxu0 0.0
      %1095 = vmatpush1.msra.mxu0 0.0
      %1096 = vmatprep.subr.mxu0 0.0
      %1097 = vmatpush1.msra.mxu0 0.0
      %1098 = vmatprep.subr.mxu0 0.0
      %1099 = vmatpush1.msra.mxu0 0.0
      %1100 = vmatprep.subr.mxu0 0.0
      %1101 = vmatpush1.msra.mxu0 0.0
      %1102 = vmatprep.subr.mxu0 0.0
      %1103 = vmatpush1.msra.mxu0 0.0
      %1104 = vmatprep.subr.mxu0 0.0
      %1105 = vmatpush1.msra.mxu0 0.0
      %1106 = vmatprep.subr.mxu0 0.0
      %1107 = vmatpush1.msra.mxu0 0.0
      %1108 = vmatprep.subr.mxu0 0.0
      %1109 = vmatpush1.msra.mxu0 0.0
      %1110 = vmatprep.subr.mxu0 0.0
      %1111 = vmatpush1.msra.mxu0 0.0
      %1112 = vmatprep.subr.mxu0 0.0
      %1113 = vmatpush1.msra.mxu0 0.0
      %1114 = vmatprep.subr.mxu0 0.0
      %1115 = vmatpush1.msra.mxu0 0.0
      %1116 = vmatprep.subr.mxu0 0.0
      %1117 = vmatpush1.msra.mxu0 0.0
      %1118 = vmatprep.subr.mxu0 0.0
      %1119 = vmatpush1.msra.mxu0 0.0
      %1120 = vmatprep.subr.mxu0 0.0
      %1121 = vmatpush1.msra.mxu0 0.0
      %1122 = vmatprep.subr.mxu0 0.0
      %1123 = vmatpush1.msra.mxu0 0.0
      %1124 = vmatprep.subr.mxu0 0.0
      %1125 = vmatpush1.msra.mxu0 0.0
      %1126 = vmatprep.subr.mxu0 0.0
      %1127 = vmatpush1.msra.mxu0 0.0
      %1128 = vmatprep.subr.mxu0 0.0
      %1129 = vmatpush1.msra.mxu0 0.0
      %1130 = vmatprep.subr.mxu0 0.0
      %1131 = vmatpush1.msra.mxu0 0.0
      %1132 = vmatprep.subr.mxu0 0.0
      %1133 = vmatpush1.msra.mxu0 0.0
      %1134 = vmatprep.subr.mxu0 0.0
      %1135 = vmatpush1.msra.mxu0 0.0
      %1136 = vmatprep.subr.mxu0 0.0
      %1137 = vmatpush1.msra.mxu0 0.0
      %1138 = vmatprep.subr.mxu0 0.0
      %1139 = vmatpush1.msra.mxu0 0.0
      %1140 = vmatprep.subr.mxu0 0.0
      %1141 = vmatpush1.msra.mxu0 0.0
      %1142 = vmatprep.mubr.f32.mxu0 0.0
      %1143 = vmatmul.mubr.f32.gmra.mrb[0].mxu0 %v1076
      %v1144 = vpop.f32.mrb[0].mxu0
      %v1145 = vadd.f32 0.0, %v1144
      %v1146 = vpop.f32.mrb[0].mxu0
      %v1147 = vadd.f32 0.0, %v1146
      %1148 = vdwg.mxu0
      %1149 = vmatprep.subr.mxu0 %v640
      %1150 = vmatpush1.msra.mxu0 %v639
      %1151 = vmatprep.subr.mxu0 %v644
      %1152 = vmatpush1.msra.mxu0 %v643
      %1153 = vmatprep.subr.mxu0 0.0
      %1154 = vmatpush1.msra.mxu0 0.0
      %1155 = vmatprep.subr.mxu0 0.0
      %1156 = vmatpush1.msra.mxu0 0.0
      %1157 = vmatprep.subr.mxu0 0.0
      %1158 = vmatpush1.msra.mxu0 0.0
      %1159 = vmatprep.subr.mxu0 0.0
      %1160 = vmatpush1.msra.mxu0 0.0
      %1161 = vmatprep.subr.mxu0 0.0
      %1162 = vmatpush1.msra.mxu0 0.0
      %1163 = vmatprep.subr.mxu0 0.0
      %1164 = vmatpush1.msra.mxu0 0.0
      %1165 = vmatprep.subr.mxu0 0.0
      %1166 = vmatpush1.msra.mxu0 0.0
      %1167 = vmatprep.subr.mxu0 0.0
      %1168 = vmatpush1.msra.mxu0 0.0
      %1169 = vmatprep.subr.mxu0 0.0
      %1170 = vmatpush1.msra.mxu0 0.0
      %1171 = vmatprep.subr.mxu0 0.0
      %1172 = vmatpush1.msra.mxu0 0.0
      %1173 = vmatprep.subr.mxu0 0.0
      %1174 = vmatpush1.msra.mxu0 0.0
      %1175 = vmatprep.subr.mxu0 0.0
      %1176 = vmatpush1.msra.mxu0 0.0
      %1177 = vmatprep.subr.mxu0 0.0
      %1178 = vmatpush1.msra.mxu0 0.0
      %1179 = vmatprep.subr.mxu0 0.0
      %1180 = vmatpush1.msra.mxu0 0.0
      %1181 = vmatprep.subr.mxu0 0.0
      %1182 = vmatpush1.msra.mxu0 0.0
      %1183 = vmatprep.subr.mxu0 0.0
      %1184 = vmatpush1.msra.mxu0 0.0
      %1185 = vmatprep.subr.mxu0 0.0
      %1186 = vmatpush1.msra.mxu0 0.0
      %1187 = vmatprep.subr.mxu0 0.0
      %1188 = vmatpush1.msra.mxu0 0.0
      %1189 = vmatprep.subr.mxu0 0.0
      %1190 = vmatpush1.msra.mxu0 0.0
      %1191 = vmatprep.subr.mxu0 0.0
      %1192 = vmatpush1.msra.mxu0 0.0
      %1193 = vmatprep.subr.mxu0 0.0
      %1194 = vmatpush1.msra.mxu0 0.0
      %1195 = vmatprep.subr.mxu0 0.0
      %1196 = vmatpush1.msra.mxu0 0.0
      %1197 = vmatprep.subr.mxu0 0.0
      %1198 = vmatpush1.msra.mxu0 0.0
      %1199 = vmatprep.subr.mxu0 0.0
      %1200 = vmatpush1.msra.mxu0 0.0
      %1201 = vmatprep.subr.mxu0 0.0
      %1202 = vmatpush1.msra.mxu0 0.0
      %1203 = vmatprep.subr.mxu0 0.0
      %1204 = vmatpush1.msra.mxu0 0.0
      %1205 = vmatprep.subr.mxu0 0.0
      %1206 = vmatpush1.msra.mxu0 0.0
      %1207 = vmatprep.subr.mxu0 0.0
      %1208 = vmatpush1.msra.mxu0 0.0
      %1209 = vmatprep.subr.mxu0 0.0
      %1210 = vmatpush1.msra.mxu0 0.0
      %1211 = vmatprep.subr.mxu0 0.0
      %1212 = vmatpush1.msra.mxu0 0.0
      %1213 = vmatprep.mubr.f32.mxu0 0.0
      %1214 = vmatmul.mubr.f32.gmra.mrb[0].mxu0 %v1076
      %v1215 = vpop.f32.mrb[0].mxu0
      %v1216 = vadd.f32 0.0, %v1215
      %v1217 = vpop.f32.mrb[0].mxu0
      %v1218 = vadd.f32 0.0, %v1217
      %1219 = vdwg.mxu0
      %v1220 = vmul.f32 %v856, %v856
      %v1221 = vmul.f32 %v858, %v858
      %v1222 = vmul.f32 %v927, %v927
      %v1223 = vmul.f32 %v929, %v929
      %v1224 = vsub.f32 %v1145, %v1220
      %v1225 = vsub.f32 %v1147, %v1221
      %v1226 = vsub.f32 %v1216, %v1222
      %v1227 = vsub.f32 %v1218, %v1223
      %v1228 = vmax.f32 %v1224, 0.0
      %v1229 = vmax.f32 %v1225, 0.0
      %v1230 = vmax.f32 %v1226, 0.0
      %v1231 = vmax.f32 %v1227, 0.0
      %v1232 = vsub.f32 %v569, %v856
      %v1233 = vsub.f32 %v570, %v858
      %v1234 = vsub.f32 %v571, %v927
      %v1235 = vsub.f32 %v572, %v929
      %v1236 = vadd.f32 %v1228, 1e-05
      %v1237 = vadd.f32 %v1229, 1e-05
      %v1238 = vadd.f32 %v1230, 1e-05
      %v1239 = vadd.f32 %v1231, 1e-05
      %v1240 = vrsqrt.pop %v1236
      %v1241 = vrsqrt.pop %v1237
      %v1242 = vrsqrt.pop %v1238
      %v1243 = vrsqrt.pop %v1239
      %v1244 = vmul.f32 %v1232, %v1240
      %v1245 = vmul.f32 %v1233, %v1241
      %v1246 = vmul.f32 %v1234, %v1242
      %v1247 = vmul.f32 %v1235, %v1243
      %v1248 = vld [vmem:[%s7] sm:$0xff]
      %v1249 = vld [vmem:[%s7 + $0x8] sm:$0xff]
      %v1250 = vld [vmem:[%s4] sm:$0xff]
      %v1251 = vld [vmem:[%s4 + $0x8] sm:$0xff]
      %v1252 = vld [vmem:[%s4 + $0x10] sm:$0xff]
      %v1253 = vld [vmem:[%s4 + $0x18] sm:$0xff]
      %v1254 = vld [vmem:[%s4 + $0x20] sm:$0xff]
      %v1255 = vld [vmem:[%s4 + $0x28] sm:$0xff]
      %v1256 = vld [vmem:[%s4 + $0x30] sm:$0xff]
      %v1257 = vld [vmem:[%s4 + $0x38] sm:$0xff]
      %v1258 = vld [vmem:[%s4 + $0x40] sm:$0xff]
      %v1259 = vld [vmem:[%s4 + $0x48] sm:$0xff]
      %v1260 = vld [vmem:[%s4 + $0x50] sm:$0xff]
      %v1261 = vld [vmem:[%s4 + $0x58] sm:$0xff]
      %v1262 = vld [vmem:[%s4 + $0x60] sm:$0xff]
      %v1263 = vld [vmem:[%s4 + $0x68] sm:$0xff]
      %v1264 = vld [vmem:[%s4 + $0x70] sm:$0xff]
      %v1265 = vld [vmem:[%s4 + $0x78] sm:$0xff]
      %v1266 = vld [vmem:[%s4 + $0x80] sm:$0xff]
      %v1267 = vld [vmem:[%s4 + $0x88] sm:$0xff]
      %v1268 = vld [vmem:[%s4 + $0x90] sm:$0xff]
      %v1269 = vld [vmem:[%s4 + $0x98] sm:$0xff]
      %v1270 = vld [vmem:[%s4 + $0xa0] sm:$0xff]
      %v1271 = vld [vmem:[%s4 + $0xa8] sm:$0xff]
      %v1272 = vld [vmem:[%s4 + $0xb0] sm:$0xff]
      %v1273 = vld [vmem:[%s4 + $0xb8] sm:$0xff]
      %v1274 = vld [vmem:[%s4 + $0xc0] sm:$0xff]
      %v1275 = vld [vmem:[%s4 + $0xc8] sm:$0xff]
      %v1276 = vld [vmem:[%s4 + $0xd0] sm:$0xff]
      %v1277 = vld [vmem:[%s4 + $0xd8] sm:$0xff]
      %v1278 = vld [vmem:[%s4 + $0xe0] sm:$0xff]
      %v1279 = vld [vmem:[%s4 + $0xe8] sm:$0xff]
      %v1280 = vld [vmem:[%s4 + $0xf0] sm:$0xff]
      %v1281 = vld [vmem:[%s4 + $0xf8] sm:$0xff]
      %v1282 = vld [vmem:[%s4 + $0x100] sm:$0xff]
      %v1283 = vld [vmem:[%s4 + $0x108] sm:$0xff]
      %v1284 = vld [vmem:[%s4 + $0x110] sm:$0xff]
      %v1285 = vld [vmem:[%s4 + $0x118] sm:$0xff]
      %v1286 = vld [vmem:[%s4 + $0x120] sm:$0xff]
      %v1287 = vld [vmem:[%s4 + $0x128] sm:$0xff]
      %v1288 = vld [vmem:[%s4 + $0x130] sm:$0xff]
      %v1289 = vld [vmem:[%s4 + $0x138] sm:$0xff]
      %v1290 = vld [vmem:[%s4 + $0x140] sm:$0xff]
      %v1291 = vld [vmem:[%s4 + $0x148] sm:$0xff]
      %v1292 = vld [vmem:[%s4 + $0x150] sm:$0xff]
      %v1293 = vld [vmem:[%s4 + $0x158] sm:$0xff]
      %v1294 = vld [vmem:[%s4 + $0x160] sm:$0xff]
      %v1295 = vld [vmem:[%s4 + $0x168] sm:$0xff]
      %v1296 = vld [vmem:[%s4 + $0x170] sm:$0xff]
      %v1297 = vld [vmem:[%s4 + $0x178] sm:$0xff]
      %v1298 = vld [vmem:[%s4 + $0x180] sm:$0xff]
      %v1299 = vld [vmem:[%s4 + $0x188] sm:$0xff]
      %v1300 = vld [vmem:[%s4 + $0x190] sm:$0xff]
      %v1301 = vld [vmem:[%s4 + $0x198] sm:$0xff]
      %v1302 = vld [vmem:[%s4 + $0x1a0] sm:$0xff]
      %v1303 = vld [vmem:[%s4 + $0x1a8] sm:$0xff]
      %v1304 = vld [vmem:[%s4 + $0x1b0] sm:$0xff]
      %v1305 = vld [vmem:[%s4 + $0x1b8] sm:$0xff]
      %v1306 = vld [vmem:[%s4 + $0x1c0] sm:$0xff]
      %v1307 = vld [vmem:[%s4 + $0x1c8] sm:$0xff]
      %v1308 = vld [vmem:[%s4 + $0x1d0] sm:$0xff]
      %v1309 = vld [vmem:[%s4 + $0x1d8] sm:$0xff]
      %v1310 = vld [vmem:[%s4 + $0x1e0] sm:$0xff]
      %v1311 = vld [vmem:[%s4 + $0x1e8] sm:$0xff]
      %v1312 = vld [vmem:[%s4 + $0x1f0] sm:$0xff]
      %v1313 = vld [vmem:[%s4 + $0x1f8] sm:$0xff]
      %v1314 = vld [vmem:[%s4 + $0x200] sm:$0xff]
      %v1315 = vld [vmem:[%s4 + $0x208] sm:$0xff]
      %v1316 = vld [vmem:[%s4 + $0x210] sm:$0xff]
      %v1317 = vld [vmem:[%s4 + $0x218] sm:$0xff]
      %v1318 = vld [vmem:[%s4 + $0x220] sm:$0xff]
      %v1319 = vld [vmem:[%s4 + $0x228] sm:$0xff]
      %v1320 = vld [vmem:[%s4 + $0x230] sm:$0xff]
      %v1321 = vld [vmem:[%s4 + $0x238] sm:$0xff]
      %v1322 = vld [vmem:[%s4 + $0x240] sm:$0xff]
      %v1323 = vld [vmem:[%s4 + $0x248] sm:$0xff]
      %v1324 = vld [vmem:[%s4 + $0x250] sm:$0xff]
      %v1325 = vld [vmem:[%s4 + $0x258] sm:$0xff]
      %v1326 = vld [vmem:[%s4 + $0x260] sm:$0xff]
      %v1327 = vld [vmem:[%s4 + $0x268] sm:$0xff]
      %v1328 = vld [vmem:[%s4 + $0x270] sm:$0xff]
      %v1329 = vld [vmem:[%s4 + $0x278] sm:$0xff]
      %v1330 = vld [vmem:[%s4 + $0x280] sm:$0xff]
      %v1331 = vld [vmem:[%s4 + $0x288] sm:$0xff]
      %v1332 = vld [vmem:[%s4 + $0x290] sm:$0xff]
      %v1333 = vld [vmem:[%s4 + $0x298] sm:$0xff]
      %v1334 = vld [vmem:[%s4 + $0x2a0] sm:$0xff]
      %v1335 = vld [vmem:[%s4 + $0x2a8] sm:$0xff]
      %v1336 = vld [vmem:[%s4 + $0x2b0] sm:$0xff]
      %v1337 = vld [vmem:[%s4 + $0x2b8] sm:$0xff]
      %v1338 = vld [vmem:[%s4 + $0x2c0] sm:$0xff]
      %v1339 = vld [vmem:[%s4 + $0x2c8] sm:$0xff]
      %v1340 = vld [vmem:[%s4 + $0x2d0] sm:$0xff]
      %v1341 = vld [vmem:[%s4 + $0x2d8] sm:$0xff]
      %v1342 = vld [vmem:[%s4 + $0x2e0] sm:$0xff]
      %v1343 = vld [vmem:[%s4 + $0x2e8] sm:$0xff]
      %v1344 = vld [vmem:[%s4 + $0x2f0] sm:$0xff]
      %v1345 = vld [vmem:[%s4 + $0x2f8] sm:$0xff]
      %v1346 = vld [vmem:[%s4 + $0x300] sm:$0xff]
      %v1347 = vld [vmem:[%s4 + $0x308] sm:$0xff]
      %v1348 = vld [vmem:[%s4 + $0x310] sm:$0xff]
      %v1349 = vld [vmem:[%s4 + $0x318] sm:$0xff]
      %v1350 = vld [vmem:[%s4 + $0x320] sm:$0xff]
      %v1351 = vld [vmem:[%s4 + $0x328] sm:$0xff]
      %v1352 = vld [vmem:[%s4 + $0x330] sm:$0xff]
      %v1353 = vld [vmem:[%s4 + $0x338] sm:$0xff]
      %v1354 = vld [vmem:[%s4 + $0x340] sm:$0xff]
      %v1355 = vld [vmem:[%s4 + $0x348] sm:$0xff]
      %v1356 = vld [vmem:[%s4 + $0x350] sm:$0xff]
      %v1357 = vld [vmem:[%s4 + $0x358] sm:$0xff]
      %v1358 = vld [vmem:[%s4 + $0x360] sm:$0xff]
      %v1359 = vld [vmem:[%s4 + $0x368] sm:$0xff]
      %v1360 = vld [vmem:[%s4 + $0x370] sm:$0xff]
      %v1361 = vld [vmem:[%s4 + $0x378] sm:$0xff]
      %v1362 = vld [vmem:[%s4 + $0x380] sm:$0xff]
      %v1363 = vld [vmem:[%s4 + $0x388] sm:$0xff]
      %v1364 = vld [vmem:[%s4 + $0x390] sm:$0xff]
      %v1365 = vld [vmem:[%s4 + $0x398] sm:$0xff]
      %v1366 = vld [vmem:[%s4 + $0x3a0] sm:$0xff]
      %v1367 = vld [vmem:[%s4 + $0x3a8] sm:$0xff]
      %v1368 = vld [vmem:[%s4 + $0x3b0] sm:$0xff]
      %v1369 = vld [vmem:[%s4 + $0x3b8] sm:$0xff]
      %v1370 = vld [vmem:[%s4 + $0x3c0] sm:$0xff]
      %v1371 = vld [vmem:[%s4 + $0x3c8] sm:$0xff]
      %v1372 = vld [vmem:[%s4 + $0x3d0] sm:$0xff]
      %v1373 = vld [vmem:[%s4 + $0x3d8] sm:$0xff]
      %v1374 = vld [vmem:[%s4 + $0x3e0] sm:$0xff]
      %v1375 = vld [vmem:[%s4 + $0x3e8] sm:$0xff]
      %v1376 = vld [vmem:[%s4 + $0x3f0] sm:$0xff]
      %v1377 = vld [vmem:[%s4 + $0x3f8] sm:$0xff]
      %v1378 = vunpack.c.l.bf16 %v1250
      %v1379 = vunpack.c.h.bf16 %v1250
      %v1380 = vunpack.c.l.bf16 %v1251
      %v1381 = vunpack.c.h.bf16 %v1251
      %v1382 = vunpack.c.l.bf16 %v1252
      %v1383 = vunpack.c.h.bf16 %v1252
      %v1384 = vunpack.c.l.bf16 %v1253
      %v1385 = vunpack.c.h.bf16 %v1253
      %v1386 = vunpack.c.l.bf16 %v1254
      %v1387 = vunpack.c.h.bf16 %v1254
      %v1388 = vunpack.c.l.bf16 %v1255
      %v1389 = vunpack.c.h.bf16 %v1255
      %v1390 = vunpack.c.l.bf16 %v1256
      %v1391 = vunpack.c.h.bf16 %v1256
      %v1392 = vunpack.c.l.bf16 %v1257
      %v1393 = vunpack.c.h.bf16 %v1257
      %v1394 = vunpack.c.l.bf16 %v1258
      %v1395 = vunpack.c.h.bf16 %v1258
      %v1396 = vunpack.c.l.bf16 %v1259
      %v1397 = vunpack.c.h.bf16 %v1259
      %v1398 = vunpack.c.l.bf16 %v1260
      %v1399 = vunpack.c.h.bf16 %v1260
      %v1400 = vunpack.c.l.bf16 %v1261
      %v1401 = vunpack.c.h.bf16 %v1261
      %v1402 = vunpack.c.l.bf16 %v1262
      %v1403 = vunpack.c.h.bf16 %v1262
      %v1404 = vunpack.c.l.bf16 %v1263
      %v1405 = vunpack.c.h.bf16 %v1263
      %v1406 = vunpack.c.l.bf16 %v1264
      %v1407 = vunpack.c.h.bf16 %v1264
      %v1408 = vunpack.c.l.bf16 %v1265
      %v1409 = vunpack.c.h.bf16 %v1265
      %v1410 = vunpack.c.l.bf16 %v1266
      %v1411 = vunpack.c.h.bf16 %v1266
      %v1412 = vunpack.c.l.bf16 %v1267
      %v1413 = vunpack.c.h.bf16 %v1267
      %v1414 = vunpack.c.l.bf16 %v1268
      %v1415 = vunpack.c.h.bf16 %v1268
      %v1416 = vunpack.c.l.bf16 %v1269
      %v1417 = vunpack.c.h.bf16 %v1269
      %v1418 = vunpack.c.l.bf16 %v1270
      %v1419 = vunpack.c.h.bf16 %v1270
      %v1420 = vunpack.c.l.bf16 %v1271
      %v1421 = vunpack.c.h.bf16 %v1271
      %v1422 = vunpack.c.l.bf16 %v1272
      %v1423 = vunpack.c.h.bf16 %v1272
      %v1424 = vunpack.c.l.bf16 %v1273
      %v1425 = vunpack.c.h.bf16 %v1273
      %v1426 = vunpack.c.l.bf16 %v1274
      %v1427 = vunpack.c.h.bf16 %v1274
      %v1428 = vunpack.c.l.bf16 %v1275
      %v1429 = vunpack.c.h.bf16 %v1275
      %v1430 = vunpack.c.l.bf16 %v1276
      %v1431 = vunpack.c.h.bf16 %v1276
      %v1432 = vunpack.c.l.bf16 %v1277
      %v1433 = vunpack.c.h.bf16 %v1277
      %v1434 = vunpack.c.l.bf16 %v1278
      %v1435 = vunpack.c.h.bf16 %v1278
      %v1436 = vunpack.c.l.bf16 %v1279
      %v1437 = vunpack.c.h.bf16 %v1279
      %v1438 = vunpack.c.l.bf16 %v1280
      %v1439 = vunpack.c.h.bf16 %v1280
      %v1440 = vunpack.c.l.bf16 %v1281
      %v1441 = vunpack.c.h.bf16 %v1281
      %v1442 = vunpack.c.l.bf16 %v1282
      %v1443 = vunpack.c.h.bf16 %v1282
      %v1444 = vunpack.c.l.bf16 %v1283
      %v1445 = vunpack.c.h.bf16 %v1283
      %v1446 = vunpack.c.l.bf16 %v1284
      %v1447 = vunpack.c.h.bf16 %v1284
      %v1448 = vunpack.c.l.bf16 %v1285
      %v1449 = vunpack.c.h.bf16 %v1285
      %v1450 = vunpack.c.l.bf16 %v1286
      %v1451 = vunpack.c.h.bf16 %v1286
      %v1452 = vunpack.c.l.bf16 %v1287
      %v1453 = vunpack.c.h.bf16 %v1287
      %v1454 = vunpack.c.l.bf16 %v1288
      %v1455 = vunpack.c.h.bf16 %v1288
      %v1456 = vunpack.c.l.bf16 %v1289
      %v1457 = vunpack.c.h.bf16 %v1289
      %v1458 = vunpack.c.l.bf16 %v1290
      %v1459 = vunpack.c.h.bf16 %v1290
      %v1460 = vunpack.c.l.bf16 %v1291
      %v1461 = vunpack.c.h.bf16 %v1291
      %v1462 = vunpack.c.l.bf16 %v1292
      %v1463 = vunpack.c.h.bf16 %v1292
      %v1464 = vunpack.c.l.bf16 %v1293
      %v1465 = vunpack.c.h.bf16 %v1293
      %v1466 = vunpack.c.l.bf16 %v1294
      %v1467 = vunpack.c.h.bf16 %v1294
      %v1468 = vunpack.c.l.bf16 %v1295
      %v1469 = vunpack.c.h.bf16 %v1295
      %v1470 = vunpack.c.l.bf16 %v1296
      %v1471 = vunpack.c.h.bf16 %v1296
      %v1472 = vunpack.c.l.bf16 %v1297
      %v1473 = vunpack.c.h.bf16 %v1297
      %v1474 = vunpack.c.l.bf16 %v1298
      %v1475 = vunpack.c.h.bf16 %v1298
      %v1476 = vunpack.c.l.bf16 %v1299
      %v1477 = vunpack.c.h.bf16 %v1299
      %v1478 = vunpack.c.l.bf16 %v1300
      %v1479 = vunpack.c.h.bf16 %v1300
      %v1480 = vunpack.c.l.bf16 %v1301
      %v1481 = vunpack.c.h.bf16 %v1301
      %v1482 = vunpack.c.l.bf16 %v1302
      %v1483 = vunpack.c.h.bf16 %v1302
      %v1484 = vunpack.c.l.bf16 %v1303
      %v1485 = vunpack.c.h.bf16 %v1303
      %v1486 = vunpack.c.l.bf16 %v1304
      %v1487 = vunpack.c.h.bf16 %v1304
      %v1488 = vunpack.c.l.bf16 %v1305
      %v1489 = vunpack.c.h.bf16 %v1305
      %v1490 = vunpack.c.l.bf16 %v1306
      %v1491 = vunpack.c.h.bf16 %v1306
      %v1492 = vunpack.c.l.bf16 %v1307
      %v1493 = vunpack.c.h.bf16 %v1307
      %v1494 = vunpack.c.l.bf16 %v1308
      %v1495 = vunpack.c.h.bf16 %v1308
      %v1496 = vunpack.c.l.bf16 %v1309
      %v1497 = vunpack.c.h.bf16 %v1309
      %v1498 = vunpack.c.l.bf16 %v1310
      %v1499 = vunpack.c.h.bf16 %v1310
      %v1500 = vunpack.c.l.bf16 %v1311
      %v1501 = vunpack.c.h.bf16 %v1311
      %v1502 = vunpack.c.l.bf16 %v1312
      %v1503 = vunpack.c.h.bf16 %v1312
      %v1504 = vunpack.c.l.bf16 %v1313
      %v1505 = vunpack.c.h.bf16 %v1313
      %v1506 = vunpack.c.l.bf16 %v1314
      %v1507 = vunpack.c.h.bf16 %v1314
      %v1508 = vunpack.c.l.bf16 %v1315
      %v1509 = vunpack.c.h.bf16 %v1315
      %v1510 = vunpack.c.l.bf16 %v1316
      %v1511 = vunpack.c.h.bf16 %v1316
      %v1512 = vunpack.c.l.bf16 %v1317
      %v1513 = vunpack.c.h.bf16 %v1317
      %v1514 = vunpack.c.l.bf16 %v1318
      %v1515 = vunpack.c.h.bf16 %v1318
      %v1516 = vunpack.c.l.bf16 %v1319
      %v1517 = vunpack.c.h.bf16 %v1319
      %v1518 = vunpack.c.l.bf16 %v1320
      %v1519 = vunpack.c.h.bf16 %v1320
      %v1520 = vunpack.c.l.bf16 %v1321
      %v1521 = vunpack.c.h.bf16 %v1321
      %v1522 = vunpack.c.l.bf16 %v1322
      %v1523 = vunpack.c.h.bf16 %v1322
      %v1524 = vunpack.c.l.bf16 %v1323
      %v1525 = vunpack.c.h.bf16 %v1323
      %v1526 = vunpack.c.l.bf16 %v1324
      %v1527 = vunpack.c.h.bf16 %v1324
      %v1528 = vunpack.c.l.bf16 %v1325
      %v1529 = vunpack.c.h.bf16 %v1325
      %v1530 = vunpack.c.l.bf16 %v1326
      %v1531 = vunpack.c.h.bf16 %v1326
      %v1532 = vunpack.c.l.bf16 %v1327
      %v1533 = vunpack.c.h.bf16 %v1327
      %v1534 = vunpack.c.l.bf16 %v1328
      %v1535 = vunpack.c.h.bf16 %v1328
      %v1536 = vunpack.c.l.bf16 %v1329
      %v1537 = vunpack.c.h.bf16 %v1329
      %v1538 = vunpack.c.l.bf16 %v1330
      %v1539 = vunpack.c.h.bf16 %v1330
      %v1540 = vunpack.c.l.bf16 %v1331
      %v1541 = vunpack.c.h.bf16 %v1331
      %v1542 = vunpack.c.l.bf16 %v1332
      %v1543 = vunpack.c.h.bf16 %v1332
      %v1544 = vunpack.c.l.bf16 %v1333
      %v1545 = vunpack.c.h.bf16 %v1333
      %v1546 = vunpack.c.l.bf16 %v1334
      %v1547 = vunpack.c.h.bf16 %v1334
      %v1548 = vunpack.c.l.bf16 %v1335
      %v1549 = vunpack.c.h.bf16 %v1335
      %v1550 = vunpack.c.l.bf16 %v1336
      %v1551 = vunpack.c.h.bf16 %v1336
      %v1552 = vunpack.c.l.bf16 %v1337
      %v1553 = vunpack.c.h.bf16 %v1337
      %v1554 = vunpack.c.l.bf16 %v1338
      %v1555 = vunpack.c.h.bf16 %v1338
      %v1556 = vunpack.c.l.bf16 %v1339
      %v1557 = vunpack.c.h.bf16 %v1339
      %v1558 = vunpack.c.l.bf16 %v1340
      %v1559 = vunpack.c.h.bf16 %v1340
      %v1560 = vunpack.c.l.bf16 %v1341
      %v1561 = vunpack.c.h.bf16 %v1341
      %v1562 = vunpack.c.l.bf16 %v1342
      %v1563 = vunpack.c.h.bf16 %v1342
      %v1564 = vunpack.c.l.bf16 %v1343
      %v1565 = vunpack.c.h.bf16 %v1343
      %v1566 = vunpack.c.l.bf16 %v1344
      %v1567 = vunpack.c.h.bf16 %v1344
      %v1568 = vunpack.c.l.bf16 %v1345
      %v1569 = vunpack.c.h.bf16 %v1345
      %v1570 = vunpack.c.l.bf16 %v1346
      %v1571 = vunpack.c.h.bf16 %v1346
      %v1572 = vunpack.c.l.bf16 %v1347
      %v1573 = vunpack.c.h.bf16 %v1347
      %v1574 = vunpack.c.l.bf16 %v1348
      %v1575 = vunpack.c.h.bf16 %v1348
      %v1576 = vunpack.c.l.bf16 %v1349
      %v1577 = vunpack.c.h.bf16 %v1349
      %v1578 = vunpack.c.l.bf16 %v1350
      %v1579 = vunpack.c.h.bf16 %v1350
      %v1580 = vunpack.c.l.bf16 %v1351
      %v1581 = vunpack.c.h.bf16 %v1351
      %v1582 = vunpack.c.l.bf16 %v1352
      %v1583 = vunpack.c.h.bf16 %v1352
      %v1584 = vunpack.c.l.bf16 %v1353
      %v1585 = vunpack.c.h.bf16 %v1353
      %v1586 = vunpack.c.l.bf16 %v1354
      %v1587 = vunpack.c.h.bf16 %v1354
      %v1588 = vunpack.c.l.bf16 %v1355
      %v1589 = vunpack.c.h.bf16 %v1355
      %v1590 = vunpack.c.l.bf16 %v1356
      %v1591 = vunpack.c.h.bf16 %v1356
      %v1592 = vunpack.c.l.bf16 %v1357
      %v1593 = vunpack.c.h.bf16 %v1357
      %v1594 = vunpack.c.l.bf16 %v1358
      %v1595 = vunpack.c.h.bf16 %v1358
      %v1596 = vunpack.c.l.bf16 %v1359
      %v1597 = vunpack.c.h.bf16 %v1359
      %v1598 = vunpack.c.l.bf16 %v1360
      %v1599 = vunpack.c.h.bf16 %v1360
      %v1600 = vunpack.c.l.bf16 %v1361
      %v1601 = vunpack.c.h.bf16 %v1361
      %v1602 = vunpack.c.l.bf16 %v1362
      %v1603 = vunpack.c.h.bf16 %v1362
      %v1604 = vunpack.c.l.bf16 %v1363
      %v1605 = vunpack.c.h.bf16 %v1363
      %v1606 = vunpack.c.l.bf16 %v1364
      %v1607 = vunpack.c.h.bf16 %v1364
      %v1608 = vunpack.c.l.bf16 %v1365
      %v1609 = vunpack.c.h.bf16 %v1365
      %v1610 = vunpack.c.l.bf16 %v1366
      %v1611 = vunpack.c.h.bf16 %v1366
      %v1612 = vunpack.c.l.bf16 %v1367
      %v1613 = vunpack.c.h.bf16 %v1367
      %v1614 = vunpack.c.l.bf16 %v1368
      %v1615 = vunpack.c.h.bf16 %v1368
      %v1616 = vunpack.c.l.bf16 %v1369
      %v1617 = vunpack.c.h.bf16 %v1369
      %v1618 = vunpack.c.l.bf16 %v1370
      %v1619 = vunpack.c.h.bf16 %v1370
      %v1620 = vunpack.c.l.bf16 %v1371
      %v1621 = vunpack.c.h.bf16 %v1371
      %v1622 = vunpack.c.l.bf16 %v1372
      %v1623 = vunpack.c.h.bf16 %v1372
      %v1624 = vunpack.c.l.bf16 %v1373
      %v1625 = vunpack.c.h.bf16 %v1373
      %v1626 = vunpack.c.l.bf16 %v1374
      %v1627 = vunpack.c.h.bf16 %v1374
      %v1628 = vunpack.c.l.bf16 %v1375
      %v1629 = vunpack.c.h.bf16 %v1375
      %v1630 = vunpack.c.l.bf16 %v1376
      %v1631 = vunpack.c.h.bf16 %v1376
      %v1632 = vunpack.c.l.bf16 %v1377
      %v1633 = vunpack.c.h.bf16 %v1377
      %v1636 = vlaneseq
      %v1637 = vshrl.u32 %v1636, 7
      %v1638 = vsub.s32 0, %v1637
      %v1639 = vrot.slane %v1248, %v1638
      %v1640 = vlaneseq
      %v1641 = vshrl.u32 %v1640, 7
      %v1642 = vsub.s32 4, %v1641
      %v1643 = vrot.slane %v1248, %v1642
      %v1644 = vlaneseq
      %v1645 = vshrl.u32 %v1644, 7
      %v1646 = vsub.s32 0, %v1645
      %v1647 = vrot.slane %v1249, %v1646
      %v1648 = vlaneseq
      %v1649 = vshrl.u32 %v1648, 7
      %v1650 = vsub.s32 4, %v1649
      %v1651 = vrot.slane %v1249, %v1650
      %v1656 = vlaneseq
      %v1657 = vshrl.u32 %v1656, 7
      %v1658 = vsub.s32 0, %v1657
      %v1659 = vrot.slane %v1639, %v1658
      %v1660 = vlaneseq
      %v1661 = vshrl.u32 %v1660, 7
      %v1662 = vsub.s32 0, %v1661
      %v1663 = vrot.slane %v1643, %v1662
      %v1664 = vlaneseq
      %v1665 = vshrl.u32 %v1664, 7
      %v1666 = vsub.s32 0, %v1665
      %v1667 = vrot.slane %v1647, %v1666
      %v1668 = vlaneseq
      %v1669 = vshrl.u32 %v1668, 7
      %v1670 = vsub.s32 0, %v1669
      %v1671 = vrot.slane %v1651, %v1670
      %1672 = vmatprep.subr.mxu0 %v1379
      %1673 = vmatpush1.msra.mxu0 %v1378
      %1674 = vmatprep.subr.mxu0 %v1383
      %1675 = vmatpush1.msra.mxu0 %v1382
      %1676 = vmatprep.subr.mxu0 %v1387
      %1677 = vmatpush1.msra.mxu0 %v1386
      %1678 = vmatprep.subr.mxu0 %v1391
      %1679 = vmatpush1.msra.mxu0 %v1390
      %1680 = vmatprep.subr.mxu0 %v1395
      %1681 = vmatpush1.msra.mxu0 %v1394
      %1682 = vmatprep.subr.mxu0 %v1399
      %1683 = vmatpush1.msra.mxu0 %v1398
      %1684 = vmatprep.subr.mxu0 %v1403
      %1685 = vmatpush1.msra.mxu0 %v1402
      %1686 = vmatprep.subr.mxu0 %v1407
      %1687 = vmatpush1.msra.mxu0 %v1406
      %1688 = vmatprep.subr.mxu0 %v1411
      %1689 = vmatpush1.msra.mxu0 %v1410
      %1690 = vmatprep.subr.mxu0 %v1415
      %1691 = vmatpush1.msra.mxu0 %v1414
      %1692 = vmatprep.subr.mxu0 %v1419
      %1693 = vmatpush1.msra.mxu0 %v1418
      %1694 = vmatprep.subr.mxu0 %v1423
      %1695 = vmatpush1.msra.mxu0 %v1422
      %1696 = vmatprep.subr.mxu0 %v1427
      %1697 = vmatpush1.msra.mxu0 %v1426
      %1698 = vmatprep.subr.mxu0 %v1431
      %1699 = vmatpush1.msra.mxu0 %v1430
      %1700 = vmatprep.subr.mxu0 %v1435
      %1701 = vmatpush1.msra.mxu0 %v1434
      %1702 = vmatprep.subr.mxu0 %v1439
      %1703 = vmatpush1.msra.mxu0 %v1438
      %1704 = vmatprep.subr.mxu0 %v1443
      %1705 = vmatpush1.msra.mxu0 %v1442
      %1706 = vmatprep.subr.mxu0 %v1447
      %1707 = vmatpush1.msra.mxu0 %v1446
      %1708 = vmatprep.subr.mxu0 %v1451
      %1709 = vmatpush1.msra.mxu0 %v1450
      %1710 = vmatprep.subr.mxu0 %v1455
      %1711 = vmatpush1.msra.mxu0 %v1454
      %1712 = vmatprep.subr.mxu0 %v1459
      %1713 = vmatpush1.msra.mxu0 %v1458
      %1714 = vmatprep.subr.mxu0 %v1463
      %1715 = vmatpush1.msra.mxu0 %v1462
      %1716 = vmatprep.subr.mxu0 %v1467
      %1717 = vmatpush1.msra.mxu0 %v1466
      %1718 = vmatprep.subr.mxu0 %v1471
      %1719 = vmatpush1.msra.mxu0 %v1470
      %1720 = vmatprep.subr.mxu0 %v1475
      %1721 = vmatpush1.msra.mxu0 %v1474
      %1722 = vmatprep.subr.mxu0 %v1479
      %1723 = vmatpush1.msra.mxu0 %v1478
      %1724 = vmatprep.subr.mxu0 %v1483
      %1725 = vmatpush1.msra.mxu0 %v1482
      %1726 = vmatprep.subr.mxu0 %v1487
      %1727 = vmatpush1.msra.mxu0 %v1486
      %1728 = vmatprep.subr.mxu0 %v1491
      %1729 = vmatpush1.msra.mxu0 %v1490
      %1730 = vmatprep.subr.mxu0 %v1495
      %1731 = vmatpush1.msra.mxu0 %v1494
      %1732 = vmatprep.subr.mxu0 %v1499
      %1733 = vmatpush1.msra.mxu0 %v1498
      %1734 = vmatprep.subr.mxu0 %v1503
      %1735 = vmatpush1.msra.mxu0 %v1502
      %1736 = vmatprep.mubr.f32.mxu0 %v1245
      %1737 = vmatmul.mubr.f32.gmra.mrb[0].mxu0 %v1244
      %v1738 = vpop.f32.mrb[0].mxu0
      %v1739 = vadd.f32 %v1659, %v1738
      %v1740 = vpop.f32.mrb[0].mxu0
      %v1741 = vadd.f32 %v1663, %v1740
      %1742 = vdwg.mxu0
      %1743 = vmatprep.subr.mxu0 %v1507
      %1744 = vmatpush1.msra.mxu0 %v1506
      %1745 = vmatprep.subr.mxu0 %v1511
      %1746 = vmatpush1.msra.mxu0 %v1510
      %1747 = vmatprep.subr.mxu0 %v1515
      %1748 = vmatpush1.msra.mxu0 %v1514
      %1749 = vmatprep.subr.mxu0 %v1519
      %1750 = vmatpush1.msra.mxu0 %v1518
      %1751 = vmatprep.subr.mxu0 %v1523
      %1752 = vmatpush1.msra.mxu0 %v1522
      %1753 = vmatprep.subr.mxu0 %v1527
      %1754 = vmatpush1.msra.mxu0 %v1526
      %1755 = vmatprep.subr.mxu0 %v1531
      %1756 = vmatpush1.msra.mxu0 %v1530
      %1757 = vmatprep.subr.mxu0 %v1535
      %1758 = vmatpush1.msra.mxu0 %v1534
      %1759 = vmatprep.subr.mxu0 %v1539
      %1760 = vmatpush1.msra.mxu0 %v1538
      %1761 = vmatprep.subr.mxu0 %v1543
      %1762 = vmatpush1.msra.mxu0 %v1542
      %1763 = vmatprep.subr.mxu0 %v1547
      %1764 = vmatpush1.msra.mxu0 %v1546
      %1765 = vmatprep.subr.mxu0 %v1551
      %1766 = vmatpush1.msra.mxu0 %v1550
      %1767 = vmatprep.subr.mxu0 %v1555
      %1768 = vmatpush1.msra.mxu0 %v1554
      %1769 = vmatprep.subr.mxu0 %v1559
      %1770 = vmatpush1.msra.mxu0 %v1558
      %1771 = vmatprep.subr.mxu0 %v1563
      %1772 = vmatpush1.msra.mxu0 %v1562
      %1773 = vmatprep.subr.mxu0 %v1567
      %1774 = vmatpush1.msra.mxu0 %v1566
      %1775 = vmatprep.subr.mxu0 %v1571
      %1776 = vmatpush1.msra.mxu0 %v1570
      %1777 = vmatprep.subr.mxu0 %v1575
      %1778 = vmatpush1.msra.mxu0 %v1574
      %1779 = vmatprep.subr.mxu0 %v1579
      %1780 = vmatpush1.msra.mxu0 %v1578
      %1781 = vmatprep.subr.mxu0 %v1583
      %1782 = vmatpush1.msra.mxu0 %v1582
      %1783 = vmatprep.subr.mxu0 %v1587
      %1784 = vmatpush1.msra.mxu0 %v1586
      %1785 = vmatprep.subr.mxu0 %v1591
      %1786 = vmatpush1.msra.mxu0 %v1590
      %1787 = vmatprep.subr.mxu0 %v1595
      %1788 = vmatpush1.msra.mxu0 %v1594
      %1789 = vmatprep.subr.mxu0 %v1599
      %1790 = vmatpush1.msra.mxu0 %v1598
      %1791 = vmatprep.subr.mxu0 %v1603
      %1792 = vmatpush1.msra.mxu0 %v1602
      %1793 = vmatprep.subr.mxu0 %v1607
      %1794 = vmatpush1.msra.mxu0 %v1606
      %1795 = vmatprep.subr.mxu0 %v1611
      %1796 = vmatpush1.msra.mxu0 %v1610
      %1797 = vmatprep.subr.mxu0 %v1615
      %1798 = vmatpush1.msra.mxu0 %v1614
      %1799 = vmatprep.subr.mxu0 %v1619
      %1800 = vmatpush1.msra.mxu0 %v1618
      %1801 = vmatprep.subr.mxu0 %v1623
      %1802 = vmatpush1.msra.mxu0 %v1622
      %1803 = vmatprep.subr.mxu0 %v1627
      %1804 = vmatpush1.msra.mxu0 %v1626
      %1805 = vmatprep.subr.mxu0 %v1631
      %1806 = vmatpush1.msra.mxu0 %v1630
      %1807 = vmatprep.mubr.f32.mxu0 %v1247
      %1808 = vmatmul.mubr.f32.gmra.mrb[0].mxu0 %v1246
      %v1809 = vpop.f32.mrb[0].mxu0
      %v1810 = vadd.f32 %v1739, %v1809
      %v1811 = vpop.f32.mrb[0].mxu0
      %v1812 = vadd.f32 %v1741, %v1811
      %1813 = vdwg.mxu0
      %1814 = vmatprep.subr.mxu0 %v1381
      %1815 = vmatpush1.msra.mxu0 %v1380
      %1816 = vmatprep.subr.mxu0 %v1385
      %1817 = vmatpush1.msra.mxu0 %v1384
      %1818 = vmatprep.subr.mxu0 %v1389
      %1819 = vmatpush1.msra.mxu0 %v1388
      %1820 = vmatprep.subr.mxu0 %v1393
      %1821 = vmatpush1.msra.mxu0 %v1392
      %1822 = vmatprep.subr.mxu0 %v1397
      %1823 = vmatpush1.msra.mxu0 %v1396
      %1824 = vmatprep.subr.mxu0 %v1401
      %1825 = vmatpush1.msra.mxu0 %v1400
      %1826 = vmatprep.subr.mxu0 %v1405
      %1827 = vmatpush1.msra.mxu0 %v1404
      %1828 = vmatprep.subr.mxu0 %v1409
      %1829 = vmatpush1.msra.mxu0 %v1408
      %1830 = vmatprep.subr.mxu0 %v1413
      %1831 = vmatpush1.msra.mxu0 %v1412
      %1832 = vmatprep.subr.mxu0 %v1417
      %1833 = vmatpush1.msra.mxu0 %v1416
      %1834 = vmatprep.subr.mxu0 %v1421
      %1835 = vmatpush1.msra.mxu0 %v1420
      %1836 = vmatprep.subr.mxu0 %v1425
      %1837 = vmatpush1.msra.mxu0 %v1424
      %1838 = vmatprep.subr.mxu0 %v1429
      %1839 = vmatpush1.msra.mxu0 %v1428
      %1840 = vmatprep.subr.mxu0 %v1433
      %1841 = vmatpush1.msra.mxu0 %v1432
      %1842 = vmatprep.subr.mxu0 %v1437
      %1843 = vmatpush1.msra.mxu0 %v1436
      %1844 = vmatprep.subr.mxu0 %v1441
      %1845 = vmatpush1.msra.mxu0 %v1440
      %1846 = vmatprep.subr.mxu0 %v1445
      %1847 = vmatpush1.msra.mxu0 %v1444
      %1848 = vmatprep.subr.mxu0 %v1449
      %1849 = vmatpush1.msra.mxu0 %v1448
      %1850 = vmatprep.subr.mxu0 %v1453
      %1851 = vmatpush1.msra.mxu0 %v1452
      %1852 = vmatprep.subr.mxu0 %v1457
      %1853 = vmatpush1.msra.mxu0 %v1456
      %1854 = vmatprep.subr.mxu0 %v1461
      %1855 = vmatpush1.msra.mxu0 %v1460
      %1856 = vmatprep.subr.mxu0 %v1465
      %1857 = vmatpush1.msra.mxu0 %v1464
      %1858 = vmatprep.subr.mxu0 %v1469
      %1859 = vmatpush1.msra.mxu0 %v1468
      %1860 = vmatprep.subr.mxu0 %v1473
      %1861 = vmatpush1.msra.mxu0 %v1472
      %1862 = vmatprep.subr.mxu0 %v1477
      %1863 = vmatpush1.msra.mxu0 %v1476
      %1864 = vmatprep.subr.mxu0 %v1481
      %1865 = vmatpush1.msra.mxu0 %v1480
      %1866 = vmatprep.subr.mxu0 %v1485
      %1867 = vmatpush1.msra.mxu0 %v1484
      %1868 = vmatprep.subr.mxu0 %v1489
      %1869 = vmatpush1.msra.mxu0 %v1488
      %1870 = vmatprep.subr.mxu0 %v1493
      %1871 = vmatpush1.msra.mxu0 %v1492
      %1872 = vmatprep.subr.mxu0 %v1497
      %1873 = vmatpush1.msra.mxu0 %v1496
      %1874 = vmatprep.subr.mxu0 %v1501
      %1875 = vmatpush1.msra.mxu0 %v1500
      %1876 = vmatprep.subr.mxu0 %v1505
      %1877 = vmatpush1.msra.mxu0 %v1504
      %1878 = vmatprep.mubr.f32.mxu0 %v1245
      %1879 = vmatmul.mubr.f32.gmra.mrb[0].mxu0 %v1244
      %v1880 = vpop.f32.mrb[0].mxu0
      %v1881 = vadd.f32 %v1667, %v1880
      %v1882 = vpop.f32.mrb[0].mxu0
      %v1883 = vadd.f32 %v1671, %v1882
      %1884 = vdwg.mxu0
      %1885 = vmatprep.subr.mxu0 %v1509
      %1886 = vmatpush1.msra.mxu0 %v1508
      %1887 = vmatprep.subr.mxu0 %v1513
      %1888 = vmatpush1.msra.mxu0 %v1512
      %1889 = vmatprep.subr.mxu0 %v1517
      %1890 = vmatpush1.msra.mxu0 %v1516
      %1891 = vmatprep.subr.mxu0 %v1521
      %1892 = vmatpush1.msra.mxu0 %v1520
      %1893 = vmatprep.subr.mxu0 %v1525
      %1894 = vmatpush1.msra.mxu0 %v1524
      %1895 = vmatprep.subr.mxu0 %v1529
      %1896 = vmatpush1.msra.mxu0 %v1528
      %1897 = vmatprep.subr.mxu0 %v1533
      %1898 = vmatpush1.msra.mxu0 %v1532
      %1899 = vmatprep.subr.mxu0 %v1537
      %1900 = vmatpush1.msra.mxu0 %v1536
      %1901 = vmatprep.subr.mxu0 %v1541
      %1902 = vmatpush1.msra.mxu0 %v1540
      %1903 = vmatprep.subr.mxu0 %v1545
      %1904 = vmatpush1.msra.mxu0 %v1544
      %1905 = vmatprep.subr.mxu0 %v1549
      %1906 = vmatpush1.msra.mxu0 %v1548
      %1907 = vmatprep.subr.mxu0 %v1553
      %1908 = vmatpush1.msra.mxu0 %v1552
      %1909 = vmatprep.subr.mxu0 %v1557
      %1910 = vmatpush1.msra.mxu0 %v1556
      %1911 = vmatprep.subr.mxu0 %v1561
      %1912 = vmatpush1.msra.mxu0 %v1560
      %1913 = vmatprep.subr.mxu0 %v1565
      %1914 = vmatpush1.msra.mxu0 %v1564
      %1915 = vmatprep.subr.mxu0 %v1569
      %1916 = vmatpush1.msra.mxu0 %v1568
      %1917 = vmatprep.subr.mxu0 %v1573
      %1918 = vmatpush1.msra.mxu0 %v1572
      %1919 = vmatprep.subr.mxu0 %v1577
      %1920 = vmatpush1.msra.mxu0 %v1576
      %1921 = vmatprep.subr.mxu0 %v1581
      %1922 = vmatpush1.msra.mxu0 %v1580
      %1923 = vmatprep.subr.mxu0 %v1585
      %1924 = vmatpush1.msra.mxu0 %v1584
      %1925 = vmatprep.subr.mxu0 %v1589
      %1926 = vmatpush1.msra.mxu0 %v1588
      %1927 = vmatprep.subr.mxu0 %v1593
      %1928 = vmatpush1.msra.mxu0 %v1592
      %1929 = vmatprep.subr.mxu0 %v1597
      %1930 = vmatpush1.msra.mxu0 %v1596
      %1931 = vmatprep.subr.mxu0 %v1601
      %1932 = vmatpush1.msra.mxu0 %v1600
      %1933 = vmatprep.subr.mxu0 %v1605
      %1934 = vmatpush1.msra.mxu0 %v1604
      %1935 = vmatprep.subr.mxu0 %v1609
      %1936 = vmatpush1.msra.mxu0 %v1608
      %1937 = vmatprep.subr.mxu0 %v1613
      %1938 = vmatpush1.msra.mxu0 %v1612
      %1939 = vmatprep.subr.mxu0 %v1617
      %1940 = vmatpush1.msra.mxu0 %v1616
      %1941 = vmatprep.subr.mxu0 %v1621
      %1942 = vmatpush1.msra.mxu0 %v1620
      %1943 = vmatprep.subr.mxu0 %v1625
      %1944 = vmatpush1.msra.mxu0 %v1624
      %1945 = vmatprep.subr.mxu0 %v1629
      %1946 = vmatpush1.msra.mxu0 %v1628
      %1947 = vmatprep.subr.mxu0 %v1633
      %1948 = vmatpush1.msra.mxu0 %v1632
      %1949 = vmatprep.mubr.f32.mxu0 %v1247
      %1950 = vmatmul.mubr.f32.gmra.mrb[0].mxu0 %v1246
      %v1951 = vpop.f32.mrb[0].mxu0
      %v1952 = vadd.f32 %v1881, %v1951
      %v1953 = vpop.f32.mrb[0].mxu0
      %v1954 = vadd.f32 %v1883, %v1953
      %1955 = vdwg.mxu0
      %v1956 = vld [vmem:[%s5] sm:$0xff]
      %v1957 = vld [vmem:[%s5 + $0x8] sm:$0xff]
      %v1958 = vld [vmem:[%s5 + $0x10] sm:$0xff]
      %v1959 = vld [vmem:[%s5 + $0x18] sm:$0xff]
      %v1960 = vld [vmem:[%s5 + $0x20] sm:$0xff]
      %v1961 = vld [vmem:[%s5 + $0x28] sm:$0xff]
      %v1962 = vld [vmem:[%s5 + $0x30] sm:$0xff]
      %v1963 = vld [vmem:[%s5 + $0x38] sm:$0xff]
      %v1964 = vld [vmem:[%s5 + $0x40] sm:$0xff]
      %v1965 = vld [vmem:[%s5 + $0x48] sm:$0xff]
      %v1966 = vld [vmem:[%s5 + $0x50] sm:$0xff]
      %v1967 = vld [vmem:[%s5 + $0x58] sm:$0xff]
      %v1968 = vld [vmem:[%s5 + $0x60] sm:$0xff]
      %v1969 = vld [vmem:[%s5 + $0x68] sm:$0xff]
      %v1970 = vld [vmem:[%s5 + $0x70] sm:$0xff]
      %v1971 = vld [vmem:[%s5 + $0x78] sm:$0xff]
      %v1972 = vld [vmem:[%s5 + $0x80] sm:$0xff]
      %v1973 = vld [vmem:[%s5 + $0x88] sm:$0xff]
      %v1974 = vld [vmem:[%s5 + $0x90] sm:$0xff]
      %v1975 = vld [vmem:[%s5 + $0x98] sm:$0xff]
      %v1976 = vld [vmem:[%s5 + $0xa0] sm:$0xff]
      %v1977 = vld [vmem:[%s5 + $0xa8] sm:$0xff]
      %v1978 = vld [vmem:[%s5 + $0xb0] sm:$0xff]
      %v1979 = vld [vmem:[%s5 + $0xb8] sm:$0xff]
      %v1980 = vld [vmem:[%s5 + $0xc0] sm:$0xff]
      %v1981 = vld [vmem:[%s5 + $0xc8] sm:$0xff]
      %v1982 = vld [vmem:[%s5 + $0xd0] sm:$0xff]
      %v1983 = vld [vmem:[%s5 + $0xd8] sm:$0xff]
      %v1984 = vld [vmem:[%s5 + $0xe0] sm:$0xff]
      %v1985 = vld [vmem:[%s5 + $0xe8] sm:$0xff]
      %v1986 = vld [vmem:[%s5 + $0xf0] sm:$0xff]
      %v1987 = vld [vmem:[%s5 + $0xf8] sm:$0xff]
      %v1988 = vld [vmem:[%s5 + $0x100] sm:$0xff]
      %v1989 = vld [vmem:[%s5 + $0x108] sm:$0xff]
      %v1990 = vld [vmem:[%s5 + $0x110] sm:$0xff]
      %v1991 = vld [vmem:[%s5 + $0x118] sm:$0xff]
      %v1992 = vld [vmem:[%s5 + $0x120] sm:$0xff]
      %v1993 = vld [vmem:[%s5 + $0x128] sm:$0xff]
      %v1994 = vld [vmem:[%s5 + $0x130] sm:$0xff]
      %v1995 = vld [vmem:[%s5 + $0x138] sm:$0xff]
      %v1996 = vld [vmem:[%s5 + $0x140] sm:$0xff]
      %v1997 = vld [vmem:[%s5 + $0x148] sm:$0xff]
      %v1998 = vld [vmem:[%s5 + $0x150] sm:$0xff]
      %v1999 = vld [vmem:[%s5 + $0x158] sm:$0xff]
      %v2000 = vld [vmem:[%s5 + $0x160] sm:$0xff]
      %v2001 = vld [vmem:[%s5 + $0x168] sm:$0xff]
      %v2002 = vld [vmem:[%s5 + $0x170] sm:$0xff]
      %v2003 = vld [vmem:[%s5 + $0x178] sm:$0xff]
      %v2004 = vld [vmem:[%s5 + $0x180] sm:$0xff]
      %v2005 = vld [vmem:[%s5 + $0x188] sm:$0xff]
      %v2006 = vld [vmem:[%s5 + $0x190] sm:$0xff]
      %v2007 = vld [vmem:[%s5 + $0x198] sm:$0xff]
      %v2008 = vld [vmem:[%s5 + $0x1a0] sm:$0xff]
      %v2009 = vld [vmem:[%s5 + $0x1a8] sm:$0xff]
      %v2010 = vld [vmem:[%s5 + $0x1b0] sm:$0xff]
      %v2011 = vld [vmem:[%s5 + $0x1b8] sm:$0xff]
      %v2012 = vld [vmem:[%s5 + $0x1c0] sm:$0xff]
      %v2013 = vld [vmem:[%s5 + $0x1c8] sm:$0xff]
      %v2014 = vld [vmem:[%s5 + $0x1d0] sm:$0xff]
      %v2015 = vld [vmem:[%s5 + $0x1d8] sm:$0xff]
      %v2016 = vld [vmem:[%s5 + $0x1e0] sm:$0xff]
      %v2017 = vld [vmem:[%s5 + $0x1e8] sm:$0xff]
      %v2018 = vld [vmem:[%s5 + $0x1f0] sm:$0xff]
      %v2019 = vld [vmem:[%s5 + $0x1f8] sm:$0xff]
      %v2020 = vld [vmem:[%s5 + $0x200] sm:$0xff]
      %v2021 = vld [vmem:[%s5 + $0x208] sm:$0xff]
      %v2022 = vld [vmem:[%s5 + $0x210] sm:$0xff]
      %v2023 = vld [vmem:[%s5 + $0x218] sm:$0xff]
      %v2024 = vld [vmem:[%s5 + $0x220] sm:$0xff]
      %v2025 = vld [vmem:[%s5 + $0x228] sm:$0xff]
      %v2026 = vld [vmem:[%s5 + $0x230] sm:$0xff]
      %v2027 = vld [vmem:[%s5 + $0x238] sm:$0xff]
      %v2028 = vld [vmem:[%s5 + $0x240] sm:$0xff]
      %v2029 = vld [vmem:[%s5 + $0x248] sm:$0xff]
      %v2030 = vld [vmem:[%s5 + $0x250] sm:$0xff]
      %v2031 = vld [vmem:[%s5 + $0x258] sm:$0xff]
      %v2032 = vld [vmem:[%s5 + $0x260] sm:$0xff]
      %v2033 = vld [vmem:[%s5 + $0x268] sm:$0xff]
      %v2034 = vld [vmem:[%s5 + $0x270] sm:$0xff]
      %v2035 = vld [vmem:[%s5 + $0x278] sm:$0xff]
      %v2036 = vld [vmem:[%s5 + $0x280] sm:$0xff]
      %v2037 = vld [vmem:[%s5 + $0x288] sm:$0xff]
      %v2038 = vld [vmem:[%s5 + $0x290] sm:$0xff]
      %v2039 = vld [vmem:[%s5 + $0x298] sm:$0xff]
      %v2040 = vld [vmem:[%s5 + $0x2a0] sm:$0xff]
      %v2041 = vld [vmem:[%s5 + $0x2a8] sm:$0xff]
      %v2042 = vld [vmem:[%s5 + $0x2b0] sm:$0xff]
      %v2043 = vld [vmem:[%s5 + $0x2b8] sm:$0xff]
      %v2044 = vld [vmem:[%s5 + $0x2c0] sm:$0xff]
      %v2045 = vld [vmem:[%s5 + $0x2c8] sm:$0xff]
      %v2046 = vld [vmem:[%s5 + $0x2d0] sm:$0xff]
      %v2047 = vld [vmem:[%s5 + $0x2d8] sm:$0xff]
      %v2048 = vld [vmem:[%s5 + $0x2e0] sm:$0xff]
      %v2049 = vld [vmem:[%s5 + $0x2e8] sm:$0xff]
      %v2050 = vld [vmem:[%s5 + $0x2f0] sm:$0xff]
      %v2051 = vld [vmem:[%s5 + $0x2f8] sm:$0xff]
      %v2052 = vld [vmem:[%s5 + $0x300] sm:$0xff]
      %v2053 = vld [vmem:[%s5 + $0x308] sm:$0xff]
      %v2054 = vld [vmem:[%s5 + $0x310] sm:$0xff]
      %v2055 = vld [vmem:[%s5 + $0x318] sm:$0xff]
      %v2056 = vld [vmem:[%s5 + $0x320] sm:$0xff]
      %v2057 = vld [vmem:[%s5 + $0x328] sm:$0xff]
      %v2058 = vld [vmem:[%s5 + $0x330] sm:$0xff]
      %v2059 = vld [vmem:[%s5 + $0x338] sm:$0xff]
      %v2060 = vld [vmem:[%s5 + $0x340] sm:$0xff]
      %v2061 = vld [vmem:[%s5 + $0x348] sm:$0xff]
      %v2062 = vld [vmem:[%s5 + $0x350] sm:$0xff]
      %v2063 = vld [vmem:[%s5 + $0x358] sm:$0xff]
      %v2064 = vld [vmem:[%s5 + $0x360] sm:$0xff]
      %v2065 = vld [vmem:[%s5 + $0x368] sm:$0xff]
      %v2066 = vld [vmem:[%s5 + $0x370] sm:$0xff]
      %v2067 = vld [vmem:[%s5 + $0x378] sm:$0xff]
      %v2068 = vld [vmem:[%s5 + $0x380] sm:$0xff]
      %v2069 = vld [vmem:[%s5 + $0x388] sm:$0xff]
      %v2070 = vld [vmem:[%s5 + $0x390] sm:$0xff]
      %v2071 = vld [vmem:[%s5 + $0x398] sm:$0xff]
      %v2072 = vld [vmem:[%s5 + $0x3a0] sm:$0xff]
      %v2073 = vld [vmem:[%s5 + $0x3a8] sm:$0xff]
      %v2074 = vld [vmem:[%s5 + $0x3b0] sm:$0xff]
      %v2075 = vld [vmem:[%s5 + $0x3b8] sm:$0xff]
      %v2076 = vld [vmem:[%s5 + $0x3c0] sm:$0xff]
      %v2077 = vld [vmem:[%s5 + $0x3c8] sm:$0xff]
      %v2078 = vld [vmem:[%s5 + $0x3d0] sm:$0xff]
      %v2079 = vld [vmem:[%s5 + $0x3d8] sm:$0xff]
      %v2080 = vld [vmem:[%s5 + $0x3e0] sm:$0xff]
      %v2081 = vld [vmem:[%s5 + $0x3e8] sm:$0xff]
      %v2082 = vld [vmem:[%s5 + $0x3f0] sm:$0xff]
      %v2083 = vld [vmem:[%s5 + $0x3f8] sm:$0xff]
      %v2084 = vunpack.c.l.bf16 %v1956
      %v2085 = vunpack.c.h.bf16 %v1956
      %v2086 = vunpack.c.l.bf16 %v1957
      %v2087 = vunpack.c.h.bf16 %v1957
      %v2088 = vunpack.c.l.bf16 %v1958
      %v2089 = vunpack.c.h.bf16 %v1958
      %v2090 = vunpack.c.l.bf16 %v1959
      %v2091 = vunpack.c.h.bf16 %v1959
      %v2092 = vunpack.c.l.bf16 %v1960
      %v2093 = vunpack.c.h.bf16 %v1960
      %v2094 = vunpack.c.l.bf16 %v1961
      %v2095 = vunpack.c.h.bf16 %v1961
      %v2096 = vunpack.c.l.bf16 %v1962
      %v2097 = vunpack.c.h.bf16 %v1962
      %v2098 = vunpack.c.l.bf16 %v1963
      %v2099 = vunpack.c.h.bf16 %v1963
      %v2100 = vunpack.c.l.bf16 %v1964
      %v2101 = vunpack.c.h.bf16 %v1964
      %v2102 = vunpack.c.l.bf16 %v1965
      %v2103 = vunpack.c.h.bf16 %v1965
      %v2104 = vunpack.c.l.bf16 %v1966
      %v2105 = vunpack.c.h.bf16 %v1966
      %v2106 = vunpack.c.l.bf16 %v1967
      %v2107 = vunpack.c.h.bf16 %v1967
      %v2108 = vunpack.c.l.bf16 %v1968
      %v2109 = vunpack.c.h.bf16 %v1968
      %v2110 = vunpack.c.l.bf16 %v1969
      %v2111 = vunpack.c.h.bf16 %v1969
      %v2112 = vunpack.c.l.bf16 %v1970
      %v2113 = vunpack.c.h.bf16 %v1970
      %v2114 = vunpack.c.l.bf16 %v1971
      %v2115 = vunpack.c.h.bf16 %v1971
      %v2116 = vunpack.c.l.bf16 %v1972
      %v2117 = vunpack.c.h.bf16 %v1972
      %v2118 = vunpack.c.l.bf16 %v1973
      %v2119 = vunpack.c.h.bf16 %v1973
      %v2120 = vunpack.c.l.bf16 %v1974
      %v2121 = vunpack.c.h.bf16 %v1974
      %v2122 = vunpack.c.l.bf16 %v1975
      %v2123 = vunpack.c.h.bf16 %v1975
      %v2124 = vunpack.c.l.bf16 %v1976
      %v2125 = vunpack.c.h.bf16 %v1976
      %v2126 = vunpack.c.l.bf16 %v1977
      %v2127 = vunpack.c.h.bf16 %v1977
      %v2128 = vunpack.c.l.bf16 %v1978
      %v2129 = vunpack.c.h.bf16 %v1978
      %v2130 = vunpack.c.l.bf16 %v1979
      %v2131 = vunpack.c.h.bf16 %v1979
      %v2132 = vunpack.c.l.bf16 %v1980
      %v2133 = vunpack.c.h.bf16 %v1980
      %v2134 = vunpack.c.l.bf16 %v1981
      %v2135 = vunpack.c.h.bf16 %v1981
      %v2136 = vunpack.c.l.bf16 %v1982
      %v2137 = vunpack.c.h.bf16 %v1982
      %v2138 = vunpack.c.l.bf16 %v1983
      %v2139 = vunpack.c.h.bf16 %v1983
      %v2140 = vunpack.c.l.bf16 %v1984
      %v2141 = vunpack.c.h.bf16 %v1984
      %v2142 = vunpack.c.l.bf16 %v1985
      %v2143 = vunpack.c.h.bf16 %v1985
      %v2144 = vunpack.c.l.bf16 %v1986
      %v2145 = vunpack.c.h.bf16 %v1986
      %v2146 = vunpack.c.l.bf16 %v1987
      %v2147 = vunpack.c.h.bf16 %v1987
      %v2148 = vunpack.c.l.bf16 %v1988
      %v2149 = vunpack.c.h.bf16 %v1988
      %v2150 = vunpack.c.l.bf16 %v1989
      %v2151 = vunpack.c.h.bf16 %v1989
      %v2152 = vunpack.c.l.bf16 %v1990
      %v2153 = vunpack.c.h.bf16 %v1990
      %v2154 = vunpack.c.l.bf16 %v1991
      %v2155 = vunpack.c.h.bf16 %v1991
      %v2156 = vunpack.c.l.bf16 %v1992
      %v2157 = vunpack.c.h.bf16 %v1992
      %v2158 = vunpack.c.l.bf16 %v1993
      %v2159 = vunpack.c.h.bf16 %v1993
      %v2160 = vunpack.c.l.bf16 %v1994
      %v2161 = vunpack.c.h.bf16 %v1994
      %v2162 = vunpack.c.l.bf16 %v1995
      %v2163 = vunpack.c.h.bf16 %v1995
      %v2164 = vunpack.c.l.bf16 %v1996
      %v2165 = vunpack.c.h.bf16 %v1996
      %v2166 = vunpack.c.l.bf16 %v1997
      %v2167 = vunpack.c.h.bf16 %v1997
      %v2168 = vunpack.c.l.bf16 %v1998
      %v2169 = vunpack.c.h.bf16 %v1998
      %v2170 = vunpack.c.l.bf16 %v1999
      %v2171 = vunpack.c.h.bf16 %v1999
      %v2172 = vunpack.c.l.bf16 %v2000
      %v2173 = vunpack.c.h.bf16 %v2000
      %v2174 = vunpack.c.l.bf16 %v2001
      %v2175 = vunpack.c.h.bf16 %v2001
      %v2176 = vunpack.c.l.bf16 %v2002
      %v2177 = vunpack.c.h.bf16 %v2002
      %v2178 = vunpack.c.l.bf16 %v2003
      %v2179 = vunpack.c.h.bf16 %v2003
      %v2180 = vunpack.c.l.bf16 %v2004
      %v2181 = vunpack.c.h.bf16 %v2004
      %v2182 = vunpack.c.l.bf16 %v2005
      %v2183 = vunpack.c.h.bf16 %v2005
      %v2184 = vunpack.c.l.bf16 %v2006
      %v2185 = vunpack.c.h.bf16 %v2006
      %v2186 = vunpack.c.l.bf16 %v2007
      %v2187 = vunpack.c.h.bf16 %v2007
      %v2188 = vunpack.c.l.bf16 %v2008
      %v2189 = vunpack.c.h.bf16 %v2008
      %v2190 = vunpack.c.l.bf16 %v2009
      %v2191 = vunpack.c.h.bf16 %v2009
      %v2192 = vunpack.c.l.bf16 %v2010
      %v2193 = vunpack.c.h.bf16 %v2010
      %v2194 = vunpack.c.l.bf16 %v2011
      %v2195 = vunpack.c.h.bf16 %v2011
      %v2196 = vunpack.c.l.bf16 %v2012
      %v2197 = vunpack.c.h.bf16 %v2012
      %v2198 = vunpack.c.l.bf16 %v2013
      %v2199 = vunpack.c.h.bf16 %v2013
      %v2200 = vunpack.c.l.bf16 %v2014
      %v2201 = vunpack.c.h.bf16 %v2014
      %v2202 = vunpack.c.l.bf16 %v2015
      %v2203 = vunpack.c.h.bf16 %v2015
      %v2204 = vunpack.c.l.bf16 %v2016
      %v2205 = vunpack.c.h.bf16 %v2016
      %v2206 = vunpack.c.l.bf16 %v2017
      %v2207 = vunpack.c.h.bf16 %v2017
      %v2208 = vunpack.c.l.bf16 %v2018
      %v2209 = vunpack.c.h.bf16 %v2018
      %v2210 = vunpack.c.l.bf16 %v2019
      %v2211 = vunpack.c.h.bf16 %v2019
      %v2212 = vunpack.c.l.bf16 %v2020
      %v2213 = vunpack.c.h.bf16 %v2020
      %v2214 = vunpack.c.l.bf16 %v2021
      %v2215 = vunpack.c.h.bf16 %v2021
      %v2216 = vunpack.c.l.bf16 %v2022
      %v2217 = vunpack.c.h.bf16 %v2022
      %v2218 = vunpack.c.l.bf16 %v2023
      %v2219 = vunpack.c.h.bf16 %v2023
      %v2220 = vunpack.c.l.bf16 %v2024
      %v2221 = vunpack.c.h.bf16 %v2024
      %v2222 = vunpack.c.l.bf16 %v2025
      %v2223 = vunpack.c.h.bf16 %v2025
      %v2224 = vunpack.c.l.bf16 %v2026
      %v2225 = vunpack.c.h.bf16 %v2026
      %v2226 = vunpack.c.l.bf16 %v2027
      %v2227 = vunpack.c.h.bf16 %v2027
      %v2228 = vunpack.c.l.bf16 %v2028
      %v2229 = vunpack.c.h.bf16 %v2028
      %v2230 = vunpack.c.l.bf16 %v2029
      %v2231 = vunpack.c.h.bf16 %v2029
      %v2232 = vunpack.c.l.bf16 %v2030
      %v2233 = vunpack.c.h.bf16 %v2030
      %v2234 = vunpack.c.l.bf16 %v2031
      %v2235 = vunpack.c.h.bf16 %v2031
      %v2236 = vunpack.c.l.bf16 %v2032
      %v2237 = vunpack.c.h.bf16 %v2032
      %v2238 = vunpack.c.l.bf16 %v2033
      %v2239 = vunpack.c.h.bf16 %v2033
      %v2240 = vunpack.c.l.bf16 %v2034
      %v2241 = vunpack.c.h.bf16 %v2034
      %v2242 = vunpack.c.l.bf16 %v2035
      %v2243 = vunpack.c.h.bf16 %v2035
      %v2244 = vunpack.c.l.bf16 %v2036
      %v2245 = vunpack.c.h.bf16 %v2036
      %v2246 = vunpack.c.l.bf16 %v2037
      %v2247 = vunpack.c.h.bf16 %v2037
      %v2248 = vunpack.c.l.bf16 %v2038
      %v2249 = vunpack.c.h.bf16 %v2038
      %v2250 = vunpack.c.l.bf16 %v2039
      %v2251 = vunpack.c.h.bf16 %v2039
      %v2252 = vunpack.c.l.bf16 %v2040
      %v2253 = vunpack.c.h.bf16 %v2040
      %v2254 = vunpack.c.l.bf16 %v2041
      %v2255 = vunpack.c.h.bf16 %v2041
      %v2256 = vunpack.c.l.bf16 %v2042
      %v2257 = vunpack.c.h.bf16 %v2042
      %v2258 = vunpack.c.l.bf16 %v2043
      %v2259 = vunpack.c.h.bf16 %v2043
      %v2260 = vunpack.c.l.bf16 %v2044
      %v2261 = vunpack.c.h.bf16 %v2044
      %v2262 = vunpack.c.l.bf16 %v2045
      %v2263 = vunpack.c.h.bf16 %v2045
      %v2264 = vunpack.c.l.bf16 %v2046
      %v2265 = vunpack.c.h.bf16 %v2046
      %v2266 = vunpack.c.l.bf16 %v2047
      %v2267 = vunpack.c.h.bf16 %v2047
      %v2268 = vunpack.c.l.bf16 %v2048
      %v2269 = vunpack.c.h.bf16 %v2048
      %v2270 = vunpack.c.l.bf16 %v2049
      %v2271 = vunpack.c.h.bf16 %v2049
      %v2272 = vunpack.c.l.bf16 %v2050
      %v2273 = vunpack.c.h.bf16 %v2050
      %v2274 = vunpack.c.l.bf16 %v2051
      %v2275 = vunpack.c.h.bf16 %v2051
      %v2276 = vunpack.c.l.bf16 %v2052
      %v2277 = vunpack.c.h.bf16 %v2052
      %v2278 = vunpack.c.l.bf16 %v2053
      %v2279 = vunpack.c.h.bf16 %v2053
      %v2280 = vunpack.c.l.bf16 %v2054
      %v2281 = vunpack.c.h.bf16 %v2054
      %v2282 = vunpack.c.l.bf16 %v2055
      %v2283 = vunpack.c.h.bf16 %v2055
      %v2284 = vunpack.c.l.bf16 %v2056
      %v2285 = vunpack.c.h.bf16 %v2056
      %v2286 = vunpack.c.l.bf16 %v2057
      %v2287 = vunpack.c.h.bf16 %v2057
      %v2288 = vunpack.c.l.bf16 %v2058
      %v2289 = vunpack.c.h.bf16 %v2058
      %v2290 = vunpack.c.l.bf16 %v2059
      %v2291 = vunpack.c.h.bf16 %v2059
      %v2292 = vunpack.c.l.bf16 %v2060
      %v2293 = vunpack.c.h.bf16 %v2060
      %v2294 = vunpack.c.l.bf16 %v2061
      %v2295 = vunpack.c.h.bf16 %v2061
      %v2296 = vunpack.c.l.bf16 %v2062
      %v2297 = vunpack.c.h.bf16 %v2062
      %v2298 = vunpack.c.l.bf16 %v2063
      %v2299 = vunpack.c.h.bf16 %v2063
      %v2300 = vunpack.c.l.bf16 %v2064
      %v2301 = vunpack.c.h.bf16 %v2064
      %v2302 = vunpack.c.l.bf16 %v2065
      %v2303 = vunpack.c.h.bf16 %v2065
      %v2304 = vunpack.c.l.bf16 %v2066
      %v2305 = vunpack.c.h.bf16 %v2066
      %v2306 = vunpack.c.l.bf16 %v2067
      %v2307 = vunpack.c.h.bf16 %v2067
      %v2308 = vunpack.c.l.bf16 %v2068
      %v2309 = vunpack.c.h.bf16 %v2068
      %v2310 = vunpack.c.l.bf16 %v2069
      %v2311 = vunpack.c.h.bf16 %v2069
      %v2312 = vunpack.c.l.bf16 %v2070
      %v2313 = vunpack.c.h.bf16 %v2070
      %v2314 = vunpack.c.l.bf16 %v2071
      %v2315 = vunpack.c.h.bf16 %v2071
      %v2316 = vunpack.c.l.bf16 %v2072
      %v2317 = vunpack.c.h.bf16 %v2072
      %v2318 = vunpack.c.l.bf16 %v2073
      %v2319 = vunpack.c.h.bf16 %v2073
      %v2320 = vunpack.c.l.bf16 %v2074
      %v2321 = vunpack.c.h.bf16 %v2074
      %v2322 = vunpack.c.l.bf16 %v2075
      %v2323 = vunpack.c.h.bf16 %v2075
      %v2324 = vunpack.c.l.bf16 %v2076
      %v2325 = vunpack.c.h.bf16 %v2076
      %v2326 = vunpack.c.l.bf16 %v2077
      %v2327 = vunpack.c.h.bf16 %v2077
      %v2328 = vunpack.c.l.bf16 %v2078
      %v2329 = vunpack.c.h.bf16 %v2078
      %v2330 = vunpack.c.l.bf16 %v2079
      %v2331 = vunpack.c.h.bf16 %v2079
      %v2332 = vunpack.c.l.bf16 %v2080
      %v2333 = vunpack.c.h.bf16 %v2080
      %v2334 = vunpack.c.l.bf16 %v2081
      %v2335 = vunpack.c.h.bf16 %v2081
      %v2336 = vunpack.c.l.bf16 %v2082
      %v2337 = vunpack.c.h.bf16 %v2082
      %v2338 = vunpack.c.l.bf16 %v2083
      %v2339 = vunpack.c.h.bf16 %v2083
      %v2340 = vlaneseq
      %v2341 = vshrl.u32 %v2340, 7
      %v2342 = vsub.s32 1, %v2341
      %v2343 = vrot.slane %v1248, %v2342
      %v2344 = vlaneseq
      %v2345 = vshrl.u32 %v2344, 7
      %v2346 = vsub.s32 5, %v2345
      %v2347 = vrot.slane %v1248, %v2346
      %v2348 = vlaneseq
      %v2349 = vshrl.u32 %v2348, 7
      %v2350 = vsub.s32 1, %v2349
      %v2351 = vrot.slane %v1249, %v2350
      %v2352 = vlaneseq
      %v2353 = vshrl.u32 %v2352, 7
      %v2354 = vsub.s32 5, %v2353
      %v2355 = vrot.slane %v1249, %v2354
      %v2360 = vlaneseq
      %v2361 = vshrl.u32 %v2360, 7
      %v2362 = vsub.s32 1, %v2361
      %v2363 = vrot.slane %v2343, %v2362
      %v2364 = vlaneseq
      %v2365 = vshrl.u32 %v2364, 7
      %v2366 = vsub.s32 1, %v2365
      %v2367 = vrot.slane %v2347, %v2366
      %v2368 = vlaneseq
      %v2369 = vshrl.u32 %v2368, 7
      %v2370 = vsub.s32 1, %v2369
      %v2371 = vrot.slane %v2351, %v2370
      %v2372 = vlaneseq
      %v2373 = vshrl.u32 %v2372, 7
      %v2374 = vsub.s32 1, %v2373
      %v2375 = vrot.slane %v2355, %v2374
      %2376 = vmatprep.subr.mxu0 %v2085
      %2377 = vmatpush1.msra.mxu0 %v2084
      %2378 = vmatprep.subr.mxu0 %v2089
      %2379 = vmatpush1.msra.mxu0 %v2088
      %2380 = vmatprep.subr.mxu0 %v2093
      %2381 = vmatpush1.msra.mxu0 %v2092
      %2382 = vmatprep.subr.mxu0 %v2097
      %2383 = vmatpush1.msra.mxu0 %v2096
      %2384 = vmatprep.subr.mxu0 %v2101
      %2385 = vmatpush1.msra.mxu0 %v2100
      %2386 = vmatprep.subr.mxu0 %v2105
      %2387 = vmatpush1.msra.mxu0 %v2104
      %2388 = vmatprep.subr.mxu0 %v2109
      %2389 = vmatpush1.msra.mxu0 %v2108
      %2390 = vmatprep.subr.mxu0 %v2113
      %2391 = vmatpush1.msra.mxu0 %v2112
      %2392 = vmatprep.subr.mxu0 %v2117
      %2393 = vmatpush1.msra.mxu0 %v2116
      %2394 = vmatprep.subr.mxu0 %v2121
      %2395 = vmatpush1.msra.mxu0 %v2120
      %2396 = vmatprep.subr.mxu0 %v2125
      %2397 = vmatpush1.msra.mxu0 %v2124
      %2398 = vmatprep.subr.mxu0 %v2129
      %2399 = vmatpush1.msra.mxu0 %v2128
      %2400 = vmatprep.subr.mxu0 %v2133
      %2401 = vmatpush1.msra.mxu0 %v2132
      %2402 = vmatprep.subr.mxu0 %v2137
      %2403 = vmatpush1.msra.mxu0 %v2136
      %2404 = vmatprep.subr.mxu0 %v2141
      %2405 = vmatpush1.msra.mxu0 %v2140
      %2406 = vmatprep.subr.mxu0 %v2145
      %2407 = vmatpush1.msra.mxu0 %v2144
      %2408 = vmatprep.subr.mxu0 %v2149
      %2409 = vmatpush1.msra.mxu0 %v2148
      %2410 = vmatprep.subr.mxu0 %v2153
      %2411 = vmatpush1.msra.mxu0 %v2152
      %2412 = vmatprep.subr.mxu0 %v2157
      %2413 = vmatpush1.msra.mxu0 %v2156
      %2414 = vmatprep.subr.mxu0 %v2161
      %2415 = vmatpush1.msra.mxu0 %v2160
      %2416 = vmatprep.subr.mxu0 %v2165
      %2417 = vmatpush1.msra.mxu0 %v2164
      %2418 = vmatprep.subr.mxu0 %v2169
      %2419 = vmatpush1.msra.mxu0 %v2168
      %2420 = vmatprep.subr.mxu0 %v2173
      %2421 = vmatpush1.msra.mxu0 %v2172
      %2422 = vmatprep.subr.mxu0 %v2177
      %2423 = vmatpush1.msra.mxu0 %v2176
      %2424 = vmatprep.subr.mxu0 %v2181
      %2425 = vmatpush1.msra.mxu0 %v2180
      %2426 = vmatprep.subr.mxu0 %v2185
      %2427 = vmatpush1.msra.mxu0 %v2184
      %2428 = vmatprep.subr.mxu0 %v2189
      %2429 = vmatpush1.msra.mxu0 %v2188
      %2430 = vmatprep.subr.mxu0 %v2193
      %2431 = vmatpush1.msra.mxu0 %v2192
      %2432 = vmatprep.subr.mxu0 %v2197
      %2433 = vmatpush1.msra.mxu0 %v2196
      %2434 = vmatprep.subr.mxu0 %v2201
      %2435 = vmatpush1.msra.mxu0 %v2200
      %2436 = vmatprep.subr.mxu0 %v2205
      %2437 = vmatpush1.msra.mxu0 %v2204
      %2438 = vmatprep.subr.mxu0 %v2209
      %2439 = vmatpush1.msra.mxu0 %v2208
      %2440 = vmatprep.mubr.f32.mxu0 %v1245
      %2441 = vmatmul.mubr.f32.gmra.mrb[0].mxu0 %v1244
      %v2442 = vpop.f32.mrb[0].mxu0
      %v2443 = vadd.f32 %v2363, %v2442
      %v2444 = vpop.f32.mrb[0].mxu0
      %v2445 = vadd.f32 %v2367, %v2444
      %2446 = vdwg.mxu0
      %2447 = vmatprep.subr.mxu0 %v2213
      %2448 = vmatpush1.msra.mxu0 %v2212
      %2449 = vmatprep.subr.mxu0 %v2217
      %2450 = vmatpush1.msra.mxu0 %v2216
      %2451 = vmatprep.subr.mxu0 %v2221
      %2452 = vmatpush1.msra.mxu0 %v2220
      %2453 = vmatprep.subr.mxu0 %v2225
      %2454 = vmatpush1.msra.mxu0 %v2224
      %2455 = vmatprep.subr.mxu0 %v2229
      %2456 = vmatpush1.msra.mxu0 %v2228
      %2457 = vmatprep.subr.mxu0 %v2233
      %2458 = vmatpush1.msra.mxu0 %v2232
      %2459 = vmatprep.subr.mxu0 %v2237
      %2460 = vmatpush1.msra.mxu0 %v2236
      %2461 = vmatprep.subr.mxu0 %v2241
      %2462 = vmatpush1.msra.mxu0 %v2240
      %2463 = vmatprep.subr.mxu0 %v2245
      %2464 = vmatpush1.msra.mxu0 %v2244
      %2465 = vmatprep.subr.mxu0 %v2249
      %2466 = vmatpush1.msra.mxu0 %v2248
      %2467 = vmatprep.subr.mxu0 %v2253
      %2468 = vmatpush1.msra.mxu0 %v2252
      %2469 = vmatprep.subr.mxu0 %v2257
      %2470 = vmatpush1.msra.mxu0 %v2256
      %2471 = vmatprep.subr.mxu0 %v2261
      %2472 = vmatpush1.msra.mxu0 %v2260
      %2473 = vmatprep.subr.mxu0 %v2265
      %2474 = vmatpush1.msra.mxu0 %v2264
      %2475 = vmatprep.subr.mxu0 %v2269
      %2476 = vmatpush1.msra.mxu0 %v2268
      %2477 = vmatprep.subr.mxu0 %v2273
      %2478 = vmatpush1.msra.mxu0 %v2272
      %2479 = vmatprep.subr.mxu0 %v2277
      %2480 = vmatpush1.msra.mxu0 %v2276
      %2481 = vmatprep.subr.mxu0 %v2281
      %2482 = vmatpush1.msra.mxu0 %v2280
      %2483 = vmatprep.subr.mxu0 %v2285
      %2484 = vmatpush1.msra.mxu0 %v2284
      %2485 = vmatprep.subr.mxu0 %v2289
      %2486 = vmatpush1.msra.mxu0 %v2288
      %2487 = vmatprep.subr.mxu0 %v2293
      %2488 = vmatpush1.msra.mxu0 %v2292
      %2489 = vmatprep.subr.mxu0 %v2297
      %2490 = vmatpush1.msra.mxu0 %v2296
      %2491 = vmatprep.subr.mxu0 %v2301
      %2492 = vmatpush1.msra.mxu0 %v2300
      %2493 = vmatprep.subr.mxu0 %v2305
      %2494 = vmatpush1.msra.mxu0 %v2304
      %2495 = vmatprep.subr.mxu0 %v2309
      %2496 = vmatpush1.msra.mxu0 %v2308
      %2497 = vmatprep.subr.mxu0 %v2313
      %2498 = vmatpush1.msra.mxu0 %v2312
      %2499 = vmatprep.subr.mxu0 %v2317
      %2500 = vmatpush1.msra.mxu0 %v2316
      %2501 = vmatprep.subr.mxu0 %v2321
      %2502 = vmatpush1.msra.mxu0 %v2320
      %2503 = vmatprep.subr.mxu0 %v2325
      %2504 = vmatpush1.msra.mxu0 %v2324
      %2505 = vmatprep.subr.mxu0 %v2329
      %2506 = vmatpush1.msra.mxu0 %v2328
      %2507 = vmatprep.subr.mxu0 %v2333
      %2508 = vmatpush1.msra.mxu0 %v2332
      %2509 = vmatprep.subr.mxu0 %v2337
      %2510 = vmatpush1.msra.mxu0 %v2336
      %2511 = vmatprep.mubr.f32.mxu0 %v1247
      %2512 = vmatmul.mubr.f32.gmra.mrb[0].mxu0 %v1246
      %v2513 = vpop.f32.mrb[0].mxu0
      %v2514 = vadd.f32 %v2443, %v2513
      %v2515 = vpop.f32.mrb[0].mxu0
      %v2516 = vadd.f32 %v2445, %v2515
      %2517 = vdwg.mxu0
      %2518 = vmatprep.subr.mxu0 %v2087
      %2519 = vmatpush1.msra.mxu0 %v2086
      %2520 = vmatprep.subr.mxu0 %v2091
      %2521 = vmatpush1.msra.mxu0 %v2090
      %2522 = vmatprep.subr.mxu0 %v2095
      %2523 = vmatpush1.msra.mxu0 %v2094
      %2524 = vmatprep.subr.mxu0 %v2099
      %2525 = vmatpush1.msra.mxu0 %v2098
      %2526 = vmatprep.subr.mxu0 %v2103
      %2527 = vmatpush1.msra.mxu0 %v2102
      %2528 = vmatprep.subr.mxu0 %v2107
      %2529 = vmatpush1.msra.mxu0 %v2106
      %2530 = vmatprep.subr.mxu0 %v2111
      %2531 = vmatpush1.msra.mxu0 %v2110
      %2532 = vmatprep.subr.mxu0 %v2115
      %2533 = vmatpush1.msra.mxu0 %v2114
      %2534 = vmatprep.subr.mxu0 %v2119
      %2535 = vmatpush1.msra.mxu0 %v2118
      %2536 = vmatprep.subr.mxu0 %v2123
      %2537 = vmatpush1.msra.mxu0 %v2122
      %2538 = vmatprep.subr.mxu0 %v2127
      %2539 = vmatpush1.msra.mxu0 %v2126
      %2540 = vmatprep.subr.mxu0 %v2131
      %2541 = vmatpush1.msra.mxu0 %v2130
      %2542 = vmatprep.subr.mxu0 %v2135
      %2543 = vmatpush1.msra.mxu0 %v2134
      %2544 = vmatprep.subr.mxu0 %v2139
      %2545 = vmatpush1.msra.mxu0 %v2138
      %2546 = vmatprep.subr.mxu0 %v2143
      %2547 = vmatpush1.msra.mxu0 %v2142
      %2548 = vmatprep.subr.mxu0 %v2147
      %2549 = vmatpush1.msra.mxu0 %v2146
      %2550 = vmatprep.subr.mxu0 %v2151
      %2551 = vmatpush1.msra.mxu0 %v2150
      %2552 = vmatprep.subr.mxu0 %v2155
      %2553 = vmatpush1.msra.mxu0 %v2154
      %2554 = vmatprep.subr.mxu0 %v2159
      %2555 = vmatpush1.msra.mxu0 %v2158
      %2556 = vmatprep.subr.mxu0 %v2163
      %2557 = vmatpush1.msra.mxu0 %v2162
      %2558 = vmatprep.subr.mxu0 %v2167
      %2559 = vmatpush1.msra.mxu0 %v2166
      %2560 = vmatprep.subr.mxu0 %v2171
      %2561 = vmatpush1.msra.mxu0 %v2170
      %2562 = vmatprep.subr.mxu0 %v2175
      %2563 = vmatpush1.msra.mxu0 %v2174
      %2564 = vmatprep.subr.mxu0 %v2179
      %2565 = vmatpush1.msra.mxu0 %v2178
      %2566 = vmatprep.subr.mxu0 %v2183
      %2567 = vmatpush1.msra.mxu0 %v2182
      %2568 = vmatprep.subr.mxu0 %v2187
      %2569 = vmatpush1.msra.mxu0 %v2186
      %2570 = vmatprep.subr.mxu0 %v2191
      %2571 = vmatpush1.msra.mxu0 %v2190
      %2572 = vmatprep.subr.mxu0 %v2195
      %2573 = vmatpush1.msra.mxu0 %v2194
      %2574 = vmatprep.subr.mxu0 %v2199
      %2575 = vmatpush1.msra.mxu0 %v2198
      %2576 = vmatprep.subr.mxu0 %v2203
      %2577 = vmatpush1.msra.mxu0 %v2202
      %2578 = vmatprep.subr.mxu0 %v2207
      %2579 = vmatpush1.msra.mxu0 %v2206
      %2580 = vmatprep.subr.mxu0 %v2211
      %2581 = vmatpush1.msra.mxu0 %v2210
      %2582 = vmatprep.mubr.f32.mxu0 %v1245
      %2583 = vmatmul.mubr.f32.gmra.mrb[0].mxu0 %v1244
      %v2584 = vpop.f32.mrb[0].mxu0
      %v2585 = vadd.f32 %v2371, %v2584
      %v2586 = vpop.f32.mrb[0].mxu0
      %v2587 = vadd.f32 %v2375, %v2586
      %2588 = vdwg.mxu0
      %2589 = vmatprep.subr.mxu0 %v2215
      %2590 = vmatpush1.msra.mxu0 %v2214
      %2591 = vmatprep.subr.mxu0 %v2219
      %2592 = vmatpush1.msra.mxu0 %v2218
      %2593 = vmatprep.subr.mxu0 %v2223
      %2594 = vmatpush1.msra.mxu0 %v2222
      %2595 = vmatprep.subr.mxu0 %v2227
      %2596 = vmatpush1.msra.mxu0 %v2226
      %2597 = vmatprep.subr.mxu0 %v2231
      %2598 = vmatpush1.msra.mxu0 %v2230
      %2599 = vmatprep.subr.mxu0 %v2235
      %2600 = vmatpush1.msra.mxu0 %v2234
      %2601 = vmatprep.subr.mxu0 %v2239
      %2602 = vmatpush1.msra.mxu0 %v2238
      %2603 = vmatprep.subr.mxu0 %v2243
      %2604 = vmatpush1.msra.mxu0 %v2242
      %2605 = vmatprep.subr.mxu0 %v2247
      %2606 = vmatpush1.msra.mxu0 %v2246
      %2607 = vmatprep.subr.mxu0 %v2251
      %2608 = vmatpush1.msra.mxu0 %v2250
      %2609 = vmatprep.subr.mxu0 %v2255
      %2610 = vmatpush1.msra.mxu0 %v2254
      %2611 = vmatprep.subr.mxu0 %v2259
      %2612 = vmatpush1.msra.mxu0 %v2258
      %2613 = vmatprep.subr.mxu0 %v2263
      %2614 = vmatpush1.msra.mxu0 %v2262
      %2615 = vmatprep.subr.mxu0 %v2267
      %2616 = vmatpush1.msra.mxu0 %v2266
      %2617 = vmatprep.subr.mxu0 %v2271
      %2618 = vmatpush1.msra.mxu0 %v2270
      %2619 = vmatprep.subr.mxu0 %v2275
      %2620 = vmatpush1.msra.mxu0 %v2274
      %2621 = vmatprep.subr.mxu0 %v2279
      %2622 = vmatpush1.msra.mxu0 %v2278
      %2623 = vmatprep.subr.mxu0 %v2283
      %2624 = vmatpush1.msra.mxu0 %v2282
      %2625 = vmatprep.subr.mxu0 %v2287
      %2626 = vmatpush1.msra.mxu0 %v2286
      %2627 = vmatprep.subr.mxu0 %v2291
      %2628 = vmatpush1.msra.mxu0 %v2290
      %2629 = vmatprep.subr.mxu0 %v2295
      %2630 = vmatpush1.msra.mxu0 %v2294
      %2631 = vmatprep.subr.mxu0 %v2299
      %2632 = vmatpush1.msra.mxu0 %v2298
      %2633 = vmatprep.subr.mxu0 %v2303
      %2634 = vmatpush1.msra.mxu0 %v2302
      %2635 = vmatprep.subr.mxu0 %v2307
      %2636 = vmatpush1.msra.mxu0 %v2306
      %2637 = vmatprep.subr.mxu0 %v2311
      %2638 = vmatpush1.msra.mxu0 %v2310
      %2639 = vmatprep.subr.mxu0 %v2315
      %2640 = vmatpush1.msra.mxu0 %v2314
      %2641 = vmatprep.subr.mxu0 %v2319
      %2642 = vmatpush1.msra.mxu0 %v2318
      %2643 = vmatprep.subr.mxu0 %v2323
      %2644 = vmatpush1.msra.mxu0 %v2322
      %2645 = vmatprep.subr.mxu0 %v2327
      %2646 = vmatpush1.msra.mxu0 %v2326
      %2647 = vmatprep.subr.mxu0 %v2331
      %2648 = vmatpush1.msra.mxu0 %v2330
      %2649 = vmatprep.subr.mxu0 %v2335
      %2650 = vmatpush1.msra.mxu0 %v2334
      %2651 = vmatprep.subr.mxu0 %v2339
      %2652 = vmatpush1.msra.mxu0 %v2338
      %2653 = vmatprep.mubr.f32.mxu0 %v1247
      %2654 = vmatmul.mubr.f32.gmra.mrb[0].mxu0 %v1246
      %v2655 = vpop.f32.mrb[0].mxu0
      %v2656 = vadd.f32 %v2585, %v2655
      %v2657 = vpop.f32.mrb[0].mxu0
      %v2658 = vadd.f32 %v2587, %v2657
      %2659 = vdwg.mxu0
      %v2660 = vld [vmem:[%s6] sm:$0xff]
      %v2661 = vld [vmem:[%s6 + $0x8] sm:$0xff]
      %v2662 = vld [vmem:[%s6 + $0x10] sm:$0xff]
      %v2663 = vld [vmem:[%s6 + $0x18] sm:$0xff]
      %v2664 = vld [vmem:[%s6 + $0x20] sm:$0xff]
      %v2665 = vld [vmem:[%s6 + $0x28] sm:$0xff]
      %v2666 = vld [vmem:[%s6 + $0x30] sm:$0xff]
      %v2667 = vld [vmem:[%s6 + $0x38] sm:$0xff]
      %v2668 = vld [vmem:[%s6 + $0x40] sm:$0xff]
      %v2669 = vld [vmem:[%s6 + $0x48] sm:$0xff]
      %v2670 = vld [vmem:[%s6 + $0x50] sm:$0xff]
      %v2671 = vld [vmem:[%s6 + $0x58] sm:$0xff]
      %v2672 = vld [vmem:[%s6 + $0x60] sm:$0xff]
      %v2673 = vld [vmem:[%s6 + $0x68] sm:$0xff]
      %v2674 = vld [vmem:[%s6 + $0x70] sm:$0xff]
      %v2675 = vld [vmem:[%s6 + $0x78] sm:$0xff]
      %2676 = vmatprep.subr.mxu0 0.0
      %2677 = vmatpush1.msra.mxu0 %v2660
      %2678 = vmatprep.subr.mxu0 0.0
      %2679 = vmatpush1.msra.mxu0 %v2661
      %2680 = vmatprep.subr.mxu0 0.0
      %2681 = vmatpush1.msra.mxu0 %v2662
      %2682 = vmatprep.subr.mxu0 0.0
      %2683 = vmatpush1.msra.mxu0 %v2663
      %2684 = vmatprep.subr.mxu0 0.0
      %2685 = vmatpush1.msra.mxu0 %v2664
      %2686 = vmatprep.subr.mxu0 0.0
      %2687 = vmatpush1.msra.mxu0 %v2665
      %2688 = vmatprep.subr.mxu0 0.0
      %2689 = vmatpush1.msra.mxu0 %v2666
      %2690 = vmatprep.subr.mxu0 0.0
      %2691 = vmatpush1.msra.mxu0 %v2667
      %2692 = vmatprep.subr.mxu0 0.0
      %2693 = vmatpush1.msra.mxu0 %v2668
      %2694 = vmatprep.subr.mxu0 0.0
      %2695 = vmatpush1.msra.mxu0 %v2669
      %2696 = vmatprep.subr.mxu0 0.0
      %2697 = vmatpush1.msra.mxu0 %v2670
      %2698 = vmatprep.subr.mxu0 0.0
      %2699 = vmatpush1.msra.mxu0 %v2671
      %2700 = vmatprep.subr.mxu0 0.0
      %2701 = vmatpush1.msra.mxu0 %v2672
      %2702 = vmatprep.subr.mxu0 0.0
      %2703 = vmatpush1.msra.mxu0 %v2673
      %2704 = vmatprep.subr.mxu0 0.0
      %2705 = vmatpush1.msra.mxu0 %v2674
      %2706 = vmatprep.subr.mxu0 0.0
      %2707 = vmatpush1.msra.mxu0 %v2675
      %2708 = vmatprep.subr.mxu0 0.0
      %2709 = vmatpush1.msra.mxu0 0.0
      %2710 = vmatprep.subr.mxu0 0.0
      %2711 = vmatpush1.msra.mxu0 0.0
      %2712 = vmatprep.subr.mxu0 0.0
      %2713 = vmatpush1.msra.mxu0 0.0
      %2714 = vmatprep.subr.mxu0 0.0
      %2715 = vmatpush1.msra.mxu0 0.0
      %2716 = vmatprep.subr.mxu0 0.0
      %2717 = vmatpush1.msra.mxu0 0.0
      %2718 = vmatprep.subr.mxu0 0.0
      %2719 = vmatpush1.msra.mxu0 0.0
      %2720 = vmatprep.subr.mxu0 0.0
      %2721 = vmatpush1.msra.mxu0 0.0
      %2722 = vmatprep.subr.mxu0 0.0
      %2723 = vmatpush1.msra.mxu0 0.0
      %2724 = vmatprep.subr.mxu0 0.0
      %2725 = vmatpush1.msra.mxu0 0.0
      %2726 = vmatprep.subr.mxu0 0.0
      %2727 = vmatpush1.msra.mxu0 0.0
      %2728 = vmatprep.subr.mxu0 0.0
      %2729 = vmatpush1.msra.mxu0 0.0
      %2730 = vmatprep.subr.mxu0 0.0
      %2731 = vmatpush1.msra.mxu0 0.0
      %2732 = vmatprep.subr.mxu0 0.0
      %2733 = vmatpush1.msra.mxu0 0.0
      %2734 = vmatprep.subr.mxu0 0.0
      %2735 = vmatpush1.msra.mxu0 0.0
      %2736 = vmatprep.subr.mxu0 0.0
      %2737 = vmatpush1.msra.mxu0 0.0
      %2738 = vmatprep.subr.mxu0 0.0
      %2739 = vmatpush1.msra.mxu0 0.0
      %2740 = vmatprep.mubr.f32.mxu0 0.0
      %2741 = vmatmul.mubr.f32.gmra.mrb[0].mxu0 %v1244
      %v2742 = vpop.f32.mrb[0].mxu0
      %v2743 = vadd.f32 0.0, %v2742
      %v2744 = vpop.f32.mrb[0].mxu0
      %2745 = vdwg.mxu0
      %2746 = vmatprep.subr.mxu0 0.0
      %2747 = vmatpush1.msra.mxu0 %v2660
      %2748 = vmatprep.subr.mxu0 0.0
      %2749 = vmatpush1.msra.mxu0 %v2661
      %2750 = vmatprep.subr.mxu0 0.0
      %2751 = vmatpush1.msra.mxu0 %v2662
      %2752 = vmatprep.subr.mxu0 0.0
      %2753 = vmatpush1.msra.mxu0 %v2663
      %2754 = vmatprep.subr.mxu0 0.0
      %2755 = vmatpush1.msra.mxu0 %v2664
      %2756 = vmatprep.subr.mxu0 0.0
      %2757 = vmatpush1.msra.mxu0 %v2665
      %2758 = vmatprep.subr.mxu0 0.0
      %2759 = vmatpush1.msra.mxu0 %v2666
      %2760 = vmatprep.subr.mxu0 0.0
      %2761 = vmatpush1.msra.mxu0 %v2667
      %2762 = vmatprep.subr.mxu0 0.0
      %2763 = vmatpush1.msra.mxu0 %v2668
      %2764 = vmatprep.subr.mxu0 0.0
      %2765 = vmatpush1.msra.mxu0 %v2669
      %2766 = vmatprep.subr.mxu0 0.0
      %2767 = vmatpush1.msra.mxu0 %v2670
      %2768 = vmatprep.subr.mxu0 0.0
      %2769 = vmatpush1.msra.mxu0 %v2671
      %2770 = vmatprep.subr.mxu0 0.0
      %2771 = vmatpush1.msra.mxu0 %v2672
      %2772 = vmatprep.subr.mxu0 0.0
      %2773 = vmatpush1.msra.mxu0 %v2673
      %2774 = vmatprep.subr.mxu0 0.0
      %2775 = vmatpush1.msra.mxu0 %v2674
      %2776 = vmatprep.subr.mxu0 0.0
      %2777 = vmatpush1.msra.mxu0 %v2675
      %2778 = vmatprep.subr.mxu0 0.0
      %2779 = vmatpush1.msra.mxu0 0.0
      %2780 = vmatprep.subr.mxu0 0.0
      %2781 = vmatpush1.msra.mxu0 0.0
      %2782 = vmatprep.subr.mxu0 0.0
      %2783 = vmatpush1.msra.mxu0 0.0
      %2784 = vmatprep.subr.mxu0 0.0
      %2785 = vmatpush1.msra.mxu0 0.0
      %2786 = vmatprep.subr.mxu0 0.0
      %2787 = vmatpush1.msra.mxu0 0.0
      %2788 = vmatprep.subr.mxu0 0.0
      %2789 = vmatpush1.msra.mxu0 0.0
      %2790 = vmatprep.subr.mxu0 0.0
      %2791 = vmatpush1.msra.mxu0 0.0
      %2792 = vmatprep.subr.mxu0 0.0
      %2793 = vmatpush1.msra.mxu0 0.0
      %2794 = vmatprep.subr.mxu0 0.0
      %2795 = vmatpush1.msra.mxu0 0.0
      %2796 = vmatprep.subr.mxu0 0.0
      %2797 = vmatpush1.msra.mxu0 0.0
      %2798 = vmatprep.subr.mxu0 0.0
      %2799 = vmatpush1.msra.mxu0 0.0
      %2800 = vmatprep.subr.mxu0 0.0
      %2801 = vmatpush1.msra.mxu0 0.0
      %2802 = vmatprep.subr.mxu0 0.0
      %2803 = vmatpush1.msra.mxu0 0.0
      %2804 = vmatprep.subr.mxu0 0.0
      %2805 = vmatpush1.msra.mxu0 0.0
      %2806 = vmatprep.subr.mxu0 0.0
      %2807 = vmatpush1.msra.mxu0 0.0
      %2808 = vmatprep.subr.mxu0 0.0
      %2809 = vmatpush1.msra.mxu0 0.0
      %2810 = vmatprep.mubr.f32.mxu0 0.0
      %2811 = vmatmul.mubr.f32.gmra.mrb[0].mxu0 %v1245
      %v2812 = vpop.f32.mrb[0].mxu0
      %v2813 = vadd.f32 0.0, %v2812
      %v2814 = vpop.f32.mrb[0].mxu0
      %2815 = vdwg.mxu0
      %2816 = vmatprep.subr.mxu0 0.0
      %2817 = vmatpush1.msra.mxu0 %v2660
      %2818 = vmatprep.subr.mxu0 0.0
      %2819 = vmatpush1.msra.mxu0 %v2661
      %2820 = vmatprep.subr.mxu0 0.0
      %2821 = vmatpush1.msra.mxu0 %v2662
      %2822 = vmatprep.subr.mxu0 0.0
      %2823 = vmatpush1.msra.mxu0 %v2663
      %2824 = vmatprep.subr.mxu0 0.0
      %2825 = vmatpush1.msra.mxu0 %v2664
      %2826 = vmatprep.subr.mxu0 0.0
      %2827 = vmatpush1.msra.mxu0 %v2665
      %2828 = vmatprep.subr.mxu0 0.0
      %2829 = vmatpush1.msra.mxu0 %v2666
      %2830 = vmatprep.subr.mxu0 0.0
      %2831 = vmatpush1.msra.mxu0 %v2667
      %2832 = vmatprep.subr.mxu0 0.0
      %2833 = vmatpush1.msra.mxu0 %v2668
      %2834 = vmatprep.subr.mxu0 0.0
      %2835 = vmatpush1.msra.mxu0 %v2669
      %2836 = vmatprep.subr.mxu0 0.0
      %2837 = vmatpush1.msra.mxu0 %v2670
      %2838 = vmatprep.subr.mxu0 0.0
      %2839 = vmatpush1.msra.mxu0 %v2671
      %2840 = vmatprep.subr.mxu0 0.0
      %2841 = vmatpush1.msra.mxu0 %v2672
      %2842 = vmatprep.subr.mxu0 0.0
      %2843 = vmatpush1.msra.mxu0 %v2673
      %2844 = vmatprep.subr.mxu0 0.0
      %2845 = vmatpush1.msra.mxu0 %v2674
      %2846 = vmatprep.subr.mxu0 0.0
      %2847 = vmatpush1.msra.mxu0 %v2675
      %2848 = vmatprep.subr.mxu0 0.0
      %2849 = vmatpush1.msra.mxu0 0.0
      %2850 = vmatprep.subr.mxu0 0.0
      %2851 = vmatpush1.msra.mxu0 0.0
      %2852 = vmatprep.subr.mxu0 0.0
      %2853 = vmatpush1.msra.mxu0 0.0
      %2854 = vmatprep.subr.mxu0 0.0
      %2855 = vmatpush1.msra.mxu0 0.0
      %2856 = vmatprep.subr.mxu0 0.0
      %2857 = vmatpush1.msra.mxu0 0.0
      %2858 = vmatprep.subr.mxu0 0.0
      %2859 = vmatpush1.msra.mxu0 0.0
      %2860 = vmatprep.subr.mxu0 0.0
      %2861 = vmatpush1.msra.mxu0 0.0
      %2862 = vmatprep.subr.mxu0 0.0
      %2863 = vmatpush1.msra.mxu0 0.0
      %2864 = vmatprep.subr.mxu0 0.0
      %2865 = vmatpush1.msra.mxu0 0.0
      %2866 = vmatprep.subr.mxu0 0.0
      %2867 = vmatpush1.msra.mxu0 0.0
      %2868 = vmatprep.subr.mxu0 0.0
      %2869 = vmatpush1.msra.mxu0 0.0
      %2870 = vmatprep.subr.mxu0 0.0
      %2871 = vmatpush1.msra.mxu0 0.0
      %2872 = vmatprep.subr.mxu0 0.0
      %2873 = vmatpush1.msra.mxu0 0.0
      %2874 = vmatprep.subr.mxu0 0.0
      %2875 = vmatpush1.msra.mxu0 0.0
      %2876 = vmatprep.subr.mxu0 0.0
      %2877 = vmatpush1.msra.mxu0 0.0
      %2878 = vmatprep.subr.mxu0 0.0
      %2879 = vmatpush1.msra.mxu0 0.0
      %2880 = vmatprep.mubr.f32.mxu0 0.0
      %2881 = vmatmul.mubr.f32.gmra.mrb[0].mxu0 %v1246
      %v2882 = vpop.f32.mrb[0].mxu0
      %v2883 = vadd.f32 0.0, %v2882
      %v2884 = vpop.f32.mrb[0].mxu0
      %2885 = vdwg.mxu0
      %2886 = vmatprep.subr.mxu0 0.0
      %2887 = vmatpush1.msra.mxu0 %v2660
      %2888 = vmatprep.subr.mxu0 0.0
      %2889 = vmatpush1.msra.mxu0 %v2661
      %2890 = vmatprep.subr.mxu0 0.0
      %2891 = vmatpush1.msra.mxu0 %v2662
      %2892 = vmatprep.subr.mxu0 0.0
      %2893 = vmatpush1.msra.mxu0 %v2663
      %2894 = vmatprep.subr.mxu0 0.0
      %2895 = vmatpush1.msra.mxu0 %v2664
      %2896 = vmatprep.subr.mxu0 0.0
      %2897 = vmatpush1.msra.mxu0 %v2665
      %2898 = vmatprep.subr.mxu0 0.0
      %2899 = vmatpush1.msra.mxu0 %v2666
      %2900 = vmatprep.subr.mxu0 0.0
      %2901 = vmatpush1.msra.mxu0 %v2667
      %2902 = vmatprep.subr.mxu0 0.0
      %2903 = vmatpush1.msra.mxu0 %v2668
      %2904 = vmatprep.subr.mxu0 0.0
      %2905 = vmatpush1.msra.mxu0 %v2669
      %2906 = vmatprep.subr.mxu0 0.0
      %2907 = vmatpush1.msra.mxu0 %v2670
      %2908 = vmatprep.subr.mxu0 0.0
      %2909 = vmatpush1.msra.mxu0 %v2671
      %2910 = vmatprep.subr.mxu0 0.0
      %2911 = vmatpush1.msra.mxu0 %v2672
      %2912 = vmatprep.subr.mxu0 0.0
      %2913 = vmatpush1.msra.mxu0 %v2673
      %2914 = vmatprep.subr.mxu0 0.0
      %2915 = vmatpush1.msra.mxu0 %v2674
      %2916 = vmatprep.subr.mxu0 0.0
      %2917 = vmatpush1.msra.mxu0 %v2675
      %2918 = vmatprep.subr.mxu0 0.0
      %2919 = vmatpush1.msra.mxu0 0.0
      %2920 = vmatprep.subr.mxu0 0.0
      %2921 = vmatpush1.msra.mxu0 0.0
      %2922 = vmatprep.subr.mxu0 0.0
      %2923 = vmatpush1.msra.mxu0 0.0
      %2924 = vmatprep.subr.mxu0 0.0
      %2925 = vmatpush1.msra.mxu0 0.0
      %2926 = vmatprep.subr.mxu0 0.0
      %2927 = vmatpush1.msra.mxu0 0.0
      %2928 = vmatprep.subr.mxu0 0.0
      %2929 = vmatpush1.msra.mxu0 0.0
      %2930 = vmatprep.subr.mxu0 0.0
      %2931 = vmatpush1.msra.mxu0 0.0
      %2932 = vmatprep.subr.mxu0 0.0
      %2933 = vmatpush1.msra.mxu0 0.0
      %2934 = vmatprep.subr.mxu0 0.0
      %2935 = vmatpush1.msra.mxu0 0.0
      %2936 = vmatprep.subr.mxu0 0.0
      %2937 = vmatpush1.msra.mxu0 0.0
      %2938 = vmatprep.subr.mxu0 0.0
      %2939 = vmatpush1.msra.mxu0 0.0
      %2940 = vmatprep.subr.mxu0 0.0
      %2941 = vmatpush1.msra.mxu0 0.0
      %2942 = vmatprep.subr.mxu0 0.0
      %2943 = vmatpush1.msra.mxu0 0.0
      %2944 = vmatprep.subr.mxu0 0.0
      %2945 = vmatpush1.msra.mxu0 0.0
      %2946 = vmatprep.subr.mxu0 0.0
      %2947 = vmatpush1.msra.mxu0 0.0
      %2948 = vmatprep.subr.mxu0 0.0
      %2949 = vmatpush1.msra.mxu0 0.0
      %2950 = vmatprep.mubr.f32.mxu0 0.0
      %2951 = vmatmul.mubr.f32.gmra.mrb[0].mxu0 %v1247
      %v2952 = vpop.f32.mrb[0].mxu0
      %v2953 = vadd.f32 0.0, %v2952
      %v2954 = vpop.f32.mrb[0].mxu0
      %2955 = vdwg.mxu0
      %v2956 = vlaneseq
      %v2957 = vshrl.u32 %v2956, 7
      %v2958 = vsub.s32 2, %v2957
      %v2959 = vrot.slane %v1248, %v2958
      %v2960 = vlaneseq
      %v2961 = vshrl.u32 %v2960, 7
      %v2962 = vsub.s32 6, %v2961
      %v2963 = vrot.slane %v1248, %v2962
      %v2964 = vlaneseq
      %v2965 = vshrl.u32 %v2964, 7
      %v2966 = vsub.s32 2, %v2965
      %v2967 = vrot.slane %v1249, %v2966
      %v2968 = vlaneseq
      %v2969 = vshrl.u32 %v2968, 7
      %v2970 = vsub.s32 6, %v2969
      %v2971 = vrot.slane %v1249, %v2970
      %v2976 = vlaneseq
      %v2977 = vshrl.u32 %v2976, 7
      %v2978 = vsub.s32 2, %v2977
      %v2979 = vrot.slane %v2959, %v2978
      %v2980 = vlaneseq
      %v2981 = vshrl.u32 %v2980, 7
      %v2982 = vsub.s32 2, %v2981
      %v2983 = vrot.slane %v2963, %v2982
      %v2984 = vlaneseq
      %v2985 = vshrl.u32 %v2984, 7
      %v2986 = vsub.s32 2, %v2985
      %v2987 = vrot.slane %v2967, %v2986
      %v2988 = vlaneseq
      %v2989 = vshrl.u32 %v2988, 7
      %v2990 = vsub.s32 2, %v2989
      %v2991 = vrot.slane %v2971, %v2990
      %v2992 = vadd.f32 %v2743, %v2979
      %v2993 = vadd.f32 %v2813, %v2983
      %v2994 = vadd.f32 %v2883, %v2987
      %v2995 = vadd.f32 %v2953, %v2991
      %v2996 = vadd.f32 %v1810, %v2514
      %v2997 = vadd.f32 %v1812, %v2516
      %v2998 = vadd.f32 %v1952, %v2656
      %v2999 = vadd.f32 %v1954, %v2658
      %v3000 = vadd.f32 %v2996, %v2992
      %v3001 = vadd.f32 %v2997, %v2993
      %v3002 = vadd.f32 %v2998, %v2994
      %v3003 = vadd.f32 %v2999, %v2995
      %v3004 = vld [vmem:[%s8] sm:$0xff]
      %vm3005 = vcmask 64512
      %v3007 = vsel %vm3005, %v3004, 0
      %3009 = vmatprep.subr.mxu0 %v3001
      %3010 = vmatpush1.msra.mxu0 %v3000
      %3011 = vmatprep.subr.mxu0 0.0
      %3012 = vmatpush1.msra.mxu0 0.0
      %3013 = vmatprep.subr.mxu0 0.0
      %3014 = vmatpush1.msra.mxu0 0.0
      %3015 = vmatprep.subr.mxu0 0.0
      %3016 = vmatpush1.msra.mxu0 0.0
      %3017 = vmatprep.subr.mxu0 0.0
      %3018 = vmatpush1.msra.mxu0 0.0
      %3019 = vmatprep.subr.mxu0 0.0
      %3020 = vmatpush1.msra.mxu0 0.0
      %3021 = vmatprep.subr.mxu0 0.0
      %3022 = vmatpush1.msra.mxu0 0.0
      %3023 = vmatprep.subr.mxu0 0.0
      %3024 = vmatpush1.msra.mxu0 0.0
      %3025 = vmatprep.subr.mxu0 0.0
      %3026 = vmatpush1.msra.mxu0 0.0
      %3027 = vmatprep.subr.mxu0 0.0
      %3028 = vmatpush1.msra.mxu0 0.0
      %3029 = vmatprep.subr.mxu0 0.0
      %3030 = vmatpush1.msra.mxu0 0.0
      %3031 = vmatprep.subr.mxu0 0.0
      %3032 = vmatpush1.msra.mxu0 0.0
      %3033 = vmatprep.subr.mxu0 0.0
      %3034 = vmatpush1.msra.mxu0 0.0
      %3035 = vmatprep.subr.mxu0 0.0
      %3036 = vmatpush1.msra.mxu0 0.0
      %3037 = vmatprep.subr.mxu0 0.0
      %3038 = vmatpush1.msra.mxu0 0.0
      %3039 = vmatprep.subr.mxu0 0.0
      %3040 = vmatpush1.msra.mxu0 0.0
      %3041 = vmatprep.subr.mxu0 0.0
      %3042 = vmatpush1.msra.mxu0 0.0
      %3043 = vmatprep.subr.mxu0 0.0
      %3044 = vmatpush1.msra.mxu0 0.0
      %3045 = vmatprep.subr.mxu0 0.0
      %3046 = vmatpush1.msra.mxu0 0.0
      %3047 = vmatprep.subr.mxu0 0.0
      %3048 = vmatpush1.msra.mxu0 0.0
      %3049 = vmatprep.subr.mxu0 0.0
      %3050 = vmatpush1.msra.mxu0 0.0
      %3051 = vmatprep.subr.mxu0 0.0
      %3052 = vmatpush1.msra.mxu0 0.0
      %3053 = vmatprep.subr.mxu0 0.0
      %3054 = vmatpush1.msra.mxu0 0.0
      %3055 = vmatprep.subr.mxu0 0.0
      %3056 = vmatpush1.msra.mxu0 0.0
      %3057 = vmatprep.subr.mxu0 0.0
      %3058 = vmatpush1.msra.mxu0 0.0
      %3059 = vmatprep.subr.mxu0 0.0
      %3060 = vmatpush1.msra.mxu0 0.0
      %3061 = vmatprep.subr.mxu0 0.0
      %3062 = vmatpush1.msra.mxu0 0.0
      %3063 = vmatprep.subr.mxu0 0.0
      %3064 = vmatpush1.msra.mxu0 0.0
      %3065 = vmatprep.subr.mxu0 0.0
      %3066 = vmatpush1.msra.mxu0 0.0
      %3067 = vmatprep.subr.mxu0 0.0
      %3068 = vmatpush1.msra.mxu0 0.0
      %3069 = vmatprep.subr.mxu0 0.0
      %3070 = vmatpush1.msra.mxu0 0.0
      %3071 = vmatprep.subr.mxu0 0.0
      %3072 = vmatpush1.msra.mxu0 0.0
      %3073 = vmatprep.mubr.f32.mxu0 0.0
      %3074 = vmatmul.mubr.f32.gmra.mrb[0].mxu0 %v3007
      %v3075 = vpop.f32.mrb[0].mxu0
      %v3076 = vadd.f32 0.0, %v3075
      %v3077 = vpop.f32.mrb[0].mxu0
      %v3078 = vadd.f32 0.0, %v3077
      %3079 = vdwg.mxu0
      %3080 = vmatprep.subr.mxu0 %v3003
      %3081 = vmatpush1.msra.mxu0 %v3002
      %3082 = vmatprep.subr.mxu0 0.0
      %3083 = vmatpush1.msra.mxu0 0.0
      %3084 = vmatprep.subr.mxu0 0.0
      %3085 = vmatpush1.msra.mxu0 0.0
      %3086 = vmatprep.subr.mxu0 0.0
      %3087 = vmatpush1.msra.mxu0 0.0
      %3088 = vmatprep.subr.mxu0 0.0
      %3089 = vmatpush1.msra.mxu0 0.0
      %3090 = vmatprep.subr.mxu0 0.0
      %3091 = vmatpush1.msra.mxu0 0.0
      %3092 = vmatprep.subr.mxu0 0.0
      %3093 = vmatpush1.msra.mxu0 0.0
      %3094 = vmatprep.subr.mxu0 0.0
      %3095 = vmatpush1.msra.mxu0 0.0
      %3096 = vmatprep.subr.mxu0 0.0
      %3097 = vmatpush1.msra.mxu0 0.0
      %3098 = vmatprep.subr.mxu0 0.0
      %3099 = vmatpush1.msra.mxu0 0.0
      %3100 = vmatprep.subr.mxu0 0.0
      %3101 = vmatpush1.msra.mxu0 0.0
      %3102 = vmatprep.subr.mxu0 0.0
      %3103 = vmatpush1.msra.mxu0 0.0
      %3104 = vmatprep.subr.mxu0 0.0
      %3105 = vmatpush1.msra.mxu0 0.0
      %3106 = vmatprep.subr.mxu0 0.0
      %3107 = vmatpush1.msra.mxu0 0.0
      %3108 = vmatprep.subr.mxu0 0.0
      %3109 = vmatpush1.msra.mxu0 0.0
      %3110 = vmatprep.subr.mxu0 0.0
      %3111 = vmatpush1.msra.mxu0 0.0
      %3112 = vmatprep.subr.mxu0 0.0
      %3113 = vmatpush1.msra.mxu0 0.0
      %3114 = vmatprep.subr.mxu0 0.0
      %3115 = vmatpush1.msra.mxu0 0.0
      %3116 = vmatprep.subr.mxu0 0.0
      %3117 = vmatpush1.msra.mxu0 0.0
      %3118 = vmatprep.subr.mxu0 0.0
      %3119 = vmatpush1.msra.mxu0 0.0
      %3120 = vmatprep.subr.mxu0 0.0
      %3121 = vmatpush1.msra.mxu0 0.0
      %3122 = vmatprep.subr.mxu0 0.0
      %3123 = vmatpush1.msra.mxu0 0.0
      %3124 = vmatprep.subr.mxu0 0.0
      %3125 = vmatpush1.msra.mxu0 0.0
      %3126 = vmatprep.subr.mxu0 0.0
      %3127 = vmatpush1.msra.mxu0 0.0
      %3128 = vmatprep.subr.mxu0 0.0
      %3129 = vmatpush1.msra.mxu0 0.0
      %3130 = vmatprep.subr.mxu0 0.0
      %3131 = vmatpush1.msra.mxu0 0.0
      %3132 = vmatprep.subr.mxu0 0.0
      %3133 = vmatpush1.msra.mxu0 0.0
      %3134 = vmatprep.subr.mxu0 0.0
      %3135 = vmatpush1.msra.mxu0 0.0
      %3136 = vmatprep.subr.mxu0 0.0
      %3137 = vmatpush1.msra.mxu0 0.0
      %3138 = vmatprep.subr.mxu0 0.0
      %3139 = vmatpush1.msra.mxu0 0.0
      %3140 = vmatprep.subr.mxu0 0.0
      %3141 = vmatpush1.msra.mxu0 0.0
      %3142 = vmatprep.subr.mxu0 0.0
      %3143 = vmatpush1.msra.mxu0 0.0
      %3144 = vmatprep.mubr.f32.mxu0 0.0
      %3145 = vmatmul.mubr.f32.gmra.mrb[0].mxu0 %v3007
      %v3146 = vpop.f32.mrb[0].mxu0
      %v3147 = vadd.f32 0.0, %v3146
      %v3148 = vpop.f32.mrb[0].mxu0
      %v3149 = vadd.f32 0.0, %v3148
      %3150 = vdwg.mxu0
      %v3151 = vld [vmem:[%s9] sm:$0xff]
      %v3152 = vld [vmem:[%s9 + $0x8] sm:$0xff]
      %v3153 = vld [vmem:[%s9 + $0x10] sm:$0xff]
      %v3154 = vld [vmem:[%s9 + $0x18] sm:$0xff]
      %v3155 = vld [vmem:[%s9 + $0x20] sm:$0xff]
      %v3156 = vld [vmem:[%s9 + $0x28] sm:$0xff]
      %v3157 = vld [vmem:[%s9 + $0x30] sm:$0xff]
      %v3158 = vld [vmem:[%s9 + $0x38] sm:$0xff]
      %v3159 = vld [vmem:[%s9 + $0x40] sm:$0xff]
      %v3160 = vld [vmem:[%s9 + $0x48] sm:$0xff]
      %v3161 = vld [vmem:[%s9 + $0x50] sm:$0xff]
      %v3162 = vld [vmem:[%s9 + $0x58] sm:$0xff]
      %v3163 = vld [vmem:[%s9 + $0x60] sm:$0xff]
      %v3164 = vld [vmem:[%s9 + $0x68] sm:$0xff]
      %v3165 = vld [vmem:[%s9 + $0x70] sm:$0xff]
      %v3166 = vld [vmem:[%s9 + $0x78] sm:$0xff]
      %v3167 = vld [vmem:[%s9 + $0x80] sm:$0xff]
      %v3168 = vld [vmem:[%s9 + $0x88] sm:$0xff]
      %v3169 = vld [vmem:[%s9 + $0x90] sm:$0xff]
      %v3170 = vld [vmem:[%s9 + $0x98] sm:$0xff]
      %v3171 = vld [vmem:[%s9 + $0xa0] sm:$0xff]
      %v3172 = vld [vmem:[%s9 + $0xa8] sm:$0xff]
      %v3173 = vld [vmem:[%s9 + $0xb0] sm:$0xff]
      %v3174 = vld [vmem:[%s9 + $0xb8] sm:$0xff]
      %v3175 = vld [vmem:[%s9 + $0xc0] sm:$0xff]
      %v3176 = vld [vmem:[%s9 + $0xc8] sm:$0xff]
      %v3177 = vld [vmem:[%s9 + $0xd0] sm:$0xff]
      %v3178 = vld [vmem:[%s9 + $0xd8] sm:$0xff]
      %v3179 = vld [vmem:[%s9 + $0xe0] sm:$0xff]
      %v3180 = vld [vmem:[%s9 + $0xe8] sm:$0xff]
      %v3181 = vld [vmem:[%s9 + $0xf0] sm:$0xff]
      %v3182 = vld [vmem:[%s9 + $0xf8] sm:$0xff]
      %v3183 = vld [vmem:[%s9 + $0x100] sm:$0xff]
      %v3184 = vld [vmem:[%s9 + $0x108] sm:$0xff]
      %v3185 = vld [vmem:[%s9 + $0x110] sm:$0xff]
      %v3186 = vld [vmem:[%s9 + $0x118] sm:$0xff]
      %v3187 = vld [vmem:[%s9 + $0x120] sm:$0xff]
      %v3188 = vld [vmem:[%s9 + $0x128] sm:$0xff]
      %v3189 = vld [vmem:[%s9 + $0x130] sm:$0xff]
      %v3190 = vld [vmem:[%s9 + $0x138] sm:$0xff]
      %v3191 = vld [vmem:[%s9 + $0x140] sm:$0xff]
      %v3192 = vld [vmem:[%s9 + $0x148] sm:$0xff]
      %v3193 = vld [vmem:[%s9 + $0x150] sm:$0xff]
      %v3194 = vld [vmem:[%s9 + $0x158] sm:$0xff]
      %v3195 = vld [vmem:[%s9 + $0x160] sm:$0xff]
      %v3196 = vld [vmem:[%s9 + $0x168] sm:$0xff]
      %v3197 = vld [vmem:[%s9 + $0x170] sm:$0xff]
      %v3198 = vld [vmem:[%s9 + $0x178] sm:$0xff]
      %v3199 = vld [vmem:[%s9 + $0x180] sm:$0xff]
      %v3200 = vld [vmem:[%s9 + $0x188] sm:$0xff]
      %v3201 = vld [vmem:[%s9 + $0x190] sm:$0xff]
      %v3202 = vld [vmem:[%s9 + $0x198] sm:$0xff]
      %v3203 = vld [vmem:[%s9 + $0x1a0] sm:$0xff]
      %v3204 = vld [vmem:[%s9 + $0x1a8] sm:$0xff]
      %v3205 = vld [vmem:[%s9 + $0x1b0] sm:$0xff]
      %v3206 = vld [vmem:[%s9 + $0x1b8] sm:$0xff]
      %v3207 = vld [vmem:[%s9 + $0x1c0] sm:$0xff]
      %v3208 = vld [vmem:[%s9 + $0x1c8] sm:$0xff]
      %v3209 = vld [vmem:[%s9 + $0x1d0] sm:$0xff]
      %v3210 = vld [vmem:[%s9 + $0x1d8] sm:$0xff]
      %v3211 = vld [vmem:[%s9 + $0x1e0] sm:$0xff]
      %v3212 = vld [vmem:[%s9 + $0x1e8] sm:$0xff]
      %v3213 = vld [vmem:[%s9 + $0x1f0] sm:$0xff]
      %v3214 = vld [vmem:[%s9 + $0x1f8] sm:$0xff]
      %3215 = vmatprep.subr.mxu0 0.0
      %3216 = vmatpush1.msra.mxu0 %v3151
      %3217 = vmatprep.subr.mxu0 0.0
      %3218 = vmatpush1.msra.mxu0 %v3152
      %3219 = vmatprep.subr.mxu0 0.0
      %3220 = vmatpush1.msra.mxu0 %v3153
      %3221 = vmatprep.subr.mxu0 0.0
      %3222 = vmatpush1.msra.mxu0 %v3154
      %3223 = vmatprep.subr.mxu0 0.0
      %3224 = vmatpush1.msra.mxu0 %v3155
      %3225 = vmatprep.subr.mxu0 0.0
      %3226 = vmatpush1.msra.mxu0 %v3156
      %3227 = vmatprep.subr.mxu0 0.0
      %3228 = vmatpush1.msra.mxu0 %v3157
      %3229 = vmatprep.subr.mxu0 0.0
      %3230 = vmatpush1.msra.mxu0 %v3158
      %3231 = vmatprep.subr.mxu0 0.0
      %3232 = vmatpush1.msra.mxu0 %v3159
      %3233 = vmatprep.subr.mxu0 0.0
      %3234 = vmatpush1.msra.mxu0 %v3160
      %3235 = vmatprep.subr.mxu0 0.0
      %3236 = vmatpush1.msra.mxu0 %v3161
      %3237 = vmatprep.subr.mxu0 0.0
      %3238 = vmatpush1.msra.mxu0 %v3162
      %3239 = vmatprep.subr.mxu0 0.0
      %3240 = vmatpush1.msra.mxu0 %v3163
      %3241 = vmatprep.subr.mxu0 0.0
      %3242 = vmatpush1.msra.mxu0 %v3164
      %3243 = vmatprep.subr.mxu0 0.0
      %3244 = vmatpush1.msra.mxu0 %v3165
      %3245 = vmatprep.subr.mxu0 0.0
      %3246 = vmatpush1.msra.mxu0 %v3166
      %3247 = vmatprep.subr.mxu0 0.0
      %3248 = vmatpush1.msra.mxu0 %v3167
      %3249 = vmatprep.subr.mxu0 0.0
      %3250 = vmatpush1.msra.mxu0 %v3168
      %3251 = vmatprep.subr.mxu0 0.0
      %3252 = vmatpush1.msra.mxu0 %v3169
      %3253 = vmatprep.subr.mxu0 0.0
      %3254 = vmatpush1.msra.mxu0 %v3170
      %3255 = vmatprep.subr.mxu0 0.0
      %3256 = vmatpush1.msra.mxu0 %v3171
      %3257 = vmatprep.subr.mxu0 0.0
      %3258 = vmatpush1.msra.mxu0 %v3172
      %3259 = vmatprep.subr.mxu0 0.0
      %3260 = vmatpush1.msra.mxu0 %v3173
      %3261 = vmatprep.subr.mxu0 0.0
      %3262 = vmatpush1.msra.mxu0 %v3174
      %3263 = vmatprep.subr.mxu0 0.0
      %3264 = vmatpush1.msra.mxu0 %v3175
      %3265 = vmatprep.subr.mxu0 0.0
      %3266 = vmatpush1.msra.mxu0 %v3176
      %3267 = vmatprep.subr.mxu0 0.0
      %3268 = vmatpush1.msra.mxu0 %v3177
      %3269 = vmatprep.subr.mxu0 0.0
      %3270 = vmatpush1.msra.mxu0 %v3178
      %3271 = vmatprep.subr.mxu0 0.0
      %3272 = vmatpush1.msra.mxu0 %v3179
      %3273 = vmatprep.subr.mxu0 0.0
      %3274 = vmatpush1.msra.mxu0 %v3180
      %3275 = vmatprep.subr.mxu0 0.0
      %3276 = vmatpush1.msra.mxu0 %v3181
      %3277 = vmatprep.subr.mxu0 0.0
      %3278 = vmatpush1.msra.mxu0 %v3182
      %3279 = vmatprep.mubr.f32.mxu0 %v3078
      %3280 = vmatmul.mubr.f32.gmra.mrb[0].mxu0 %v3076
      %v3281 = vpop.f32.mrb[0].mxu0
      %v3282 = vadd.f32 0.0, %v3281
      %v3283 = vpop.f32.mrb[0].mxu0
      %3284 = vdwg.mxu0
      %3285 = vmatprep.subr.mxu0 0.0
      %3286 = vmatpush1.msra.mxu0 %v3183
      %3287 = vmatprep.subr.mxu0 0.0
      %3288 = vmatpush1.msra.mxu0 %v3184
      %3289 = vmatprep.subr.mxu0 0.0
      %3290 = vmatpush1.msra.mxu0 %v3185
      %3291 = vmatprep.subr.mxu0 0.0
      %3292 = vmatpush1.msra.mxu0 %v3186
      %3293 = vmatprep.subr.mxu0 0.0
      %3294 = vmatpush1.msra.mxu0 %v3187
      %3295 = vmatprep.subr.mxu0 0.0
      %3296 = vmatpush1.msra.mxu0 %v3188
      %3297 = vmatprep.subr.mxu0 0.0
      %3298 = vmatpush1.msra.mxu0 %v3189
      %3299 = vmatprep.subr.mxu0 0.0
      %3300 = vmatpush1.msra.mxu0 %v3190
      %3301 = vmatprep.subr.mxu0 0.0
      %3302 = vmatpush1.msra.mxu0 %v3191
      %3303 = vmatprep.subr.mxu0 0.0
      %3304 = vmatpush1.msra.mxu0 %v3192
      %3305 = vmatprep.subr.mxu0 0.0
      %3306 = vmatpush1.msra.mxu0 %v3193
      %3307 = vmatprep.subr.mxu0 0.0
      %3308 = vmatpush1.msra.mxu0 %v3194
      %3309 = vmatprep.subr.mxu0 0.0
      %3310 = vmatpush1.msra.mxu0 %v3195
      %3311 = vmatprep.subr.mxu0 0.0
      %3312 = vmatpush1.msra.mxu0 %v3196
      %3313 = vmatprep.subr.mxu0 0.0
      %3314 = vmatpush1.msra.mxu0 %v3197
      %3315 = vmatprep.subr.mxu0 0.0
      %3316 = vmatpush1.msra.mxu0 %v3198
      %3317 = vmatprep.subr.mxu0 0.0
      %3318 = vmatpush1.msra.mxu0 %v3199
      %3319 = vmatprep.subr.mxu0 0.0
      %3320 = vmatpush1.msra.mxu0 %v3200
      %3321 = vmatprep.subr.mxu0 0.0
      %3322 = vmatpush1.msra.mxu0 %v3201
      %3323 = vmatprep.subr.mxu0 0.0
      %3324 = vmatpush1.msra.mxu0 %v3202
      %3325 = vmatprep.subr.mxu0 0.0
      %3326 = vmatpush1.msra.mxu0 %v3203
      %3327 = vmatprep.subr.mxu0 0.0
      %3328 = vmatpush1.msra.mxu0 %v3204
      %3329 = vmatprep.subr.mxu0 0.0
      %3330 = vmatpush1.msra.mxu0 %v3205
      %3331 = vmatprep.subr.mxu0 0.0
      %3332 = vmatpush1.msra.mxu0 %v3206
      %3333 = vmatprep.subr.mxu0 0.0
      %3334 = vmatpush1.msra.mxu0 %v3207
      %3335 = vmatprep.subr.mxu0 0.0
      %3336 = vmatpush1.msra.mxu0 %v3208
      %3337 = vmatprep.subr.mxu0 0.0
      %3338 = vmatpush1.msra.mxu0 %v3209
      %3339 = vmatprep.subr.mxu0 0.0
      %3340 = vmatpush1.msra.mxu0 %v3210
      %3341 = vmatprep.subr.mxu0 0.0
      %3342 = vmatpush1.msra.mxu0 %v3211
      %3343 = vmatprep.subr.mxu0 0.0
      %3344 = vmatpush1.msra.mxu0 %v3212
      %3345 = vmatprep.subr.mxu0 0.0
      %3346 = vmatpush1.msra.mxu0 %v3213
      %3347 = vmatprep.subr.mxu0 0.0
      %3348 = vmatpush1.msra.mxu0 %v3214
      %3349 = vmatprep.mubr.f32.mxu0 %v3149
      %3350 = vmatmul.mubr.f32.gmra.mrb[0].mxu0 %v3147
      %v3351 = vpop.f32.mrb[0].mxu0
      %v3352 = vadd.f32 %v3282, %v3351
      %v3353 = vpop.f32.mrb[0].mxu0
      %3354 = vdwg.mxu0
      %v3355 = vld [vmem:[%s10] sm:$0xff]
      %v3356 = vld [vmem:[%s10 + $0x8] sm:$0xff]
      %v3357 = vld [vmem:[%s10 + $0x10] sm:$0xff]
      %v3358 = vld [vmem:[%s10 + $0x18] sm:$0xff]
      %v3359 = vld [vmem:[%s11] sm:$0x1]
      %v3361 = vlaneseq
      %v3362 = vshrl.u32 %v3361, 7
      %v3363 = vsub.s32 0, %v3362
      %v3364 = vrot.slane %v3359, %v3363
      %vm3366 = vcmask 261120
      %v3368 = vsel %vm3366, %v3352, 0
      %3370 = vmatprep.subr.mxu0 0.0
      %3371 = vmatpush1.msra.mxu0 %v3355
      %3372 = vmatprep.subr.mxu0 0.0
      %3373 = vmatpush1.msra.mxu0 %v3356
      %3374 = vmatprep.subr.mxu0 0.0
      %3375 = vmatpush1.msra.mxu0 %v3357
      %3376 = vmatprep.subr.mxu0 0.0
      %3377 = vmatpush1.msra.mxu0 %v3358
      %3378 = vmatprep.subr.mxu0 0.0
      %3379 = vmatpush1.msra.mxu0 0.0
      %3380 = vmatprep.subr.mxu0 0.0
      %3381 = vmatpush1.msra.mxu0 0.0
      %3382 = vmatprep.subr.mxu0 0.0
      %3383 = vmatpush1.msra.mxu0 0.0
      %3384 = vmatprep.subr.mxu0 0.0
      %3385 = vmatpush1.msra.mxu0 0.0
      %3386 = vmatprep.subr.mxu0 0.0
      %3387 = vmatpush1.msra.mxu0 0.0
      %3388 = vmatprep.subr.mxu0 0.0
      %3389 = vmatpush1.msra.mxu0 0.0
      %3390 = vmatprep.subr.mxu0 0.0
      %3391 = vmatpush1.msra.mxu0 0.0
      %3392 = vmatprep.subr.mxu0 0.0
      %3393 = vmatpush1.msra.mxu0 0.0
      %3394 = vmatprep.subr.mxu0 0.0
      %3395 = vmatpush1.msra.mxu0 0.0
      %3396 = vmatprep.subr.mxu0 0.0
      %3397 = vmatpush1.msra.mxu0 0.0
      %3398 = vmatprep.subr.mxu0 0.0
      %3399 = vmatpush1.msra.mxu0 0.0
      %3400 = vmatprep.subr.mxu0 0.0
      %3401 = vmatpush1.msra.mxu0 0.0
      %3402 = vmatprep.subr.mxu0 0.0
      %3403 = vmatpush1.msra.mxu0 0.0
      %3404 = vmatprep.subr.mxu0 0.0
      %3405 = vmatpush1.msra.mxu0 0.0
      %3406 = vmatprep.subr.mxu0 0.0
      %3407 = vmatpush1.msra.mxu0 0.0
      %3408 = vmatprep.subr.mxu0 0.0
      %3409 = vmatpush1.msra.mxu0 0.0
      %3410 = vmatprep.subr.mxu0 0.0
      %3411 = vmatpush1.msra.mxu0 0.0
      %3412 = vmatprep.subr.mxu0 0.0
      %3413 = vmatpush1.msra.mxu0 0.0
      %3414 = vmatprep.subr.mxu0 0.0
      %3415 = vmatpush1.msra.mxu0 0.0
      %3416 = vmatprep.subr.mxu0 0.0
      %3417 = vmatpush1.msra.mxu0 0.0
      %3418 = vmatprep.subr.mxu0 0.0
      %3419 = vmatpush1.msra.mxu0 0.0
      %3420 = vmatprep.subr.mxu0 0.0
      %3421 = vmatpush1.msra.mxu0 0.0
      %3422 = vmatprep.subr.mxu0 0.0
      %3423 = vmatpush1.msra.mxu0 0.0
      %3424 = vmatprep.subr.mxu0 0.0
      %3425 = vmatpush1.msra.mxu0 0.0
      %3426 = vmatprep.subr.mxu0 0.0
      %3427 = vmatpush1.msra.mxu0 0.0
      %3428 = vmatprep.subr.mxu0 0.0
      %3429 = vmatpush1.msra.mxu0 0.0
      %3430 = vmatprep.subr.mxu0 0.0
      %3431 = vmatpush1.msra.mxu0 0.0
      %3432 = vmatprep.subr.mxu0 0.0
      %3433 = vmatpush1.msra.mxu0 0.0
      %3434 = vmatprep.mubr.f32.mxu0 0.0
      %3435 = vmatmul.mubr.f32.gmra.mrb[0].mxu0 %v3368
      %v3436 = vpop.f32.mrb[0].mxu0
      %v3437 = vadd.f32 %v3364, %v3436
      %v3438 = vpop.f32.mrb[0].mxu0
      %3439 = vdwg.mxu0
      %v3440 = vmul.f32 %v3437, 0.5
      %v3441 = vmul.f32 %v3437, 0.70710677
      %vm3442 = vcmp.ge.f32.partialorder %v3441, 0.0
      %v3443 = vsel %vm3442, 1.0, -1.0
      %v3444 = vmul.f32 %v3441, %v3443
      %v3445 = vmul.f32 %v3444, 0.3275911
      %v3446 = vadd.f32 %v3445, 1.0
      %v3447 = vrcp.pop %v3446
      %v3448 = vmul.f32 %v3447, 1.0614054
      %v3449 = vadd.f32 %v3448, -1.4531521
      %v3450 = vmul.f32 %v3449, %v3447
      %v3451 = vadd.f32 %v3450, 1.4214138
      %v3452 = vmul.f32 %v3451, %v3447
      %v3453 = vadd.f32 %v3452, -0.28449672
      %v3454 = vmul.f32 %v3453, %v3447
      %v3455 = vadd.f32 %v3454, 0.2548296
      %v3456 = vmul.f32 %v3455, %v3447
      %v3457 = vsub.f32 0.0, %v3444
      %v3458 = vmul.f32 %v3457, %v3444
      %v3459 = vmul.f32 %v3458, 1.442695
      %v3460 = vpow.pop %v3459
      %v3461 = vmul.f32 %v3456, %v3460
      %v3462 = vsub.f32 1.0, %v3461
      %v3463 = vmul.f32 %v3443, %v3462
      %v3464 = vadd.f32 %v3463, 1.0
      %v3465 = vmul.f32 %v3440, %v3464
      %v3466 = vld [vmem:[%s12] sm:$0xff]
      %v3467 = vld [vmem:[%s13] sm:$0x1]
      %v3469 = vlaneseq
      %v3470 = vshrl.u32 %v3469, 7
      %v3471 = vsub.s32 0, %v3470
      %v3472 = vrot.slane %v3467, %v3471
      %v3475 = vsel %vm3005, %v3465, 0
      %3477 = vmatprep.subr.mxu0 0.0
      %3478 = vmatpush1.msra.mxu0 %v3466
      %3479 = vmatprep.subr.mxu0 0.0
      %3480 = vmatpush1.msra.mxu0 0.0
      %3481 = vmatprep.subr.mxu0 0.0
      %3482 = vmatpush1.msra.mxu0 0.0
      %3483 = vmatprep.subr.mxu0 0.0
      %3484 = vmatpush1.msra.mxu0 0.0
      %3485 = vmatprep.subr.mxu0 0.0
      %3486 = vmatpush1.msra.mxu0 0.0
      %3487 = vmatprep.subr.mxu0 0.0
      %3488 = vmatpush1.msra.mxu0 0.0
      %3489 = vmatprep.subr.mxu0 0.0
      %3490 = vmatpush1.msra.mxu0 0.0
      %3491 = vmatprep.subr.mxu0 0.0
      %3492 = vmatpush1.msra.mxu0 0.0
      %3493 = vmatprep.subr.mxu0 0.0
      %3494 = vmatpush1.msra.mxu0 0.0
      %3495 = vmatprep.subr.mxu0 0.0
      %3496 = vmatpush1.msra.mxu0 0.0
      %3497 = vmatprep.subr.mxu0 0.0
      %3498 = vmatpush1.msra.mxu0 0.0
      %3499 = vmatprep.subr.mxu0 0.0
      %3500 = vmatpush1.msra.mxu0 0.0
      %3501 = vmatprep.subr.mxu0 0.0
      %3502 = vmatpush1.msra.mxu0 0.0
      %3503 = vmatprep.subr.mxu0 0.0
      %3504 = vmatpush1.msra.mxu0 0.0
      %3505 = vmatprep.subr.mxu0 0.0
      %3506 = vmatpush1.msra.mxu0 0.0
      %3507 = vmatprep.subr.mxu0 0.0
      %3508 = vmatpush1.msra.mxu0 0.0
      %3509 = vmatprep.subr.mxu0 0.0
      %3510 = vmatpush1.msra.mxu0 0.0
      %3511 = vmatprep.subr.mxu0 0.0
      %3512 = vmatpush1.msra.mxu0 0.0
      %3513 = vmatprep.subr.mxu0 0.0
      %3514 = vmatpush1.msra.mxu0 0.0
      %3515 = vmatprep.subr.mxu0 0.0
      %3516 = vmatpush1.msra.mxu0 0.0
      %3517 = vmatprep.subr.mxu0 0.0
      %3518 = vmatpush1.msra.mxu0 0.0
      %3519 = vmatprep.subr.mxu0 0.0
      %3520 = vmatpush1.msra.mxu0 0.0
      %3521 = vmatprep.subr.mxu0 0.0
      %3522 = vmatpush1.msra.mxu0 0.0
      %3523 = vmatprep.subr.mxu0 0.0
      %3524 = vmatpush1.msra.mxu0 0.0
      %3525 = vmatprep.subr.mxu0 0.0
      %3526 = vmatpush1.msra.mxu0 0.0
      %3527 = vmatprep.subr.mxu0 0.0
      %3528 = vmatpush1.msra.mxu0 0.0
      %3529 = vmatprep.subr.mxu0 0.0
      %3530 = vmatpush1.msra.mxu0 0.0
      %3531 = vmatprep.subr.mxu0 0.0
      %3532 = vmatpush1.msra.mxu0 0.0
      %3533 = vmatprep.subr.mxu0 0.0
      %3534 = vmatpush1.msra.mxu0 0.0
      %3535 = vmatprep.subr.mxu0 0.0
      %3536 = vmatpush1.msra.mxu0 0.0
      %3537 = vmatprep.subr.mxu0 0.0
      %3538 = vmatpush1.msra.mxu0 0.0
      %3539 = vmatprep.subr.mxu0 0.0
      %3540 = vmatpush1.msra.mxu0 0.0
      %3541 = vmatprep.mubr.f32.mxu0 0.0
      %3542 = vmatmul.mubr.f32.gmra.mrb[0].mxu0 %v3475
      %v3543 = vpop.f32.mrb[0].mxu0
      %v3544 = vadd.f32 %v3472, %v3543
      %v3545 = vpop.f32.mrb[0].mxu0
      %3546 = vdwg.mxu0
      %3548 = vrot.lane.b32.xlu0 %v3544, 96
      %v3549 = vpop.permute.xlu0 %3548
      %v3551 = vmax.f32 %v3544, %v3549
      %3553 = vrot.lane.b32.xlu0 %v3551, 96
      %v3554 = vpop.permute.xlu0 %3553
      %v3556 = vmax.f32 %v3544, %v3554
      %v3557 = vsub.f32 %v3544, %v3556
      %v3558 = vmul.f32 %v3557, 1.442695
      %v3559 = vpow.pop %v3558
      %3561 = vrot.lane.b32.xlu0 %v3556, 32
      %v3562 = vpop.permute.xlu0 %3561
      %v3564 = vsub.f32 %v3544, %v3562
      %v3565 = vmul.f32 %v3564, 1.442695
      %v3566 = vpow.pop %v3565
      %3567 = vrot.lane.b32.xlu0 %v3556, 64
      %v3568 = vpop.permute.xlu0 %3567
      %v3570 = vsub.f32 %v3544, %v3568
      %v3571 = vmul.f32 %v3570, 1.442695
      %v3572 = vpow.pop %v3571
      %3574 = vrot.lane.b32.xlu0 %v3566, 96
      %v3575 = vpop.permute.xlu0 %3574
      %v3577 = vadd.f32 %v3559, %v3575
      %3579 = vrot.lane.b32.xlu0 %v3572, 64
      %v3580 = vpop.permute.xlu0 %3579
      %v3582 = vadd.f32 %v3577, %v3580
      %v3583 = vrcp.pop %v3582
      %v3584 = vld [vmem:[%s14] sm:$0xff]
      %v3585 = vmul.f32 %v3559, %v3583
      %v3587 = vsel %vm3005, %v3584, 0
      %3589 = vmatprep.subr.mxu0 0.0
      %3590 = vmatpush1.msra.mxu0 %v3585
      %3591 = vmatprep.subr.mxu0 0.0
      %3592 = vmatpush1.msra.mxu0 0.0
      %3593 = vmatprep.subr.mxu0 0.0
      %3594 = vmatpush1.msra.mxu0 0.0
      %3595 = vmatprep.subr.mxu0 0.0
      %3596 = vmatpush1.msra.mxu0 0.0
      %3597 = vmatprep.subr.mxu0 0.0
      %3598 = vmatpush1.msra.mxu0 0.0
      %3599 = vmatprep.subr.mxu0 0.0
      %3600 = vmatpush1.msra.mxu0 0.0
      %3601 = vmatprep.subr.mxu0 0.0
      %3602 = vmatpush1.msra.mxu0 0.0
      %3603 = vmatprep.subr.mxu0 0.0
      %3604 = vmatpush1.msra.mxu0 0.0
      %3605 = vmatprep.subr.mxu0 0.0
      %3606 = vmatpush1.msra.mxu0 0.0
      %3607 = vmatprep.subr.mxu0 0.0
      %3608 = vmatpush1.msra.mxu0 0.0
      %3609 = vmatprep.subr.mxu0 0.0
      %3610 = vmatpush1.msra.mxu0 0.0
      %3611 = vmatprep.subr.mxu0 0.0
      %3612 = vmatpush1.msra.mxu0 0.0
      %3613 = vmatprep.subr.mxu0 0.0
      %3614 = vmatpush1.msra.mxu0 0.0
      %3615 = vmatprep.subr.mxu0 0.0
      %3616 = vmatpush1.msra.mxu0 0.0
      %3617 = vmatprep.subr.mxu0 0.0
      %3618 = vmatpush1.msra.mxu0 0.0
      %3619 = vmatprep.subr.mxu0 0.0
      %3620 = vmatpush1.msra.mxu0 0.0
      %3621 = vmatprep.subr.mxu0 0.0
      %3622 = vmatpush1.msra.mxu0 0.0
      %3623 = vmatprep.subr.mxu0 0.0
      %3624 = vmatpush1.msra.mxu0 0.0
      %3625 = vmatprep.subr.mxu0 0.0
      %3626 = vmatpush1.msra.mxu0 0.0
      %3627 = vmatprep.subr.mxu0 0.0
      %3628 = vmatpush1.msra.mxu0 0.0
      %3629 = vmatprep.subr.mxu0 0.0
      %3630 = vmatpush1.msra.mxu0 0.0
      %3631 = vmatprep.subr.mxu0 0.0
      %3632 = vmatpush1.msra.mxu0 0.0
      %3633 = vmatprep.subr.mxu0 0.0
      %3634 = vmatpush1.msra.mxu0 0.0
      %3635 = vmatprep.subr.mxu0 0.0
      %3636 = vmatpush1.msra.mxu0 0.0
      %3637 = vmatprep.subr.mxu0 0.0
      %3638 = vmatpush1.msra.mxu0 0.0
      %3639 = vmatprep.subr.mxu0 0.0
      %3640 = vmatpush1.msra.mxu0 0.0
      %3641 = vmatprep.subr.mxu0 0.0
      %3642 = vmatpush1.msra.mxu0 0.0
      %3643 = vmatprep.subr.mxu0 0.0
      %3644 = vmatpush1.msra.mxu0 0.0
      %3645 = vmatprep.subr.mxu0 0.0
      %3646 = vmatpush1.msra.mxu0 0.0
      %3647 = vmatprep.subr.mxu0 0.0
      %3648 = vmatpush1.msra.mxu0 0.0
      %3649 = vmatprep.subr.mxu0 0.0
      %3650 = vmatpush1.msra.mxu0 0.0
      %3651 = vmatprep.subr.mxu0 0.0
      %3652 = vmatpush1.msra.mxu0 0.0
      %3653 = vmatprep.mubr.f32.mxu0 0.0
      %3654 = vmatmul.mubr.f32.gmra.mrb[0].mxu0 %v3587
      %v3655 = vpop.f32.mrb[0].mxu0
      %v3656 = vadd.f32 0.0, %v3655
      %v3657 = vpop.f32.mrb[0].mxu0
      %3658 = vdwg.mxu0
      %v3659 = vld [vmem:[%s15] sm:$0xff]
      %v3660 = vld [vmem:[%s15 + $0x8] sm:$0xff]
      %v3661 = vld [vmem:[%s15 + $0x10] sm:$0xff]
      %v3662 = vld [vmem:[%s15 + $0x18] sm:$0xff]
      %v3663 = vld [vmem:[%s15 + $0x20] sm:$0xff]
      %v3664 = vld [vmem:[%s15 + $0x28] sm:$0xff]
      %v3665 = vld [vmem:[%s15 + $0x30] sm:$0xff]
      %v3666 = vld [vmem:[%s15 + $0x38] sm:$0xff]
      %v3667 = vld [vmem:[%s15 + $0x40] sm:$0xff]
      %v3668 = vld [vmem:[%s15 + $0x48] sm:$0xff]
      %v3669 = vld [vmem:[%s15 + $0x50] sm:$0xff]
      %v3670 = vld [vmem:[%s15 + $0x58] sm:$0xff]
      %v3671 = vld [vmem:[%s15 + $0x60] sm:$0xff]
      %v3672 = vld [vmem:[%s15 + $0x68] sm:$0xff]
      %v3673 = vld [vmem:[%s15 + $0x70] sm:$0xff]
      %v3674 = vld [vmem:[%s15 + $0x78] sm:$0xff]
      %v3676 = vsel %vm3366, %v3656, 0
      %3678 = vmatprep.subr.mxu0 %v3660
      %3679 = vmatpush1.msra.mxu0 %v3659
      %3680 = vmatprep.subr.mxu0 %v3664
      %3681 = vmatpush1.msra.mxu0 %v3663
      %3682 = vmatprep.subr.mxu0 %v3668
      %3683 = vmatpush1.msra.mxu0 %v3667
      %3684 = vmatprep.subr.mxu0 %v3672
      %3685 = vmatpush1.msra.mxu0 %v3671
      %3686 = vmatprep.subr.mxu0 0.0
      %3687 = vmatpush1.msra.mxu0 0.0
      %3688 = vmatprep.subr.mxu0 0.0
      %3689 = vmatpush1.msra.mxu0 0.0
      %3690 = vmatprep.subr.mxu0 0.0
      %3691 = vmatpush1.msra.mxu0 0.0
      %3692 = vmatprep.subr.mxu0 0.0
      %3693 = vmatpush1.msra.mxu0 0.0
      %3694 = vmatprep.subr.mxu0 0.0
      %3695 = vmatpush1.msra.mxu0 0.0
      %3696 = vmatprep.subr.mxu0 0.0
      %3697 = vmatpush1.msra.mxu0 0.0
      %3698 = vmatprep.subr.mxu0 0.0
      %3699 = vmatpush1.msra.mxu0 0.0
      %3700 = vmatprep.subr.mxu0 0.0
      %3701 = vmatpush1.msra.mxu0 0.0
      %3702 = vmatprep.subr.mxu0 0.0
      %3703 = vmatpush1.msra.mxu0 0.0
      %3704 = vmatprep.subr.mxu0 0.0
      %3705 = vmatpush1.msra.mxu0 0.0
      %3706 = vmatprep.subr.mxu0 0.0
      %3707 = vmatpush1.msra.mxu0 0.0
      %3708 = vmatprep.subr.mxu0 0.0
      %3709 = vmatpush1.msra.mxu0 0.0
      %3710 = vmatprep.subr.mxu0 0.0
      %3711 = vmatpush1.msra.mxu0 0.0
      %3712 = vmatprep.subr.mxu0 0.0
      %3713 = vmatpush1.msra.mxu0 0.0
      %3714 = vmatprep.subr.mxu0 0.0
      %3715 = vmatpush1.msra.mxu0 0.0
      %3716 = vmatprep.subr.mxu0 0.0
      %3717 = vmatpush1.msra.mxu0 0.0
      %3718 = vmatprep.subr.mxu0 0.0
      %3719 = vmatpush1.msra.mxu0 0.0
      %3720 = vmatprep.subr.mxu0 0.0
      %3721 = vmatpush1.msra.mxu0 0.0
      %3722 = vmatprep.subr.mxu0 0.0
      %3723 = vmatpush1.msra.mxu0 0.0
      %3724 = vmatprep.subr.mxu0 0.0
      %3725 = vmatpush1.msra.mxu0 0.0
      %3726 = vmatprep.subr.mxu0 0.0
      %3727 = vmatpush1.msra.mxu0 0.0
      %3728 = vmatprep.subr.mxu0 0.0
      %3729 = vmatpush1.msra.mxu0 0.0
      %3730 = vmatprep.subr.mxu0 0.0
      %3731 = vmatpush1.msra.mxu0 0.0
      %3732 = vmatprep.subr.mxu0 0.0
      %3733 = vmatpush1.msra.mxu0 0.0
      %3734 = vmatprep.subr.mxu0 0.0
      %3735 = vmatpush1.msra.mxu0 0.0
      %3736 = vmatprep.subr.mxu0 0.0
      %3737 = vmatpush1.msra.mxu0 0.0
      %3738 = vmatprep.subr.mxu0 0.0
      %3739 = vmatpush1.msra.mxu0 0.0
      %3740 = vmatprep.subr.mxu0 0.0
      %3741 = vmatpush1.msra.mxu0 0.0
      %3742 = vmatprep.mubr.f32.mxu0 0.0
      %3743 = vmatmul.mubr.f32.gmra.mrb[0].mxu0 %v3676
      %v3744 = vpop.f32.mrb[0].mxu0
      %v3745 = vadd.f32 0.0, %v3744
      %v3746 = vpop.f32.mrb[0].mxu0
      %v3747 = vadd.f32 0.0, %v3746
      %3748 = vdwg.mxu0
      %3749 = vmatprep.subr.mxu0 %v3662
      %3750 = vmatpush1.msra.mxu0 %v3661
      %3751 = vmatprep.subr.mxu0 %v3666
      %3752 = vmatpush1.msra.mxu0 %v3665
      %3753 = vmatprep.subr.mxu0 %v3670
      %3754 = vmatpush1.msra.mxu0 %v3669
      %3755 = vmatprep.subr.mxu0 %v3674
      %3756 = vmatpush1.msra.mxu0 %v3673
      %3757 = vmatprep.subr.mxu0 0.0
      %3758 = vmatpush1.msra.mxu0 0.0
      %3759 = vmatprep.subr.mxu0 0.0
      %3760 = vmatpush1.msra.mxu0 0.0
      %3761 = vmatprep.subr.mxu0 0.0
      %3762 = vmatpush1.msra.mxu0 0.0
      %3763 = vmatprep.subr.mxu0 0.0
      %3764 = vmatpush1.msra.mxu0 0.0
      %3765 = vmatprep.subr.mxu0 0.0
      %3766 = vmatpush1.msra.mxu0 0.0
      %3767 = vmatprep.subr.mxu0 0.0
      %3768 = vmatpush1.msra.mxu0 0.0
      %3769 = vmatprep.subr.mxu0 0.0
      %3770 = vmatpush1.msra.mxu0 0.0
      %3771 = vmatprep.subr.mxu0 0.0
      %3772 = vmatpush1.msra.mxu0 0.0
      %3773 = vmatprep.subr.mxu0 0.0
      %3774 = vmatpush1.msra.mxu0 0.0
      %3775 = vmatprep.subr.mxu0 0.0
      %3776 = vmatpush1.msra.mxu0 0.0
      %3777 = vmatprep.subr.mxu0 0.0
      %3778 = vmatpush1.msra.mxu0 0.0
      %3779 = vmatprep.subr.mxu0 0.0
      %3780 = vmatpush1.msra.mxu0 0.0
      %3781 = vmatprep.subr.mxu0 0.0
      %3782 = vmatpush1.msra.mxu0 0.0
      %3783 = vmatprep.subr.mxu0 0.0
      %3784 = vmatpush1.msra.mxu0 0.0
      %3785 = vmatprep.subr.mxu0 0.0
      %3786 = vmatpush1.msra.mxu0 0.0
      %3787 = vmatprep.subr.mxu0 0.0
      %3788 = vmatpush1.msra.mxu0 0.0
      %3789 = vmatprep.subr.mxu0 0.0
      %3790 = vmatpush1.msra.mxu0 0.0
      %3791 = vmatprep.subr.mxu0 0.0
      %3792 = vmatpush1.msra.mxu0 0.0
      %3793 = vmatprep.subr.mxu0 0.0
      %3794 = vmatpush1.msra.mxu0 0.0
      %3795 = vmatprep.subr.mxu0 0.0
      %3796 = vmatpush1.msra.mxu0 0.0
      %3797 = vmatprep.subr.mxu0 0.0
      %3798 = vmatpush1.msra.mxu0 0.0
      %3799 = vmatprep.subr.mxu0 0.0
      %3800 = vmatpush1.msra.mxu0 0.0
      %3801 = vmatprep.subr.mxu0 0.0
      %3802 = vmatpush1.msra.mxu0 0.0
      %3803 = vmatprep.subr.mxu0 0.0
      %3804 = vmatpush1.msra.mxu0 0.0
      %3805 = vmatprep.subr.mxu0 0.0
      %3806 = vmatpush1.msra.mxu0 0.0
      %3807 = vmatprep.subr.mxu0 0.0
      %3808 = vmatpush1.msra.mxu0 0.0
      %3809 = vmatprep.subr.mxu0 0.0
      %3810 = vmatpush1.msra.mxu0 0.0
      %3811 = vmatprep.subr.mxu0 0.0
      %3812 = vmatpush1.msra.mxu0 0.0
      %3813 = vmatprep.mubr.f32.mxu0 0.0
      %3814 = vmatmul.mubr.f32.gmra.mrb[0].mxu0 %v3676
      %v3815 = vpop.f32.mrb[0].mxu0
      %v3816 = vadd.f32 0.0, %v3815
      %v3817 = vpop.f32.mrb[0].mxu0
      %v3818 = vadd.f32 0.0, %v3817
      %3819 = vdwg.mxu0
      %3821 = vrot.lane.b32.xlu0 %v3583, 32
      %v3822 = vpop.permute.xlu0 %3821
      %v3824 = vmul.f32 %v3566, %v3822
      %3826 = vrot.lane.b32.xlu0 %v3824, 96
      %v3827 = vpop.permute.xlu0 %3826
      %3829 = vmatprep.subr.mxu0 0.0
      %3830 = vmatpush1.msra.mxu0 %v3827
      %3831 = vmatprep.subr.mxu0 0.0
      %3832 = vmatpush1.msra.mxu0 0.0
      %3833 = vmatprep.subr.mxu0 0.0
      %3834 = vmatpush1.msra.mxu0 0.0
      %3835 = vmatprep.subr.mxu0 0.0
      %3836 = vmatpush1.msra.mxu0 0.0
      %3837 = vmatprep.subr.mxu0 0.0
      %3838 = vmatpush1.msra.mxu0 0.0
      %3839 = vmatprep.subr.mxu0 0.0
      %3840 = vmatpush1.msra.mxu0 0.0
      %3841 = vmatprep.subr.mxu0 0.0
      %3842 = vmatpush1.msra.mxu0 0.0
      %3843 = vmatprep.subr.mxu0 0.0
      %3844 = vmatpush1.msra.mxu0 0.0
      %3845 = vmatprep.subr.mxu0 0.0
      %3846 = vmatpush1.msra.mxu0 0.0
      %3847 = vmatprep.subr.mxu0 0.0
      %3848 = vmatpush1.msra.mxu0 0.0
      %3849 = vmatprep.subr.mxu0 0.0
      %3850 = vmatpush1.msra.mxu0 0.0
      %3851 = vmatprep.subr.mxu0 0.0
      %3852 = vmatpush1.msra.mxu0 0.0
      %3853 = vmatprep.subr.mxu0 0.0
      %3854 = vmatpush1.msra.mxu0 0.0
      %3855 = vmatprep.subr.mxu0 0.0
      %3856 = vmatpush1.msra.mxu0 0.0
      %3857 = vmatprep.subr.mxu0 0.0
      %3858 = vmatpush1.msra.mxu0 0.0
      %3859 = vmatprep.subr.mxu0 0.0
      %3860 = vmatpush1.msra.mxu0 0.0
      %3861 = vmatprep.subr.mxu0 0.0
      %3862 = vmatpush1.msra.mxu0 0.0
      %3863 = vmatprep.subr.mxu0 0.0
      %3864 = vmatpush1.msra.mxu0 0.0
      %3865 = vmatprep.subr.mxu0 0.0
      %3866 = vmatpush1.msra.mxu0 0.0
      %3867 = vmatprep.subr.mxu0 0.0
      %3868 = vmatpush1.msra.mxu0 0.0
      %3869 = vmatprep.subr.mxu0 0.0
      %3870 = vmatpush1.msra.mxu0 0.0
      %3871 = vmatprep.subr.mxu0 0.0
      %3872 = vmatpush1.msra.mxu0 0.0
      %3873 = vmatprep.subr.mxu0 0.0
      %3874 = vmatpush1.msra.mxu0 0.0
      %3875 = vmatprep.subr.mxu0 0.0
      %3876 = vmatpush1.msra.mxu0 0.0
      %3877 = vmatprep.subr.mxu0 0.0
      %3878 = vmatpush1.msra.mxu0 0.0
      %3879 = vmatprep.subr.mxu0 0.0
      %3880 = vmatpush1.msra.mxu0 0.0
      %3881 = vmatprep.subr.mxu0 0.0
      %3882 = vmatpush1.msra.mxu0 0.0
      %3883 = vmatprep.subr.mxu0 0.0
      %3884 = vmatpush1.msra.mxu0 0.0
      %3885 = vmatprep.subr.mxu0 0.0
      %3886 = vmatpush1.msra.mxu0 0.0
      %3887 = vmatprep.subr.mxu0 0.0
      %3888 = vmatpush1.msra.mxu0 0.0
      %3889 = vmatprep.subr.mxu0 0.0
      %3890 = vmatpush1.msra.mxu0 0.0
      %3891 = vmatprep.subr.mxu0 0.0
      %3892 = vmatpush1.msra.mxu0 0.0
      %3893 = vmatprep.mubr.f32.mxu0 0.0
      %3894 = vmatmul.mubr.f32.gmra.mrb[0].mxu0 %v3587
      %v3895 = vpop.f32.mrb[0].mxu0
      %v3896 = vadd.f32 0.0, %v3895
      %v3897 = vpop.f32.mrb[0].mxu0
      %3898 = vdwg.mxu0
      %v3900 = vsel %vm3366, %v3896, 0
      %3902 = vmatprep.subr.mxu0 %v3660
      %3903 = vmatpush1.msra.mxu0 %v3659
      %3904 = vmatprep.subr.mxu0 %v3664
      %3905 = vmatpush1.msra.mxu0 %v3663
      %3906 = vmatprep.subr.mxu0 %v3668
      %3907 = vmatpush1.msra.mxu0 %v3667
      %3908 = vmatprep.subr.mxu0 %v3672
      %3909 = vmatpush1.msra.mxu0 %v3671
      %3910 = vmatprep.subr.mxu0 0.0
      %3911 = vmatpush1.msra.mxu0 0.0
      %3912 = vmatprep.subr.mxu0 0.0
      %3913 = vmatpush1.msra.mxu0 0.0
      %3914 = vmatprep.subr.mxu0 0.0
      %3915 = vmatpush1.msra.mxu0 0.0
      %3916 = vmatprep.subr.mxu0 0.0
      %3917 = vmatpush1.msra.mxu0 0.0
      %3918 = vmatprep.subr.mxu0 0.0
      %3919 = vmatpush1.msra.mxu0 0.0
      %3920 = vmatprep.subr.mxu0 0.0
      %3921 = vmatpush1.msra.mxu0 0.0
      %3922 = vmatprep.subr.mxu0 0.0
      %3923 = vmatpush1.msra.mxu0 0.0
      %3924 = vmatprep.subr.mxu0 0.0
      %3925 = vmatpush1.msra.mxu0 0.0
      %3926 = vmatprep.subr.mxu0 0.0
      %3927 = vmatpush1.msra.mxu0 0.0
      %3928 = vmatprep.subr.mxu0 0.0
      %3929 = vmatpush1.msra.mxu0 0.0
      %3930 = vmatprep.subr.mxu0 0.0
      %3931 = vmatpush1.msra.mxu0 0.0
      %3932 = vmatprep.subr.mxu0 0.0
      %3933 = vmatpush1.msra.mxu0 0.0
      %3934 = vmatprep.subr.mxu0 0.0
      %3935 = vmatpush1.msra.mxu0 0.0
      %3936 = vmatprep.subr.mxu0 0.0
      %3937 = vmatpush1.msra.mxu0 0.0
      %3938 = vmatprep.subr.mxu0 0.0
      %3939 = vmatpush1.msra.mxu0 0.0
      %3940 = vmatprep.subr.mxu0 0.0
      %3941 = vmatpush1.msra.mxu0 0.0
      %3942 = vmatprep.subr.mxu0 0.0
      %3943 = vmatpush1.msra.mxu0 0.0
      %3944 = vmatprep.subr.mxu0 0.0
      %3945 = vmatpush1.msra.mxu0 0.0
      %3946 = vmatprep.subr.mxu0 0.0
      %3947 = vmatpush1.msra.mxu0 0.0
      %3948 = vmatprep.subr.mxu0 0.0
      %3949 = vmatpush1.msra.mxu0 0.0
      %3950 = vmatprep.subr.mxu0 0.0
      %3951 = vmatpush1.msra.mxu0 0.0
      %3952 = vmatprep.subr.mxu0 0.0
      %3953 = vmatpush1.msra.mxu0 0.0
      %3954 = vmatprep.subr.mxu0 0.0
      %3955 = vmatpush1.msra.mxu0 0.0
      %3956 = vmatprep.subr.mxu0 0.0
      %3957 = vmatpush1.msra.mxu0 0.0
      %3958 = vmatprep.subr.mxu0 0.0
      %3959 = vmatpush1.msra.mxu0 0.0
      %3960 = vmatprep.subr.mxu0 0.0
      %3961 = vmatpush1.msra.mxu0 0.0
      %3962 = vmatprep.subr.mxu0 0.0
      %3963 = vmatpush1.msra.mxu0 0.0
      %3964 = vmatprep.subr.mxu0 0.0
      %3965 = vmatpush1.msra.mxu0 0.0
      %3966 = vmatprep.mubr.f32.mxu0 0.0
      %3967 = vmatmul.mubr.f32.gmra.mrb[0].mxu0 %v3900
      %v3968 = vpop.f32.mrb[0].mxu0
      %v3969 = vadd.f32 0.0, %v3968
      %v3970 = vpop.f32.mrb[0].mxu0
      %v3971 = vadd.f32 0.0, %v3970
      %3972 = vdwg.mxu0
      %3973 = vmatprep.subr.mxu0 %v3662
      %3974 = vmatpush1.msra.mxu0 %v3661
      %3975 = vmatprep.subr.mxu0 %v3666
      %3976 = vmatpush1.msra.mxu0 %v3665
      %3977 = vmatprep.subr.mxu0 %v3670
      %3978 = vmatpush1.msra.mxu0 %v3669
      %3979 = vmatprep.subr.mxu0 %v3674
      %3980 = vmatpush1.msra.mxu0 %v3673
      %3981 = vmatprep.subr.mxu0 0.0
      %3982 = vmatpush1.msra.mxu0 0.0
      %3983 = vmatprep.subr.mxu0 0.0
      %3984 = vmatpush1.msra.mxu0 0.0
      %3985 = vmatprep.subr.mxu0 0.0
      %3986 = vmatpush1.msra.mxu0 0.0
      %3987 = vmatprep.subr.mxu0 0.0
      %3988 = vmatpush1.msra.mxu0 0.0
      %3989 = vmatprep.subr.mxu0 0.0
      %3990 = vmatpush1.msra.mxu0 0.0
      %3991 = vmatprep.subr.mxu0 0.0
      %3992 = vmatpush1.msra.mxu0 0.0
      %3993 = vmatprep.subr.mxu0 0.0
      %3994 = vmatpush1.msra.mxu0 0.0
      %3995 = vmatprep.subr.mxu0 0.0
      %3996 = vmatpush1.msra.mxu0 0.0
      %3997 = vmatprep.subr.mxu0 0.0
      %3998 = vmatpush1.msra.mxu0 0.0
      %3999 = vmatprep.subr.mxu0 0.0
      %4000 = vmatpush1.msra.mxu0 0.0
      %4001 = vmatprep.subr.mxu0 0.0
      %4002 = vmatpush1.msra.mxu0 0.0
      %4003 = vmatprep.subr.mxu0 0.0
      %4004 = vmatpush1.msra.mxu0 0.0
      %4005 = vmatprep.subr.mxu0 0.0
      %4006 = vmatpush1.msra.mxu0 0.0
      %4007 = vmatprep.subr.mxu0 0.0
      %4008 = vmatpush1.msra.mxu0 0.0
      %4009 = vmatprep.subr.mxu0 0.0
      %4010 = vmatpush1.msra.mxu0 0.0
      %4011 = vmatprep.subr.mxu0 0.0
      %4012 = vmatpush1.msra.mxu0 0.0
      %4013 = vmatprep.subr.mxu0 0.0
      %4014 = vmatpush1.msra.mxu0 0.0
      %4015 = vmatprep.subr.mxu0 0.0
      %4016 = vmatpush1.msra.mxu0 0.0
      %4017 = vmatprep.subr.mxu0 0.0
      %4018 = vmatpush1.msra.mxu0 0.0
      %4019 = vmatprep.subr.mxu0 0.0
      %4020 = vmatpush1.msra.mxu0 0.0
      %4021 = vmatprep.subr.mxu0 0.0
      %4022 = vmatpush1.msra.mxu0 0.0
      %4023 = vmatprep.subr.mxu0 0.0
      %4024 = vmatpush1.msra.mxu0 0.0
      %4025 = vmatprep.subr.mxu0 0.0
      %4026 = vmatpush1.msra.mxu0 0.0
      %4027 = vmatprep.subr.mxu0 0.0
      %4028 = vmatpush1.msra.mxu0 0.0
      %4029 = vmatprep.subr.mxu0 0.0
      %4030 = vmatpush1.msra.mxu0 0.0
      %4031 = vmatprep.subr.mxu0 0.0
      %4032 = vmatpush1.msra.mxu0 0.0
      %4033 = vmatprep.subr.mxu0 0.0
      %4034 = vmatpush1.msra.mxu0 0.0
      %4035 = vmatprep.subr.mxu0 0.0
      %4036 = vmatpush1.msra.mxu0 0.0
      %4037 = vmatprep.mubr.f32.mxu0 0.0
      %4038 = vmatmul.mubr.f32.gmra.mrb[0].mxu0 %v3900
      %v4039 = vpop.f32.mrb[0].mxu0
      %v4040 = vadd.f32 0.0, %v4039
      %v4041 = vpop.f32.mrb[0].mxu0
      %v4042 = vadd.f32 0.0, %v4041
      %4043 = vdwg.mxu0
      %4044 = vrot.lane.b32.xlu0 %v3583, 64
      %v4045 = vpop.permute.xlu0 %4044
      %v4047 = vmul.f32 %v3572, %v4045
      %4049 = vrot.lane.b32.xlu0 %v4047, 64
      %v4050 = vpop.permute.xlu0 %4049
      %4052 = vmatprep.subr.mxu0 0.0
      %4053 = vmatpush1.msra.mxu0 %v4050
      %4054 = vmatprep.subr.mxu0 0.0
      %4055 = vmatpush1.msra.mxu0 0.0
      %4056 = vmatprep.subr.mxu0 0.0
      %4057 = vmatpush1.msra.mxu0 0.0
      %4058 = vmatprep.subr.mxu0 0.0
      %4059 = vmatpush1.msra.mxu0 0.0
      %4060 = vmatprep.subr.mxu0 0.0
      %4061 = vmatpush1.msra.mxu0 0.0
      %4062 = vmatprep.subr.mxu0 0.0
      %4063 = vmatpush1.msra.mxu0 0.0
      %4064 = vmatprep.subr.mxu0 0.0
      %4065 = vmatpush1.msra.mxu0 0.0
      %4066 = vmatprep.subr.mxu0 0.0
      %4067 = vmatpush1.msra.mxu0 0.0
      %4068 = vmatprep.subr.mxu0 0.0
      %4069 = vmatpush1.msra.mxu0 0.0
      %4070 = vmatprep.subr.mxu0 0.0
      %4071 = vmatpush1.msra.mxu0 0.0
      %4072 = vmatprep.subr.mxu0 0.0
      %4073 = vmatpush1.msra.mxu0 0.0
      %4074 = vmatprep.subr.mxu0 0.0
      %4075 = vmatpush1.msra.mxu0 0.0
      %4076 = vmatprep.subr.mxu0 0.0
      %4077 = vmatpush1.msra.mxu0 0.0
      %4078 = vmatprep.subr.mxu0 0.0
      %4079 = vmatpush1.msra.mxu0 0.0
      %4080 = vmatprep.subr.mxu0 0.0
      %4081 = vmatpush1.msra.mxu0 0.0
      %4082 = vmatprep.subr.mxu0 0.0
      %4083 = vmatpush1.msra.mxu0 0.0
      %4084 = vmatprep.subr.mxu0 0.0
      %4085 = vmatpush1.msra.mxu0 0.0
      %4086 = vmatprep.subr.mxu0 0.0
      %4087 = vmatpush1.msra.mxu0 0.0
      %4088 = vmatprep.subr.mxu0 0.0
      %4089 = vmatpush1.msra.mxu0 0.0
      %4090 = vmatprep.subr.mxu0 0.0
      %4091 = vmatpush1.msra.mxu0 0.0
      %4092 = vmatprep.subr.mxu0 0.0
      %4093 = vmatpush1.msra.mxu0 0.0
      %4094 = vmatprep.subr.mxu0 0.0
      %4095 = vmatpush1.msra.mxu0 0.0
      %4096 = vmatprep.subr.mxu0 0.0
      %4097 = vmatpush1.msra.mxu0 0.0
      %4098 = vmatprep.subr.mxu0 0.0
      %4099 = vmatpush1.msra.mxu0 0.0
      %4100 = vmatprep.subr.mxu0 0.0
      %4101 = vmatpush1.msra.mxu0 0.0
      %4102 = vmatprep.subr.mxu0 0.0
      %4103 = vmatpush1.msra.mxu0 0.0
      %4104 = vmatprep.subr.mxu0 0.0
      %4105 = vmatpush1.msra.mxu0 0.0
      %4106 = vmatprep.subr.mxu0 0.0
      %4107 = vmatpush1.msra.mxu0 0.0
      %4108 = vmatprep.subr.mxu0 0.0
      %4109 = vmatpush1.msra.mxu0 0.0
      %4110 = vmatprep.subr.mxu0 0.0
      %4111 = vmatpush1.msra.mxu0 0.0
      %4112 = vmatprep.subr.mxu0 0.0
      %4113 = vmatpush1.msra.mxu0 0.0
      %4114 = vmatprep.subr.mxu0 0.0
      %4115 = vmatpush1.msra.mxu0 0.0
      %4116 = vmatprep.mubr.f32.mxu0 0.0
      %4117 = vmatmul.mubr.f32.gmra.mrb[0].mxu0 %v3587
      %v4118 = vpop.f32.mrb[0].mxu0
      %v4119 = vadd.f32 0.0, %v4118
      %v4120 = vpop.f32.mrb[0].mxu0
      %4121 = vdwg.mxu0
      %v4123 = vsel %vm3366, %v4119, 0
      %4125 = vmatprep.subr.mxu0 %v3660
      %4126 = vmatpush1.msra.mxu0 %v3659
      %4127 = vmatprep.subr.mxu0 %v3664
      %4128 = vmatpush1.msra.mxu0 %v3663
      %4129 = vmatprep.subr.mxu0 %v3668
      %4130 = vmatpush1.msra.mxu0 %v3667
      %4131 = vmatprep.subr.mxu0 %v3672
      %4132 = vmatpush1.msra.mxu0 %v3671
      %4133 = vmatprep.subr.mxu0 0.0
      %4134 = vmatpush1.msra.mxu0 0.0
      %4135 = vmatprep.subr.mxu0 0.0
      %4136 = vmatpush1.msra.mxu0 0.0
      %4137 = vmatprep.subr.mxu0 0.0
      %4138 = vmatpush1.msra.mxu0 0.0
      %4139 = vmatprep.subr.mxu0 0.0
      %4140 = vmatpush1.msra.mxu0 0.0
      %4141 = vmatprep.subr.mxu0 0.0
      %4142 = vmatpush1.msra.mxu0 0.0
      %4143 = vmatprep.subr.mxu0 0.0
      %4144 = vmatpush1.msra.mxu0 0.0
      %4145 = vmatprep.subr.mxu0 0.0
      %4146 = vmatpush1.msra.mxu0 0.0
      %4147 = vmatprep.subr.mxu0 0.0
      %4148 = vmatpush1.msra.mxu0 0.0
      %4149 = vmatprep.subr.mxu0 0.0
      %4150 = vmatpush1.msra.mxu0 0.0
      %4151 = vmatprep.subr.mxu0 0.0
      %4152 = vmatpush1.msra.mxu0 0.0
      %4153 = vmatprep.subr.mxu0 0.0
      %4154 = vmatpush1.msra.mxu0 0.0
      %4155 = vmatprep.subr.mxu0 0.0
      %4156 = vmatpush1.msra.mxu0 0.0
      %4157 = vmatprep.subr.mxu0 0.0
      %4158 = vmatpush1.msra.mxu0 0.0
      %4159 = vmatprep.subr.mxu0 0.0
      %4160 = vmatpush1.msra.mxu0 0.0
      %4161 = vmatprep.subr.mxu0 0.0
      %4162 = vmatpush1.msra.mxu0 0.0
      %4163 = vmatprep.subr.mxu0 0.0
      %4164 = vmatpush1.msra.mxu0 0.0
      %4165 = vmatprep.subr.mxu0 0.0
      %4166 = vmatpush1.msra.mxu0 0.0
      %4167 = vmatprep.subr.mxu0 0.0
      %4168 = vmatpush1.msra.mxu0 0.0
      %4169 = vmatprep.subr.mxu0 0.0
      %4170 = vmatpush1.msra.mxu0 0.0
      %4171 = vmatprep.subr.mxu0 0.0
      %4172 = vmatpush1.msra.mxu0 0.0
      %4173 = vmatprep.subr.mxu0 0.0
      %4174 = vmatpush1.msra.mxu0 0.0
      %4175 = vmatprep.subr.mxu0 0.0
      %4176 = vmatpush1.msra.mxu0 0.0
      %4177 = vmatprep.subr.mxu0 0.0
      %4178 = vmatpush1.msra.mxu0 0.0
      %4179 = vmatprep.subr.mxu0 0.0
      %4180 = vmatpush1.msra.mxu0 0.0
      %4181 = vmatprep.subr.mxu0 0.0
      %4182 = vmatpush1.msra.mxu0 0.0
      %4183 = vmatprep.subr.mxu0 0.0
      %4184 = vmatpush1.msra.mxu0 0.0
      %4185 = vmatprep.subr.mxu0 0.0
      %4186 = vmatpush1.msra.mxu0 0.0
      %4187 = vmatprep.subr.mxu0 0.0
      %4188 = vmatpush1.msra.mxu0 0.0
      %4189 = vmatprep.mubr.f32.mxu0 0.0
      %4190 = vmatmul.mubr.f32.gmra.mrb[0].mxu0 %v4123
      %v4191 = vpop.f32.mrb[0].mxu0
      %v4192 = vadd.f32 0.0, %v4191
      %v4193 = vpop.f32.mrb[0].mxu0
      %v4194 = vadd.f32 0.0, %v4193
      %4195 = vdwg.mxu0
      %4196 = vmatprep.subr.mxu0 %v3662
      %4197 = vmatpush1.msra.mxu0 %v3661
      %4198 = vmatprep.subr.mxu0 %v3666
      %4199 = vmatpush1.msra.mxu0 %v3665
      %4200 = vmatprep.subr.mxu0 %v3670
      %4201 = vmatpush1.msra.mxu0 %v3669
      %4202 = vmatprep.subr.mxu0 %v3674
      %4203 = vmatpush1.msra.mxu0 %v3673
      %4204 = vmatprep.subr.mxu0 0.0
      %4205 = vmatpush1.msra.mxu0 0.0
      %4206 = vmatprep.subr.mxu0 0.0
      %4207 = vmatpush1.msra.mxu0 0.0
      %4208 = vmatprep.subr.mxu0 0.0
      %4209 = vmatpush1.msra.mxu0 0.0
      %4210 = vmatprep.subr.mxu0 0.0
      %4211 = vmatpush1.msra.mxu0 0.0
      %4212 = vmatprep.subr.mxu0 0.0
      %4213 = vmatpush1.msra.mxu0 0.0
      %4214 = vmatprep.subr.mxu0 0.0
      %4215 = vmatpush1.msra.mxu0 0.0
      %4216 = vmatprep.subr.mxu0 0.0
      %4217 = vmatpush1.msra.mxu0 0.0
      %4218 = vmatprep.subr.mxu0 0.0
      %4219 = vmatpush1.msra.mxu0 0.0
      %4220 = vmatprep.subr.mxu0 0.0
      %4221 = vmatpush1.msra.mxu0 0.0
      %4222 = vmatprep.subr.mxu0 0.0
      %4223 = vmatpush1.msra.mxu0 0.0
      %4224 = vmatprep.subr.mxu0 0.0
      %4225 = vmatpush1.msra.mxu0 0.0
      %4226 = vmatprep.subr.mxu0 0.0
      %4227 = vmatpush1.msra.mxu0 0.0
      %4228 = vmatprep.subr.mxu0 0.0
      %4229 = vmatpush1.msra.mxu0 0.0
      %4230 = vmatprep.subr.mxu0 0.0
      %4231 = vmatpush1.msra.mxu0 0.0
      %4232 = vmatprep.subr.mxu0 0.0
      %4233 = vmatpush1.msra.mxu0 0.0
      %4234 = vmatprep.subr.mxu0 0.0
      %4235 = vmatpush1.msra.mxu0 0.0
      %4236 = vmatprep.subr.mxu0 0.0
      %4237 = vmatpush1.msra.mxu0 0.0
      %4238 = vmatprep.subr.mxu0 0.0
      %4239 = vmatpush1.msra.mxu0 0.0
      %4240 = vmatprep.subr.mxu0 0.0
      %4241 = vmatpush1.msra.mxu0 0.0
      %4242 = vmatprep.subr.mxu0 0.0
      %4243 = vmatpush1.msra.mxu0 0.0
      %4244 = vmatprep.subr.mxu0 0.0
      %4245 = vmatpush1.msra.mxu0 0.0
      %4246 = vmatprep.subr.mxu0 0.0
      %4247 = vmatpush1.msra.mxu0 0.0
      %4248 = vmatprep.subr.mxu0 0.0
      %4249 = vmatpush1.msra.mxu0 0.0
      %4250 = vmatprep.subr.mxu0 0.0
      %4251 = vmatpush1.msra.mxu0 0.0
      %4252 = vmatprep.subr.mxu0 0.0
      %4253 = vmatpush1.msra.mxu0 0.0
      %4254 = vmatprep.subr.mxu0 0.0
      %4255 = vmatpush1.msra.mxu0 0.0
      %4256 = vmatprep.subr.mxu0 0.0
      %4257 = vmatpush1.msra.mxu0 0.0
      %4258 = vmatprep.subr.mxu0 0.0
      %4259 = vmatpush1.msra.mxu0 0.0
      %4260 = vmatprep.mubr.f32.mxu0 0.0
      %4261 = vmatmul.mubr.f32.gmra.mrb[0].mxu0 %v4123
      %v4262 = vpop.f32.mrb[0].mxu0
      %v4263 = vadd.f32 0.0, %v4262
      %v4264 = vpop.f32.mrb[0].mxu0
      %v4265 = vadd.f32 0.0, %v4264
      %4266 = vdwg.mxu0
      %v4267 = vmul.f32 %v1810, %v3745
      %v4268 = vmul.f32 %v1812, %v3747
      %v4269 = vmul.f32 %v1952, %v3816
      %v4270 = vmul.f32 %v1954, %v3818
      %v4271 = vmul.f32 %v2514, %v3969
      %v4272 = vmul.f32 %v2516, %v3971
      %v4273 = vmul.f32 %v2656, %v4040
      %v4274 = vmul.f32 %v2658, %v4042
      %v4275 = vadd.f32 %v4267, %v4271
      %v4276 = vadd.f32 %v4268, %v4272
      %v4277 = vadd.f32 %v4269, %v4273
      %v4278 = vadd.f32 %v4270, %v4274
      %v4279 = vmul.f32 %v2992, %v4192
      %v4280 = vmul.f32 %v2993, %v4194
      %v4281 = vmul.f32 %v2994, %v4263
      %v4282 = vmul.f32 %v2995, %v4265
      %v4283 = vadd.f32 %v4275, %v4279
      %v4284 = vadd.f32 %v4276, %v4280
      %v4285 = vadd.f32 %v4277, %v4281
      %v4286 = vadd.f32 %v4278, %v4282
      %v4287 = vld [vmem:[%s558] sm:$0xff]
      %v4288 = vld [vmem:[%s558 + $0x8] sm:$0xff]
      %v4289 = vld [vmem:[%s558 + $0x10] sm:$0xff]
      %v4290 = vld [vmem:[%s558 + $0x18] sm:$0xff]
      %v4291 = vld [vmem:[%s16] sm:$0xff]
      %v4292 = vld [vmem:[%s16 + $0x8] sm:$0xff]
      %v4293 = vld [vmem:[%s16 + $0x10] sm:$0xff]
      %v4294 = vld [vmem:[%s16 + $0x18] sm:$0xff]
      %v4295 = vld [vmem:[%s16 + $0x20] sm:$0xff]
      %v4296 = vld [vmem:[%s16 + $0x28] sm:$0xff]
      %v4297 = vld [vmem:[%s16 + $0x30] sm:$0xff]
      %v4298 = vld [vmem:[%s16 + $0x38] sm:$0xff]
      %v4299 = vld [vmem:[%s16 + $0x40] sm:$0xff]
      %v4300 = vld [vmem:[%s16 + $0x48] sm:$0xff]
      %v4301 = vld [vmem:[%s16 + $0x50] sm:$0xff]
      %v4302 = vld [vmem:[%s16 + $0x58] sm:$0xff]
      %v4303 = vld [vmem:[%s16 + $0x60] sm:$0xff]
      %v4304 = vld [vmem:[%s16 + $0x68] sm:$0xff]
      %v4305 = vld [vmem:[%s16 + $0x70] sm:$0xff]
      %v4306 = vld [vmem:[%s16 + $0x78] sm:$0xff]
      %4307 = vmatprep.subr.mxu0 0.0
      %4308 = vmatpush1.msra.mxu0 %v4291
      %4309 = vmatprep.subr.mxu0 0.0
      %4310 = vmatpush1.msra.mxu0 %v4292
      %4311 = vmatprep.subr.mxu0 0.0
      %4312 = vmatpush1.msra.mxu0 %v4293
      %4313 = vmatprep.subr.mxu0 0.0
      %4314 = vmatpush1.msra.mxu0 %v4294
      %4315 = vmatprep.subr.mxu0 0.0
      %4316 = vmatpush1.msra.mxu0 %v4295
      %4317 = vmatprep.subr.mxu0 0.0
      %4318 = vmatpush1.msra.mxu0 %v4296
      %4319 = vmatprep.subr.mxu0 0.0
      %4320 = vmatpush1.msra.mxu0 %v4297
      %4321 = vmatprep.subr.mxu0 0.0
      %4322 = vmatpush1.msra.mxu0 %v4298
      %4323 = vmatprep.subr.mxu0 0.0
      %4324 = vmatpush1.msra.mxu0 %v4299
      %4325 = vmatprep.subr.mxu0 0.0
      %4326 = vmatpush1.msra.mxu0 %v4300
      %4327 = vmatprep.subr.mxu0 0.0
      %4328 = vmatpush1.msra.mxu0 %v4301
      %4329 = vmatprep.subr.mxu0 0.0
      %4330 = vmatpush1.msra.mxu0 %v4302
      %4331 = vmatprep.subr.mxu0 0.0
      %4332 = vmatpush1.msra.mxu0 %v4303
      %4333 = vmatprep.subr.mxu0 0.0
      %4334 = vmatpush1.msra.mxu0 %v4304
      %4335 = vmatprep.subr.mxu0 0.0
      %4336 = vmatpush1.msra.mxu0 %v4305
      %4337 = vmatprep.subr.mxu0 0.0
      %4338 = vmatpush1.msra.mxu0 %v4306
      %4339 = vmatprep.subr.mxu0 0.0
      %4340 = vmatpush1.msra.mxu0 0.0
      %4341 = vmatprep.subr.mxu0 0.0
      %4342 = vmatpush1.msra.mxu0 0.0
      %4343 = vmatprep.subr.mxu0 0.0
      %4344 = vmatpush1.msra.mxu0 0.0
      %4345 = vmatprep.subr.mxu0 0.0
      %4346 = vmatpush1.msra.mxu0 0.0
      %4347 = vmatprep.subr.mxu0 0.0
      %4348 = vmatpush1.msra.mxu0 0.0
      %4349 = vmatprep.subr.mxu0 0.0
      %4350 = vmatpush1.msra.mxu0 0.0
      %4351 = vmatprep.subr.mxu0 0.0
      %4352 = vmatpush1.msra.mxu0 0.0
      %4353 = vmatprep.subr.mxu0 0.0
      %4354 = vmatpush1.msra.mxu0 0.0
      %4355 = vmatprep.subr.mxu0 0.0
      %4356 = vmatpush1.msra.mxu0 0.0
      %4357 = vmatprep.subr.mxu0 0.0
      %4358 = vmatpush1.msra.mxu0 0.0
      %4359 = vmatprep.subr.mxu0 0.0
      %4360 = vmatpush1.msra.mxu0 0.0
      %4361 = vmatprep.subr.mxu0 0.0
      %4362 = vmatpush1.msra.mxu0 0.0
      %4363 = vmatprep.subr.mxu0 0.0
      %4364 = vmatpush1.msra.mxu0 0.0
      %4365 = vmatprep.subr.mxu0 0.0
      %4366 = vmatpush1.msra.mxu0 0.0
      %4367 = vmatprep.subr.mxu0 0.0
      %4368 = vmatpush1.msra.mxu0 0.0
      %4369 = vmatprep.subr.mxu0 0.0
      %4370 = vmatpush1.msra.mxu0 0.0
      %4371 = vmatprep.mubr.f32.mxu0 0.0
      %4372 = vmatmul.mubr.f32.gmra.mrb[0].mxu0 %v4283
      %v4373 = vpop.f32.mrb[0].mxu0
      %v4374 = vadd.f32 0.0, %v4373
      %v4375 = vpop.f32.mrb[0].mxu0
      %4376 = vdwg.mxu0
      %4377 = vmatprep.subr.mxu0 0.0
      %4378 = vmatpush1.msra.mxu0 %v4291
      %4379 = vmatprep.subr.mxu0 0.0
      %4380 = vmatpush1.msra.mxu0 %v4292
      %4381 = vmatprep.subr.mxu0 0.0
      %4382 = vmatpush1.msra.mxu0 %v4293
      %4383 = vmatprep.subr.mxu0 0.0
      %4384 = vmatpush1.msra.mxu0 %v4294
      %4385 = vmatprep.subr.mxu0 0.0
      %4386 = vmatpush1.msra.mxu0 %v4295
      %4387 = vmatprep.subr.mxu0 0.0
      %4388 = vmatpush1.msra.mxu0 %v4296
      %4389 = vmatprep.subr.mxu0 0.0
      %4390 = vmatpush1.msra.mxu0 %v4297
      %4391 = vmatprep.subr.mxu0 0.0
      %4392 = vmatpush1.msra.mxu0 %v4298
      %4393 = vmatprep.subr.mxu0 0.0
      %4394 = vmatpush1.msra.mxu0 %v4299
      %4395 = vmatprep.subr.mxu0 0.0
      %4396 = vmatpush1.msra.mxu0 %v4300
      %4397 = vmatprep.subr.mxu0 0.0
      %4398 = vmatpush1.msra.mxu0 %v4301
      %4399 = vmatprep.subr.mxu0 0.0
      %4400 = vmatpush1.msra.mxu0 %v4302
      %4401 = vmatprep.subr.mxu0 0.0
      %4402 = vmatpush1.msra.mxu0 %v4303
      %4403 = vmatprep.subr.mxu0 0.0
      %4404 = vmatpush1.msra.mxu0 %v4304
      %4405 = vmatprep.subr.mxu0 0.0
      %4406 = vmatpush1.msra.mxu0 %v4305
      %4407 = vmatprep.subr.mxu0 0.0
      %4408 = vmatpush1.msra.mxu0 %v4306
      %4409 = vmatprep.subr.mxu0 0.0
      %4410 = vmatpush1.msra.mxu0 0.0
      %4411 = vmatprep.subr.mxu0 0.0
      %4412 = vmatpush1.msra.mxu0 0.0
      %4413 = vmatprep.subr.mxu0 0.0
      %4414 = vmatpush1.msra.mxu0 0.0
      %4415 = vmatprep.subr.mxu0 0.0
      %4416 = vmatpush1.msra.mxu0 0.0
      %4417 = vmatprep.subr.mxu0 0.0
      %4418 = vmatpush1.msra.mxu0 0.0
      %4419 = vmatprep.subr.mxu0 0.0
      %4420 = vmatpush1.msra.mxu0 0.0
      %4421 = vmatprep.subr.mxu0 0.0
      %4422 = vmatpush1.msra.mxu0 0.0
      %4423 = vmatprep.subr.mxu0 0.0
      %4424 = vmatpush1.msra.mxu0 0.0
      %4425 = vmatprep.subr.mxu0 0.0
      %4426 = vmatpush1.msra.mxu0 0.0
      %4427 = vmatprep.subr.mxu0 0.0
      %4428 = vmatpush1.msra.mxu0 0.0
      %4429 = vmatprep.subr.mxu0 0.0
      %4430 = vmatpush1.msra.mxu0 0.0
      %4431 = vmatprep.subr.mxu0 0.0
      %4432 = vmatpush1.msra.mxu0 0.0
      %4433 = vmatprep.subr.mxu0 0.0
      %4434 = vmatpush1.msra.mxu0 0.0
      %4435 = vmatprep.subr.mxu0 0.0
      %4436 = vmatpush1.msra.mxu0 0.0
      %4437 = vmatprep.subr.mxu0 0.0
      %4438 = vmatpush1.msra.mxu0 0.0
      %4439 = vmatprep.subr.mxu0 0.0
      %4440 = vmatpush1.msra.mxu0 0.0
      %4441 = vmatprep.mubr.f32.mxu0 0.0
      %4442 = vmatmul.mubr.f32.gmra.mrb[0].mxu0 %v4284
      %v4443 = vpop.f32.mrb[0].mxu0
      %v4444 = vadd.f32 0.0, %v4443
      %v4445 = vpop.f32.mrb[0].mxu0
      %4446 = vdwg.mxu0
      %4447 = vmatprep.subr.mxu0 0.0
      %4448 = vmatpush1.msra.mxu0 %v4291
      %4449 = vmatprep.subr.mxu0 0.0
      %4450 = vmatpush1.msra.mxu0 %v4292
      %4451 = vmatprep.subr.mxu0 0.0
      %4452 = vmatpush1.msra.mxu0 %v4293
      %4453 = vmatprep.subr.mxu0 0.0
      %4454 = vmatpush1.msra.mxu0 %v4294
      %4455 = vmatprep.subr.mxu0 0.0
      %4456 = vmatpush1.msra.mxu0 %v4295
      %4457 = vmatprep.subr.mxu0 0.0
      %4458 = vmatpush1.msra.mxu0 %v4296
      %4459 = vmatprep.subr.mxu0 0.0
      %4460 = vmatpush1.msra.mxu0 %v4297
      %4461 = vmatprep.subr.mxu0 0.0
      %4462 = vmatpush1.msra.mxu0 %v4298
      %4463 = vmatprep.subr.mxu0 0.0
      %4464 = vmatpush1.msra.mxu0 %v4299
      %4465 = vmatprep.subr.mxu0 0.0
      %4466 = vmatpush1.msra.mxu0 %v4300
      %4467 = vmatprep.subr.mxu0 0.0
      %4468 = vmatpush1.msra.mxu0 %v4301
      %4469 = vmatprep.subr.mxu0 0.0
      %4470 = vmatpush1.msra.mxu0 %v4302
      %4471 = vmatprep.subr.mxu0 0.0
      %4472 = vmatpush1.msra.mxu0 %v4303
      %4473 = vmatprep.subr.mxu0 0.0
      %4474 = vmatpush1.msra.mxu0 %v4304
      %4475 = vmatprep.subr.mxu0 0.0
      %4476 = vmatpush1.msra.mxu0 %v4305
      %4477 = vmatprep.subr.mxu0 0.0
      %4478 = vmatpush1.msra.mxu0 %v4306
      %4479 = vmatprep.subr.mxu0 0.0
      %4480 = vmatpush1.msra.mxu0 0.0
      %4481 = vmatprep.subr.mxu0 0.0
      %4482 = vmatpush1.msra.mxu0 0.0
      %4483 = vmatprep.subr.mxu0 0.0
      %4484 = vmatpush1.msra.mxu0 0.0
      %4485 = vmatprep.subr.mxu0 0.0
      %4486 = vmatpush1.msra.mxu0 0.0
      %4487 = vmatprep.subr.mxu0 0.0
      %4488 = vmatpush1.msra.mxu0 0.0
      %4489 = vmatprep.subr.mxu0 0.0
      %4490 = vmatpush1.msra.mxu0 0.0
      %4491 = vmatprep.subr.mxu0 0.0
      %4492 = vmatpush1.msra.mxu0 0.0
      %4493 = vmatprep.subr.mxu0 0.0
      %4494 = vmatpush1.msra.mxu0 0.0
      %4495 = vmatprep.subr.mxu0 0.0
      %4496 = vmatpush1.msra.mxu0 0.0
      %4497 = vmatprep.subr.mxu0 0.0
      %4498 = vmatpush1.msra.mxu0 0.0
      %4499 = vmatprep.subr.mxu0 0.0
      %4500 = vmatpush1.msra.mxu0 0.0
      %4501 = vmatprep.subr.mxu0 0.0
      %4502 = vmatpush1.msra.mxu0 0.0
      %4503 = vmatprep.subr.mxu0 0.0
      %4504 = vmatpush1.msra.mxu0 0.0
      %4505 = vmatprep.subr.mxu0 0.0
      %4506 = vmatpush1.msra.mxu0 0.0
      %4507 = vmatprep.subr.mxu0 0.0
      %4508 = vmatpush1.msra.mxu0 0.0
      %4509 = vmatprep.subr.mxu0 0.0
      %4510 = vmatpush1.msra.mxu0 0.0
      %4511 = vmatprep.mubr.f32.mxu0 0.0
      %4512 = vmatmul.mubr.f32.gmra.mrb[0].mxu0 %v4285
      %v4513 = vpop.f32.mrb[0].mxu0
      %v4514 = vadd.f32 0.0, %v4513
      %v4515 = vpop.f32.mrb[0].mxu0
      %4516 = vdwg.mxu0
      %4517 = vmatprep.subr.mxu0 0.0
      %4518 = vmatpush1.msra.mxu0 %v4291
      %4519 = vmatprep.subr.mxu0 0.0
      %4520 = vmatpush1.msra.mxu0 %v4292
      %4521 = vmatprep.subr.mxu0 0.0
      %4522 = vmatpush1.msra.mxu0 %v4293
      %4523 = vmatprep.subr.mxu0 0.0
      %4524 = vmatpush1.msra.mxu0 %v4294
      %4525 = vmatprep.subr.mxu0 0.0
      %4526 = vmatpush1.msra.mxu0 %v4295
      %4527 = vmatprep.subr.mxu0 0.0
      %4528 = vmatpush1.msra.mxu0 %v4296
      %4529 = vmatprep.subr.mxu0 0.0
      %4530 = vmatpush1.msra.mxu0 %v4297
      %4531 = vmatprep.subr.mxu0 0.0
      %4532 = vmatpush1.msra.mxu0 %v4298
      %4533 = vmatprep.subr.mxu0 0.0
      %4534 = vmatpush1.msra.mxu0 %v4299
      %4535 = vmatprep.subr.mxu0 0.0
      %4536 = vmatpush1.msra.mxu0 %v4300
      %4537 = vmatprep.subr.mxu0 0.0
      %4538 = vmatpush1.msra.mxu0 %v4301
      %4539 = vmatprep.subr.mxu0 0.0
      %4540 = vmatpush1.msra.mxu0 %v4302
      %4541 = vmatprep.subr.mxu0 0.0
      %4542 = vmatpush1.msra.mxu0 %v4303
      %4543 = vmatprep.subr.mxu0 0.0
      %4544 = vmatpush1.msra.mxu0 %v4304
      %4545 = vmatprep.subr.mxu0 0.0
      %4546 = vmatpush1.msra.mxu0 %v4305
      %4547 = vmatprep.subr.mxu0 0.0
      %4548 = vmatpush1.msra.mxu0 %v4306
      %4549 = vmatprep.subr.mxu0 0.0
      %4550 = vmatpush1.msra.mxu0 0.0
      %4551 = vmatprep.subr.mxu0 0.0
      %4552 = vmatpush1.msra.mxu0 0.0
      %4553 = vmatprep.subr.mxu0 0.0
      %4554 = vmatpush1.msra.mxu0 0.0
      %4555 = vmatprep.subr.mxu0 0.0
      %4556 = vmatpush1.msra.mxu0 0.0
      %4557 = vmatprep.subr.mxu0 0.0
      %4558 = vmatpush1.msra.mxu0 0.0
      %4559 = vmatprep.subr.mxu0 0.0
      %4560 = vmatpush1.msra.mxu0 0.0
      %4561 = vmatprep.subr.mxu0 0.0
      %4562 = vmatpush1.msra.mxu0 0.0
      %4563 = vmatprep.subr.mxu0 0.0
      %4564 = vmatpush1.msra.mxu0 0.0
      %4565 = vmatprep.subr.mxu0 0.0
      %4566 = vmatpush1.msra.mxu0 0.0
      %4567 = vmatprep.subr.mxu0 0.0
      %4568 = vmatpush1.msra.mxu0 0.0
      %4569 = vmatprep.subr.mxu0 0.0
      %4570 = vmatpush1.msra.mxu0 0.0
      %4571 = vmatprep.subr.mxu0 0.0
      %4572 = vmatpush1.msra.mxu0 0.0
      %4573 = vmatprep.subr.mxu0 0.0
      %4574 = vmatpush1.msra.mxu0 0.0
      %4575 = vmatprep.subr.mxu0 0.0
      %4576 = vmatpush1.msra.mxu0 0.0
      %4577 = vmatprep.subr.mxu0 0.0
      %4578 = vmatpush1.msra.mxu0 0.0
      %4579 = vmatprep.subr.mxu0 0.0
      %4580 = vmatpush1.msra.mxu0 0.0
      %4581 = vmatprep.mubr.f32.mxu0 0.0
      %4582 = vmatmul.mubr.f32.gmra.mrb[0].mxu0 %v4286
      %v4583 = vpop.f32.mrb[0].mxu0
      %v4584 = vadd.f32 0.0, %v4583
      %v4585 = vpop.f32.mrb[0].mxu0
      %4586 = vdwg.mxu0
      %v4587 = vlaneseq
      %v4588 = vshrl.u32 %v4587, 7
      %v4589 = vsub.s32 3, %v4588
      %v4590 = vrot.slane %v1248, %v4589
      %v4591 = vlaneseq
      %v4592 = vshrl.u32 %v4591, 7
      %v4593 = vsub.s32 7, %v4592
      %v4594 = vrot.slane %v1248, %v4593
      %v4595 = vlaneseq
      %v4596 = vshrl.u32 %v4595, 7
      %v4597 = vsub.s32 3, %v4596
      %v4598 = vrot.slane %v1249, %v4597
      %v4599 = vlaneseq
      %v4600 = vshrl.u32 %v4599, 7
      %v4601 = vsub.s32 7, %v4600
      %v4602 = vrot.slane %v1249, %v4601
      %v4607 = vlaneseq
      %v4608 = vshrl.u32 %v4607, 7
      %v4609 = vsub.s32 3, %v4608
      %v4610 = vrot.slane %v4590, %v4609
      %v4611 = vlaneseq
      %v4612 = vshrl.u32 %v4611, 7
      %v4613 = vsub.s32 3, %v4612
      %v4614 = vrot.slane %v4594, %v4613
      %v4615 = vlaneseq
      %v4616 = vshrl.u32 %v4615, 7
      %v4617 = vsub.s32 3, %v4616
      %v4618 = vrot.slane %v4598, %v4617
      %v4619 = vlaneseq
      %v4620 = vshrl.u32 %v4619, 7
      %v4621 = vsub.s32 3, %v4620
      %v4622 = vrot.slane %v4602, %v4621
      %v4623 = vadd.f32 %v4374, %v4610
      %v4624 = vadd.f32 %v4444, %v4614
      %v4625 = vadd.f32 %v4514, %v4618
      %v4626 = vadd.f32 %v4584, %v4622
      %v4627 = vadd.f32 %v4287, %v4623
      %v4628 = vadd.f32 %v4288, %v4624
      %v4629 = vadd.f32 %v4289, %v4625
      %v4630 = vadd.f32 %v4290, %v4626
      %4631 = vst [vmem:[%s568] sm:$0xff] %v4627
      %4632 = vst [vmem:[%s568 + $0x8] sm:$0xff] %v4628
      %4633 = vst [vmem:[%s568 + $0x10] sm:$0xff] %v4629
      %4634 = vst [vmem:[%s568 + $0x18] sm:$0xff] %v4630
      %p4635 = scmp.lt.s32.totalorder %s28, 1
      %s4636 = scalar_select %p4635, %s28, 1
      %s4637 = smul.addr %s4636, 4
      %s4638 = smul.addr %s4637, 8
      %s4639 = scalar_lea.vmem %s17, %s4638
      // Predicated region
      $region89: #{permutator_block.4} parent=87 // pred_check
        %p4640 = pneg %p413
      $region90: #{permutator_block.4} parent=87 // pred_check_branch
        %4642 = sbr.rel (%p4640) target = $region92
      $region91: #{permutator_block.4} parent=87 // pred_region
        _
      $region92: #{permutator_block.4} parent=87 // pred_fallthru
        _
    $region88: #{permutator_block.4} parent=5 // pred_fallthru
      _
    %p4643 = scmp.le.s32.totalorder 2, %s23
    // Predicated region
    $region93: #{permutator_block.4} parent=5 // pred_check
      %p4644 = pneg %p4643
    $region94: #{permutator_block.4} parent=5 // pred_check_branch
      %4646 = sbr.rel (%p4644) target = $region96
    $region95: #{permutator_block.4} parent=5 // pred_region
      %s4647 = ssub.s32 %s23, 2
      // Predicated region
      $region97: #{permutator_block.4} parent=95 // pred_check
        %p4648 = pneg %p419
      $region98: #{permutator_block.4} parent=95 // pred_check_branch
        %4650 = sbr.rel (%p4648) target = $region100
      $region99: #{permutator_block.4} parent=95 // pred_region
        %p4651 = scmp.lt.s32.totalorder %s29, 1
        %s4652 = scalar_select %p4651, %s29, 1
        %s4653 = smul.addr %s4652, 4
        %s4654 = smul.addr %s4653, 8
        %s4655 = scalar_lea.vmem %s17, %s4654
      $region100: #{permutator_block.4} parent=95 // pred_fallthru
        _
    $region96: #{permutator_block.4} parent=5 // pred_fallthru
      _
  $region6: #{permutator_block.4} parent=0 // loop_footer
    %s27 = sadd.s32 1, %s23
  $region7: #{permutator_block.4} parent=0 // loop_footer_branch
    %22 = sbr.rel target = $region3
  $region8: #{permutator_block.4} parent=0 // loop_exit
    _

</llo_original>
